<compile_context>
chip_gen: v7x
topology: tpu7x:2x2x1
jax: 0.10.0
libtpu: 0.0.40
codegen_flags: <defaults>
</compile_context>

<pallas_src>
import functools

import jax
import jax.numpy as jnp
from jax.experimental import pallas as pl
from jax.experimental.pallas import tpu as pltpu

_MXU_DTYPE = jnp.bfloat16  # matmul operand dtype (accumulation stays fp32)


def _fullspec(shape):
    """BlockSpec covering the whole array (grid=(1,))."""
    ndim = len(shape)

    def index_map(i):
        return (0,) * ndim

    return pl.BlockSpec(shape, index_map)


# --------------------------- embedding kernel -------------------------------

def _embed_kernel(x_ref, wp_ref, bp_ref, wpos_ref, o_ref, *, B, L):
    """Patch embedding Linear(patch_len->d_model) + positional encoding add."""
    D = wp_ref.shape[1]
    emb = jnp.dot(x_ref[...].astype(_MXU_DTYPE),
                  wp_ref[...].astype(_MXU_DTYPE),
                  preferred_element_type=jnp.float32) + bp_ref[...]
    # rows are ordered (b, v, l) with l fastest -> add W_pos per length index
    o_ref[...] = (emb.reshape(B, L, D) + wpos_ref[...]).reshape(B * L, D)


def pallas_embed(x2d, W_P, b_P, W_pos, *, B, L):
    R, P = x2d.shape
    D = W_P.shape[1]
    kern = functools.partial(_embed_kernel, B=B, L=L)
    return pl.pallas_call(
        kern,
        out_shape=jax.ShapeDtypeStruct((R, D), jnp.float32),
        grid=(1,),
        in_specs=[_fullspec((R, P)),
                  _fullspec((P, D)),
                  _fullspec((1, D)),
                  _fullspec((L, D))],
        out_specs=_fullspec((R, D)),
        compiler_params=pltpu.CompilerParams(
            dimension_semantics=("arbitrary",)),
    )(x2d, W_P, b_P.reshape(1, D), W_pos)


# --------------------------- fused encoder layer ----------------------------

def _layer_kernel(*refs, B, L, H, dh, scale, has_prev):
    """One full EncoderLayer:
       QKV proj -> per-head attention (+prev scores) -> Wo proj
       -> BN(residual) -> FFN(GELU) -> BN(residual)."""
    if has_prev:
        z_ref, prev_ref = refs[0], refs[1]
        rest = refs[2:]
    else:
        z_ref, prev_ref = refs[0], None
        rest = refs[1:]
    (wqkv_ref, bqkv_ref, wo_ref, bo_ref, g1_ref, be1_ref,
     w1_ref, bf1_ref, w2_ref, bf2_ref, g2_ref, be2_ref,
     zo_ref, so_ref, qkv_scr) = rest

    D = H * dh
    R = B * L
    cdt = _MXU_DTYPE

    z = z_ref[...]                                                   # [R, D] fp32

    # ---- fused QKV projection (one big matmul), staged in VMEM scratch ----
    qkv = jnp.dot(z.astype(cdt), wqkv_ref[...].astype(cdt),
                  preferred_element_type=jnp.float32) + bqkv_ref[...]
    qkv_scr[...] = qkv.reshape(B, L, 3 * D)

    # ---- multi-head attention with res_attention score carry ----
    o = jnp.zeros((R, D), jnp.float32)
    for h in range(H):
        qh = qkv_scr[:, :, h * dh:(h + 1) * dh].astype(cdt)          # [B, L, dh]
        kh = qkv_scr[:, :, D + h * dh:D + (h + 1) * dh].astype(cdt)
        vh = qkv_scr[:, :, 2 * D + h * dh:2 * D + (h + 1) * dh].astype(cdt)

        s = jnp.einsum('bqd,bkd->bqk', qh, kh,
                       preferred_element_type=jnp.float32) * scale   # [B, L, L]
        if has_prev:
            s = s + prev_ref[h]
        so_ref[h] = s                                                # score carry out

        m = jnp.max(s, axis=-1, keepdims=True)
        p = jnp.exp(s - m)
        w = p * pl.reciprocal(jnp.sum(p, axis=-1, keepdims=True), approx=True)

        oh = jnp.einsum('bqk,bkd->bqd', w.astype(cdt), vh,
                        preferred_element_type=jnp.float32)          # [B, L, dh]
        # fold the to_out projection per head: o += oh @ Wo[h*dh:(h+1)*dh, :]
        o = o + jnp.dot(oh.reshape(R, dh).astype(cdt),
                        wo_ref[h * dh:(h + 1) * dh, :].astype(cdt),
                        preferred_element_type=jnp.float32)
    o = o + bo_ref[...]

    # ---- residual + BatchNorm1d (training stats over all rows, eps=1e-5) ----
    x1 = z + o
    mean1 = jnp.mean(x1, axis=0, keepdims=True)
    var1 = jnp.mean(jnp.square(x1 - mean1), axis=0, keepdims=True)
    z1 = (x1 - mean1) * jax.lax.rsqrt(var1 + 1e-5) * g1_ref[...] + be1_ref[...]

    # ---- FFN: Linear -> exact GELU -> Linear ----
    h1 = jnp.dot(z1.astype(cdt), w1_ref[...].astype(cdt),
                 preferred_element_type=jnp.float32) + bf1_ref[...]
    h1 = 0.5 * h1 * (1.0 + jax.lax.erf(h1 * 0.7071067811865476))
    ff = jnp.dot(h1.astype(cdt), w2_ref[...].astype(cdt),
                 preferred_element_type=jnp.float32) + bf2_ref[...]

    # ---- residual + BatchNorm1d ----
    x2 = z1 + ff
    mean2 = jnp.mean(x2, axis=0, keepdims=True)
    var2 = jnp.mean(jnp.square(x2 - mean2), axis=0, keepdims=True)
    zo_ref[...] = ((x2 - mean2) * jax.lax.rsqrt(var2 + 1e-5)
                   * g2_ref[...] + be2_ref[...])


def pallas_encoder_layer(z, prev, lp, *, B, L, H, dh):
    """z: [R, d_model]; prev: None or [H, B, L, L].  Returns (z_out, scores)."""
    R, D = z.shape
    F = lp["W1"].shape[1]
    has_prev = prev is not None
    scale = float(dh) ** -0.5

    kern = functools.partial(_layer_kernel, B=B, L=L, H=H, dh=dh,
                             scale=scale, has_prev=has_prev)

    param_arrays = [
        lp["Wqkv"], lp["bqkv"].reshape(1, 3 * D),
        lp["Wo"], lp["bo"].reshape(1, D),
        lp["g1"].reshape(1, D), lp["be1"].reshape(1, D),
        lp["W1"], lp["bf1"].reshape(1, F),
        lp["W2"], lp["bf2"].reshape(1, D),
        lp["g2"].reshape(1, D), lp["be2"].reshape(1, D),
    ]
    inputs = [z] + ([prev] if has_prev else []) + param_arrays
    in_specs = [_fullspec(a.shape) for a in inputs]

    out_shape = (jax.ShapeDtypeStruct((R, D), jnp.float32),
                 jax.ShapeDtypeStruct((H, B, L, L), jnp.float32))
    out_specs = (_fullspec((R, D)), _fullspec((H, B, L, L)))

    return pl.pallas_call(
        kern,
        out_shape=out_shape,
        grid=(1,),
        in_specs=in_specs,
        out_specs=out_specs,
        scratch_shapes=[pltpu.VMEM((B, L, 3 * D), jnp.float32)],
        compiler_params=pltpu.CompilerParams(
            dimension_semantics=("arbitrary",)),
    )(*inputs)


# ------------------------------ parameters ---------------------------------

def init_params(key, num_patch, patch_len, d_model, d_ff, n_layers):
    keys = jax.random.split(key, 2 + n_layers)
    k0, k1 = jax.random.split(keys[0])
    p = {
        "W_P": 0.02 * jax.random.normal(k0, (patch_len, d_model), jnp.float32),
        "b_P": 0.02 * jax.random.normal(k1, (d_model,), jnp.float32),
        "W_pos": 0.02 * jax.random.normal(keys[1], (num_patch, d_model), jnp.float32),
        "layers": [],
    }
    for l in range(n_layers):
        lk = jax.random.split(keys[2 + l], 8)
        p["layers"].append({
            # W_Q | W_K | W_V concatenated along the output dim (head-major per block)
            "Wqkv": 0.02 * jax.random.normal(lk[0], (d_model, 3 * d_model), jnp.float32),
            "bqkv": 0.02 * jax.random.normal(lk[1], (3 * d_model,), jnp.float32),
            "Wo":   0.02 * jax.random.normal(lk[2], (d_model, d_model), jnp.float32),
            "bo":   0.02 * jax.random.normal(lk[3], (d_model,), jnp.float32),
            "g1":   jnp.ones((d_model,), jnp.float32),   # BatchNorm affine (torch default)
            "be1":  jnp.zeros((d_model,), jnp.float32),
            "W1":   0.02 * jax.random.normal(lk[4], (d_model, d_ff), jnp.float32),
            "bf1":  0.02 * jax.random.normal(lk[5], (d_ff,), jnp.float32),
            "W2":   0.02 * jax.random.normal(lk[6], (d_ff, d_model), jnp.float32),
            "bf2":  0.02 * jax.random.normal(lk[7], (d_model,), jnp.float32),
            "g2":   jnp.ones((d_model,), jnp.float32),
            "be2":  jnp.zeros((d_model,), jnp.float32),
        })
    return p


# ------------------------------ forward pass --------------------------------

def shuffle_mtm_encoder_forward(x, params, n_heads):
    """x: [bs, num_patch, n_vars, patch_len] -> [bs, n_vars, d_model, num_patch]."""
    bs, L, V, P = x.shape
    D = params["W_P"].shape[1]
    assert D % n_heads == 0
    dh = D // n_heads
    B = bs * V
    R = B * L

    # one-time layout change: [bs, L, V, P] -> [bs, V, L, P] -> [R, P]
    x2d = x.transpose(0, 2, 1, 3).reshape(R, P)

    # shared patch embedding + positional encoding (dropout p=0 == identity)
    z = pallas_embed(x2d, params["W_P"], params["b_P"], params["W_pos"], B=B, L=L)

    # res_attention=True score carry; layer 0 gets no `prev` (no zero tensor DMA)
    scores = None
    for lp in params["layers"]:
        z, scores = pallas_encoder_layer(z, scores, lp, B=B, L=L, H=n_heads, dh=dh)

    # reshape(-1, n_vars, num_patch, d_model).permute(0, 1, 3, 2)
    z = z.reshape(bs, V, L, D).transpose(0, 1, 3, 2)   # [bs, n_vars, d_model, num_patch]
    return z


# --------------------------------- main -------------------------------------

if __name__ == "__main__":
    bs, num_patch, n_vars, patch_len = 2, 8, 4, 16
    d_model, n_heads, d_ff, n_layers = 32, 4, 64, 2

    key = jax.random.PRNGKey(0)
    kx, kp = jax.random.split(key)
    x = jax.random.normal(kx, (bs, num_patch, n_vars, patch_len), jnp.float32)
    params = init_params(kp, num_patch, patch_len, d_model, d_ff, n_layers)

    fwd = jax.jit(functools.partial(shuffle_mtm_encoder_forward, n_heads=n_heads))
    out = fwd(x, params)
    out = jax.block_until_ready(out)
    assert out.shape == (bs, n_vars, d_model, num_patch), out.shape
    assert bool(jnp.all(jnp.isfinite(out)))
    print("KERNEL_OK")
</pallas_src>

<mosaic_0001>
module attributes {stable_mosaic.version = 11 : i64} {
  func.func @_embed_kernel(%arg0: i32, %arg1: memref<64x16xf32, #tpu.memory_space<vmem>>, %arg2: memref<16x32xf32, #tpu.memory_space<vmem>>, %arg3: memref<1x32xf32, #tpu.memory_space<vmem>>, %arg4: memref<8x32xf32, #tpu.memory_space<vmem>>, %arg5: memref<64x32xf32, #tpu.memory_space<vmem>>) attributes {dimension_semantics = [#tpu.dimension_semantics<arbitrary>], iteration_bounds = array<i64: 1>, scalar_prefetch = 0 : i64, scratch_operands = 0 : i64, tpu.core_type = #tpu.core_type<tc>, window_params = [{pipeline_mode = #tpu.pipeline_mode<synchronous>, transform_indices = @transform_0, window_bounds = array<i64: 64, 16>}, {pipeline_mode = #tpu.pipeline_mode<synchronous>, transform_indices = @transform_1, window_bounds = array<i64: 16, 32>}, {pipeline_mode = #tpu.pipeline_mode<synchronous>, transform_indices = @transform_2, window_bounds = array<i64: 1, 32>}, {pipeline_mode = #tpu.pipeline_mode<synchronous>, transform_indices = @transform_3, window_bounds = array<i64: 8, 32>}, {pipeline_mode = #tpu.pipeline_mode<synchronous>, transform_indices = @transform_4, window_bounds = array<i64: 64, 32>}]} {
    %c0 = arith.constant 0 : index
    %c0_0 = arith.constant 0 : index
    %0 = vector.load %arg1[%c0, %c0_0] : memref<64x16xf32, #tpu.memory_space<vmem>>, vector<64x16xf32>
    %1 = arith.truncf %0 : vector<64x16xf32> to vector<64x16xbf16>
    %c0_1 = arith.constant 0 : index
    %c0_2 = arith.constant 0 : index
    %2 = vector.load %arg2[%c0_1, %c0_2] : memref<16x32xf32, #tpu.memory_space<vmem>>, vector<16x32xf32>
    %3 = arith.truncf %2 : vector<16x32xf32> to vector<16x32xbf16>
    %cst = arith.constant dense<0.000000e+00> : vector<64x32xf32>
    %4 = tpu.matmul %1, %3, %cst {dimension_numbers = #tpu.dot_dimension_numbers<[1], [0], [0], [1], [0, 0, 1, 1], [], []>} : vector<64x16xbf16>, vector<16x32xbf16>, vector<64x32xf32> -> vector<64x32xf32>
    %c0_3 = arith.constant 0 : index
    %c0_4 = arith.constant 0 : index
    %5 = vector.load %arg3[%c0_3, %c0_4] : memref<1x32xf32, #tpu.memory_space<vmem>>, vector<1x32xf32>
    %6 = vector.broadcast %5 : vector<1x32xf32> to vector<64x32xf32>
    %7 = arith.addf %4, %6 : vector<64x32xf32>
    %8 = vector.shape_cast %7 : vector<64x32xf32> to vector<8x8x32xf32>
    %c0_5 = arith.constant 0 : index
    %c0_6 = arith.constant 0 : index
    %9 = vector.load %arg4[%c0_5, %c0_6] : memref<8x32xf32, #tpu.memory_space<vmem>>, vector<8x32xf32>
    %10 = vector.shape_cast %9 : vector<8x32xf32> to vector<1x8x32xf32>
    %11 = vector.broadcast %10 : vector<1x8x32xf32> to vector<8x8x32xf32>
    %12 = arith.addf %8, %11 : vector<8x8x32xf32>
    %13 = vector.shape_cast %12 : vector<8x8x32xf32> to vector<64x32xf32>
    %c0_7 = arith.constant 0 : index
    %c0_8 = arith.constant 0 : index
    %14 = vector.load %arg5[%c0_7, %c0_8] : memref<64x32xf32, #tpu.memory_space<vmem>>, vector<64x32xf32>
    tpu.vector_store %arg5[%c0_7, %c0_8], %13 {strides = array<i32>} : memref<64x32xf32, #tpu.memory_space<vmem>>, vector<64x32xf32>,
    return
  }
  func.func @transform_0(%arg0: i32) -> (i32, i32) {
    %c0_i32 = arith.constant 0 : i32
    %c0_i32_0 = arith.constant 0 : i32
    %c0_i32_1 = arith.constant 0 : i32
    return %c0_i32, %c0_i32_0 : i32, i32
  }
  func.func @transform_1(%arg0: i32) -> (i32, i32) {
    %c0_i32 = arith.constant 0 : i32
    %c0_i32_0 = arith.constant 0 : i32
    %c0_i32_1 = arith.constant 0 : i32
    return %c0_i32, %c0_i32_0 : i32, i32
  }
  func.func @transform_2(%arg0: i32) -> (i32, i32) {
    %c0_i32 = arith.constant 0 : i32
    %c0_i32_0 = arith.constant 0 : i32
    %c0_i32_1 = arith.constant 0 : i32
    return %c0_i32, %c0_i32_0 : i32, i32
  }
  func.func @transform_3(%arg0: i32) -> (i32, i32) {
    %c0_i32 = arith.constant 0 : i32
    %c0_i32_0 = arith.constant 0 : i32
    %c0_i32_1 = arith.constant 0 : i32
    return %c0_i32, %c0_i32_0 : i32, i32
  }
  func.func @transform_4(%arg0: i32) -> (i32, i32) {
    %c0_i32 = arith.constant 0 : i32
    %c0_i32_0 = arith.constant 0 : i32
    %c0_i32_1 = arith.constant 0 : i32
    return %c0_i32, %c0_i32_0 : i32, i32
  }
}

module attributes {stable_mosaic.version = 11 : i64} {
  func.func @_layer_kernel(%arg0: i32, %arg1: memref<64x32xf32, #tpu.memory_space<vmem>>, %arg2: memref<32x96xf32, #tpu.memory_space<vmem>>, %arg3: memref<1x96xf32, #tpu.memory_space<vmem>>, %arg4: memref<32x32xf32, #tpu.memory_space<vmem>>, %arg5: memref<1x32xf32, #tpu.memory_space<vmem>>, %arg6: memref<1x32xf32, #tpu.memory_space<vmem>>, %arg7: memref<1x32xf32, #tpu.memory_space<vmem>>, %arg8: memref<32x64xf32, #tpu.memory_space<vmem>>, %arg9: memref<1x64xf32, #tpu.memory_space<vmem>>, %arg10: memref<64x32xf32, #tpu.memory_space<vmem>>, %arg11: memref<1x32xf32, #tpu.memory_space<vmem>>, %arg12: memref<1x32xf32, #tpu.memory_space<vmem>>, %arg13: memref<1x32xf32, #tpu.memory_space<vmem>>, %arg14: memref<64x32xf32, #tpu.memory_space<vmem>>, %arg15: memref<4x8x8x8xf32, #tpu.memory_space<vmem>>, %arg16: memref<8x8x96xf32, #tpu.memory_space<vmem>>) attributes {dimension_semantics = [#tpu.dimension_semantics<arbitrary>], iteration_bounds = array<i64: 1>, scalar_prefetch = 0 : i64, scratch_operands = 1 : i64, tpu.core_type = #tpu.core_type<tc>, window_params = [{pipeline_mode = #tpu.pipeline_mode<synchronous>, transform_indices = @transform_0, window_bounds = array<i64: 64, 32>}, {pipeline_mode = #tpu.pipeline_mode<synchronous>, transform_indices = @transform_1, window_bounds = array<i64: 32, 96>}, {pipeline_mode = #tpu.pipeline_mode<synchronous>, transform_indices = @transform_2, window_bounds = array<i64: 1, 96>}, {pipeline_mode = #tpu.pipeline_mode<synchronous>, transform_indices = @transform_3, window_bounds = array<i64: 32, 32>}, {pipeline_mode = #tpu.pipeline_mode<synchronous>, transform_indices = @transform_4, window_bounds = array<i64: 1, 32>}, {pipeline_mode = #tpu.pipeline_mode<synchronous>, transform_indices = @transform_5, window_bounds = array<i64: 1, 32>}, {pipeline_mode = #tpu.pipeline_mode<synchronous>, transform_indices = @transform_6, window_bounds = array<i64: 1, 32>}, {pipeline_mode = #tpu.pipeline_mode<synchronous>, transform_indices = @transform_7, window_bounds = array<i64: 32, 64>}, {pipeline_mode = #tpu.pipeline_mode<synchronous>, transform_indices = @transform_8, window_bounds = array<i64: 1, 64>}, {pipeline_mode = #tpu.pipeline_mode<synchronous>, transform_indices = @transform_9, window_bounds = array<i64: 64, 32>}, {pipeline_mode = #tpu.pipeline_mode<synchronous>, transform_indices = @transform_10, window_bounds = array<i64: 1, 32>}, {pipeline_mode = #tpu.pipeline_mode<synchronous>, transform_indices = @transform_11, window_bounds = array<i64: 1, 32>}, {pipeline_mode = #tpu.pipeline_mode<synchronous>, transform_indices = @transform_12, window_bounds = array<i64: 1, 32>}, {pipeline_mode = #tpu.pipeline_mode<synchronous>, transform_indices = @transform_13, window_bounds = array<i64: 64, 32>}, {pipeline_mode = #tpu.pipeline_mode<synchronous>, transform_indices = @transform_14, window_bounds = array<i64: 4, 8, 8, 8>}]} {
    %c0 = arith.constant 0 : index
    %c0_0 = arith.constant 0 : index
    %0 = vector.load %arg1[%c0, %c0_0] : memref<64x32xf32, #tpu.memory_space<vmem>>, vector<64x32xf32>
    %1 = arith.truncf %0 : vector<64x32xf32> to vector<64x32xbf16>
    %c0_1 = arith.constant 0 : index
    %c0_2 = arith.constant 0 : index
    %2 = vector.load %arg2[%c0_1, %c0_2] : memref<32x96xf32, #tpu.memory_space<vmem>>, vector<32x96xf32>
    %3 = arith.truncf %2 : vector<32x96xf32> to vector<32x96xbf16>
    %cst = arith.constant dense<0.000000e+00> : vector<64x96xf32>
    %4 = tpu.matmul %1, %3, %cst {dimension_numbers = #tpu.dot_dimension_numbers<[1], [0], [0], [1], [0, 0, 1, 1], [], []>} : vector<64x32xbf16>, vector<32x96xbf16>, vector<64x96xf32> -> vector<64x96xf32>
    %c0_3 = arith.constant 0 : index
    %c0_4 = arith.constant 0 : index
    %5 = vector.load %arg3[%c0_3, %c0_4] : memref<1x96xf32, #tpu.memory_space<vmem>>, vector<1x96xf32>
    %6 = vector.broadcast %5 : vector<1x96xf32> to vector<64x96xf32>
    %7 = arith.addf %4, %6 : vector<64x96xf32>
    %8 = vector.shape_cast %7 : vector<64x96xf32> to vector<8x8x96xf32>
    %c0_5 = arith.constant 0 : index
    %c0_6 = arith.constant 0 : index
    %c0_7 = arith.constant 0 : index
    %9 = vector.load %arg16[%c0_5, %c0_6, %c0_7] : memref<8x8x96xf32, #tpu.memory_space<vmem>>, vector<8x8x96xf32>
    tpu.vector_store %arg16[%c0_5, %c0_6, %c0_7], %8 {strides = array<i32>} : memref<8x8x96xf32, #tpu.memory_space<vmem>>, vector<8x8x96xf32>,
    %cst_8 = arith.constant 0.000000e+00 : f32
    %10 = vector.broadcast %cst_8 : f32 to vector<64x32xf32>
    %c0_9 = arith.constant 0 : index
    %c0_10 = arith.constant 0 : index
    %c0_11 = arith.constant 0 : index
    %11 = vector.load %arg16[%c0_9, %c0_10, %c0_11] : memref<8x8x96xf32, #tpu.memory_space<vmem>>, vector<8x8x8xf32>
    %12 = arith.truncf %11 : vector<8x8x8xf32> to vector<8x8x8xbf16>
    %c0_12 = arith.constant 0 : index
    %c0_13 = arith.constant 0 : index
    %c32 = arith.constant 32 : index
    %13 = vector.load %arg16[%c0_12, %c0_13, %c32] : memref<8x8x96xf32, #tpu.memory_space<vmem>>, vector<8x8x8xf32>
    %14 = arith.truncf %13 : vector<8x8x8xf32> to vector<8x8x8xbf16>
    %c0_14 = arith.constant 0 : index
    %c0_15 = arith.constant 0 : index
    %c64 = arith.constant 64 : index
    %15 = vector.load %arg16[%c0_14, %c0_15, %c64] : memref<8x8x96xf32, #tpu.memory_space<vmem>>, vector<8x8x8xf32>
    %16 = arith.truncf %15 : vector<8x8x8xf32> to vector<8x8x8xbf16>
    "tpu.trace_start"() <{level = 10 : i32, message = "bqd,bkd->bqk"}> : () -> ()
    %cst_16 = arith.constant dense<0.000000e+00> : vector<8x8x8xf32>
    %17 = tpu.matmul %12, %14, %cst_16 {dimension_numbers = #tpu.dot_dimension_numbers<[2], [2], [1], [1], [0, 0, 0, 1, 1, 1], [0], [0]>} : vector<8x8x8xbf16>, vector<8x8x8xbf16>, vector<8x8x8xf32> -> vector<8x8x8xf32>
    "tpu.trace_stop"() : () -> ()
    %cst_17 = arith.constant 0.353553385 : f32
    %18 = vector.broadcast %cst_17 : f32 to vector<8x8x8xf32>
    %19 = arith.mulf %17, %18 : vector<8x8x8xf32>
    %c0_18 = arith.constant 0 : index
    %c0_19 = arith.constant 0 : index
    %c0_20 = arith.constant 0 : index
    %c0_21 = arith.constant 0 : index
    %20 = vector.load %arg15[%c0_18, %c0_19, %c0_20, %c0_21] : memref<4x8x8x8xf32, #tpu.memory_space<vmem>>, vector<1x8x8x8xf32>
    %21 = vector.shape_cast %20 : vector<1x8x8x8xf32> to vector<8x8x8xf32>
    %22 = vector.shape_cast %19 : vector<8x8x8xf32> to vector<1x8x8x8xf32>
    tpu.vector_store %arg15[%c0_18, %c0_19, %c0_20, %c0_21], %22 {strides = array<i32>} : memref<4x8x8x8xf32, #tpu.memory_space<vmem>>, vector<1x8x8x8xf32>,
    %cst_22 = arith.constant dense<0xFF800000> : vector<8x8xf32>
    %23 = vector.multi_reduction <maximumf>, %19, %cst_22 [2] : vector<8x8x8xf32> to vector<8x8xf32>
    %24 = vector.shape_cast %23 : vector<8x8xf32> to vector<8x8x1xf32>
    %25 = vector.broadcast %24 : vector<8x8x1xf32> to vector<8x8x8xf32>
    %26 = arith.subf %19, %25 : vector<8x8x8xf32>
    %27 = math.exp %26 : vector<8x8x8xf32>
    %cst_23 = arith.constant dense<0.000000e+00> : vector<8x8xf32>
    %28 = vector.multi_reduction <add>, %27, %cst_23 [2] : vector<8x8x8xf32> to vector<8x8xf32>
    %29 = vector.shape_cast %28 : vector<8x8xf32> to vector<8x8x1xf32>
    %30 = tpu.reciprocal %29 {approx = true} : vector<8x8x1xf32> -> vector<8x8x1xf32>
    %31 = vector.broadcast %30 : vector<8x8x1xf32> to vector<8x8x8xf32>
    %32 = arith.mulf %27, %31 : vector<8x8x8xf32>
    %33 = arith.truncf %32 : vector<8x8x8xf32> to vector<8x8x8xbf16>
    "tpu.trace_start"() <{level = 10 : i32, message = "bqk,bkd->bqd"}> : () -> ()
    %cst_24 = arith.constant dense<0.000000e+00> : vector<8x8x8xf32>
    %34 = tpu.matmul %33, %16, %cst_24 {dimension_numbers = #tpu.dot_dimension_numbers<[2], [1], [1], [2], [0, 0, 0, 1, 1, 2], [0], [0]>} : vector<8x8x8xbf16>, vector<8x8x8xbf16>, vector<8x8x8xf32> -> vector<8x8x8xf32>
    "tpu.trace_stop"() : () -> ()
    %35 = vector.shape_cast %34 : vector<8x8x8xf32> to vector<64x8xf32>
    %36 = arith.truncf %35 : vector<64x8xf32> to vector<64x8xbf16>
    %c0_25 = arith.constant 0 : index
    %c0_26 = arith.constant 0 : index
    %37 = vector.load %arg4[%c0_25, %c0_26] : memref<32x32xf32, #tpu.memory_space<vmem>>, vector<8x32xf32>
    %38 = arith.truncf %37 : vector<8x32xf32> to vector<8x32xbf16>
    %cst_27 = arith.constant dense<0.000000e+00> : vector<64x32xf32>
    %39 = tpu.matmul %36, %38, %cst_27 {dimension_numbers = #tpu.dot_dimension_numbers<[1], [0], [0], [1], [0, 0, 1, 1], [], []>} : vector<64x8xbf16>, vector<8x32xbf16>, vector<64x32xf32> -> vector<64x32xf32>
    %40 = arith.addf %10, %39 : vector<64x32xf32>
    %c0_28 = arith.constant 0 : index
    %c0_29 = arith.constant 0 : index
    %c8 = arith.constant 8 : index
    %41 = vector.load %arg16[%c0_28, %c0_29, %c8] : memref<8x8x96xf32, #tpu.memory_space<vmem>>, vector<8x8x8xf32>
    %42 = arith.truncf %41 : vector<8x8x8xf32> to vector<8x8x8xbf16>
    %c0_30 = arith.constant 0 : index
    %c0_31 = arith.constant 0 : index
    %c40 = arith.constant 40 : index
    %43 = vector.load %arg16[%c0_30, %c0_31, %c40] : memref<8x8x96xf32, #tpu.memory_space<vmem>>, vector<8x8x8xf32>
    %44 = arith.truncf %43 : vector<8x8x8xf32> to vector<8x8x8xbf16>
    %c0_32 = arith.constant 0 : index
    %c0_33 = arith.constant 0 : index
    %c72 = arith.constant 72 : index
    %45 = vector.load %arg16[%c0_32, %c0_33, %c72] : memref<8x8x96xf32, #tpu.memory_space<vmem>>, vector<8x8x8xf32>
    %46 = arith.truncf %45 : vector<8x8x8xf32> to vector<8x8x8xbf16>
    "tpu.trace_start"() <{level = 10 : i32, message = "bqd,bkd->bqk"}> : () -> ()
    %cst_34 = arith.constant dense<0.000000e+00> : vector<8x8x8xf32>
    %47 = tpu.matmul %42, %44, %cst_34 {dimension_numbers = #tpu.dot_dimension_numbers<[2], [2], [1], [1], [0, 0, 0, 1, 1, 1], [0], [0]>} : vector<8x8x8xbf16>, vector<8x8x8xbf16>, vector<8x8x8xf32> -> vector<8x8x8xf32>
    "tpu.trace_stop"() : () -> ()
    %cst_35 = arith.constant 0.353553385 : f32
    %48 = vector.broadcast %cst_35 : f32 to vector<8x8x8xf32>
    %49 = arith.mulf %47, %48 : vector<8x8x8xf32>
    %c1 = arith.constant 1 : index
    %c0_36 = arith.constant 0 : index
    %c0_37 = arith.constant 0 : index
    %c0_38 = arith.constant 0 : index
    %50 = vector.load %arg15[%c1, %c0_36, %c0_37, %c0_38] : memref<4x8x8x8xf32, #tpu.memory_space<vmem>>, vector<1x8x8x8xf32>
    %51 = vector.shape_cast %50 : vector<1x8x8x8xf32> to vector<8x8x8xf32>
    %52 = vector.shape_cast %49 : vector<8x8x8xf32> to vector<1x8x8x8xf32>
    tpu.vector_store %arg15[%c1, %c0_36, %c0_37, %c0_38], %52 {strides = array<i32>} : memref<4x8x8x8xf32, #tpu.memory_space<vmem>>, vector<1x8x8x8xf32>,
    %cst_39 = arith.constant dense<0xFF800000> : vector<8x8xf32>
    %53 = vector.multi_reduction <maximumf>, %49, %cst_39 [2] : vector<8x8x8xf32> to vector<8x8xf32>
    %54 = vector.shape_cast %53 : vector<8x8xf32> to vector<8x8x1xf32>
    %55 = vector.broadcast %54 : vector<8x8x1xf32> to vector<8x8x8xf32>
    %56 = arith.subf %49, %55 : vector<8x8x8xf32>
    %57 = math.exp %56 : vector<8x8x8xf32>
    %cst_40 = arith.constant dense<0.000000e+00> : vector<8x8xf32>
    %58 = vector.multi_reduction <add>, %57, %cst_40 [2] : vector<8x8x8xf32> to vector<8x8xf32>
    %59 = vector.shape_cast %58 : vector<8x8xf32> to vector<8x8x1xf32>
    %60 = tpu.reciprocal %59 {approx = true} : vector<8x8x1xf32> -> vector<8x8x1xf32>
    %61 = vector.broadcast %60 : vector<8x8x1xf32> to vector<8x8x8xf32>
    %62 = arith.mulf %57, %61 : vector<8x8x8xf32>
    %63 = arith.truncf %62 : vector<8x8x8xf32> to vector<8x8x8xbf16>
    "tpu.trace_start"() <{level = 10 : i32, message = "bqk,bkd->bqd"}> : () -> ()
    %cst_41 = arith.constant dense<0.000000e+00> : vector<8x8x8xf32>
    %64 = tpu.matmul %63, %46, %cst_41 {dimension_numbers = #tpu.dot_dimension_numbers<[2], [1], [1], [2], [0, 0, 0, 1, 1, 2], [0], [0]>} : vector<8x8x8xbf16>, vector<8x8x8xbf16>, vector<8x8x8xf32> -> vector<8x8x8xf32>
    "tpu.trace_stop"() : () -> ()
    %65 = vector.shape_cast %64 : vector<8x8x8xf32> to vector<64x8xf32>
    %66 = arith.truncf %65 : vector<64x8xf32> to vector<64x8xbf16>
    %c8_42 = arith.constant 8 : index
    %c0_43 = arith.constant 0 : index
    %67 = vector.load %arg4[%c8_42, %c0_43] : memref<32x32xf32, #tpu.memory_space<vmem>>, vector<8x32xf32>
    %68 = arith.truncf %67 : vector<8x32xf32> to vector<8x32xbf16>
    %cst_44 = arith.constant dense<0.000000e+00> : vector<64x32xf32>
    %69 = tpu.matmul %66, %68, %cst_44 {dimension_numbers = #tpu.dot_dimension_numbers<[1], [0], [0], [1], [0, 0, 1, 1], [], []>} : vector<64x8xbf16>, vector<8x32xbf16>, vector<64x32xf32> -> vector<64x32xf32>
    %70 = arith.addf %40, %69 : vector<64x32xf32>
    %c0_45 = arith.constant 0 : index
    %c0_46 = arith.constant 0 : index
    %c16 = arith.constant 16 : index
    %71 = vector.load %arg16[%c0_45, %c0_46, %c16] : memref<8x8x96xf32, #tpu.memory_space<vmem>>, vector<8x8x8xf32>
    %72 = arith.truncf %71 : vector<8x8x8xf32> to vector<8x8x8xbf16>
    %c0_47 = arith.constant 0 : index
    %c0_48 = arith.constant 0 : index
    %c48 = arith.constant 48 : index
    %73 = vector.load %arg16[%c0_47, %c0_48, %c48] : memref<8x8x96xf32, #tpu.memory_space<vmem>>, vector<8x8x8xf32>
    %74 = arith.truncf %73 : vector<8x8x8xf32> to vector<8x8x8xbf16>
    %c0_49 = arith.constant 0 : index
    %c0_50 = arith.constant 0 : index
    %c80 = arith.constant 80 : index
    %75 = vector.load %arg16[%c0_49, %c0_50, %c80] : memref<8x8x96xf32, #tpu.memory_space<vmem>>, vector<8x8x8xf32>
    %76 = arith.truncf %75 : vector<8x8x8xf32> to vector<8x8x8xbf16>
    "tpu.trace_start"() <{level = 10 : i32, message = "bqd,bkd->bqk"}> : () -> ()
    %cst_51 = arith.constant dense<0.000000e+00> : vector<8x8x8xf32>
    %77 = tpu.matmul %72, %74, %cst_51 {dimension_numbers = #tpu.dot_dimension_numbers<[2], [2], [1], [1], [0, 0, 0, 1, 1, 1], [0], [0]>} : vector<8x8x8xbf16>, vector<8x8x8xbf16>, vector<8x8x8xf32> -> vector<8x8x8xf32>
    "tpu.trace_stop"() : () -> ()
    %cst_52 = arith.constant 0.353553385 : f32
    %78 = vector.broadcast %cst_52 : f32 to vector<8x8x8xf32>
    %79 = arith.mulf %77, %78 : vector<8x8x8xf32>
    %c2 = arith.constant 2 : index
    %c0_53 = arith.constant 0 : index
    %c0_54 = arith.constant 0 : index
    %c0_55 = arith.constant 0 : index
    %80 = vector.load %arg15[%c2, %c0_53, %c0_54, %c0_55] : memref<4x8x8x8xf32, #tpu.memory_space<vmem>>, vector<1x8x8x8xf32>
    %81 = vector.shape_cast %80 : vector<1x8x8x8xf32> to vector<8x8x8xf32>
    %82 = vector.shape_cast %79 : vector<8x8x8xf32> to vector<1x8x8x8xf32>
    tpu.vector_store %arg15[%c2, %c0_53, %c0_54, %c0_55], %82 {strides = array<i32>} : memref<4x8x8x8xf32, #tpu.memory_space<vmem>>, vector<1x8x8x8xf32>,
    %cst_56 = arith.constant dense<0xFF800000> : vector<8x8xf32>
    %83 = vector.multi_reduction <maximumf>, %79, %cst_56 [2] : vector<8x8x8xf32> to vector<8x8xf32>
    %84 = vector.shape_cast %83 : vector<8x8xf32> to vector<8x8x1xf32>
    %85 = vector.broadcast %84 : vector<8x8x1xf32> to vector<8x8x8xf32>
    %86 = arith.subf %79, %85 : vector<8x8x8xf32>
    %87 = math.exp %86 : vector<8x8x8xf32>
    %cst_57 = arith.constant dense<0.000000e+00> : vector<8x8xf32>
    %88 = vector.multi_reduction <add>, %87, %cst_57 [2] : vector<8x8x8xf32> to vector<8x8xf32>
    %89 = vector.shape_cast %88 : vector<8x8xf32> to vector<8x8x1xf32>
    %90 = tpu.reciprocal %89 {approx = true} : vector<8x8x1xf32> -> vector<8x8x1xf32>
    %91 = vector.broadcast %90 : vector<8x8x1xf32> to vector<8x8x8xf32>
    %92 = arith.mulf %87, %91 : vector<8x8x8xf32>
    %93 = arith.truncf %92 : vector<8x8x8xf32> to vector<8x8x8xbf16>
    "tpu.trace_start"() <{level = 10 : i32, message = "bqk,bkd->bqd"}> : () -> ()
    %cst_58 = arith.constant dense<0.000000e+00> : vector<8x8x8xf32>
    %94 = tpu.matmul %93, %76, %cst_58 {dimension_numbers = #tpu.dot_dimension_numbers<[2], [1], [1], [2], [0, 0, 0, 1, 1, 2], [0], [0]>} : vector<8x8x8xbf16>, vector<8x8x8xbf16>, vector<8x8x8xf32> -> vector<8x8x8xf32>
    "tpu.trace_stop"() : () -> ()
    %95 = vector.shape_cast %94 : vector<8x8x8xf32> to vector<64x8xf32>
    %96 = arith.truncf %95 : vector<64x8xf32> to vector<64x8xbf16>
    %c16_59 = arith.constant 16 : index
    %c0_60 = arith.constant 0 : index
    %97 = vector.load %arg4[%c16_59, %c0_60] : memref<32x32xf32, #tpu.memory_space<vmem>>, vector<8x32xf32>
    %98 = arith.truncf %97 : vector<8x32xf32> to vector<8x32xbf16>
    %cst_61 = arith.constant dense<0.000000e+00> : vector<64x32xf32>
    %99 = tpu.matmul %96, %98, %cst_61 {dimension_numbers = #tpu.dot_dimension_numbers<[1], [0], [0], [1], [0, 0, 1, 1], [], []>} : vector<64x8xbf16>, vector<8x32xbf16>, vector<64x32xf32> -> vector<64x32xf32>
    %100 = arith.addf %70, %99 : vector<64x32xf32>
    %c0_62 = arith.constant 0 : index
    %c0_63 = arith.constant 0 : index
    %c24 = arith.constant 24 : index
    %101 = vector.load %arg16[%c0_62, %c0_63, %c24] : memref<8x8x96xf32, #tpu.memory_space<vmem>>, vector<8x8x8xf32>
    %102 = arith.truncf %101 : vector<8x8x8xf32> to vector<8x8x8xbf16>
    %c0_64 = arith.constant 0 : index
    %c0_65 = arith.constant 0 : index
    %c56 = arith.constant 56 : index
    %103 = vector.load %arg16[%c0_64, %c0_65, %c56] : memref<8x8x96xf32, #tpu.memory_space<vmem>>, vector<8x8x8xf32>
    %104 = arith.truncf %103 : vector<8x8x8xf32> to vector<8x8x8xbf16>
    %c0_66 = arith.constant 0 : index
    %c0_67 = arith.constant 0 : index
    %c88 = arith.constant 88 : index
    %105 = vector.load %arg16[%c0_66, %c0_67, %c88] : memref<8x8x96xf32, #tpu.memory_space<vmem>>, vector<8x8x8xf32>
    %106 = arith.truncf %105 : vector<8x8x8xf32> to vector<8x8x8xbf16>
    "tpu.trace_start"() <{level = 10 : i32, message = "bqd,bkd->bqk"}> : () -> ()
    %cst_68 = arith.constant dense<0.000000e+00> : vector<8x8x8xf32>
    %107 = tpu.matmul %102, %104, %cst_68 {dimension_numbers = #tpu.dot_dimension_numbers<[2], [2], [1], [1], [0, 0, 0, 1, 1, 1], [0], [0]>} : vector<8x8x8xbf16>, vector<8x8x8xbf16>, vector<8x8x8xf32> -> vector<8x8x8xf32>
    "tpu.trace_stop"() : () -> ()
    %cst_69 = arith.constant 0.353553385 : f32
    %108 = vector.broadcast %cst_69 : f32 to vector<8x8x8xf32>
    %109 = arith.mulf %107, %108 : vector<8x8x8xf32>
    %c3 = arith.constant 3 : index
    %c0_70 = arith.constant 0 : index
    %c0_71 = arith.constant 0 : index
    %c0_72 = arith.constant 0 : index
    %110 = vector.load %arg15[%c3, %c0_70, %c0_71, %c0_72] : memref<4x8x8x8xf32, #tpu.memory_space<vmem>>, vector<1x8x8x8xf32>
    %111 = vector.shape_cast %110 : vector<1x8x8x8xf32> to vector<8x8x8xf32>
    %112 = vector.shape_cast %109 : vector<8x8x8xf32> to vector<1x8x8x8xf32>
    tpu.vector_store %arg15[%c3, %c0_70, %c0_71, %c0_72], %112 {strides = array<i32>} : memref<4x8x8x8xf32, #tpu.memory_space<vmem>>, vector<1x8x8x8xf32>,
    %cst_73 = arith.constant dense<0xFF800000> : vector<8x8xf32>
    %113 = vector.multi_reduction <maximumf>, %109, %cst_73 [2] : vector<8x8x8xf32> to vector<8x8xf32>
    %114 = vector.shape_cast %113 : vector<8x8xf32> to vector<8x8x1xf32>
    %115 = vector.broadcast %114 : vector<8x8x1xf32> to vector<8x8x8xf32>
    %116 = arith.subf %109, %115 : vector<8x8x8xf32>
    %117 = math.exp %116 : vector<8x8x8xf32>
    %cst_74 = arith.constant dense<0.000000e+00> : vector<8x8xf32>
    %118 = vector.multi_reduction <add>, %117, %cst_74 [2] : vector<8x8x8xf32> to vector<8x8xf32>
    %119 = vector.shape_cast %118 : vector<8x8xf32> to vector<8x8x1xf32>
    %120 = tpu.reciprocal %119 {approx = true} : vector<8x8x1xf32> -> vector<8x8x1xf32>
    %121 = vector.broadcast %120 : vector<8x8x1xf32> to vector<8x8x8xf32>
    %122 = arith.mulf %117, %121 : vector<8x8x8xf32>
    %123 = arith.truncf %122 : vector<8x8x8xf32> to vector<8x8x8xbf16>
    "tpu.trace_start"() <{level = 10 : i32, message = "bqk,bkd->bqd"}> : () -> ()
    %cst_75 = arith.constant dense<0.000000e+00> : vector<8x8x8xf32>
    %124 = tpu.matmul %123, %106, %cst_75 {dimension_numbers = #tpu.dot_dimension_numbers<[2], [1], [1], [2], [0, 0, 0, 1, 1, 2], [0], [0]>} : vector<8x8x8xbf16>, vector<8x8x8xbf16>, vector<8x8x8xf32> -> vector<8x8x8xf32>
    "tpu.trace_stop"() : () -> ()
    %125 = vector.shape_cast %124 : vector<8x8x8xf32> to vector<64x8xf32>
    %126 = arith.truncf %125 : vector<64x8xf32> to vector<64x8xbf16>
    %c24_76 = arith.constant 24 : index
    %c0_77 = arith.constant 0 : index
    %127 = vector.load %arg4[%c24_76, %c0_77] : memref<32x32xf32, #tpu.memory_space<vmem>>, vector<8x32xf32>
    %128 = arith.truncf %127 : vector<8x32xf32> to vector<8x32xbf16>
    %cst_78 = arith.constant dense<0.000000e+00> : vector<64x32xf32>
    %129 = tpu.matmul %126, %128, %cst_78 {dimension_numbers = #tpu.dot_dimension_numbers<[1], [0], [0], [1], [0, 0, 1, 1], [], []>} : vector<64x8xbf16>, vector<8x32xbf16>, vector<64x32xf32> -> vector<64x32xf32>
    %130 = arith.addf %100, %129 : vector<64x32xf32>
    %c0_79 = arith.constant 0 : index
    %c0_80 = arith.constant 0 : index
    %131 = vector.load %arg5[%c0_79, %c0_80] : memref<1x32xf32, #tpu.memory_space<vmem>>, vector<1x32xf32>
    %132 = vector.broadcast %131 : vector<1x32xf32> to vector<64x32xf32>
    %133 = arith.addf %130, %132 : vector<64x32xf32>
    %134 = arith.addf %0, %133 : vector<64x32xf32>
    %cst_81 = arith.constant dense<0.000000e+00> : vector<32xf32>
    %135 = vector.multi_reduction <add>, %134, %cst_81 [0] : vector<64x32xf32> to vector<32xf32>
    %136 = vector.shape_cast %135 : vector<32xf32> to vector<1x32xf32>
    %cst_82 = arith.constant 6.400000e+01 : f32
    %137 = vector.broadcast %cst_82 : f32 to vector<1x32xf32>
    %138 = arith.divf %136, %137 : vector<1x32xf32>
    %139 = vector.broadcast %138 : vector<1x32xf32> to vector<64x32xf32>
    %140 = arith.subf %134, %139 : vector<64x32xf32>
    %141 = arith.mulf %140, %140 : vector<64x32xf32>
    %cst_83 = arith.constant dense<0.000000e+00> : vector<32xf32>
    %142 = vector.multi_reduction <add>, %141, %cst_83 [0] : vector<64x32xf32> to vector<32xf32>
    %143 = vector.shape_cast %142 : vector<32xf32> to vector<1x32xf32>
    %cst_84 = arith.constant 6.400000e+01 : f32
    %144 = vector.broadcast %cst_84 : f32 to vector<1x32xf32>
    %145 = arith.divf %143, %144 : vector<1x32xf32>
    %146 = vector.broadcast %138 : vector<1x32xf32> to vector<64x32xf32>
    %147 = arith.subf %134, %146 : vector<64x32xf32>
    %cst_85 = arith.constant 9.99999974E-6 : f32
    %148 = vector.broadcast %cst_85 : f32 to vector<1x32xf32>
    %149 = arith.addf %145, %148 : vector<1x32xf32>
    %150 = math.rsqrt %149 : vector<1x32xf32>
    %151 = vector.broadcast %150 : vector<1x32xf32> to vector<64x32xf32>
    %152 = arith.mulf %147, %151 : vector<64x32xf32>
    %c0_86 = arith.constant 0 : index
    %c0_87 = arith.constant 0 : index
    %153 = vector.load %arg6[%c0_86, %c0_87] : memref<1x32xf32, #tpu.memory_space<vmem>>, vector<1x32xf32>
    %154 = vector.broadcast %153 : vector<1x32xf32> to vector<64x32xf32>
    %155 = arith.mulf %152, %154 : vector<64x32xf32>
    %c0_88 = arith.constant 0 : index
    %c0_89 = arith.constant 0 : index
    %156 = vector.load %arg7[%c0_88, %c0_89] : memref<1x32xf32, #tpu.memory_space<vmem>>, vector<1x32xf32>
    %157 = vector.broadcast %156 : vector<1x32xf32> to vector<64x32xf32>
    %158 = arith.addf %155, %157 : vector<64x32xf32>
    %159 = arith.truncf %158 : vector<64x32xf32> to vector<64x32xbf16>
    %c0_90 = arith.constant 0 : index
    %c0_91 = arith.constant 0 : index
    %160 = vector.load %arg8[%c0_90, %c0_91] : memref<32x64xf32, #tpu.memory_space<vmem>>, vector<32x64xf32>
    %161 = arith.truncf %160 : vector<32x64xf32> to vector<32x64xbf16>
    %cst_92 = arith.constant dense<0.000000e+00> : vector<64x64xf32>
    %162 = tpu.matmul %159, %161, %cst_92 {dimension_numbers = #tpu.dot_dimension_numbers<[1], [0], [0], [1], [0, 0, 1, 1], [], []>} : vector<64x32xbf16>, vector<32x64xbf16>, vector<64x64xf32> -> vector<64x64xf32>
    %c0_93 = arith.constant 0 : index
    %c0_94 = arith.constant 0 : index
    %163 = vector.load %arg9[%c0_93, %c0_94] : memref<1x64xf32, #tpu.memory_space<vmem>>, vector<1x64xf32>
    %164 = vector.broadcast %163 : vector<1x64xf32> to vector<64x64xf32>
    %165 = arith.addf %162, %164 : vector<64x64xf32>
    %cst_95 = arith.constant 5.000000e-01 : f32
    %166 = vector.broadcast %cst_95 : f32 to vector<64x64xf32>
    %167 = arith.mulf %166, %165 : vector<64x64xf32>
    %cst_96 = arith.constant 0.707106769 : f32
    %168 = vector.broadcast %cst_96 : f32 to vector<64x64xf32>
    %169 = arith.mulf %165, %168 : vector<64x64xf32>
    %170 = math.erf %169 : vector<64x64xf32>
    %cst_97 = arith.constant 1.000000e+00 : f32
    %171 = vector.broadcast %cst_97 : f32 to vector<64x64xf32>
    %172 = arith.addf %171, %170 : vector<64x64xf32>
    %173 = arith.mulf %167, %172 : vector<64x64xf32>
    %174 = arith.truncf %173 : vector<64x64xf32> to vector<64x64xbf16>
    %c0_98 = arith.constant 0 : index
    %c0_99 = arith.constant 0 : index
    %175 = vector.load %arg10[%c0_98, %c0_99] : memref<64x32xf32, #tpu.memory_space<vmem>>, vector<64x32xf32>
    %176 = arith.truncf %175 : vector<64x32xf32> to vector<64x32xbf16>
    %cst_100 = arith.constant dense<0.000000e+00> : vector<64x32xf32>
    %177 = tpu.matmul %174, %176, %cst_100 {dimension_numbers = #tpu.dot_dimension_numbers<[1], [0], [0], [1], [0, 0, 1, 1], [], []>} : vector<64x64xbf16>, vector<64x32xbf16>, vector<64x32xf32> -> vector<64x32xf32>
    %c0_101 = arith.constant 0 : index
    %c0_102 = arith.constant 0 : index
    %178 = vector.load %arg11[%c0_101, %c0_102] : memref<1x32xf32, #tpu.memory_space<vmem>>, vector<1x32xf32>
    %179 = vector.broadcast %178 : vector<1x32xf32> to vector<64x32xf32>
    %180 = arith.addf %177, %179 : vector<64x32xf32>
    %181 = arith.addf %158, %180 : vector<64x32xf32>
    %cst_103 = arith.constant dense<0.000000e+00> : vector<32xf32>
    %182 = vector.multi_reduction <add>, %181, %cst_103 [0] : vector<64x32xf32> to vector<32xf32>
    %183 = vector.shape_cast %182 : vector<32xf32> to vector<1x32xf32>
    %cst_104 = arith.constant 6.400000e+01 : f32
    %184 = vector.broadcast %cst_104 : f32 to vector<1x32xf32>
    %185 = arith.divf %183, %184 : vector<1x32xf32>
    %186 = vector.broadcast %185 : vector<1x32xf32> to vector<64x32xf32>
    %187 = arith.subf %181, %186 : vector<64x32xf32>
    %188 = arith.mulf %187, %187 : vector<64x32xf32>
    %cst_105 = arith.constant dense<0.000000e+00> : vector<32xf32>
    %189 = vector.multi_reduction <add>, %188, %cst_105 [0] : vector<64x32xf32> to vector<32xf32>
    %190 = vector.shape_cast %189 : vector<32xf32> to vector<1x32xf32>
    %cst_106 = arith.constant 6.400000e+01 : f32
    %191 = vector.broadcast %cst_106 : f32 to vector<1x32xf32>
    %192 = arith.divf %190, %191 : vector<1x32xf32>
    %193 = vector.broadcast %185 : vector<1x32xf32> to vector<64x32xf32>
    %194 = arith.subf %181, %193 : vector<64x32xf32>
    %cst_107 = arith.constant 9.99999974E-6 : f32
    %195 = vector.broadcast %cst_107 : f32 to vector<1x32xf32>
    %196 = arith.addf %192, %195 : vector<1x32xf32>
    %197 = math.rsqrt %196 : vector<1x32xf32>
    %198 = vector.broadcast %197 : vector<1x32xf32> to vector<64x32xf32>
    %199 = arith.mulf %194, %198 : vector<64x32xf32>
    %c0_108 = arith.constant 0 : index
    %c0_109 = arith.constant 0 : index
    %200 = vector.load %arg12[%c0_108, %c0_109] : memref<1x32xf32, #tpu.memory_space<vmem>>, vector<1x32xf32>
    %201 = vector.broadcast %200 : vector<1x32xf32> to vector<64x32xf32>
    %202 = arith.mulf %199, %201 : vector<64x32xf32>
    %c0_110 = arith.constant 0 : index
    %c0_111 = arith.constant 0 : index
    %203 = vector.load %arg13[%c0_110, %c0_111] : memref<1x32xf32, #tpu.memory_space<vmem>>, vector<1x32xf32>
    %204 = vector.broadcast %203 : vector<1x32xf32> to vector<64x32xf32>
    %205 = arith.addf %202, %204 : vector<64x32xf32>
    %c0_112 = arith.constant 0 : index
    %c0_113 = arith.constant 0 : index
    %206 = vector.load %arg14[%c0_112, %c0_113] : memref<64x32xf32, #tpu.memory_space<vmem>>, vector<64x32xf32>
    tpu.vector_store %arg14[%c0_112, %c0_113], %205 {strides = array<i32>} : memref<64x32xf32, #tpu.memory_space<vmem>>, vector<64x32xf32>,
    return
  }
  func.func @transform_0(%arg0: i32) -> (i32, i32) {
    %c0_i32 = arith.constant 0 : i32
    %c0_i32_0 = arith.constant 0 : i32
    %c0_i32_1 = arith.constant 0 : i32
    return %c0_i32, %c0_i32_0 : i32, i32
  }
  func.func @transform_1(%arg0: i32) -> (i32, i32) {
    %c0_i32 = arith.constant 0 : i32
    %c0_i32_0 = arith.constant 0 : i32
    %c0_i32_1 = arith.constant 0 : i32
    return %c0_i32, %c0_i32_0 : i32, i32
  }
  func.func @transform_2(%arg0: i32) -> (i32, i32) {
    %c0_i32 = arith.constant 0 : i32
    %c0_i32_0 = arith.constant 0 : i32
    %c0_i32_1 = arith.constant 0 : i32
    return %c0_i32, %c0_i32_0 : i32, i32
  }
  func.func @transform_3(%arg0: i32) -> (i32, i32) {
    %c0_i32 = arith.constant 0 : i32
    %c0_i32_0 = arith.constant 0 : i32
    %c0_i32_1 = arith.constant 0 : i32
    return %c0_i32, %c0_i32_0 : i32, i32
  }
  func.func @transform_4(%arg0: i32) -> (i32, i32) {
    %c0_i32 = arith.constant 0 : i32
    %c0_i32_0 = arith.constant 0 : i32
    %c0_i32_1 = arith.constant 0 : i32
    return %c0_i32, %c0_i32_0 : i32, i32
  }
  func.func @transform_5(%arg0: i32) -> (i32, i32) {
    %c0_i32 = arith.constant 0 : i32
    %c0_i32_0 = arith.constant 0 : i32
    %c0_i32_1 = arith.constant 0 : i32
    return %c0_i32, %c0_i32_0 : i32, i32
  }
  func.func @transform_6(%arg0: i32) -> (i32, i32) {
    %c0_i32 = arith.constant 0 : i32
    %c0_i32_0 = arith.constant 0 : i32
    %c0_i32_1 = arith.constant 0 : i32
    return %c0_i32, %c0_i32_0 : i32, i32
  }
  func.func @transform_7(%arg0: i32) -> (i32, i32) {
    %c0_i32 = arith.constant 0 : i32
    %c0_i32_0 = arith.constant 0 : i32
    %c0_i32_1 = arith.constant 0 : i32
    return %c0_i32, %c0_i32_0 : i32, i32
  }
  func.func @transform_8(%arg0: i32) -> (i32, i32) {
    %c0_i32 = arith.constant 0 : i32
    %c0_i32_0 = arith.constant 0 : i32
    %c0_i32_1 = arith.constant 0 : i32
    return %c0_i32, %c0_i32_0 : i32, i32
  }
  func.func @transform_9(%arg0: i32) -> (i32, i32) {
    %c0_i32 = arith.constant 0 : i32
    %c0_i32_0 = arith.constant 0 : i32
    %c0_i32_1 = arith.constant 0 : i32
    return %c0_i32, %c0_i32_0 : i32, i32
  }
  func.func @transform_10(%arg0: i32) -> (i32, i32) {
    %c0_i32 = arith.constant 0 : i32
    %c0_i32_0 = arith.constant 0 : i32
    %c0_i32_1 = arith.constant 0 : i32
    return %c0_i32, %c0_i32_0 : i32, i32
  }
  func.func @transform_11(%arg0: i32) -> (i32, i32) {
    %c0_i32 = arith.constant 0 : i32
    %c0_i32_0 = arith.constant 0 : i32
    %c0_i32_1 = arith.constant 0 : i32
    return %c0_i32, %c0_i32_0 : i32, i32
  }
  func.func @transform_12(%arg0: i32) -> (i32, i32) {
    %c0_i32 = arith.constant 0 : i32
    %c0_i32_0 = arith.constant 0 : i32
    %c0_i32_1 = arith.constant 0 : i32
    return %c0_i32, %c0_i32_0 : i32, i32
  }
  func.func @transform_13(%arg0: i32) -> (i32, i32) {
    %c0_i32 = arith.constant 0 : i32
    %c0_i32_0 = arith.constant 0 : i32
    %c0_i32_1 = arith.constant 0 : i32
    return %c0_i32, %c0_i32_0 : i32, i32
  }
  func.func @transform_14(%arg0: i32) -> (i32, i32, i32, i32) {
    %c0_i32 = arith.constant 0 : i32
    %c0_i32_0 = arith.constant 0 : i32
    %c0_i32_1 = arith.constant 0 : i32
    %c0_i32_2 = arith.constant 0 : i32
    %c0_i32_3 = arith.constant 0 : i32
    return %c0_i32, %c0_i32_0, %c0_i32_1, %c0_i32_2 : i32, i32, i32, i32
  }
}

module attributes {stable_mosaic.version = 11 : i64} {
  func.func @_layer_kernel(%arg0: i32, %arg1: memref<64x32xf32, #tpu.memory_space<vmem>>, %arg2: memref<4x8x8x8xf32, #tpu.memory_space<vmem>>, %arg3: memref<32x96xf32, #tpu.memory_space<vmem>>, %arg4: memref<1x96xf32, #tpu.memory_space<vmem>>, %arg5: memref<32x32xf32, #tpu.memory_space<vmem>>, %arg6: memref<1x32xf32, #tpu.memory_space<vmem>>, %arg7: memref<1x32xf32, #tpu.memory_space<vmem>>, %arg8: memref<1x32xf32, #tpu.memory_space<vmem>>, %arg9: memref<32x64xf32, #tpu.memory_space<vmem>>, %arg10: memref<1x64xf32, #tpu.memory_space<vmem>>, %arg11: memref<64x32xf32, #tpu.memory_space<vmem>>, %arg12: memref<1x32xf32, #tpu.memory_space<vmem>>, %arg13: memref<1x32xf32, #tpu.memory_space<vmem>>, %arg14: memref<1x32xf32, #tpu.memory_space<vmem>>, %arg15: memref<64x32xf32, #tpu.memory_space<vmem>>, %arg16: memref<4x8x8x8xf32, #tpu.memory_space<vmem>>, %arg17: memref<8x8x96xf32, #tpu.memory_space<vmem>>) attributes {dimension_semantics = [#tpu.dimension_semantics<arbitrary>], iteration_bounds = array<i64: 1>, scalar_prefetch = 0 : i64, scratch_operands = 1 : i64, tpu.core_type = #tpu.core_type<tc>, window_params = [{pipeline_mode = #tpu.pipeline_mode<synchronous>, transform_indices = @transform_0, window_bounds = array<i64: 64, 32>}, {pipeline_mode = #tpu.pipeline_mode<synchronous>, transform_indices = @transform_1, window_bounds = array<i64: 4, 8, 8, 8>}, {pipeline_mode = #tpu.pipeline_mode<synchronous>, transform_indices = @transform_2, window_bounds = array<i64: 32, 96>}, {pipeline_mode = #tpu.pipeline_mode<synchronous>, transform_indices = @transform_3, window_bounds = array<i64: 1, 96>}, {pipeline_mode = #tpu.pipeline_mode<synchronous>, transform_indices = @transform_4, window_bounds = array<i64: 32, 32>}, {pipeline_mode = #tpu.pipeline_mode<synchronous>, transform_indices = @transform_5, window_bounds = array<i64: 1, 32>}, {pipeline_mode = #tpu.pipeline_mode<synchronous>, transform_indices = @transform_6, window_bounds = array<i64: 1, 32>}, {pipeline_mode = #tpu.pipeline_mode<synchronous>, transform_indices = @transform_7, window_bounds = array<i64: 1, 32>}, {pipeline_mode = #tpu.pipeline_mode<synchronous>, transform_indices = @transform_8, window_bounds = array<i64: 32, 64>}, {pipeline_mode = #tpu.pipeline_mode<synchronous>, transform_indices = @transform_9, window_bounds = array<i64: 1, 64>}, {pipeline_mode = #tpu.pipeline_mode<synchronous>, transform_indices = @transform_10, window_bounds = array<i64: 64, 32>}, {pipeline_mode = #tpu.pipeline_mode<synchronous>, transform_indices = @transform_11, window_bounds = array<i64: 1, 32>}, {pipeline_mode = #tpu.pipeline_mode<synchronous>, transform_indices = @transform_12, window_bounds = array<i64: 1, 32>}, {pipeline_mode = #tpu.pipeline_mode<synchronous>, transform_indices = @transform_13, window_bounds = array<i64: 1, 32>}, {pipeline_mode = #tpu.pipeline_mode<synchronous>, transform_indices = @transform_14, window_bounds = array<i64: 64, 32>}, {pipeline_mode = #tpu.pipeline_mode<synchronous>, transform_indices = @transform_15, window_bounds = array<i64: 4, 8, 8, 8>}]} {
    %c0 = arith.constant 0 : index
    %c0_0 = arith.constant 0 : index
    %0 = vector.load %arg1[%c0, %c0_0] : memref<64x32xf32, #tpu.memory_space<vmem>>, vector<64x32xf32>
    %1 = arith.truncf %0 : vector<64x32xf32> to vector<64x32xbf16>
    %c0_1 = arith.constant 0 : index
    %c0_2 = arith.constant 0 : index
    %2 = vector.load %arg3[%c0_1, %c0_2] : memref<32x96xf32, #tpu.memory_space<vmem>>, vector<32x96xf32>
    %3 = arith.truncf %2 : vector<32x96xf32> to vector<32x96xbf16>
    %cst = arith.constant dense<0.000000e+00> : vector<64x96xf32>
    %4 = tpu.matmul %1, %3, %cst {dimension_numbers = #tpu.dot_dimension_numbers<[1], [0], [0], [1], [0, 0, 1, 1], [], []>} : vector<64x32xbf16>, vector<32x96xbf16>, vector<64x96xf32> -> vector<64x96xf32>
    %c0_3 = arith.constant 0 : index
    %c0_4 = arith.constant 0 : index
    %5 = vector.load %arg4[%c0_3, %c0_4] : memref<1x96xf32, #tpu.memory_space<vmem>>, vector<1x96xf32>
    %6 = vector.broadcast %5 : vector<1x96xf32> to vector<64x96xf32>
    %7 = arith.addf %4, %6 : vector<64x96xf32>
    %8 = vector.shape_cast %7 : vector<64x96xf32> to vector<8x8x96xf32>
    %c0_5 = arith.constant 0 : index
    %c0_6 = arith.constant 0 : index
    %c0_7 = arith.constant 0 : index
    %9 = vector.load %arg17[%c0_5, %c0_6, %c0_7] : memref<8x8x96xf32, #tpu.memory_space<vmem>>, vector<8x8x96xf32>
    tpu.vector_store %arg17[%c0_5, %c0_6, %c0_7], %8 {strides = array<i32>} : memref<8x8x96xf32, #tpu.memory_space<vmem>>, vector<8x8x96xf32>,
    %cst_8 = arith.constant 0.000000e+00 : f32
    %10 = vector.broadcast %cst_8 : f32 to vector<64x32xf32>
    %c0_9 = arith.constant 0 : index
    %c0_10 = arith.constant 0 : index
    %c0_11 = arith.constant 0 : index
    %11 = vector.load %arg17[%c0_9, %c0_10, %c0_11] : memref<8x8x96xf32, #tpu.memory_space<vmem>>, vector<8x8x8xf32>
    %12 = arith.truncf %11 : vector<8x8x8xf32> to vector<8x8x8xbf16>
    %c0_12 = arith.constant 0 : index
    %c0_13 = arith.constant 0 : index
    %c32 = arith.constant 32 : index
    %13 = vector.load %arg17[%c0_12, %c0_13, %c32] : memref<8x8x96xf32, #tpu.memory_space<vmem>>, vector<8x8x8xf32>
    %14 = arith.truncf %13 : vector<8x8x8xf32> to vector<8x8x8xbf16>
    %c0_14 = arith.constant 0 : index
    %c0_15 = arith.constant 0 : index
    %c64 = arith.constant 64 : index
    %15 = vector.load %arg17[%c0_14, %c0_15, %c64] : memref<8x8x96xf32, #tpu.memory_space<vmem>>, vector<8x8x8xf32>
    %16 = arith.truncf %15 : vector<8x8x8xf32> to vector<8x8x8xbf16>
    "tpu.trace_start"() <{level = 10 : i32, message = "bqd,bkd->bqk"}> : () -> ()
    %cst_16 = arith.constant dense<0.000000e+00> : vector<8x8x8xf32>
    %17 = tpu.matmul %12, %14, %cst_16 {dimension_numbers = #tpu.dot_dimension_numbers<[2], [2], [1], [1], [0, 0, 0, 1, 1, 1], [0], [0]>} : vector<8x8x8xbf16>, vector<8x8x8xbf16>, vector<8x8x8xf32> -> vector<8x8x8xf32>
    "tpu.trace_stop"() : () -> ()
    %cst_17 = arith.constant 0.353553385 : f32
    %18 = vector.broadcast %cst_17 : f32 to vector<8x8x8xf32>
    %19 = arith.mulf %17, %18 : vector<8x8x8xf32>
    %c0_18 = arith.constant 0 : index
    %c0_19 = arith.constant 0 : index
    %c0_20 = arith.constant 0 : index
    %c0_21 = arith.constant 0 : index
    %20 = vector.load %arg2[%c0_18, %c0_19, %c0_20, %c0_21] : memref<4x8x8x8xf32, #tpu.memory_space<vmem>>, vector<1x8x8x8xf32>
    %21 = vector.shape_cast %20 : vector<1x8x8x8xf32> to vector<8x8x8xf32>
    %22 = arith.addf %19, %21 : vector<8x8x8xf32>
    %c0_22 = arith.constant 0 : index
    %c0_23 = arith.constant 0 : index
    %c0_24 = arith.constant 0 : index
    %c0_25 = arith.constant 0 : index
    %23 = vector.load %arg16[%c0_22, %c0_23, %c0_24, %c0_25] : memref<4x8x8x8xf32, #tpu.memory_space<vmem>>, vector<1x8x8x8xf32>
    %24 = vector.shape_cast %23 : vector<1x8x8x8xf32> to vector<8x8x8xf32>
    %25 = vector.shape_cast %22 : vector<8x8x8xf32> to vector<1x8x8x8xf32>
    tpu.vector_store %arg16[%c0_22, %c0_23, %c0_24, %c0_25], %25 {strides = array<i32>} : memref<4x8x8x8xf32, #tpu.memory_space<vmem>>, vector<1x8x8x8xf32>,
    %cst_26 = arith.constant dense<0xFF800000> : vector<8x8xf32>
    %26 = vector.multi_reduction <maximumf>, %22, %cst_26 [2] : vector<8x8x8xf32> to vector<8x8xf32>
    %27 = vector.shape_cast %26 : vector<8x8xf32> to vector<8x8x1xf32>
    %28 = vector.broadcast %27 : vector<8x8x1xf32> to vector<8x8x8xf32>
    %29 = arith.subf %22, %28 : vector<8x8x8xf32>
    %30 = math.exp %29 : vector<8x8x8xf32>
    %cst_27 = arith.constant dense<0.000000e+00> : vector<8x8xf32>
    %31 = vector.multi_reduction <add>, %30, %cst_27 [2] : vector<8x8x8xf32> to vector<8x8xf32>
    %32 = vector.shape_cast %31 : vector<8x8xf32> to vector<8x8x1xf32>
    %33 = tpu.reciprocal %32 {approx = true} : vector<8x8x1xf32> -> vector<8x8x1xf32>
    %34 = vector.broadcast %33 : vector<8x8x1xf32> to vector<8x8x8xf32>
    %35 = arith.mulf %30, %34 : vector<8x8x8xf32>
    %36 = arith.truncf %35 : vector<8x8x8xf32> to vector<8x8x8xbf16>
    "tpu.trace_start"() <{level = 10 : i32, message = "bqk,bkd->bqd"}> : () -> ()
    %cst_28 = arith.constant dense<0.000000e+00> : vector<8x8x8xf32>
    %37 = tpu.matmul %36, %16, %cst_28 {dimension_numbers = #tpu.dot_dimension_numbers<[2], [1], [1], [2], [0, 0, 0, 1, 1, 2], [0], [0]>} : vector<8x8x8xbf16>, vector<8x8x8xbf16>, vector<8x8x8xf32> -> vector<8x8x8xf32>
    "tpu.trace_stop"() : () -> ()
    %38 = vector.shape_cast %37 : vector<8x8x8xf32> to vector<64x8xf32>
    %39 = arith.truncf %38 : vector<64x8xf32> to vector<64x8xbf16>
    %c0_29 = arith.constant 0 : index
    %c0_30 = arith.constant 0 : index
    %40 = vector.load %arg5[%c0_29, %c0_30] : memref<32x32xf32, #tpu.memory_space<vmem>>, vector<8x32xf32>
    %41 = arith.truncf %40 : vector<8x32xf32> to vector<8x32xbf16>
    %cst_31 = arith.constant dense<0.000000e+00> : vector<64x32xf32>
    %42 = tpu.matmul %39, %41, %cst_31 {dimension_numbers = #tpu.dot_dimension_numbers<[1], [0], [0], [1], [0, 0, 1, 1], [], []>} : vector<64x8xbf16>, vector<8x32xbf16>, vector<64x32xf32> -> vector<64x32xf32>
    %43 = arith.addf %10, %42 : vector<64x32xf32>
    %c0_32 = arith.constant 0 : index
    %c0_33 = arith.constant 0 : index
    %c8 = arith.constant 8 : index
    %44 = vector.load %arg17[%c0_32, %c0_33, %c8] : memref<8x8x96xf32, #tpu.memory_space<vmem>>, vector<8x8x8xf32>
    %45 = arith.truncf %44 : vector<8x8x8xf32> to vector<8x8x8xbf16>
    %c0_34 = arith.constant 0 : index
    %c0_35 = arith.constant 0 : index
    %c40 = arith.constant 40 : index
    %46 = vector.load %arg17[%c0_34, %c0_35, %c40] : memref<8x8x96xf32, #tpu.memory_space<vmem>>, vector<8x8x8xf32>
    %47 = arith.truncf %46 : vector<8x8x8xf32> to vector<8x8x8xbf16>
    %c0_36 = arith.constant 0 : index
    %c0_37 = arith.constant 0 : index
    %c72 = arith.constant 72 : index
    %48 = vector.load %arg17[%c0_36, %c0_37, %c72] : memref<8x8x96xf32, #tpu.memory_space<vmem>>, vector<8x8x8xf32>
    %49 = arith.truncf %48 : vector<8x8x8xf32> to vector<8x8x8xbf16>
    "tpu.trace_start"() <{level = 10 : i32, message = "bqd,bkd->bqk"}> : () -> ()
    %cst_38 = arith.constant dense<0.000000e+00> : vector<8x8x8xf32>
    %50 = tpu.matmul %45, %47, %cst_38 {dimension_numbers = #tpu.dot_dimension_numbers<[2], [2], [1], [1], [0, 0, 0, 1, 1, 1], [0], [0]>} : vector<8x8x8xbf16>, vector<8x8x8xbf16>, vector<8x8x8xf32> -> vector<8x8x8xf32>
    "tpu.trace_stop"() : () -> ()
    %cst_39 = arith.constant 0.353553385 : f32
    %51 = vector.broadcast %cst_39 : f32 to vector<8x8x8xf32>
    %52 = arith.mulf %50, %51 : vector<8x8x8xf32>
    %c1 = arith.constant 1 : index
    %c0_40 = arith.constant 0 : index
    %c0_41 = arith.constant 0 : index
    %c0_42 = arith.constant 0 : index
    %53 = vector.load %arg2[%c1, %c0_40, %c0_41, %c0_42] : memref<4x8x8x8xf32, #tpu.memory_space<vmem>>, vector<1x8x8x8xf32>
    %54 = vector.shape_cast %53 : vector<1x8x8x8xf32> to vector<8x8x8xf32>
    %55 = arith.addf %52, %54 : vector<8x8x8xf32>
    %c1_43 = arith.constant 1 : index
    %c0_44 = arith.constant 0 : index
    %c0_45 = arith.constant 0 : index
    %c0_46 = arith.constant 0 : index
    %56 = vector.load %arg16[%c1_43, %c0_44, %c0_45, %c0_46] : memref<4x8x8x8xf32, #tpu.memory_space<vmem>>, vector<1x8x8x8xf32>
    %57 = vector.shape_cast %56 : vector<1x8x8x8xf32> to vector<8x8x8xf32>
    %58 = vector.shape_cast %55 : vector<8x8x8xf32> to vector<1x8x8x8xf32>
    tpu.vector_store %arg16[%c1_43, %c0_44, %c0_45, %c0_46], %58 {strides = array<i32>} : memref<4x8x8x8xf32, #tpu.memory_space<vmem>>, vector<1x8x8x8xf32>,
    %cst_47 = arith.constant dense<0xFF800000> : vector<8x8xf32>
    %59 = vector.multi_reduction <maximumf>, %55, %cst_47 [2] : vector<8x8x8xf32> to vector<8x8xf32>
    %60 = vector.shape_cast %59 : vector<8x8xf32> to vector<8x8x1xf32>
    %61 = vector.broadcast %60 : vector<8x8x1xf32> to vector<8x8x8xf32>
    %62 = arith.subf %55, %61 : vector<8x8x8xf32>
    %63 = math.exp %62 : vector<8x8x8xf32>
    %cst_48 = arith.constant dense<0.000000e+00> : vector<8x8xf32>
    %64 = vector.multi_reduction <add>, %63, %cst_48 [2] : vector<8x8x8xf32> to vector<8x8xf32>
    %65 = vector.shape_cast %64 : vector<8x8xf32> to vector<8x8x1xf32>
    %66 = tpu.reciprocal %65 {approx = true} : vector<8x8x1xf32> -> vector<8x8x1xf32>
    %67 = vector.broadcast %66 : vector<8x8x1xf32> to vector<8x8x8xf32>
    %68 = arith.mulf %63, %67 : vector<8x8x8xf32>
    %69 = arith.truncf %68 : vector<8x8x8xf32> to vector<8x8x8xbf16>
    "tpu.trace_start"() <{level = 10 : i32, message = "bqk,bkd->bqd"}> : () -> ()
    %cst_49 = arith.constant dense<0.000000e+00> : vector<8x8x8xf32>
    %70 = tpu.matmul %69, %49, %cst_49 {dimension_numbers = #tpu.dot_dimension_numbers<[2], [1], [1], [2], [0, 0, 0, 1, 1, 2], [0], [0]>} : vector<8x8x8xbf16>, vector<8x8x8xbf16>, vector<8x8x8xf32> -> vector<8x8x8xf32>
    "tpu.trace_stop"() : () -> ()
    %71 = vector.shape_cast %70 : vector<8x8x8xf32> to vector<64x8xf32>
    %72 = arith.truncf %71 : vector<64x8xf32> to vector<64x8xbf16>
    %c8_50 = arith.constant 8 : index
    %c0_51 = arith.constant 0 : index
    %73 = vector.load %arg5[%c8_50, %c0_51] : memref<32x32xf32, #tpu.memory_space<vmem>>, vector<8x32xf32>
    %74 = arith.truncf %73 : vector<8x32xf32> to vector<8x32xbf16>
    %cst_52 = arith.constant dense<0.000000e+00> : vector<64x32xf32>
    %75 = tpu.matmul %72, %74, %cst_52 {dimension_numbers = #tpu.dot_dimension_numbers<[1], [0], [0], [1], [0, 0, 1, 1], [], []>} : vector<64x8xbf16>, vector<8x32xbf16>, vector<64x32xf32> -> vector<64x32xf32>
    %76 = arith.addf %43, %75 : vector<64x32xf32>
    %c0_53 = arith.constant 0 : index
    %c0_54 = arith.constant 0 : index
    %c16 = arith.constant 16 : index
    %77 = vector.load %arg17[%c0_53, %c0_54, %c16] : memref<8x8x96xf32, #tpu.memory_space<vmem>>, vector<8x8x8xf32>
    %78 = arith.truncf %77 : vector<8x8x8xf32> to vector<8x8x8xbf16>
    %c0_55 = arith.constant 0 : index
    %c0_56 = arith.constant 0 : index
    %c48 = arith.constant 48 : index
    %79 = vector.load %arg17[%c0_55, %c0_56, %c48] : memref<8x8x96xf32, #tpu.memory_space<vmem>>, vector<8x8x8xf32>
    %80 = arith.truncf %79 : vector<8x8x8xf32> to vector<8x8x8xbf16>
    %c0_57 = arith.constant 0 : index
    %c0_58 = arith.constant 0 : index
    %c80 = arith.constant 80 : index
    %81 = vector.load %arg17[%c0_57, %c0_58, %c80] : memref<8x8x96xf32, #tpu.memory_space<vmem>>, vector<8x8x8xf32>
    %82 = arith.truncf %81 : vector<8x8x8xf32> to vector<8x8x8xbf16>
    "tpu.trace_start"() <{level = 10 : i32, message = "bqd,bkd->bqk"}> : () -> ()
    %cst_59 = arith.constant dense<0.000000e+00> : vector<8x8x8xf32>
    %83 = tpu.matmul %78, %80, %cst_59 {dimension_numbers = #tpu.dot_dimension_numbers<[2], [2], [1], [1], [0, 0, 0, 1, 1, 1], [0], [0]>} : vector<8x8x8xbf16>, vector<8x8x8xbf16>, vector<8x8x8xf32> -> vector<8x8x8xf32>
    "tpu.trace_stop"() : () -> ()
    %cst_60 = arith.constant 0.353553385 : f32
    %84 = vector.broadcast %cst_60 : f32 to vector<8x8x8xf32>
    %85 = arith.mulf %83, %84 : vector<8x8x8xf32>
    %c2 = arith.constant 2 : index
    %c0_61 = arith.constant 0 : index
    %c0_62 = arith.constant 0 : index
    %c0_63 = arith.constant 0 : index
    %86 = vector.load %arg2[%c2, %c0_61, %c0_62, %c0_63] : memref<4x8x8x8xf32, #tpu.memory_space<vmem>>, vector<1x8x8x8xf32>
    %87 = vector.shape_cast %86 : vector<1x8x8x8xf32> to vector<8x8x8xf32>
    %88 = arith.addf %85, %87 : vector<8x8x8xf32>
    %c2_64 = arith.constant 2 : index
    %c0_65 = arith.constant 0 : index
    %c0_66 = arith.constant 0 : index
    %c0_67 = arith.constant 0 : index
    %89 = vector.load %arg16[%c2_64, %c0_65, %c0_66, %c0_67] : memref<4x8x8x8xf32, #tpu.memory_space<vmem>>, vector<1x8x8x8xf32>
    %90 = vector.shape_cast %89 : vector<1x8x8x8xf32> to vector<8x8x8xf32>
    %91 = vector.shape_cast %88 : vector<8x8x8xf32> to vector<1x8x8x8xf32>
    tpu.vector_store %arg16[%c2_64, %c0_65, %c0_66, %c0_67], %91 {strides = array<i32>} : memref<4x8x8x8xf32, #tpu.memory_space<vmem>>, vector<1x8x8x8xf32>,
    %cst_68 = arith.constant dense<0xFF800000> : vector<8x8xf32>
    %92 = vector.multi_reduction <maximumf>, %88, %cst_68 [2] : vector<8x8x8xf32> to vector<8x8xf32>
    %93 = vector.shape_cast %92 : vector<8x8xf32> to vector<8x8x1xf32>
    %94 = vector.broadcast %93 : vector<8x8x1xf32> to vector<8x8x8xf32>
    %95 = arith.subf %88, %94 : vector<8x8x8xf32>
    %96 = math.exp %95 : vector<8x8x8xf32>
    %cst_69 = arith.constant dense<0.000000e+00> : vector<8x8xf32>
    %97 = vector.multi_reduction <add>, %96, %cst_69 [2] : vector<8x8x8xf32> to vector<8x8xf32>
    %98 = vector.shape_cast %97 : vector<8x8xf32> to vector<8x8x1xf32>
    %99 = tpu.reciprocal %98 {approx = true} : vector<8x8x1xf32> -> vector<8x8x1xf32>
    %100 = vector.broadcast %99 : vector<8x8x1xf32> to vector<8x8x8xf32>
    %101 = arith.mulf %96, %100 : vector<8x8x8xf32>
    %102 = arith.truncf %101 : vector<8x8x8xf32> to vector<8x8x8xbf16>
    "tpu.trace_start"() <{level = 10 : i32, message = "bqk,bkd->bqd"}> : () -> ()
    %cst_70 = arith.constant dense<0.000000e+00> : vector<8x8x8xf32>
    %103 = tpu.matmul %102, %82, %cst_70 {dimension_numbers = #tpu.dot_dimension_numbers<[2], [1], [1], [2], [0, 0, 0, 1, 1, 2], [0], [0]>} : vector<8x8x8xbf16>, vector<8x8x8xbf16>, vector<8x8x8xf32> -> vector<8x8x8xf32>
    "tpu.trace_stop"() : () -> ()
    %104 = vector.shape_cast %103 : vector<8x8x8xf32> to vector<64x8xf32>
    %105 = arith.truncf %104 : vector<64x8xf32> to vector<64x8xbf16>
    %c16_71 = arith.constant 16 : index
    %c0_72 = arith.constant 0 : index
    %106 = vector.load %arg5[%c16_71, %c0_72] : memref<32x32xf32, #tpu.memory_space<vmem>>, vector<8x32xf32>
    %107 = arith.truncf %106 : vector<8x32xf32> to vector<8x32xbf16>
    %cst_73 = arith.constant dense<0.000000e+00> : vector<64x32xf32>
    %108 = tpu.matmul %105, %107, %cst_73 {dimension_numbers = #tpu.dot_dimension_numbers<[1], [0], [0], [1], [0, 0, 1, 1], [], []>} : vector<64x8xbf16>, vector<8x32xbf16>, vector<64x32xf32> -> vector<64x32xf32>
    %109 = arith.addf %76, %108 : vector<64x32xf32>
    %c0_74 = arith.constant 0 : index
    %c0_75 = arith.constant 0 : index
    %c24 = arith.constant 24 : index
    %110 = vector.load %arg17[%c0_74, %c0_75, %c24] : memref<8x8x96xf32, #tpu.memory_space<vmem>>, vector<8x8x8xf32>
    %111 = arith.truncf %110 : vector<8x8x8xf32> to vector<8x8x8xbf16>
    %c0_76 = arith.constant 0 : index
    %c0_77 = arith.constant 0 : index
    %c56 = arith.constant 56 : index
    %112 = vector.load %arg17[%c0_76, %c0_77, %c56] : memref<8x8x96xf32, #tpu.memory_space<vmem>>, vector<8x8x8xf32>
    %113 = arith.truncf %112 : vector<8x8x8xf32> to vector<8x8x8xbf16>
    %c0_78 = arith.constant 0 : index
    %c0_79 = arith.constant 0 : index
    %c88 = arith.constant 88 : index
    %114 = vector.load %arg17[%c0_78, %c0_79, %c88] : memref<8x8x96xf32, #tpu.memory_space<vmem>>, vector<8x8x8xf32>
    %115 = arith.truncf %114 : vector<8x8x8xf32> to vector<8x8x8xbf16>
    "tpu.trace_start"() <{level = 10 : i32, message = "bqd,bkd->bqk"}> : () -> ()
    %cst_80 = arith.constant dense<0.000000e+00> : vector<8x8x8xf32>
    %116 = tpu.matmul %111, %113, %cst_80 {dimension_numbers = #tpu.dot_dimension_numbers<[2], [2], [1], [1], [0, 0, 0, 1, 1, 1], [0], [0]>} : vector<8x8x8xbf16>, vector<8x8x8xbf16>, vector<8x8x8xf32> -> vector<8x8x8xf32>
    "tpu.trace_stop"() : () -> ()
    %cst_81 = arith.constant 0.353553385 : f32
    %117 = vector.broadcast %cst_81 : f32 to vector<8x8x8xf32>
    %118 = arith.mulf %116, %117 : vector<8x8x8xf32>
    %c3 = arith.constant 3 : index
    %c0_82 = arith.constant 0 : index
    %c0_83 = arith.constant 0 : index
    %c0_84 = arith.constant 0 : index
    %119 = vector.load %arg2[%c3, %c0_82, %c0_83, %c0_84] : memref<4x8x8x8xf32, #tpu.memory_space<vmem>>, vector<1x8x8x8xf32>
    %120 = vector.shape_cast %119 : vector<1x8x8x8xf32> to vector<8x8x8xf32>
    %121 = arith.addf %118, %120 : vector<8x8x8xf32>
    %c3_85 = arith.constant 3 : index
    %c0_86 = arith.constant 0 : index
    %c0_87 = arith.constant 0 : index
    %c0_88 = arith.constant 0 : index
    %122 = vector.load %arg16[%c3_85, %c0_86, %c0_87, %c0_88] : memref<4x8x8x8xf32, #tpu.memory_space<vmem>>, vector<1x8x8x8xf32>
    %123 = vector.shape_cast %122 : vector<1x8x8x8xf32> to vector<8x8x8xf32>
    %124 = vector.shape_cast %121 : vector<8x8x8xf32> to vector<1x8x8x8xf32>
    tpu.vector_store %arg16[%c3_85, %c0_86, %c0_87, %c0_88], %124 {strides = array<i32>} : memref<4x8x8x8xf32, #tpu.memory_space<vmem>>, vector<1x8x8x8xf32>,
    %cst_89 = arith.constant dense<0xFF800000> : vector<8x8xf32>
    %125 = vector.multi_reduction <maximumf>, %121, %cst_89 [2] : vector<8x8x8xf32> to vector<8x8xf32>
    %126 = vector.shape_cast %125 : vector<8x8xf32> to vector<8x8x1xf32>
    %127 = vector.broadcast %126 : vector<8x8x1xf32> to vector<8x8x8xf32>
    %128 = arith.subf %121, %127 : vector<8x8x8xf32>
    %129 = math.exp %128 : vector<8x8x8xf32>
    %cst_90 = arith.constant dense<0.000000e+00> : vector<8x8xf32>
    %130 = vector.multi_reduction <add>, %129, %cst_90 [2] : vector<8x8x8xf32> to vector<8x8xf32>
    %131 = vector.shape_cast %130 : vector<8x8xf32> to vector<8x8x1xf32>
    %132 = tpu.reciprocal %131 {approx = true} : vector<8x8x1xf32> -> vector<8x8x1xf32>
    %133 = vector.broadcast %132 : vector<8x8x1xf32> to vector<8x8x8xf32>
    %134 = arith.mulf %129, %133 : vector<8x8x8xf32>
    %135 = arith.truncf %134 : vector<8x8x8xf32> to vector<8x8x8xbf16>
    "tpu.trace_start"() <{level = 10 : i32, message = "bqk,bkd->bqd"}> : () -> ()
    %cst_91 = arith.constant dense<0.000000e+00> : vector<8x8x8xf32>
    %136 = tpu.matmul %135, %115, %cst_91 {dimension_numbers = #tpu.dot_dimension_numbers<[2], [1], [1], [2], [0, 0, 0, 1, 1, 2], [0], [0]>} : vector<8x8x8xbf16>, vector<8x8x8xbf16>, vector<8x8x8xf32> -> vector<8x8x8xf32>
    "tpu.trace_stop"() : () -> ()
    %137 = vector.shape_cast %136 : vector<8x8x8xf32> to vector<64x8xf32>
    %138 = arith.truncf %137 : vector<64x8xf32> to vector<64x8xbf16>
    %c24_92 = arith.constant 24 : index
    %c0_93 = arith.constant 0 : index
    %139 = vector.load %arg5[%c24_92, %c0_93] : memref<32x32xf32, #tpu.memory_space<vmem>>, vector<8x32xf32>
    %140 = arith.truncf %139 : vector<8x32xf32> to vector<8x32xbf16>
    %cst_94 = arith.constant dense<0.000000e+00> : vector<64x32xf32>
    %141 = tpu.matmul %138, %140, %cst_94 {dimension_numbers = #tpu.dot_dimension_numbers<[1], [0], [0], [1], [0, 0, 1, 1], [], []>} : vector<64x8xbf16>, vector<8x32xbf16>, vector<64x32xf32> -> vector<64x32xf32>
    %142 = arith.addf %109, %141 : vector<64x32xf32>
    %c0_95 = arith.constant 0 : index
    %c0_96 = arith.constant 0 : index
    %143 = vector.load %arg6[%c0_95, %c0_96] : memref<1x32xf32, #tpu.memory_space<vmem>>, vector<1x32xf32>
    %144 = vector.broadcast %143 : vector<1x32xf32> to vector<64x32xf32>
    %145 = arith.addf %142, %144 : vector<64x32xf32>
    %146 = arith.addf %0, %145 : vector<64x32xf32>
    %cst_97 = arith.constant dense<0.000000e+00> : vector<32xf32>
    %147 = vector.multi_reduction <add>, %146, %cst_97 [0] : vector<64x32xf32> to vector<32xf32>
    %148 = vector.shape_cast %147 : vector<32xf32> to vector<1x32xf32>
    %cst_98 = arith.constant 6.400000e+01 : f32
    %149 = vector.broadcast %cst_98 : f32 to vector<1x32xf32>
    %150 = arith.divf %148, %149 : vector<1x32xf32>
    %151 = vector.broadcast %150 : vector<1x32xf32> to vector<64x32xf32>
    %152 = arith.subf %146, %151 : vector<64x32xf32>
    %153 = arith.mulf %152, %152 : vector<64x32xf32>
    %cst_99 = arith.constant dense<0.000000e+00> : vector<32xf32>
    %154 = vector.multi_reduction <add>, %153, %cst_99 [0] : vector<64x32xf32> to vector<32xf32>
    %155 = vector.shape_cast %154 : vector<32xf32> to vector<1x32xf32>
    %cst_100 = arith.constant 6.400000e+01 : f32
    %156 = vector.broadcast %cst_100 : f32 to vector<1x32xf32>
    %157 = arith.divf %155, %156 : vector<1x32xf32>
    %158 = vector.broadcast %150 : vector<1x32xf32> to vector<64x32xf32>
    %159 = arith.subf %146, %158 : vector<64x32xf32>
    %cst_101 = arith.constant 9.99999974E-6 : f32
    %160 = vector.broadcast %cst_101 : f32 to vector<1x32xf32>
    %161 = arith.addf %157, %160 : vector<1x32xf32>
    %162 = math.rsqrt %161 : vector<1x32xf32>
    %163 = vector.broadcast %162 : vector<1x32xf32> to vector<64x32xf32>
    %164 = arith.mulf %159, %163 : vector<64x32xf32>
    %c0_102 = arith.constant 0 : index
    %c0_103 = arith.constant 0 : index
    %165 = vector.load %arg7[%c0_102, %c0_103] : memref<1x32xf32, #tpu.memory_space<vmem>>, vector<1x32xf32>
    %166 = vector.broadcast %165 : vector<1x32xf32> to vector<64x32xf32>
    %167 = arith.mulf %164, %166 : vector<64x32xf32>
    %c0_104 = arith.constant 0 : index
    %c0_105 = arith.constant 0 : index
    %168 = vector.load %arg8[%c0_104, %c0_105] : memref<1x32xf32, #tpu.memory_space<vmem>>, vector<1x32xf32>
    %169 = vector.broadcast %168 : vector<1x32xf32> to vector<64x32xf32>
    %170 = arith.addf %167, %169 : vector<64x32xf32>
    %171 = arith.truncf %170 : vector<64x32xf32> to vector<64x32xbf16>
    %c0_106 = arith.constant 0 : index
    %c0_107 = arith.constant 0 : index
    %172 = vector.load %arg9[%c0_106, %c0_107] : memref<32x64xf32, #tpu.memory_space<vmem>>, vector<32x64xf32>
    %173 = arith.truncf %172 : vector<32x64xf32> to vector<32x64xbf16>
    %cst_108 = arith.constant dense<0.000000e+00> : vector<64x64xf32>
    %174 = tpu.matmul %171, %173, %cst_108 {dimension_numbers = #tpu.dot_dimension_numbers<[1], [0], [0], [1], [0, 0, 1, 1], [], []>} : vector<64x32xbf16>, vector<32x64xbf16>, vector<64x64xf32> -> vector<64x64xf32>
    %c0_109 = arith.constant 0 : index
    %c0_110 = arith.constant 0 : index
    %175 = vector.load %arg10[%c0_109, %c0_110] : memref<1x64xf32, #tpu.memory_space<vmem>>, vector<1x64xf32>
    %176 = vector.broadcast %175 : vector<1x64xf32> to vector<64x64xf32>
    %177 = arith.addf %174, %176 : vector<64x64xf32>
    %cst_111 = arith.constant 5.000000e-01 : f32
    %178 = vector.broadcast %cst_111 : f32 to vector<64x64xf32>
    %179 = arith.mulf %178, %177 : vector<64x64xf32>
    %cst_112 = arith.constant 0.707106769 : f32
    %180 = vector.broadcast %cst_112 : f32 to vector<64x64xf32>
    %181 = arith.mulf %177, %180 : vector<64x64xf32>
    %182 = math.erf %181 : vector<64x64xf32>
    %cst_113 = arith.constant 1.000000e+00 : f32
    %183 = vector.broadcast %cst_113 : f32 to vector<64x64xf32>
    %184 = arith.addf %183, %182 : vector<64x64xf32>
    %185 = arith.mulf %179, %184 : vector<64x64xf32>
    %186 = arith.truncf %185 : vector<64x64xf32> to vector<64x64xbf16>
    %c0_114 = arith.constant 0 : index
    %c0_115 = arith.constant 0 : index
    %187 = vector.load %arg11[%c0_114, %c0_115] : memref<64x32xf32, #tpu.memory_space<vmem>>, vector<64x32xf32>
    %188 = arith.truncf %187 : vector<64x32xf32> to vector<64x32xbf16>
    %cst_116 = arith.constant dense<0.000000e+00> : vector<64x32xf32>
    %189 = tpu.matmul %186, %188, %cst_116 {dimension_numbers = #tpu.dot_dimension_numbers<[1], [0], [0], [1], [0, 0, 1, 1], [], []>} : vector<64x64xbf16>, vector<64x32xbf16>, vector<64x32xf32> -> vector<64x32xf32>
    %c0_117 = arith.constant 0 : index
    %c0_118 = arith.constant 0 : index
    %190 = vector.load %arg12[%c0_117, %c0_118] : memref<1x32xf32, #tpu.memory_space<vmem>>, vector<1x32xf32>
    %191 = vector.broadcast %190 : vector<1x32xf32> to vector<64x32xf32>
    %192 = arith.addf %189, %191 : vector<64x32xf32>
    %193 = arith.addf %170, %192 : vector<64x32xf32>
    %cst_119 = arith.constant dense<0.000000e+00> : vector<32xf32>
    %194 = vector.multi_reduction <add>, %193, %cst_119 [0] : vector<64x32xf32> to vector<32xf32>
    %195 = vector.shape_cast %194 : vector<32xf32> to vector<1x32xf32>
    %cst_120 = arith.constant 6.400000e+01 : f32
    %196 = vector.broadcast %cst_120 : f32 to vector<1x32xf32>
    %197 = arith.divf %195, %196 : vector<1x32xf32>
    %198 = vector.broadcast %197 : vector<1x32xf32> to vector<64x32xf32>
    %199 = arith.subf %193, %198 : vector<64x32xf32>
    %200 = arith.mulf %199, %199 : vector<64x32xf32>
    %cst_121 = arith.constant dense<0.000000e+00> : vector<32xf32>
    %201 = vector.multi_reduction <add>, %200, %cst_121 [0] : vector<64x32xf32> to vector<32xf32>
    %202 = vector.shape_cast %201 : vector<32xf32> to vector<1x32xf32>
    %cst_122 = arith.constant 6.400000e+01 : f32
    %203 = vector.broadcast %cst_122 : f32 to vector<1x32xf32>
    %204 = arith.divf %202, %203 : vector<1x32xf32>
    %205 = vector.broadcast %197 : vector<1x32xf32> to vector<64x32xf32>
    %206 = arith.subf %193, %205 : vector<64x32xf32>
    %cst_123 = arith.constant 9.99999974E-6 : f32
    %207 = vector.broadcast %cst_123 : f32 to vector<1x32xf32>
    %208 = arith.addf %204, %207 : vector<1x32xf32>
    %209 = math.rsqrt %208 : vector<1x32xf32>
    %210 = vector.broadcast %209 : vector<1x32xf32> to vector<64x32xf32>
    %211 = arith.mulf %206, %210 : vector<64x32xf32>
    %c0_124 = arith.constant 0 : index
    %c0_125 = arith.constant 0 : index
    %212 = vector.load %arg13[%c0_124, %c0_125] : memref<1x32xf32, #tpu.memory_space<vmem>>, vector<1x32xf32>
    %213 = vector.broadcast %212 : vector<1x32xf32> to vector<64x32xf32>
    %214 = arith.mulf %211, %213 : vector<64x32xf32>
    %c0_126 = arith.constant 0 : index
    %c0_127 = arith.constant 0 : index
    %215 = vector.load %arg14[%c0_126, %c0_127] : memref<1x32xf32, #tpu.memory_space<vmem>>, vector<1x32xf32>
    %216 = vector.broadcast %215 : vector<1x32xf32> to vector<64x32xf32>
    %217 = arith.addf %214, %216 : vector<64x32xf32>
    %c0_128 = arith.constant 0 : index
    %c0_129 = arith.constant 0 : index
    %218 = vector.load %arg15[%c0_128, %c0_129] : memref<64x32xf32, #tpu.memory_space<vmem>>, vector<64x32xf32>
    tpu.vector_store %arg15[%c0_128, %c0_129], %217 {strides = array<i32>} : memref<64x32xf32, #tpu.memory_space<vmem>>, vector<64x32xf32>,
    return
  }
  func.func @transform_0(%arg0: i32) -> (i32, i32) {
    %c0_i32 = arith.constant 0 : i32
    %c0_i32_0 = arith.constant 0 : i32
    %c0_i32_1 = arith.constant 0 : i32
    return %c0_i32, %c0_i32_0 : i32, i32
  }
  func.func @transform_1(%arg0: i32) -> (i32, i32, i32, i32) {
    %c0_i32 = arith.constant 0 : i32
    %c0_i32_0 = arith.constant 0 : i32
    %c0_i32_1 = arith.constant 0 : i32
    %c0_i32_2 = arith.constant 0 : i32
    %c0_i32_3 = arith.constant 0 : i32
    return %c0_i32, %c0_i32_0, %c0_i32_1, %c0_i32_2 : i32, i32, i32, i32
  }
  func.func @transform_2(%arg0: i32) -> (i32, i32) {
    %c0_i32 = arith.constant 0 : i32
    %c0_i32_0 = arith.constant 0 : i32
    %c0_i32_1 = arith.constant 0 : i32
    return %c0_i32, %c0_i32_0 : i32, i32
  }
  func.func @transform_3(%arg0: i32) -> (i32, i32) {
    %c0_i32 = arith.constant 0 : i32
    %c0_i32_0 = arith.constant 0 : i32
    %c0_i32_1 = arith.constant 0 : i32
    return %c0_i32, %c0_i32_0 : i32, i32
  }
  func.func @transform_4(%arg0: i32) -> (i32, i32) {
    %c0_i32 = arith.constant 0 : i32
    %c0_i32_0 = arith.constant 0 : i32
    %c0_i32_1 = arith.constant 0 : i32
    return %c0_i32, %c0_i32_0 : i32, i32
  }
  func.func @transform_5(%arg0: i32) -> (i32, i32) {
    %c0_i32 = arith.constant 0 : i32
    %c0_i32_0 = arith.constant 0 : i32
    %c0_i32_1 = arith.constant 0 : i32
    return %c0_i32, %c0_i32_0 : i32, i32
  }
  func.func @transform_6(%arg0: i32) -> (i32, i32) {
    %c0_i32 = arith.constant 0 : i32
    %c0_i32_0 = arith.constant 0 : i32
    %c0_i32_1 = arith.constant 0 : i32
    return %c0_i32, %c0_i32_0 : i32, i32
  }
  func.func @transform_7(%arg0: i32) -> (i32, i32) {
    %c0_i32 = arith.constant 0 : i32
    %c0_i32_0 = arith.constant 0 : i32
    %c0_i32_1 = arith.constant 0 : i32
    return %c0_i32, %c0_i32_0 : i32, i32
  }
  func.func @transform_8(%arg0: i32) -> (i32, i32) {
    %c0_i32 = arith.constant 0 : i32
    %c0_i32_0 = arith.constant 0 : i32
    %c0_i32_1 = arith.constant 0 : i32
    return %c0_i32, %c0_i32_0 : i32, i32
  }
  func.func @transform_9(%arg0: i32) -> (i32, i32) {
    %c0_i32 = arith.constant 0 : i32
    %c0_i32_0 = arith.constant 0 : i32
    %c0_i32_1 = arith.constant 0 : i32
    return %c0_i32, %c0_i32_0 : i32, i32
  }
  func.func @transform_10(%arg0: i32) -> (i32, i32) {
    %c0_i32 = arith.constant 0 : i32
    %c0_i32_0 = arith.constant 0 : i32
    %c0_i32_1 = arith.constant 0 : i32
    return %c0_i32, %c0_i32_0 : i32, i32
  }
  func.func @transform_11(%arg0: i32) -> (i32, i32) {
    %c0_i32 = arith.constant 0 : i32
    %c0_i32_0 = arith.constant 0 : i32
    %c0_i32_1 = arith.constant 0 : i32
    return %c0_i32, %c0_i32_0 : i32, i32
  }
  func.func @transform_12(%arg0: i32) -> (i32, i32) {
    %c0_i32 = arith.constant 0 : i32
    %c0_i32_0 = arith.constant 0 : i32
    %c0_i32_1 = arith.constant 0 : i32
    return %c0_i32, %c0_i32_0 : i32, i32
  }
  func.func @transform_13(%arg0: i32) -> (i32, i32) {
    %c0_i32 = arith.constant 0 : i32
    %c0_i32_0 = arith.constant 0 : i32
    %c0_i32_1 = arith.constant 0 : i32
    return %c0_i32, %c0_i32_0 : i32, i32
  }
  func.func @transform_14(%arg0: i32) -> (i32, i32) {
    %c0_i32 = arith.constant 0 : i32
    %c0_i32_0 = arith.constant 0 : i32
    %c0_i32_1 = arith.constant 0 : i32
    return %c0_i32, %c0_i32_0 : i32, i32
  }
  func.func @transform_15(%arg0: i32) -> (i32, i32, i32, i32) {
    %c0_i32 = arith.constant 0 : i32
    %c0_i32_0 = arith.constant 0 : i32
    %c0_i32_1 = arith.constant 0 : i32
    %c0_i32_2 = arith.constant 0 : i32
    %c0_i32_3 = arith.constant 0 : i32
    return %c0_i32, %c0_i32_0, %c0_i32_1, %c0_i32_2 : i32, i32, i32, i32
  }
}

</mosaic_0001>

<llo_original>
// kernel: shuffle_mtm_encoder_forward.3
$region0: #{shuffle_mtm_encoder_forward.3}
  #allocation0 [shape = 'u32[]', space=smem, size = 0x4, offset = 0x4, fixed_abs, tag = 'smem constant byte address 0x4 - core index']
  #allocation1 [shape = 'u32[144,128]{1,0:T(1,128)}', space=vmem, size = 0x12000, scoped, tag = 'internal scratch']
  %s0 = inlined_call_operand.vmem [shape: f32[64,16], index: 0, kind: input, shape index: {}]
  %s1 = inlined_call_operand.vmem [shape: f32[16,32], index: 1, kind: input, shape index: {}]
  %s2 = inlined_call_operand.vmem [shape: f32[1,32], index: 2, kind: input, shape index: {}]
  %s3 = inlined_call_operand.vmem [shape: f32[8,32], index: 3, kind: input, shape index: {}]
  %s4 = inlined_call_operand.vmem [shape: f32[64,32], index: 4, kind: output, shape index: {}]
  %s5 = sld [smem:[#allocation0]]
  $region26: #{shuffle_mtm_encoder_forward.3} parent=0
    _
  %s7 = ssub.s32 1, %s5
  %s8 = scalar_select 0, %s7, %s5
  // Predicated region
  $region2: #{shuffle_mtm_encoder_forward.3} parent=0 // pred_check
    _
  $region3: #{shuffle_mtm_encoder_forward.3} parent=0 // pred_check_branch
    %10 = sbr.rel (0) target = $region5
  $region4: #{shuffle_mtm_encoder_forward.3} parent=0 // pred_region
    _
  $region5: #{shuffle_mtm_encoder_forward.3} parent=0 // pred_fallthru
    _
  // Predicated region
  $region6: #{shuffle_mtm_encoder_forward.3} parent=0 // pred_check
    _
  $region7: #{shuffle_mtm_encoder_forward.3} parent=0 // pred_check_branch
    %12 = sbr.rel (0) target = $region9
  $region8: #{shuffle_mtm_encoder_forward.3} parent=0 // pred_region
    _
  $region9: #{shuffle_mtm_encoder_forward.3} parent=0 // pred_fallthru
    _
  // Predicated region
  $region10: #{shuffle_mtm_encoder_forward.3} parent=0 // pred_check
    _
  $region11: #{shuffle_mtm_encoder_forward.3} parent=0 // pred_check_branch
    %14 = sbr.rel (0) target = $region13
  $region12: #{shuffle_mtm_encoder_forward.3} parent=0 // pred_region
    _
  $region13: #{shuffle_mtm_encoder_forward.3} parent=0 // pred_fallthru
    _
  // Predicated region
  $region14: #{shuffle_mtm_encoder_forward.3} parent=0 // pred_check
    _
  $region15: #{shuffle_mtm_encoder_forward.3} parent=0 // pred_check_branch
    %16 = sbr.rel (0) target = $region17
  $region16: #{shuffle_mtm_encoder_forward.3} parent=0 // pred_region
    _
  $region17: #{shuffle_mtm_encoder_forward.3} parent=0 // pred_fallthru
    _
  %v18 = vld [vmem:[%s0] sm:$0xff]
  %v19 = vld [vmem:[%s0 + $0x8] sm:$0xff]
  %v20 = vld [vmem:[%s0 + $0x10] sm:$0xff]
  %v21 = vld [vmem:[%s0 + $0x18] sm:$0xff]
  %v22 = vld [vmem:[%s0 + $0x20] sm:$0xff]
  %v23 = vld [vmem:[%s0 + $0x28] sm:$0xff]
  %v24 = vld [vmem:[%s0 + $0x30] sm:$0xff]
  %v25 = vld [vmem:[%s0 + $0x38] sm:$0xff]
  %v26 = vpack.c.bf16 %v19, %v18
  %v27 = vpack.c.bf16 %v21, %v20
  %v28 = vpack.c.bf16 %v23, %v22
  %v29 = vpack.c.bf16 %v25, %v24
  %v30 = vld [vmem:[%s1] sm:$0xff]
  %v31 = vld [vmem:[%s1 + $0x8] sm:$0xff]
  %v32 = vpack.c.bf16 %v31, %v30
  %v33 = vld [vmem:[%s2] sm:$0x1]
  %v35 = vlaneseq
  %v36 = vshrl.u32 %v35, 7
  %v37 = vsub.s32 0, %v36
  %v38 = vrot.slane %v33, %v37
  %vm40 = vcmask 130048
  %v42 = vsel %vm40, %v26, 0
  %v45 = vsel %vm40, %v27, 0
  %v48 = vsel %vm40, %v28, 0
  %v51 = vsel %vm40, %v29, 0
  %53 = vmatprep.subr.bf16.mxu0 0
  %54 = vmatpush1.bf16.msra.mxu0 %v32
  %55 = vmatprep.subr.bf16.mxu0 0
  %56 = vmatpush1.bf16.msra.mxu0 0
  %57 = vmatprep.subr.bf16.mxu0 0
  %58 = vmatpush1.bf16.msra.mxu0 0
  %59 = vmatprep.subr.bf16.mxu0 0
  %60 = vmatpush1.bf16.msra.mxu0 0
  %61 = vmatprep.subr.bf16.mxu0 0
  %62 = vmatpush1.bf16.msra.mxu0 0
  %63 = vmatprep.subr.bf16.mxu0 0
  %64 = vmatpush1.bf16.msra.mxu0 0
  %65 = vmatprep.subr.bf16.mxu0 0
  %66 = vmatpush1.bf16.msra.mxu0 0
  %67 = vmatprep.subr.bf16.mxu0 0
  %68 = vmatpush1.bf16.msra.mxu0 0
  %69 = vmatprep.subr.bf16.mxu0 0
  %70 = vmatpush1.bf16.msra.mxu0 0
  %71 = vmatprep.subr.bf16.mxu0 0
  %72 = vmatpush1.bf16.msra.mxu0 0
  %73 = vmatprep.subr.bf16.mxu0 0
  %74 = vmatpush1.bf16.msra.mxu0 0
  %75 = vmatprep.subr.bf16.mxu0 0
  %76 = vmatpush1.bf16.msra.mxu0 0
  %77 = vmatprep.subr.bf16.mxu0 0
  %78 = vmatpush1.bf16.msra.mxu0 0
  %79 = vmatprep.subr.bf16.mxu0 0
  %80 = vmatpush1.bf16.msra.mxu0 0
  %81 = vmatprep.subr.bf16.mxu0 0
  %82 = vmatpush1.bf16.msra.mxu0 0
  %83 = vmatprep.subr.bf16.mxu0 0
  %84 = vmatpush1.bf16.msra.mxu0 0
  %85 = vmatprep.mubr.bf16.mxu0 0
  %86 = vmatmul.mubr.bf16.gmra.mrb[0].mxu0 %v42
  %v87 = vpop.f32.mrb[0].mxu0
  %v88 = vadd.f32 %v38, %v87
  %v89 = vpop.f32.mrb[0].mxu0
  %v90 = vpop.f32.mrb[0].mxu0
  %v91 = vadd.f32 %v38, %v90
  %v92 = vpop.f32.mrb[0].mxu0
  %93 = vmatprep.mubr.bf16.mxu0 0
  %94 = vmatmul.mubr.bf16.gmra.mrb[0].mxu0 %v45
  %v95 = vpop.f32.mrb[0].mxu0
  %v96 = vadd.f32 %v38, %v95
  %v97 = vpop.f32.mrb[0].mxu0
  %v98 = vpop.f32.mrb[0].mxu0
  %v99 = vadd.f32 %v38, %v98
  %v100 = vpop.f32.mrb[0].mxu0
  %101 = vmatprep.mubr.bf16.mxu0 0
  %102 = vmatmul.mubr.bf16.gmra.mrb[0].mxu0 %v48
  %v103 = vpop.f32.mrb[0].mxu0
  %v104 = vadd.f32 %v38, %v103
  %v105 = vpop.f32.mrb[0].mxu0
  %v106 = vpop.f32.mrb[0].mxu0
  %v107 = vadd.f32 %v38, %v106
  %v108 = vpop.f32.mrb[0].mxu0
  %109 = vmatprep.mubr.bf16.mxu0 0
  %110 = vmatmul.mubr.bf16.gmra.mrb[0].mxu0 %v51
  %v111 = vpop.f32.mrb[0].mxu0
  %v112 = vadd.f32 %v38, %v111
  %v113 = vpop.f32.mrb[0].mxu0
  %v114 = vpop.f32.mrb[0].mxu0
  %v115 = vadd.f32 %v38, %v114
  %v116 = vpop.f32.mrb[0].mxu0
  %117 = vdwg.mxu0
  %v118 = vld [vmem:[%s3] sm:$0xff]
  %v119 = vadd.f32 %v88, %v118
  %v120 = vadd.f32 %v91, %v118
  %v121 = vadd.f32 %v96, %v118
  %v122 = vadd.f32 %v99, %v118
  %v123 = vadd.f32 %v104, %v118
  %v124 = vadd.f32 %v107, %v118
  %v125 = vadd.f32 %v112, %v118
  %v126 = vadd.f32 %v115, %v118
  %vm127 = vcmask 261120
  %128 = vst.msk [vmem:[%s4] sm:$0xff] %vm127, %v119
  %129 = vst.msk [vmem:[%s4 + $0x8] sm:$0xff] %vm127, %v120
  %130 = vst.msk [vmem:[%s4 + $0x10] sm:$0xff] %vm127, %v121
  %131 = vst.msk [vmem:[%s4 + $0x18] sm:$0xff] %vm127, %v122
  %132 = vst.msk [vmem:[%s4 + $0x20] sm:$0xff] %vm127, %v123
  %133 = vst.msk [vmem:[%s4 + $0x28] sm:$0xff] %vm127, %v124
  %134 = vst.msk [vmem:[%s4 + $0x30] sm:$0xff] %vm127, %v125
  %135 = vst.msk [vmem:[%s4 + $0x38] sm:$0xff] %vm127, %v126
  // Predicated region
  $region18: #{shuffle_mtm_encoder_forward.3} parent=0 // pred_check
    _
  $region19: #{shuffle_mtm_encoder_forward.3} parent=0 // pred_check_branch
    %137 = sbr.rel (0) target = $region21
  $region20: #{shuffle_mtm_encoder_forward.3} parent=0 // pred_region
    _
  $region21: #{shuffle_mtm_encoder_forward.3} parent=0 // pred_fallthru
    _
  // Predicated region
  $region22: #{shuffle_mtm_encoder_forward.3} parent=0 // pred_check
    _
  $region23: #{shuffle_mtm_encoder_forward.3} parent=0 // pred_check_branch
    %139 = sbr.rel (0) target = $region25
  $region24: #{shuffle_mtm_encoder_forward.3} parent=0 // pred_region
    _
  $region25: #{shuffle_mtm_encoder_forward.3} parent=0 // pred_fallthru
    _

// kernel: shuffle_mtm_encoder_forward.4
$region0: #{shuffle_mtm_encoder_forward.4}
  #allocation0 [shape = 'u32[]', space=smem, size = 0x4, offset = 0x4, fixed_abs, tag = 'smem constant byte address 0x4 - core index']
  #allocation1 [shape = 'u32[144,128]{1,0:T(1,128)}', space=vmem, size = 0x12000, scoped, tag = 'internal scratch']
  #allocation2 [shape = 'f32[8,8,96]{2,1,0:T(8,128)}', space=vmem, size = 0x8000, scoped, tag = 'scratch operand']
  %s0 = inlined_call_operand.vmem [shape: f32[64,32], index: 0, kind: input, shape index: {}]
  %s1 = inlined_call_operand.vmem [shape: f32[32,96], index: 1, kind: input, shape index: {}]
  %s2 = inlined_call_operand.vmem [shape: f32[1,96], index: 2, kind: input, shape index: {}]
  %s3 = inlined_call_operand.vmem [shape: f32[32,32], index: 3, kind: input, shape index: {}]
  %s4 = inlined_call_operand.vmem [shape: f32[1,32], index: 4, kind: input, shape index: {}]
  %s5 = inlined_call_operand.vmem [shape: f32[1,32], index: 5, kind: input, shape index: {}]
  %s6 = inlined_call_operand.vmem [shape: f32[1,32], index: 6, kind: input, shape index: {}]
  %s7 = inlined_call_operand.vmem [shape: f32[32,64], index: 7, kind: input, shape index: {}]
  %s8 = inlined_call_operand.vmem [shape: f32[1,64], index: 8, kind: input, shape index: {}]
  %s9 = inlined_call_operand.vmem [shape: f32[64,32], index: 9, kind: input, shape index: {}]
  %s10 = inlined_call_operand.vmem [shape: f32[1,32], index: 10, kind: input, shape index: {}]
  %s11 = inlined_call_operand.vmem [shape: f32[1,32], index: 11, kind: input, shape index: {}]
  %s12 = inlined_call_operand.vmem [shape: f32[1,32], index: 12, kind: input, shape index: {}]
  %s13 = inlined_call_operand.vmem [shape: f32[64,32], index: 13, kind: output, shape index: {0}]
  %s14 = inlined_call_operand.vmem [shape: f32[4,8,8,8], index: 14, kind: output, shape index: {1}]
  %15 = xla_tuple %s13, %s14
  %s16 = sld [smem:[#allocation0]]
  $region70: #{shuffle_mtm_encoder_forward.4} parent=0
    _
  %s18 = ssub.s32 1, %s16
  %s19 = scalar_select 0, %s18, %s16
  // Predicated region
  $region2: #{shuffle_mtm_encoder_forward.4} parent=0 // pred_check
    _
  $region3: #{shuffle_mtm_encoder_forward.4} parent=0 // pred_check_branch
    %21 = sbr.rel (0) target = $region5
  $region4: #{shuffle_mtm_encoder_forward.4} parent=0 // pred_region
    _
  $region5: #{shuffle_mtm_encoder_forward.4} parent=0 // pred_fallthru
    _
  // Predicated region
  $region6: #{shuffle_mtm_encoder_forward.4} parent=0 // pred_check
    _
  $region7: #{shuffle_mtm_encoder_forward.4} parent=0 // pred_check_branch
    %23 = sbr.rel (0) target = $region9
  $region8: #{shuffle_mtm_encoder_forward.4} parent=0 // pred_region
    _
  $region9: #{shuffle_mtm_encoder_forward.4} parent=0 // pred_fallthru
    _
  // Predicated region
  $region10: #{shuffle_mtm_encoder_forward.4} parent=0 // pred_check
    _
  $region11: #{shuffle_mtm_encoder_forward.4} parent=0 // pred_check_branch
    %25 = sbr.rel (0) target = $region13
  $region12: #{shuffle_mtm_encoder_forward.4} parent=0 // pred_region
    _
  $region13: #{shuffle_mtm_encoder_forward.4} parent=0 // pred_fallthru
    _
  // Predicated region
  $region14: #{shuffle_mtm_encoder_forward.4} parent=0 // pred_check
    _
  $region15: #{shuffle_mtm_encoder_forward.4} parent=0 // pred_check_branch
    %27 = sbr.rel (0) target = $region17
  $region16: #{shuffle_mtm_encoder_forward.4} parent=0 // pred_region
    _
  $region17: #{shuffle_mtm_encoder_forward.4} parent=0 // pred_fallthru
    _
  // Predicated region
  $region18: #{shuffle_mtm_encoder_forward.4} parent=0 // pred_check
    _
  $region19: #{shuffle_mtm_encoder_forward.4} parent=0 // pred_check_branch
    %29 = sbr.rel (0) target = $region21
  $region20: #{shuffle_mtm_encoder_forward.4} parent=0 // pred_region
    _
  $region21: #{shuffle_mtm_encoder_forward.4} parent=0 // pred_fallthru
    _
  // Predicated region
  $region22: #{shuffle_mtm_encoder_forward.4} parent=0 // pred_check
    _
  $region23: #{shuffle_mtm_encoder_forward.4} parent=0 // pred_check_branch
    %31 = sbr.rel (0) target = $region25
  $region24: #{shuffle_mtm_encoder_forward.4} parent=0 // pred_region
    _
  $region25: #{shuffle_mtm_encoder_forward.4} parent=0 // pred_fallthru
    _
  // Predicated region
  $region26: #{shuffle_mtm_encoder_forward.4} parent=0 // pred_check
    _
  $region27: #{shuffle_mtm_encoder_forward.4} parent=0 // pred_check_branch
    %33 = sbr.rel (0) target = $region29
  $region28: #{shuffle_mtm_encoder_forward.4} parent=0 // pred_region
    _
  $region29: #{shuffle_mtm_encoder_forward.4} parent=0 // pred_fallthru
    _
  // Predicated region
  $region30: #{shuffle_mtm_encoder_forward.4} parent=0 // pred_check
    _
  $region31: #{shuffle_mtm_encoder_forward.4} parent=0 // pred_check_branch
    %35 = sbr.rel (0) target = $region33
  $region32: #{shuffle_mtm_encoder_forward.4} parent=0 // pred_region
    _
  $region33: #{shuffle_mtm_encoder_forward.4} parent=0 // pred_fallthru
    _
  // Predicated region
  $region34: #{shuffle_mtm_encoder_forward.4} parent=0 // pred_check
    _
  $region35: #{shuffle_mtm_encoder_forward.4} parent=0 // pred_check_branch
    %37 = sbr.rel (0) target = $region37
  $region36: #{shuffle_mtm_encoder_forward.4} parent=0 // pred_region
    _
  $region37: #{shuffle_mtm_encoder_forward.4} parent=0 // pred_fallthru
    _
  // Predicated region
  $region38: #{shuffle_mtm_encoder_forward.4} parent=0 // pred_check
    _
  $region39: #{shuffle_mtm_encoder_forward.4} parent=0 // pred_check_branch
    %39 = sbr.rel (0) target = $region41
  $region40: #{shuffle_mtm_encoder_forward.4} parent=0 // pred_region
    _
  $region41: #{shuffle_mtm_encoder_forward.4} parent=0 // pred_fallthru
    _
  // Predicated region
  $region42: #{shuffle_mtm_encoder_forward.4} parent=0 // pred_check
    _
  $region43: #{shuffle_mtm_encoder_forward.4} parent=0 // pred_check_branch
    %41 = sbr.rel (0) target = $region45
  $region44: #{shuffle_mtm_encoder_forward.4} parent=0 // pred_region
    _
  $region45: #{shuffle_mtm_encoder_forward.4} parent=0 // pred_fallthru
    _
  // Predicated region
  $region46: #{shuffle_mtm_encoder_forward.4} parent=0 // pred_check
    _
  $region47: #{shuffle_mtm_encoder_forward.4} parent=0 // pred_check_branch
    %43 = sbr.rel (0) target = $region49
  $region48: #{shuffle_mtm_encoder_forward.4} parent=0 // pred_region
    _
  $region49: #{shuffle_mtm_encoder_forward.4} parent=0 // pred_fallthru
    _
  // Predicated region
  $region50: #{shuffle_mtm_encoder_forward.4} parent=0 // pred_check
    _
  $region51: #{shuffle_mtm_encoder_forward.4} parent=0 // pred_check_branch
    %45 = sbr.rel (0) target = $region53
  $region52: #{shuffle_mtm_encoder_forward.4} parent=0 // pred_region
    _
  $region53: #{shuffle_mtm_encoder_forward.4} parent=0 // pred_fallthru
    _
  %v47 = vld [vmem:[%s0] sm:$0xff]
  %v48 = vld [vmem:[%s0 + $0x8] sm:$0xff]
  %v49 = vld [vmem:[%s0 + $0x10] sm:$0xff]
  %v50 = vld [vmem:[%s0 + $0x18] sm:$0xff]
  %v51 = vld [vmem:[%s0 + $0x20] sm:$0xff]
  %v52 = vld [vmem:[%s0 + $0x28] sm:$0xff]
  %v53 = vld [vmem:[%s0 + $0x30] sm:$0xff]
  %v54 = vld [vmem:[%s0 + $0x38] sm:$0xff]
  %v55 = vpack.c.bf16 %v48, %v47
  %v56 = vpack.c.bf16 %v50, %v49
  %v57 = vpack.c.bf16 %v52, %v51
  %v58 = vpack.c.bf16 %v54, %v53
  %v59 = vld [vmem:[%s1] sm:$0xff]
  %v60 = vld [vmem:[%s1 + $0x8] sm:$0xff]
  %v61 = vld [vmem:[%s1 + $0x10] sm:$0xff]
  %v62 = vld [vmem:[%s1 + $0x18] sm:$0xff]
  %v63 = vpack.c.bf16 %v60, %v59
  %v64 = vpack.c.bf16 %v62, %v61
  %v65 = vld [vmem:[%s2] sm:$0x1]
  %v67 = vlaneseq
  %v68 = vshrl.u32 %v67, 7
  %v69 = vsub.s32 0, %v68
  %v70 = vrot.slane %v65, %v69
  %vm72 = vcmask 261120
  %v74 = vsel %vm72, %v55, 0
  %v77 = vsel %vm72, %v56, 0
  %v80 = vsel %vm72, %v57, 0
  %v83 = vsel %vm72, %v58, 0
  %85 = vmatprep.subr.bf16.mxu0 0
  %86 = vmatpush1.bf16.msra.mxu0 %v63
  %87 = vmatprep.subr.bf16.mxu0 0
  %88 = vmatpush1.bf16.msra.mxu0 %v64
  %89 = vmatprep.subr.bf16.mxu0 0
  %90 = vmatpush1.bf16.msra.mxu0 0
  %91 = vmatprep.subr.bf16.mxu0 0
  %92 = vmatpush1.bf16.msra.mxu0 0
  %93 = vmatprep.subr.bf16.mxu0 0
  %94 = vmatpush1.bf16.msra.mxu0 0
  %95 = vmatprep.subr.bf16.mxu0 0
  %96 = vmatpush1.bf16.msra.mxu0 0
  %97 = vmatprep.subr.bf16.mxu0 0
  %98 = vmatpush1.bf16.msra.mxu0 0
  %99 = vmatprep.subr.bf16.mxu0 0
  %100 = vmatpush1.bf16.msra.mxu0 0
  %101 = vmatprep.subr.bf16.mxu0 0
  %102 = vmatpush1.bf16.msra.mxu0 0
  %103 = vmatprep.subr.bf16.mxu0 0
  %104 = vmatpush1.bf16.msra.mxu0 0
  %105 = vmatprep.subr.bf16.mxu0 0
  %106 = vmatpush1.bf16.msra.mxu0 0
  %107 = vmatprep.subr.bf16.mxu0 0
  %108 = vmatpush1.bf16.msra.mxu0 0
  %109 = vmatprep.subr.bf16.mxu0 0
  %110 = vmatpush1.bf16.msra.mxu0 0
  %111 = vmatprep.subr.bf16.mxu0 0
  %112 = vmatpush1.bf16.msra.mxu0 0
  %113 = vmatprep.subr.bf16.mxu0 0
  %114 = vmatpush1.bf16.msra.mxu0 0
  %115 = vmatprep.subr.bf16.mxu0 0
  %116 = vmatpush1.bf16.msra.mxu0 0
  %117 = vmatprep.mubr.bf16.mxu0 0
  %118 = vmatmul.mubr.bf16.gmra.mrb[0].mxu0 %v74
  %v119 = vpop.f32.mrb[0].mxu0
  %v120 = vadd.f32 %v70, %v119
  %v121 = vpop.f32.mrb[0].mxu0
  %v122 = vpop.f32.mrb[0].mxu0
  %v123 = vadd.f32 %v70, %v122
  %v124 = vpop.f32.mrb[0].mxu0
  %125 = vmatprep.mubr.bf16.mxu0 0
  %126 = vmatmul.mubr.bf16.gmra.mrb[0].mxu0 %v77
  %v127 = vpop.f32.mrb[0].mxu0
  %v128 = vadd.f32 %v70, %v127
  %v129 = vpop.f32.mrb[0].mxu0
  %v130 = vpop.f32.mrb[0].mxu0
  %v131 = vadd.f32 %v70, %v130
  %v132 = vpop.f32.mrb[0].mxu0
  %133 = vmatprep.mubr.bf16.mxu0 0
  %134 = vmatmul.mubr.bf16.gmra.mrb[0].mxu0 %v80
  %v135 = vpop.f32.mrb[0].mxu0
  %v136 = vadd.f32 %v70, %v135
  %v137 = vpop.f32.mrb[0].mxu0
  %v138 = vpop.f32.mrb[0].mxu0
  %v139 = vadd.f32 %v70, %v138
  %v140 = vpop.f32.mrb[0].mxu0
  %141 = vmatprep.mubr.bf16.mxu0 0
  %142 = vmatmul.mubr.bf16.gmra.mrb[0].mxu0 %v83
  %v143 = vpop.f32.mrb[0].mxu0
  %v144 = vadd.f32 %v70, %v143
  %v145 = vpop.f32.mrb[0].mxu0
  %v146 = vpop.f32.mrb[0].mxu0
  %v147 = vadd.f32 %v70, %v146
  %v148 = vpop.f32.mrb[0].mxu0
  %149 = vdwg.mxu0
  %vm150 = vcmask 785408
  %151 = vst.msk [vmem:[#allocation2] sm:$0xff] %vm150, %v120
  %152 = vst.msk [vmem:[#allocation2 + $0x8] sm:$0xff] %vm150, %v123
  %153 = vst.msk [vmem:[#allocation2 + $0x10] sm:$0xff] %vm150, %v128
  %154 = vst.msk [vmem:[#allocation2 + $0x18] sm:$0xff] %vm150, %v131
  %155 = vst.msk [vmem:[#allocation2 + $0x20] sm:$0xff] %vm150, %v136
  %156 = vst.msk [vmem:[#allocation2 + $0x28] sm:$0xff] %vm150, %v139
  %157 = vst.msk [vmem:[#allocation2 + $0x30] sm:$0xff] %vm150, %v144
  %158 = vst.msk [vmem:[#allocation2 + $0x38] sm:$0xff] %vm150, %v147
  %v159 = vld [vmem:[#allocation2] sm:$0xff]
  %v160 = vld [vmem:[#allocation2 + $0x8] sm:$0xff]
  %v161 = vld [vmem:[#allocation2 + $0x10] sm:$0xff]
  %v162 = vld [vmem:[#allocation2 + $0x18] sm:$0xff]
  %v163 = vld [vmem:[#allocation2 + $0x20] sm:$0xff]
  %v164 = vld [vmem:[#allocation2 + $0x28] sm:$0xff]
  %v165 = vld [vmem:[#allocation2 + $0x30] sm:$0xff]
  %v166 = vld [vmem:[#allocation2 + $0x38] sm:$0xff]
  %v167 = vpack.c.bf16 %v159, %v159
  %v168 = vpack.c.bf16 %v160, %v160
  %v169 = vpack.c.bf16 %v161, %v161
  %v170 = vpack.c.bf16 %v162, %v162
  %v171 = vpack.c.bf16 %v163, %v163
  %v172 = vpack.c.bf16 %v164, %v164
  %v173 = vpack.c.bf16 %v165, %v165
  %v174 = vpack.c.bf16 %v166, %v166
  %176 = vrot.lane.b32.xlu0 %v167, 96
  %v177 = vpop.permute.xlu0 %176
  %vm178 = vcmask 64512
  %v180 = vsel %vm178, %v167, 0
  %v183 = vsel %vm178, %v177, 0
  %185 = vmatprep.subr.bf16.mxu0 0
  %186 = vmatpush1.bf16.xpose.msra.mxu0 %v183
  %187 = vmatprep.subr.bf16.mxu0 0
  %188 = vmatpush1.bf16.xpose.msra.mxu0 0
  %189 = vmatprep.subr.bf16.mxu0 0
  %190 = vmatpush1.bf16.xpose.msra.mxu0 0
  %191 = vmatprep.subr.bf16.mxu0 0
  %192 = vmatpush1.bf16.xpose.msra.mxu0 0
  %193 = vmatprep.subr.bf16.mxu0 0
  %194 = vmatpush1.bf16.xpose.msra.mxu0 0
  %195 = vmatprep.subr.bf16.mxu0 0
  %196 = vmatpush1.bf16.xpose.msra.mxu0 0
  %197 = vmatprep.subr.bf16.mxu0 0
  %198 = vmatpush1.bf16.xpose.msra.mxu0 0
  %199 = vmatprep.subr.bf16.mxu0 0
  %200 = vmatpush1.bf16.xpose.msra.mxu0 0
  %201 = vmatprep.subr.bf16.mxu0 0
  %202 = vmatpush1.bf16.xpose.msra.mxu0 0
  %203 = vmatprep.subr.bf16.mxu0 0
  %204 = vmatpush1.bf16.xpose.msra.mxu0 0
  %205 = vmatprep.subr.bf16.mxu0 0
  %206 = vmatpush1.bf16.xpose.msra.mxu0 0
  %207 = vmatprep.subr.bf16.mxu0 0
  %208 = vmatpush1.bf16.xpose.msra.mxu0 0
  %209 = vmatprep.subr.bf16.mxu0 0
  %210 = vmatpush1.bf16.xpose.msra.mxu0 0
  %211 = vmatprep.subr.bf16.mxu0 0
  %212 = vmatpush1.bf16.xpose.msra.mxu0 0
  %213 = vmatprep.subr.bf16.mxu0 0
  %214 = vmatpush1.bf16.xpose.msra.mxu0 0
  %215 = vmatprep.subr.bf16.mxu0 0
  %216 = vmatpush1.bf16.xpose.msra.mxu0 0
  %217 = vmatprep.mubr.bf16.mxu0 0
  %218 = vmatmul.mubr.bf16.gmra.mrb[0].mxu0 %v180
  %v219 = vpop.f32.mrb[0].mxu0
  %v220 = vadd.f32 0.0, %v219
  %v221 = vpop.f32.mrb[0].mxu0
  %v222 = vpop.f32.mrb[0].mxu0
  %v223 = vpop.f32.mrb[0].mxu0
  %224 = vdwg.mxu0
  %226 = vrot.lane.b32.xlu0 %v168, 96
  %v227 = vpop.permute.xlu0 %226
  %v229 = vsel %vm178, %v168, 0
  %v232 = vsel %vm178, %v227, 0
  %234 = vmatprep.subr.bf16.mxu0 0
  %235 = vmatpush1.bf16.xpose.msra.mxu0 %v232
  %236 = vmatprep.subr.bf16.mxu0 0
  %237 = vmatpush1.bf16.xpose.msra.mxu0 0
  %238 = vmatprep.subr.bf16.mxu0 0
  %239 = vmatpush1.bf16.xpose.msra.mxu0 0
  %240 = vmatprep.subr.bf16.mxu0 0
  %241 = vmatpush1.bf16.xpose.msra.mxu0 0
  %242 = vmatprep.subr.bf16.mxu0 0
  %243 = vmatpush1.bf16.xpose.msra.mxu0 0
  %244 = vmatprep.subr.bf16.mxu0 0
  %245 = vmatpush1.bf16.xpose.msra.mxu0 0
  %246 = vmatprep.subr.bf16.mxu0 0
  %247 = vmatpush1.bf16.xpose.msra.mxu0 0
  %248 = vmatprep.subr.bf16.mxu0 0
  %249 = vmatpush1.bf16.xpose.msra.mxu0 0
  %250 = vmatprep.subr.bf16.mxu0 0
  %251 = vmatpush1.bf16.xpose.msra.mxu0 0
  %252 = vmatprep.subr.bf16.mxu0 0
  %253 = vmatpush1.bf16.xpose.msra.mxu0 0
  %254 = vmatprep.subr.bf16.mxu0 0
  %255 = vmatpush1.bf16.xpose.msra.mxu0 0
  %256 = vmatprep.subr.bf16.mxu0 0
  %257 = vmatpush1.bf16.xpose.msra.mxu0 0
  %258 = vmatprep.subr.bf16.mxu0 0
  %259 = vmatpush1.bf16.xpose.msra.mxu0 0
  %260 = vmatprep.subr.bf16.mxu0 0
  %261 = vmatpush1.bf16.xpose.msra.mxu0 0
  %262 = vmatprep.subr.bf16.mxu0 0
  %263 = vmatpush1.bf16.xpose.msra.mxu0 0
  %264 = vmatprep.subr.bf16.mxu0 0
  %265 = vmatpush1.bf16.xpose.msra.mxu0 0
  %266 = vmatprep.mubr.bf16.mxu0 0
  %267 = vmatmul.mubr.bf16.gmra.mrb[0].mxu0 %v229
  %v268 = vpop.f32.mrb[0].mxu0
  %v269 = vadd.f32 0.0, %v268
  %v270 = vpop.f32.mrb[0].mxu0
  %v271 = vpop.f32.mrb[0].mxu0
  %v272 = vpop.f32.mrb[0].mxu0
  %273 = vdwg.mxu0
  %275 = vrot.lane.b32.xlu0 %v169, 96
  %v276 = vpop.permute.xlu0 %275
  %v278 = vsel %vm178, %v169, 0
  %v281 = vsel %vm178, %v276, 0
  %283 = vmatprep.subr.bf16.mxu0 0
  %284 = vmatpush1.bf16.xpose.msra.mxu0 %v281
  %285 = vmatprep.subr.bf16.mxu0 0
  %286 = vmatpush1.bf16.xpose.msra.mxu0 0
  %287 = vmatprep.subr.bf16.mxu0 0
  %288 = vmatpush1.bf16.xpose.msra.mxu0 0
  %289 = vmatprep.subr.bf16.mxu0 0
  %290 = vmatpush1.bf16.xpose.msra.mxu0 0
  %291 = vmatprep.subr.bf16.mxu0 0
  %292 = vmatpush1.bf16.xpose.msra.mxu0 0
  %293 = vmatprep.subr.bf16.mxu0 0
  %294 = vmatpush1.bf16.xpose.msra.mxu0 0
  %295 = vmatprep.subr.bf16.mxu0 0
  %296 = vmatpush1.bf16.xpose.msra.mxu0 0
  %297 = vmatprep.subr.bf16.mxu0 0
  %298 = vmatpush1.bf16.xpose.msra.mxu0 0
  %299 = vmatprep.subr.bf16.mxu0 0
  %300 = vmatpush1.bf16.xpose.msra.mxu0 0
  %301 = vmatprep.subr.bf16.mxu0 0
  %302 = vmatpush1.bf16.xpose.msra.mxu0 0
  %303 = vmatprep.subr.bf16.mxu0 0
  %304 = vmatpush1.bf16.xpose.msra.mxu0 0
  %305 = vmatprep.subr.bf16.mxu0 0
  %306 = vmatpush1.bf16.xpose.msra.mxu0 0
  %307 = vmatprep.subr.bf16.mxu0 0
  %308 = vmatpush1.bf16.xpose.msra.mxu0 0
  %309 = vmatprep.subr.bf16.mxu0 0
  %310 = vmatpush1.bf16.xpose.msra.mxu0 0
  %311 = vmatprep.subr.bf16.mxu0 0
  %312 = vmatpush1.bf16.xpose.msra.mxu0 0
  %313 = vmatprep.subr.bf16.mxu0 0
  %314 = vmatpush1.bf16.xpose.msra.mxu0 0
  %315 = vmatprep.mubr.bf16.mxu0 0
  %316 = vmatmul.mubr.bf16.gmra.mrb[0].mxu0 %v278
  %v317 = vpop.f32.mrb[0].mxu0
  %v318 = vadd.f32 0.0, %v317
  %v319 = vpop.f32.mrb[0].mxu0
  %v320 = vpop.f32.mrb[0].mxu0
  %v321 = vpop.f32.mrb[0].mxu0
  %322 = vdwg.mxu0
  %324 = vrot.lane.b32.xlu0 %v170, 96
  %v325 = vpop.permute.xlu0 %324
  %v327 = vsel %vm178, %v170, 0
  %v330 = vsel %vm178, %v325, 0
  %332 = vmatprep.subr.bf16.mxu0 0
  %333 = vmatpush1.bf16.xpose.msra.mxu0 %v330
  %334 = vmatprep.subr.bf16.mxu0 0
  %335 = vmatpush1.bf16.xpose.msra.mxu0 0
  %336 = vmatprep.subr.bf16.mxu0 0
  %337 = vmatpush1.bf16.xpose.msra.mxu0 0
  %338 = vmatprep.subr.bf16.mxu0 0
  %339 = vmatpush1.bf16.xpose.msra.mxu0 0
  %340 = vmatprep.subr.bf16.mxu0 0
  %341 = vmatpush1.bf16.xpose.msra.mxu0 0
  %342 = vmatprep.subr.bf16.mxu0 0
  %343 = vmatpush1.bf16.xpose.msra.mxu0 0
  %344 = vmatprep.subr.bf16.mxu0 0
  %345 = vmatpush1.bf16.xpose.msra.mxu0 0
  %346 = vmatprep.subr.bf16.mxu0 0
  %347 = vmatpush1.bf16.xpose.msra.mxu0 0
  %348 = vmatprep.subr.bf16.mxu0 0
  %349 = vmatpush1.bf16.xpose.msra.mxu0 0
  %350 = vmatprep.subr.bf16.mxu0 0
  %351 = vmatpush1.bf16.xpose.msra.mxu0 0
  %352 = vmatprep.subr.bf16.mxu0 0
  %353 = vmatpush1.bf16.xpose.msra.mxu0 0
  %354 = vmatprep.subr.bf16.mxu0 0
  %355 = vmatpush1.bf16.xpose.msra.mxu0 0
  %356 = vmatprep.subr.bf16.mxu0 0
  %357 = vmatpush1.bf16.xpose.msra.mxu0 0
  %358 = vmatprep.subr.bf16.mxu0 0
  %359 = vmatpush1.bf16.xpose.msra.mxu0 0
  %360 = vmatprep.subr.bf16.mxu0 0
  %361 = vmatpush1.bf16.xpose.msra.mxu0 0
  %362 = vmatprep.subr.bf16.mxu0 0
  %363 = vmatpush1.bf16.xpose.msra.mxu0 0
  %364 = vmatprep.mubr.bf16.mxu0 0
  %365 = vmatmul.mubr.bf16.gmra.mrb[0].mxu0 %v327
  %v366 = vpop.f32.mrb[0].mxu0
  %v367 = vadd.f32 0.0, %v366
  %v368 = vpop.f32.mrb[0].mxu0
  %v369 = vpop.f32.mrb[0].mxu0
  %v370 = vpop.f32.mrb[0].mxu0
  %371 = vdwg.mxu0
  %373 = vrot.lane.b32.xlu0 %v171, 96
  %v374 = vpop.permute.xlu0 %373
  %v376 = vsel %vm178, %v171, 0
  %v379 = vsel %vm178, %v374, 0
  %381 = vmatprep.subr.bf16.mxu0 0
  %382 = vmatpush1.bf16.xpose.msra.mxu0 %v379
  %383 = vmatprep.subr.bf16.mxu0 0
  %384 = vmatpush1.bf16.xpose.msra.mxu0 0
  %385 = vmatprep.subr.bf16.mxu0 0
  %386 = vmatpush1.bf16.xpose.msra.mxu0 0
  %387 = vmatprep.subr.bf16.mxu0 0
  %388 = vmatpush1.bf16.xpose.msra.mxu0 0
  %389 = vmatprep.subr.bf16.mxu0 0
  %390 = vmatpush1.bf16.xpose.msra.mxu0 0
  %391 = vmatprep.subr.bf16.mxu0 0
  %392 = vmatpush1.bf16.xpose.msra.mxu0 0
  %393 = vmatprep.subr.bf16.mxu0 0
  %394 = vmatpush1.bf16.xpose.msra.mxu0 0
  %395 = vmatprep.subr.bf16.mxu0 0
  %396 = vmatpush1.bf16.xpose.msra.mxu0 0
  %397 = vmatprep.subr.bf16.mxu0 0
  %398 = vmatpush1.bf16.xpose.msra.mxu0 0
  %399 = vmatprep.subr.bf16.mxu0 0
  %400 = vmatpush1.bf16.xpose.msra.mxu0 0
  %401 = vmatprep.subr.bf16.mxu0 0
  %402 = vmatpush1.bf16.xpose.msra.mxu0 0
  %403 = vmatprep.subr.bf16.mxu0 0
  %404 = vmatpush1.bf16.xpose.msra.mxu0 0
  %405 = vmatprep.subr.bf16.mxu0 0
  %406 = vmatpush1.bf16.xpose.msra.mxu0 0
  %407 = vmatprep.subr.bf16.mxu0 0
  %408 = vmatpush1.bf16.xpose.msra.mxu0 0
  %409 = vmatprep.subr.bf16.mxu0 0
  %410 = vmatpush1.bf16.xpose.msra.mxu0 0
  %411 = vmatprep.subr.bf16.mxu0 0
  %412 = vmatpush1.bf16.xpose.msra.mxu0 0
  %413 = vmatprep.mubr.bf16.mxu0 0
  %414 = vmatmul.mubr.bf16.gmra.mrb[0].mxu0 %v376
  %v415 = vpop.f32.mrb[0].mxu0
  %v416 = vadd.f32 0.0, %v415
  %v417 = vpop.f32.mrb[0].mxu0
  %v418 = vpop.f32.mrb[0].mxu0
  %v419 = vpop.f32.mrb[0].mxu0
  %420 = vdwg.mxu0
  %422 = vrot.lane.b32.xlu0 %v172, 96
  %v423 = vpop.permute.xlu0 %422
  %v425 = vsel %vm178, %v172, 0
  %v428 = vsel %vm178, %v423, 0
  %430 = vmatprep.subr.bf16.mxu0 0
  %431 = vmatpush1.bf16.xpose.msra.mxu0 %v428
  %432 = vmatprep.subr.bf16.mxu0 0
  %433 = vmatpush1.bf16.xpose.msra.mxu0 0
  %434 = vmatprep.subr.bf16.mxu0 0
  %435 = vmatpush1.bf16.xpose.msra.mxu0 0
  %436 = vmatprep.subr.bf16.mxu0 0
  %437 = vmatpush1.bf16.xpose.msra.mxu0 0
  %438 = vmatprep.subr.bf16.mxu0 0
  %439 = vmatpush1.bf16.xpose.msra.mxu0 0
  %440 = vmatprep.subr.bf16.mxu0 0
  %441 = vmatpush1.bf16.xpose.msra.mxu0 0
  %442 = vmatprep.subr.bf16.mxu0 0
  %443 = vmatpush1.bf16.xpose.msra.mxu0 0
  %444 = vmatprep.subr.bf16.mxu0 0
  %445 = vmatpush1.bf16.xpose.msra.mxu0 0
  %446 = vmatprep.subr.bf16.mxu0 0
  %447 = vmatpush1.bf16.xpose.msra.mxu0 0
  %448 = vmatprep.subr.bf16.mxu0 0
  %449 = vmatpush1.bf16.xpose.msra.mxu0 0
  %450 = vmatprep.subr.bf16.mxu0 0
  %451 = vmatpush1.bf16.xpose.msra.mxu0 0
  %452 = vmatprep.subr.bf16.mxu0 0
  %453 = vmatpush1.bf16.xpose.msra.mxu0 0
  %454 = vmatprep.subr.bf16.mxu0 0
  %455 = vmatpush1.bf16.xpose.msra.mxu0 0
  %456 = vmatprep.subr.bf16.mxu0 0
  %457 = vmatpush1.bf16.xpose.msra.mxu0 0
  %458 = vmatprep.subr.bf16.mxu0 0
  %459 = vmatpush1.bf16.xpose.msra.mxu0 0
  %460 = vmatprep.subr.bf16.mxu0 0
  %461 = vmatpush1.bf16.xpose.msra.mxu0 0
  %462 = vmatprep.mubr.bf16.mxu0 0
  %463 = vmatmul.mubr.bf16.gmra.mrb[0].mxu0 %v425
  %v464 = vpop.f32.mrb[0].mxu0
  %v465 = vadd.f32 0.0, %v464
  %v466 = vpop.f32.mrb[0].mxu0
  %v467 = vpop.f32.mrb[0].mxu0
  %v468 = vpop.f32.mrb[0].mxu0
  %469 = vdwg.mxu0
  %471 = vrot.lane.b32.xlu0 %v173, 96
  %v472 = vpop.permute.xlu0 %471
  %v474 = vsel %vm178, %v173, 0
  %v477 = vsel %vm178, %v472, 0
  %479 = vmatprep.subr.bf16.mxu0 0
  %480 = vmatpush1.bf16.xpose.msra.mxu0 %v477
  %481 = vmatprep.subr.bf16.mxu0 0
  %482 = vmatpush1.bf16.xpose.msra.mxu0 0
  %483 = vmatprep.subr.bf16.mxu0 0
  %484 = vmatpush1.bf16.xpose.msra.mxu0 0
  %485 = vmatprep.subr.bf16.mxu0 0
  %486 = vmatpush1.bf16.xpose.msra.mxu0 0
  %487 = vmatprep.subr.bf16.mxu0 0
  %488 = vmatpush1.bf16.xpose.msra.mxu0 0
  %489 = vmatprep.subr.bf16.mxu0 0
  %490 = vmatpush1.bf16.xpose.msra.mxu0 0
  %491 = vmatprep.subr.bf16.mxu0 0
  %492 = vmatpush1.bf16.xpose.msra.mxu0 0
  %493 = vmatprep.subr.bf16.mxu0 0
  %494 = vmatpush1.bf16.xpose.msra.mxu0 0
  %495 = vmatprep.subr.bf16.mxu0 0
  %496 = vmatpush1.bf16.xpose.msra.mxu0 0
  %497 = vmatprep.subr.bf16.mxu0 0
  %498 = vmatpush1.bf16.xpose.msra.mxu0 0
  %499 = vmatprep.subr.bf16.mxu0 0
  %500 = vmatpush1.bf16.xpose.msra.mxu0 0
  %501 = vmatprep.subr.bf16.mxu0 0
  %502 = vmatpush1.bf16.xpose.msra.mxu0 0
  %503 = vmatprep.subr.bf16.mxu0 0
  %504 = vmatpush1.bf16.xpose.msra.mxu0 0
  %505 = vmatprep.subr.bf16.mxu0 0
  %506 = vmatpush1.bf16.xpose.msra.mxu0 0
  %507 = vmatprep.subr.bf16.mxu0 0
  %508 = vmatpush1.bf16.xpose.msra.mxu0 0
  %509 = vmatprep.subr.bf16.mxu0 0
  %510 = vmatpush1.bf16.xpose.msra.mxu0 0
  %511 = vmatprep.mubr.bf16.mxu0 0
  %512 = vmatmul.mubr.bf16.gmra.mrb[0].mxu0 %v474
  %v513 = vpop.f32.mrb[0].mxu0
  %v514 = vadd.f32 0.0, %v513
  %v515 = vpop.f32.mrb[0].mxu0
  %v516 = vpop.f32.mrb[0].mxu0
  %v517 = vpop.f32.mrb[0].mxu0
  %518 = vdwg.mxu0
  %520 = vrot.lane.b32.xlu0 %v174, 96
  %v521 = vpop.permute.xlu0 %520
  %v523 = vsel %vm178, %v174, 0
  %v526 = vsel %vm178, %v521, 0
  %528 = vmatprep.subr.bf16.mxu0 0
  %529 = vmatpush1.bf16.xpose.msra.mxu0 %v526
  %530 = vmatprep.subr.bf16.mxu0 0
  %531 = vmatpush1.bf16.xpose.msra.mxu0 0
  %532 = vmatprep.subr.bf16.mxu0 0
  %533 = vmatpush1.bf16.xpose.msra.mxu0 0
  %534 = vmatprep.subr.bf16.mxu0 0
  %535 = vmatpush1.bf16.xpose.msra.mxu0 0
  %536 = vmatprep.subr.bf16.mxu0 0
  %537 = vmatpush1.bf16.xpose.msra.mxu0 0
  %538 = vmatprep.subr.bf16.mxu0 0
  %539 = vmatpush1.bf16.xpose.msra.mxu0 0
  %540 = vmatprep.subr.bf16.mxu0 0
  %541 = vmatpush1.bf16.xpose.msra.mxu0 0
  %542 = vmatprep.subr.bf16.mxu0 0
  %543 = vmatpush1.bf16.xpose.msra.mxu0 0
  %544 = vmatprep.subr.bf16.mxu0 0
  %545 = vmatpush1.bf16.xpose.msra.mxu0 0
  %546 = vmatprep.subr.bf16.mxu0 0
  %547 = vmatpush1.bf16.xpose.msra.mxu0 0
  %548 = vmatprep.subr.bf16.mxu0 0
  %549 = vmatpush1.bf16.xpose.msra.mxu0 0
  %550 = vmatprep.subr.bf16.mxu0 0
  %551 = vmatpush1.bf16.xpose.msra.mxu0 0
  %552 = vmatprep.subr.bf16.mxu0 0
  %553 = vmatpush1.bf16.xpose.msra.mxu0 0
  %554 = vmatprep.subr.bf16.mxu0 0
  %555 = vmatpush1.bf16.xpose.msra.mxu0 0
  %556 = vmatprep.subr.bf16.mxu0 0
  %557 = vmatpush1.bf16.xpose.msra.mxu0 0
  %558 = vmatprep.subr.bf16.mxu0 0
  %559 = vmatpush1.bf16.xpose.msra.mxu0 0
  %560 = vmatprep.mubr.bf16.mxu0 0
  %561 = vmatmul.mubr.bf16.gmra.mrb[0].mxu0 %v523
  %v562 = vpop.f32.mrb[0].mxu0
  %v563 = vadd.f32 0.0, %v562
  %v564 = vpop.f32.mrb[0].mxu0
  %v565 = vpop.f32.mrb[0].mxu0
  %v566 = vpop.f32.mrb[0].mxu0
  %567 = vdwg.mxu0
  %v568 = vmul.f32 %v220, 0.35355338
  %v569 = vmul.f32 %v269, 0.35355338
  %v570 = vmul.f32 %v318, 0.35355338
  %v571 = vmul.f32 %v367, 0.35355338
  %v572 = vmul.f32 %v416, 0.35355338
  %v573 = vmul.f32 %v465, 0.35355338
  %v574 = vmul.f32 %v514, 0.35355338
  %v575 = vmul.f32 %v563, 0.35355338
  %576 = vst.msk [vmem:[%s14] sm:$0xff] %vm178, %v568
  %577 = vst.msk [vmem:[%s14 + $0x8] sm:$0xff] %vm178, %v569
  %578 = vst.msk [vmem:[%s14 + $0x10] sm:$0xff] %vm178, %v570
  %579 = vst.msk [vmem:[%s14 + $0x18] sm:$0xff] %vm178, %v571
  %580 = vst.msk [vmem:[%s14 + $0x20] sm:$0xff] %vm178, %v572
  %581 = vst.msk [vmem:[%s14 + $0x28] sm:$0xff] %vm178, %v573
  %582 = vst.msk [vmem:[%s14 + $0x30] sm:$0xff] %vm178, %v574
  %583 = vst.msk [vmem:[%s14 + $0x38] sm:$0xff] %vm178, %v575
  %v584 = vsel %vm178, %v568, -inf
  %585 = vmax.xlane.f32.xlu0 %v584
  %v586 = vpop.xlane.xlu0 %585
  %v587 = vsel %vm178, %v569, -inf
  %588 = vmax.xlane.f32.xlu0 %v587
  %v589 = vpop.xlane.xlu0 %588
  %v590 = vsel %vm178, %v570, -inf
  %591 = vmax.xlane.f32.xlu0 %v590
  %v592 = vpop.xlane.xlu0 %591
  %v593 = vsel %vm178, %v571, -inf
  %594 = vmax.xlane.f32.xlu0 %v593
  %v595 = vpop.xlane.xlu0 %594
  %v596 = vsel %vm178, %v572, -inf
  %597 = vmax.xlane.f32.xlu0 %v596
  %v598 = vpop.xlane.xlu0 %597
  %v599 = vsel %vm178, %v573, -inf
  %600 = vmax.xlane.f32.xlu0 %v599
  %v601 = vpop.xlane.xlu0 %600
  %v602 = vsel %vm178, %v574, -inf
  %603 = vmax.xlane.f32.xlu0 %v602
  %v604 = vpop.xlane.xlu0 %603
  %v605 = vsel %vm178, %v575, -inf
  %606 = vmax.xlane.f32.xlu0 %v605
  %v607 = vpop.xlane.xlu0 %606
  %v608 = vsub.f32 %v568, %v586
  %v609 = vsub.f32 %v569, %v589
  %v610 = vsub.f32 %v570, %v592
  %v611 = vsub.f32 %v571, %v595
  %v612 = vsub.f32 %v572, %v598
  %v613 = vsub.f32 %v573, %v601
  %v614 = vsub.f32 %v574, %v604
  %v615 = vsub.f32 %v575, %v607
  %v616 = vmul.f32 %v608, 1.442695
  %v617 = vpow.pop %v616
  %v618 = vmul.f32 %v609, 1.442695
  %v619 = vpow.pop %v618
  %v620 = vmul.f32 %v610, 1.442695
  %v621 = vpow.pop %v620
  %v622 = vmul.f32 %v611, 1.442695
  %v623 = vpow.pop %v622
  %v624 = vmul.f32 %v612, 1.442695
  %v625 = vpow.pop %v624
  %v626 = vmul.f32 %v613, 1.442695
  %v627 = vpow.pop %v626
  %v628 = vmul.f32 %v614, 1.442695
  %v629 = vpow.pop %v628
  %v630 = vmul.f32 %v615, 1.442695
  %v631 = vpow.pop %v630
  %v632 = vsel %vm178, %v617, 0.0
  %633 = vadd.xlane.f32.xlu0 %v632
  %v634 = vpop.xlane.xlu0 %633
  %v635 = vsel %vm178, %v619, 0.0
  %636 = vadd.xlane.f32.xlu0 %v635
  %v637 = vpop.xlane.xlu0 %636
  %v638 = vsel %vm178, %v621, 0.0
  %639 = vadd.xlane.f32.xlu0 %v638
  %v640 = vpop.xlane.xlu0 %639
  %v641 = vsel %vm178, %v623, 0.0
  %642 = vadd.xlane.f32.xlu0 %v641
  %v643 = vpop.xlane.xlu0 %642
  %v644 = vsel %vm178, %v625, 0.0
  %645 = vadd.xlane.f32.xlu0 %v644
  %v646 = vpop.xlane.xlu0 %645
  %v647 = vsel %vm178, %v627, 0.0
  %648 = vadd.xlane.f32.xlu0 %v647
  %v649 = vpop.xlane.xlu0 %648
  %v650 = vsel %vm178, %v629, 0.0
  %651 = vadd.xlane.f32.xlu0 %v650
  %v652 = vpop.xlane.xlu0 %651
  %v653 = vsel %vm178, %v631, 0.0
  %654 = vadd.xlane.f32.xlu0 %v653
  %v655 = vpop.xlane.xlu0 %654
  %v656 = vrcp.pop %v634
  %v657 = vrcp.pop %v637
  %v658 = vrcp.pop %v640
  %v659 = vrcp.pop %v643
  %v660 = vrcp.pop %v646
  %v661 = vrcp.pop %v649
  %v662 = vrcp.pop %v652
  %v663 = vrcp.pop %v655
  %v664 = vmul.f32 %v617, %v656
  %v665 = vmul.f32 %v619, %v657
  %v666 = vmul.f32 %v621, %v658
  %v667 = vmul.f32 %v623, %v659
  %v668 = vmul.f32 %v625, %v660
  %v669 = vmul.f32 %v627, %v661
  %v670 = vmul.f32 %v629, %v662
  %v671 = vmul.f32 %v631, %v663
  %v672 = vpack.c.bf16 %v664, %v664
  %v673 = vpack.c.bf16 %v665, %v665
  %v674 = vpack.c.bf16 %v666, %v666
  %v675 = vpack.c.bf16 %v667, %v667
  %v676 = vpack.c.bf16 %v668, %v668
  %v677 = vpack.c.bf16 %v669, %v669
  %v678 = vpack.c.bf16 %v670, %v670
  %v679 = vpack.c.bf16 %v671, %v671
  %680 = vrot.lane.b32.xlu0 %v167, 64
  %v681 = vpop.permute.xlu0 %680
  %v683 = vsel %vm178, %v672, 0
  %vm685 = vcmask 1043456
  %v687 = vsel %vm685, %v681, 0
  %689 = vmatprep.subr.bf16.mxu0 0
  %690 = vmatpush1.bf16.msra.mxu0 %v687
  %691 = vmatprep.subr.bf16.mxu0 0
  %692 = vmatpush1.bf16.msra.mxu0 0
  %693 = vmatprep.subr.bf16.mxu0 0
  %694 = vmatpush1.bf16.msra.mxu0 0
  %695 = vmatprep.subr.bf16.mxu0 0
  %696 = vmatpush1.bf16.msra.mxu0 0
  %697 = vmatprep.subr.bf16.mxu0 0
  %698 = vmatpush1.bf16.msra.mxu0 0
  %699 = vmatprep.subr.bf16.mxu0 0
  %700 = vmatpush1.bf16.msra.mxu0 0
  %701 = vmatprep.subr.bf16.mxu0 0
  %702 = vmatpush1.bf16.msra.mxu0 0
  %703 = vmatprep.subr.bf16.mxu0 0
  %704 = vmatpush1.bf16.msra.mxu0 0
  %705 = vmatprep.subr.bf16.mxu0 0
  %706 = vmatpush1.bf16.msra.mxu0 0
  %707 = vmatprep.subr.bf16.mxu0 0
  %708 = vmatpush1.bf16.msra.mxu0 0
  %709 = vmatprep.subr.bf16.mxu0 0
  %710 = vmatpush1.bf16.msra.mxu0 0
  %711 = vmatprep.subr.bf16.mxu0 0
  %712 = vmatpush1.bf16.msra.mxu0 0
  %713 = vmatprep.subr.bf16.mxu0 0
  %714 = vmatpush1.bf16.msra.mxu0 0
  %715 = vmatprep.subr.bf16.mxu0 0
  %716 = vmatpush1.bf16.msra.mxu0 0
  %717 = vmatprep.subr.bf16.mxu0 0
  %718 = vmatpush1.bf16.msra.mxu0 0
  %719 = vmatprep.subr.bf16.mxu0 0
  %720 = vmatpush1.bf16.msra.mxu0 0
  %721 = vmatprep.mubr.bf16.mxu0 0
  %722 = vmatmul.mubr.bf16.gmra.mrb[0].mxu0 %v683
  %v723 = vpop.f32.mrb[0].mxu0
  %v724 = vadd.f32 0.0, %v723
  %v725 = vpop.f32.mrb[0].mxu0
  %v726 = vpop.f32.mrb[0].mxu0
  %v727 = vpop.f32.mrb[0].mxu0
  %728 = vdwg.mxu0
  %729 = vrot.lane.b32.xlu0 %v168, 64
  %v730 = vpop.permute.xlu0 %729
  %v732 = vsel %vm178, %v673, 0
  %v735 = vsel %vm685, %v730, 0
  %737 = vmatprep.subr.bf16.mxu0 0
  %738 = vmatpush1.bf16.msra.mxu0 %v735
  %739 = vmatprep.subr.bf16.mxu0 0
  %740 = vmatpush1.bf16.msra.mxu0 0
  %741 = vmatprep.subr.bf16.mxu0 0
  %742 = vmatpush1.bf16.msra.mxu0 0
  %743 = vmatprep.subr.bf16.mxu0 0
  %744 = vmatpush1.bf16.msra.mxu0 0
  %745 = vmatprep.subr.bf16.mxu0 0
  %746 = vmatpush1.bf16.msra.mxu0 0
  %747 = vmatprep.subr.bf16.mxu0 0
  %748 = vmatpush1.bf16.msra.mxu0 0
  %749 = vmatprep.subr.bf16.mxu0 0
  %750 = vmatpush1.bf16.msra.mxu0 0
  %751 = vmatprep.subr.bf16.mxu0 0
  %752 = vmatpush1.bf16.msra.mxu0 0
  %753 = vmatprep.subr.bf16.mxu0 0
  %754 = vmatpush1.bf16.msra.mxu0 0
  %755 = vmatprep.subr.bf16.mxu0 0
  %756 = vmatpush1.bf16.msra.mxu0 0
  %757 = vmatprep.subr.bf16.mxu0 0
  %758 = vmatpush1.bf16.msra.mxu0 0
  %759 = vmatprep.subr.bf16.mxu0 0
  %760 = vmatpush1.bf16.msra.mxu0 0
  %761 = vmatprep.subr.bf16.mxu0 0
  %762 = vmatpush1.bf16.msra.mxu0 0
  %763 = vmatprep.subr.bf16.mxu0 0
  %764 = vmatpush1.bf16.msra.mxu0 0
  %765 = vmatprep.subr.bf16.mxu0 0
  %766 = vmatpush1.bf16.msra.mxu0 0
  %767 = vmatprep.subr.bf16.mxu0 0
  %768 = vmatpush1.bf16.msra.mxu0 0
  %769 = vmatprep.mubr.bf16.mxu0 0
  %770 = vmatmul.mubr.bf16.gmra.mrb[0].mxu0 %v732
  %v771 = vpop.f32.mrb[0].mxu0
  %v772 = vadd.f32 0.0, %v771
  %v773 = vpop.f32.mrb[0].mxu0
  %v774 = vpop.f32.mrb[0].mxu0
  %v775 = vpop.f32.mrb[0].mxu0
  %776 = vdwg.mxu0
  %777 = vrot.lane.b32.xlu0 %v169, 64
  %v778 = vpop.permute.xlu0 %777
  %v780 = vsel %vm178, %v674, 0
  %v783 = vsel %vm685, %v778, 0
  %785 = vmatprep.subr.bf16.mxu0 0
  %786 = vmatpush1.bf16.msra.mxu0 %v783
  %787 = vmatprep.subr.bf16.mxu0 0
  %788 = vmatpush1.bf16.msra.mxu0 0
  %789 = vmatprep.subr.bf16.mxu0 0
  %790 = vmatpush1.bf16.msra.mxu0 0
  %791 = vmatprep.subr.bf16.mxu0 0
  %792 = vmatpush1.bf16.msra.mxu0 0
  %793 = vmatprep.subr.bf16.mxu0 0
  %794 = vmatpush1.bf16.msra.mxu0 0
  %795 = vmatprep.subr.bf16.mxu0 0
  %796 = vmatpush1.bf16.msra.mxu0 0
  %797 = vmatprep.subr.bf16.mxu0 0
  %798 = vmatpush1.bf16.msra.mxu0 0
  %799 = vmatprep.subr.bf16.mxu0 0
  %800 = vmatpush1.bf16.msra.mxu0 0
  %801 = vmatprep.subr.bf16.mxu0 0
  %802 = vmatpush1.bf16.msra.mxu0 0
  %803 = vmatprep.subr.bf16.mxu0 0
  %804 = vmatpush1.bf16.msra.mxu0 0
  %805 = vmatprep.subr.bf16.mxu0 0
  %806 = vmatpush1.bf16.msra.mxu0 0
  %807 = vmatprep.subr.bf16.mxu0 0
  %808 = vmatpush1.bf16.msra.mxu0 0
  %809 = vmatprep.subr.bf16.mxu0 0
  %810 = vmatpush1.bf16.msra.mxu0 0
  %811 = vmatprep.subr.bf16.mxu0 0
  %812 = vmatpush1.bf16.msra.mxu0 0
  %813 = vmatprep.subr.bf16.mxu0 0
  %814 = vmatpush1.bf16.msra.mxu0 0
  %815 = vmatprep.subr.bf16.mxu0 0
  %816 = vmatpush1.bf16.msra.mxu0 0
  %817 = vmatprep.mubr.bf16.mxu0 0
  %818 = vmatmul.mubr.bf16.gmra.mrb[0].mxu0 %v780
  %v819 = vpop.f32.mrb[0].mxu0
  %v820 = vadd.f32 0.0, %v819
  %v821 = vpop.f32.mrb[0].mxu0
  %v822 = vpop.f32.mrb[0].mxu0
  %v823 = vpop.f32.mrb[0].mxu0
  %824 = vdwg.mxu0
  %825 = vrot.lane.b32.xlu0 %v170, 64
  %v826 = vpop.permute.xlu0 %825
  %v828 = vsel %vm178, %v675, 0
  %v831 = vsel %vm685, %v826, 0
  %833 = vmatprep.subr.bf16.mxu0 0
  %834 = vmatpush1.bf16.msra.mxu0 %v831
  %835 = vmatprep.subr.bf16.mxu0 0
  %836 = vmatpush1.bf16.msra.mxu0 0
  %837 = vmatprep.subr.bf16.mxu0 0
  %838 = vmatpush1.bf16.msra.mxu0 0
  %839 = vmatprep.subr.bf16.mxu0 0
  %840 = vmatpush1.bf16.msra.mxu0 0
  %841 = vmatprep.subr.bf16.mxu0 0
  %842 = vmatpush1.bf16.msra.mxu0 0
  %843 = vmatprep.subr.bf16.mxu0 0
  %844 = vmatpush1.bf16.msra.mxu0 0
  %845 = vmatprep.subr.bf16.mxu0 0
  %846 = vmatpush1.bf16.msra.mxu0 0
  %847 = vmatprep.subr.bf16.mxu0 0
  %848 = vmatpush1.bf16.msra.mxu0 0
  %849 = vmatprep.subr.bf16.mxu0 0
  %850 = vmatpush1.bf16.msra.mxu0 0
  %851 = vmatprep.subr.bf16.mxu0 0
  %852 = vmatpush1.bf16.msra.mxu0 0
  %853 = vmatprep.subr.bf16.mxu0 0
  %854 = vmatpush1.bf16.msra.mxu0 0
  %855 = vmatprep.subr.bf16.mxu0 0
  %856 = vmatpush1.bf16.msra.mxu0 0
  %857 = vmatprep.subr.bf16.mxu0 0
  %858 = vmatpush1.bf16.msra.mxu0 0
  %859 = vmatprep.subr.bf16.mxu0 0
  %860 = vmatpush1.bf16.msra.mxu0 0
  %861 = vmatprep.subr.bf16.mxu0 0
  %862 = vmatpush1.bf16.msra.mxu0 0
  %863 = vmatprep.subr.bf16.mxu0 0
  %864 = vmatpush1.bf16.msra.mxu0 0
  %865 = vmatprep.mubr.bf16.mxu0 0
  %866 = vmatmul.mubr.bf16.gmra.mrb[0].mxu0 %v828
  %v867 = vpop.f32.mrb[0].mxu0
  %v868 = vadd.f32 0.0, %v867
  %v869 = vpop.f32.mrb[0].mxu0
  %v870 = vpop.f32.mrb[0].mxu0
  %v871 = vpop.f32.mrb[0].mxu0
  %872 = vdwg.mxu0
  %873 = vrot.lane.b32.xlu0 %v171, 64
  %v874 = vpop.permute.xlu0 %873
  %v876 = vsel %vm178, %v676, 0
  %v879 = vsel %vm685, %v874, 0
  %881 = vmatprep.subr.bf16.mxu0 0
  %882 = vmatpush1.bf16.msra.mxu0 %v879
  %883 = vmatprep.subr.bf16.mxu0 0
  %884 = vmatpush1.bf16.msra.mxu0 0
  %885 = vmatprep.subr.bf16.mxu0 0
  %886 = vmatpush1.bf16.msra.mxu0 0
  %887 = vmatprep.subr.bf16.mxu0 0
  %888 = vmatpush1.bf16.msra.mxu0 0
  %889 = vmatprep.subr.bf16.mxu0 0
  %890 = vmatpush1.bf16.msra.mxu0 0
  %891 = vmatprep.subr.bf16.mxu0 0
  %892 = vmatpush1.bf16.msra.mxu0 0
  %893 = vmatprep.subr.bf16.mxu0 0
  %894 = vmatpush1.bf16.msra.mxu0 0
  %895 = vmatprep.subr.bf16.mxu0 0
  %896 = vmatpush1.bf16.msra.mxu0 0
  %897 = vmatprep.subr.bf16.mxu0 0
  %898 = vmatpush1.bf16.msra.mxu0 0
  %899 = vmatprep.subr.bf16.mxu0 0
  %900 = vmatpush1.bf16.msra.mxu0 0
  %901 = vmatprep.subr.bf16.mxu0 0
  %902 = vmatpush1.bf16.msra.mxu0 0
  %903 = vmatprep.subr.bf16.mxu0 0
  %904 = vmatpush1.bf16.msra.mxu0 0
  %905 = vmatprep.subr.bf16.mxu0 0
  %906 = vmatpush1.bf16.msra.mxu0 0
  %907 = vmatprep.subr.bf16.mxu0 0
  %908 = vmatpush1.bf16.msra.mxu0 0
  %909 = vmatprep.subr.bf16.mxu0 0
  %910 = vmatpush1.bf16.msra.mxu0 0
  %911 = vmatprep.subr.bf16.mxu0 0
  %912 = vmatpush1.bf16.msra.mxu0 0
  %913 = vmatprep.mubr.bf16.mxu0 0
  %914 = vmatmul.mubr.bf16.gmra.mrb[0].mxu0 %v876
  %v915 = vpop.f32.mrb[0].mxu0
  %v916 = vadd.f32 0.0, %v915
  %v917 = vpop.f32.mrb[0].mxu0
  %v918 = vpop.f32.mrb[0].mxu0
  %v919 = vpop.f32.mrb[0].mxu0
  %920 = vdwg.mxu0
  %921 = vrot.lane.b32.xlu0 %v172, 64
  %v922 = vpop.permute.xlu0 %921
  %v924 = vsel %vm178, %v677, 0
  %v927 = vsel %vm685, %v922, 0
  %929 = vmatprep.subr.bf16.mxu0 0
  %930 = vmatpush1.bf16.msra.mxu0 %v927
  %931 = vmatprep.subr.bf16.mxu0 0
  %932 = vmatpush1.bf16.msra.mxu0 0
  %933 = vmatprep.subr.bf16.mxu0 0
  %934 = vmatpush1.bf16.msra.mxu0 0
  %935 = vmatprep.subr.bf16.mxu0 0
  %936 = vmatpush1.bf16.msra.mxu0 0
  %937 = vmatprep.subr.bf16.mxu0 0
  %938 = vmatpush1.bf16.msra.mxu0 0
  %939 = vmatprep.subr.bf16.mxu0 0
  %940 = vmatpush1.bf16.msra.mxu0 0
  %941 = vmatprep.subr.bf16.mxu0 0
  %942 = vmatpush1.bf16.msra.mxu0 0
  %943 = vmatprep.subr.bf16.mxu0 0
  %944 = vmatpush1.bf16.msra.mxu0 0
  %945 = vmatprep.subr.bf16.mxu0 0
  %946 = vmatpush1.bf16.msra.mxu0 0
  %947 = vmatprep.subr.bf16.mxu0 0
  %948 = vmatpush1.bf16.msra.mxu0 0
  %949 = vmatprep.subr.bf16.mxu0 0
  %950 = vmatpush1.bf16.msra.mxu0 0
  %951 = vmatprep.subr.bf16.mxu0 0
  %952 = vmatpush1.bf16.msra.mxu0 0
  %953 = vmatprep.subr.bf16.mxu0 0
  %954 = vmatpush1.bf16.msra.mxu0 0
  %955 = vmatprep.subr.bf16.mxu0 0
  %956 = vmatpush1.bf16.msra.mxu0 0
  %957 = vmatprep.subr.bf16.mxu0 0
  %958 = vmatpush1.bf16.msra.mxu0 0
  %959 = vmatprep.subr.bf16.mxu0 0
  %960 = vmatpush1.bf16.msra.mxu0 0
  %961 = vmatprep.mubr.bf16.mxu0 0
  %962 = vmatmul.mubr.bf16.gmra.mrb[0].mxu0 %v924
  %v963 = vpop.f32.mrb[0].mxu0
  %v964 = vadd.f32 0.0, %v963
  %v965 = vpop.f32.mrb[0].mxu0
  %v966 = vpop.f32.mrb[0].mxu0
  %v967 = vpop.f32.mrb[0].mxu0
  %968 = vdwg.mxu0
  %969 = vrot.lane.b32.xlu0 %v173, 64
  %v970 = vpop.permute.xlu0 %969
  %v972 = vsel %vm178, %v678, 0
  %v975 = vsel %vm685, %v970, 0
  %977 = vmatprep.subr.bf16.mxu0 0
  %978 = vmatpush1.bf16.msra.mxu0 %v975
  %979 = vmatprep.subr.bf16.mxu0 0
  %980 = vmatpush1.bf16.msra.mxu0 0
  %981 = vmatprep.subr.bf16.mxu0 0
  %982 = vmatpush1.bf16.msra.mxu0 0
  %983 = vmatprep.subr.bf16.mxu0 0
  %984 = vmatpush1.bf16.msra.mxu0 0
  %985 = vmatprep.subr.bf16.mxu0 0
  %986 = vmatpush1.bf16.msra.mxu0 0
  %987 = vmatprep.subr.bf16.mxu0 0
  %988 = vmatpush1.bf16.msra.mxu0 0
  %989 = vmatprep.subr.bf16.mxu0 0
  %990 = vmatpush1.bf16.msra.mxu0 0
  %991 = vmatprep.subr.bf16.mxu0 0
  %992 = vmatpush1.bf16.msra.mxu0 0
  %993 = vmatprep.subr.bf16.mxu0 0
  %994 = vmatpush1.bf16.msra.mxu0 0
  %995 = vmatprep.subr.bf16.mxu0 0
  %996 = vmatpush1.bf16.msra.mxu0 0
  %997 = vmatprep.subr.bf16.mxu0 0
  %998 = vmatpush1.bf16.msra.mxu0 0
  %999 = vmatprep.subr.bf16.mxu0 0
  %1000 = vmatpush1.bf16.msra.mxu0 0
  %1001 = vmatprep.subr.bf16.mxu0 0
  %1002 = vmatpush1.bf16.msra.mxu0 0
  %1003 = vmatprep.subr.bf16.mxu0 0
  %1004 = vmatpush1.bf16.msra.mxu0 0
  %1005 = vmatprep.subr.bf16.mxu0 0
  %1006 = vmatpush1.bf16.msra.mxu0 0
  %1007 = vmatprep.subr.bf16.mxu0 0
  %1008 = vmatpush1.bf16.msra.mxu0 0
  %1009 = vmatprep.mubr.bf16.mxu0 0
  %1010 = vmatmul.mubr.bf16.gmra.mrb[0].mxu0 %v972
  %v1011 = vpop.f32.mrb[0].mxu0
  %v1012 = vadd.f32 0.0, %v1011
  %v1013 = vpop.f32.mrb[0].mxu0
  %v1014 = vpop.f32.mrb[0].mxu0
  %v1015 = vpop.f32.mrb[0].mxu0
  %1016 = vdwg.mxu0
  %1017 = vrot.lane.b32.xlu0 %v174, 64
  %v1018 = vpop.permute.xlu0 %1017
  %v1020 = vsel %vm178, %v679, 0
  %v1023 = vsel %vm685, %v1018, 0
  %1025 = vmatprep.subr.bf16.mxu0 0
  %1026 = vmatpush1.bf16.msra.mxu0 %v1023
  %1027 = vmatprep.subr.bf16.mxu0 0
  %1028 = vmatpush1.bf16.msra.mxu0 0
  %1029 = vmatprep.subr.bf16.mxu0 0
  %1030 = vmatpush1.bf16.msra.mxu0 0
  %1031 = vmatprep.subr.bf16.mxu0 0
  %1032 = vmatpush1.bf16.msra.mxu0 0
  %1033 = vmatprep.subr.bf16.mxu0 0
  %1034 = vmatpush1.bf16.msra.mxu0 0
  %1035 = vmatprep.subr.bf16.mxu0 0
  %1036 = vmatpush1.bf16.msra.mxu0 0
  %1037 = vmatprep.subr.bf16.mxu0 0
  %1038 = vmatpush1.bf16.msra.mxu0 0
  %1039 = vmatprep.subr.bf16.mxu0 0
  %1040 = vmatpush1.bf16.msra.mxu0 0
  %1041 = vmatprep.subr.bf16.mxu0 0
  %1042 = vmatpush1.bf16.msra.mxu0 0
  %1043 = vmatprep.subr.bf16.mxu0 0
  %1044 = vmatpush1.bf16.msra.mxu0 0
  %1045 = vmatprep.subr.bf16.mxu0 0
  %1046 = vmatpush1.bf16.msra.mxu0 0
  %1047 = vmatprep.subr.bf16.mxu0 0
  %1048 = vmatpush1.bf16.msra.mxu0 0
  %1049 = vmatprep.subr.bf16.mxu0 0
  %1050 = vmatpush1.bf16.msra.mxu0 0
  %1051 = vmatprep.subr.bf16.mxu0 0
  %1052 = vmatpush1.bf16.msra.mxu0 0
  %1053 = vmatprep.subr.bf16.mxu0 0
  %1054 = vmatpush1.bf16.msra.mxu0 0
  %1055 = vmatprep.subr.bf16.mxu0 0
  %1056 = vmatpush1.bf16.msra.mxu0 0
  %1057 = vmatprep.mubr.bf16.mxu0 0
  %1058 = vmatmul.mubr.bf16.gmra.mrb[0].mxu0 %v1020
  %v1059 = vpop.f32.mrb[0].mxu0
  %v1060 = vadd.f32 0.0, %v1059
  %v1061 = vpop.f32.mrb[0].mxu0
  %v1062 = vpop.f32.mrb[0].mxu0
  %v1063 = vpop.f32.mrb[0].mxu0
  %1064 = vdwg.mxu0
  %v1065 = vpack.c.bf16 %v772, %v724
  %v1066 = vpack.c.bf16 %v868, %v820
  %v1067 = vpack.c.bf16 %v964, %v916
  %v1068 = vpack.c.bf16 %v1060, %v1012
  %v1069 = vld [vmem:[%s3] sm:$0xff]
  %v1070 = vpack.c.bf16 %v1069, %v1069
  %v1071 = vld [vmem:[#allocation2] sm:$0xff]
  %v1072 = vld [vmem:[#allocation2 + $0x8] sm:$0xff]
  %v1073 = vld [vmem:[#allocation2 + $0x10] sm:$0xff]
  %v1074 = vld [vmem:[#allocation2 + $0x18] sm:$0xff]
  %v1075 = vld [vmem:[#allocation2 + $0x20] sm:$0xff]
  %v1076 = vld [vmem:[#allocation2 + $0x28] sm:$0xff]
  %v1077 = vld [vmem:[#allocation2 + $0x30] sm:$0xff]
  %v1078 = vld [vmem:[#allocation2 + $0x38] sm:$0xff]
  %v1079 = vpack.c.bf16 %v1071, %v1071
  %v1080 = vpack.c.bf16 %v1072, %v1072
  %v1081 = vpack.c.bf16 %v1073, %v1073
  %v1082 = vpack.c.bf16 %v1074, %v1074
  %v1083 = vpack.c.bf16 %v1075, %v1075
  %v1084 = vpack.c.bf16 %v1076, %v1076
  %v1085 = vpack.c.bf16 %v1077, %v1077
  %v1086 = vpack.c.bf16 %v1078, %v1078
  %1088 = vrot.lane.b32.xlu0 %v1079, 120
  %v1089 = vpop.permute.xlu0 %1088
  %1090 = vrot.lane.b32.xlu0 %v1079, 88
  %v1091 = vpop.permute.xlu0 %1090
  %v1093 = vsel %vm178, %v1089, 0
  %v1096 = vsel %vm178, %v1091, 0
  %1098 = vmatprep.subr.bf16.mxu0 0
  %1099 = vmatpush1.bf16.xpose.msra.mxu0 %v1096
  %1100 = vmatprep.subr.bf16.mxu0 0
  %1101 = vmatpush1.bf16.xpose.msra.mxu0 0
  %1102 = vmatprep.subr.bf16.mxu0 0
  %1103 = vmatpush1.bf16.xpose.msra.mxu0 0
  %1104 = vmatprep.subr.bf16.mxu0 0
  %1105 = vmatpush1.bf16.xpose.msra.mxu0 0
  %1106 = vmatprep.subr.bf16.mxu0 0
  %1107 = vmatpush1.bf16.xpose.msra.mxu0 0
  %1108 = vmatprep.subr.bf16.mxu0 0
  %1109 = vmatpush1.bf16.xpose.msra.mxu0 0
  %1110 = vmatprep.subr.bf16.mxu0 0
  %1111 = vmatpush1.bf16.xpose.msra.mxu0 0
  %1112 = vmatprep.subr.bf16.mxu0 0
  %1113 = vmatpush1.bf16.xpose.msra.mxu0 0
  %1114 = vmatprep.subr.bf16.mxu0 0
  %1115 = vmatpush1.bf16.xpose.msra.mxu0 0
  %1116 = vmatprep.subr.bf16.mxu0 0
  %1117 = vmatpush1.bf16.xpose.msra.mxu0 0
  %1118 = vmatprep.subr.bf16.mxu0 0
  %1119 = vmatpush1.bf16.xpose.msra.mxu0 0
  %1120 = vmatprep.subr.bf16.mxu0 0
  %1121 = vmatpush1.bf16.xpose.msra.mxu0 0
  %1122 = vmatprep.subr.bf16.mxu0 0
  %1123 = vmatpush1.bf16.xpose.msra.mxu0 0
  %1124 = vmatprep.subr.bf16.mxu0 0
  %1125 = vmatpush1.bf16.xpose.msra.mxu0 0
  %1126 = vmatprep.subr.bf16.mxu0 0
  %1127 = vmatpush1.bf16.xpose.msra.mxu0 0
  %1128 = vmatprep.subr.bf16.mxu0 0
  %1129 = vmatpush1.bf16.xpose.msra.mxu0 0
  %1130 = vmatprep.mubr.bf16.mxu0 0
  %1131 = vmatmul.mubr.bf16.gmra.mrb[0].mxu0 %v1093
  %v1132 = vpop.f32.mrb[0].mxu0
  %v1133 = vadd.f32 0.0, %v1132
  %v1134 = vpop.f32.mrb[0].mxu0
  %v1135 = vpop.f32.mrb[0].mxu0
  %v1136 = vpop.f32.mrb[0].mxu0
  %1137 = vdwg.mxu0
  %1139 = vrot.lane.b32.xlu0 %v1080, 120
  %v1140 = vpop.permute.xlu0 %1139
  %1141 = vrot.lane.b32.xlu0 %v1080, 88
  %v1142 = vpop.permute.xlu0 %1141
  %v1144 = vsel %vm178, %v1140, 0
  %v1147 = vsel %vm178, %v1142, 0
  %1149 = vmatprep.subr.bf16.mxu0 0
  %1150 = vmatpush1.bf16.xpose.msra.mxu0 %v1147
  %1151 = vmatprep.subr.bf16.mxu0 0
  %1152 = vmatpush1.bf16.xpose.msra.mxu0 0
  %1153 = vmatprep.subr.bf16.mxu0 0
  %1154 = vmatpush1.bf16.xpose.msra.mxu0 0
  %1155 = vmatprep.subr.bf16.mxu0 0
  %1156 = vmatpush1.bf16.xpose.msra.mxu0 0
  %1157 = vmatprep.subr.bf16.mxu0 0
  %1158 = vmatpush1.bf16.xpose.msra.mxu0 0
  %1159 = vmatprep.subr.bf16.mxu0 0
  %1160 = vmatpush1.bf16.xpose.msra.mxu0 0
  %1161 = vmatprep.subr.bf16.mxu0 0
  %1162 = vmatpush1.bf16.xpose.msra.mxu0 0
  %1163 = vmatprep.subr.bf16.mxu0 0
  %1164 = vmatpush1.bf16.xpose.msra.mxu0 0
  %1165 = vmatprep.subr.bf16.mxu0 0
  %1166 = vmatpush1.bf16.xpose.msra.mxu0 0
  %1167 = vmatprep.subr.bf16.mxu0 0
  %1168 = vmatpush1.bf16.xpose.msra.mxu0 0
  %1169 = vmatprep.subr.bf16.mxu0 0
  %1170 = vmatpush1.bf16.xpose.msra.mxu0 0
  %1171 = vmatprep.subr.bf16.mxu0 0
  %1172 = vmatpush1.bf16.xpose.msra.mxu0 0
  %1173 = vmatprep.subr.bf16.mxu0 0
  %1174 = vmatpush1.bf16.xpose.msra.mxu0 0
  %1175 = vmatprep.subr.bf16.mxu0 0
  %1176 = vmatpush1.bf16.xpose.msra.mxu0 0
  %1177 = vmatprep.subr.bf16.mxu0 0
  %1178 = vmatpush1.bf16.xpose.msra.mxu0 0
  %1179 = vmatprep.subr.bf16.mxu0 0
  %1180 = vmatpush1.bf16.xpose.msra.mxu0 0
  %1181 = vmatprep.mubr.bf16.mxu0 0
  %1182 = vmatmul.mubr.bf16.gmra.mrb[0].mxu0 %v1144
  %v1183 = vpop.f32.mrb[0].mxu0
  %v1184 = vadd.f32 0.0, %v1183
  %v1185 = vpop.f32.mrb[0].mxu0
  %v1186 = vpop.f32.mrb[0].mxu0
  %v1187 = vpop.f32.mrb[0].mxu0
  %1188 = vdwg.mxu0
  %1190 = vrot.lane.b32.xlu0 %v1081, 120
  %v1191 = vpop.permute.xlu0 %1190
  %1192 = vrot.lane.b32.xlu0 %v1081, 88
  %v1193 = vpop.permute.xlu0 %1192
  %v1195 = vsel %vm178, %v1191, 0
  %v1198 = vsel %vm178, %v1193, 0
  %1200 = vmatprep.subr.bf16.mxu0 0
  %1201 = vmatpush1.bf16.xpose.msra.mxu0 %v1198
  %1202 = vmatprep.subr.bf16.mxu0 0
  %1203 = vmatpush1.bf16.xpose.msra.mxu0 0
  %1204 = vmatprep.subr.bf16.mxu0 0
  %1205 = vmatpush1.bf16.xpose.msra.mxu0 0
  %1206 = vmatprep.subr.bf16.mxu0 0
  %1207 = vmatpush1.bf16.xpose.msra.mxu0 0
  %1208 = vmatprep.subr.bf16.mxu0 0
  %1209 = vmatpush1.bf16.xpose.msra.mxu0 0
  %1210 = vmatprep.subr.bf16.mxu0 0
  %1211 = vmatpush1.bf16.xpose.msra.mxu0 0
  %1212 = vmatprep.subr.bf16.mxu0 0
  %1213 = vmatpush1.bf16.xpose.msra.mxu0 0
  %1214 = vmatprep.subr.bf16.mxu0 0
  %1215 = vmatpush1.bf16.xpose.msra.mxu0 0
  %1216 = vmatprep.subr.bf16.mxu0 0
  %1217 = vmatpush1.bf16.xpose.msra.mxu0 0
  %1218 = vmatprep.subr.bf16.mxu0 0
  %1219 = vmatpush1.bf16.xpose.msra.mxu0 0
  %1220 = vmatprep.subr.bf16.mxu0 0
  %1221 = vmatpush1.bf16.xpose.msra.mxu0 0
  %1222 = vmatprep.subr.bf16.mxu0 0
  %1223 = vmatpush1.bf16.xpose.msra.mxu0 0
  %1224 = vmatprep.subr.bf16.mxu0 0
  %1225 = vmatpush1.bf16.xpose.msra.mxu0 0
  %1226 = vmatprep.subr.bf16.mxu0 0
  %1227 = vmatpush1.bf16.xpose.msra.mxu0 0
  %1228 = vmatprep.subr.bf16.mxu0 0
  %1229 = vmatpush1.bf16.xpose.msra.mxu0 0
  %1230 = vmatprep.subr.bf16.mxu0 0
  %1231 = vmatpush1.bf16.xpose.msra.mxu0 0
  %1232 = vmatprep.mubr.bf16.mxu0 0
  %1233 = vmatmul.mubr.bf16.gmra.mrb[0].mxu0 %v1195
  %v1234 = vpop.f32.mrb[0].mxu0
  %v1235 = vadd.f32 0.0, %v1234
  %v1236 = vpop.f32.mrb[0].mxu0
  %v1237 = vpop.f32.mrb[0].mxu0
  %v1238 = vpop.f32.mrb[0].mxu0
  %1239 = vdwg.mxu0
  %1241 = vrot.lane.b32.xlu0 %v1082, 120
  %v1242 = vpop.permute.xlu0 %1241
  %1243 = vrot.lane.b32.xlu0 %v1082, 88
  %v1244 = vpop.permute.xlu0 %1243
  %v1246 = vsel %vm178, %v1242, 0
  %v1249 = vsel %vm178, %v1244, 0
  %1251 = vmatprep.subr.bf16.mxu0 0
  %1252 = vmatpush1.bf16.xpose.msra.mxu0 %v1249
  %1253 = vmatprep.subr.bf16.mxu0 0
  %1254 = vmatpush1.bf16.xpose.msra.mxu0 0
  %1255 = vmatprep.subr.bf16.mxu0 0
  %1256 = vmatpush1.bf16.xpose.msra.mxu0 0
  %1257 = vmatprep.subr.bf16.mxu0 0
  %1258 = vmatpush1.bf16.xpose.msra.mxu0 0
  %1259 = vmatprep.subr.bf16.mxu0 0
  %1260 = vmatpush1.bf16.xpose.msra.mxu0 0
  %1261 = vmatprep.subr.bf16.mxu0 0
  %1262 = vmatpush1.bf16.xpose.msra.mxu0 0
  %1263 = vmatprep.subr.bf16.mxu0 0
  %1264 = vmatpush1.bf16.xpose.msra.mxu0 0
  %1265 = vmatprep.subr.bf16.mxu0 0
  %1266 = vmatpush1.bf16.xpose.msra.mxu0 0
  %1267 = vmatprep.subr.bf16.mxu0 0
  %1268 = vmatpush1.bf16.xpose.msra.mxu0 0
  %1269 = vmatprep.subr.bf16.mxu0 0
  %1270 = vmatpush1.bf16.xpose.msra.mxu0 0
  %1271 = vmatprep.subr.bf16.mxu0 0
  %1272 = vmatpush1.bf16.xpose.msra.mxu0 0
  %1273 = vmatprep.subr.bf16.mxu0 0
  %1274 = vmatpush1.bf16.xpose.msra.mxu0 0
  %1275 = vmatprep.subr.bf16.mxu0 0
  %1276 = vmatpush1.bf16.xpose.msra.mxu0 0
  %1277 = vmatprep.subr.bf16.mxu0 0
  %1278 = vmatpush1.bf16.xpose.msra.mxu0 0
  %1279 = vmatprep.subr.bf16.mxu0 0
  %1280 = vmatpush1.bf16.xpose.msra.mxu0 0
  %1281 = vmatprep.subr.bf16.mxu0 0
  %1282 = vmatpush1.bf16.xpose.msra.mxu0 0
  %1283 = vmatprep.mubr.bf16.mxu0 0
  %1284 = vmatmul.mubr.bf16.gmra.mrb[0].mxu0 %v1246
  %v1285 = vpop.f32.mrb[0].mxu0
  %v1286 = vadd.f32 0.0, %v1285
  %v1287 = vpop.f32.mrb[0].mxu0
  %v1288 = vpop.f32.mrb[0].mxu0
  %v1289 = vpop.f32.mrb[0].mxu0
  %1290 = vdwg.mxu0
  %1292 = vrot.lane.b32.xlu0 %v1083, 120
  %v1293 = vpop.permute.xlu0 %1292
  %1294 = vrot.lane.b32.xlu0 %v1083, 88
  %v1295 = vpop.permute.xlu0 %1294
  %v1297 = vsel %vm178, %v1293, 0
  %v1300 = vsel %vm178, %v1295, 0
  %1302 = vmatprep.subr.bf16.mxu0 0
  %1303 = vmatpush1.bf16.xpose.msra.mxu0 %v1300
  %1304 = vmatprep.subr.bf16.mxu0 0
  %1305 = vmatpush1.bf16.xpose.msra.mxu0 0
  %1306 = vmatprep.subr.bf16.mxu0 0
  %1307 = vmatpush1.bf16.xpose.msra.mxu0 0
  %1308 = vmatprep.subr.bf16.mxu0 0
  %1309 = vmatpush1.bf16.xpose.msra.mxu0 0
  %1310 = vmatprep.subr.bf16.mxu0 0
  %1311 = vmatpush1.bf16.xpose.msra.mxu0 0
  %1312 = vmatprep.subr.bf16.mxu0 0
  %1313 = vmatpush1.bf16.xpose.msra.mxu0 0
  %1314 = vmatprep.subr.bf16.mxu0 0
  %1315 = vmatpush1.bf16.xpose.msra.mxu0 0
  %1316 = vmatprep.subr.bf16.mxu0 0
  %1317 = vmatpush1.bf16.xpose.msra.mxu0 0
  %1318 = vmatprep.subr.bf16.mxu0 0
  %1319 = vmatpush1.bf16.xpose.msra.mxu0 0
  %1320 = vmatprep.subr.bf16.mxu0 0
  %1321 = vmatpush1.bf16.xpose.msra.mxu0 0
  %1322 = vmatprep.subr.bf16.mxu0 0
  %1323 = vmatpush1.bf16.xpose.msra.mxu0 0
  %1324 = vmatprep.subr.bf16.mxu0 0
  %1325 = vmatpush1.bf16.xpose.msra.mxu0 0
  %1326 = vmatprep.subr.bf16.mxu0 0
  %1327 = vmatpush1.bf16.xpose.msra.mxu0 0
  %1328 = vmatprep.subr.bf16.mxu0 0
  %1329 = vmatpush1.bf16.xpose.msra.mxu0 0
  %1330 = vmatprep.subr.bf16.mxu0 0
  %1331 = vmatpush1.bf16.xpose.msra.mxu0 0
  %1332 = vmatprep.subr.bf16.mxu0 0
  %1333 = vmatpush1.bf16.xpose.msra.mxu0 0
  %1334 = vmatprep.mubr.bf16.mxu0 0
  %1335 = vmatmul.mubr.bf16.gmra.mrb[0].mxu0 %v1297
  %v1336 = vpop.f32.mrb[0].mxu0
  %v1337 = vadd.f32 0.0, %v1336
  %v1338 = vpop.f32.mrb[0].mxu0
  %v1339 = vpop.f32.mrb[0].mxu0
  %v1340 = vpop.f32.mrb[0].mxu0
  %1341 = vdwg.mxu0
  %1343 = vrot.lane.b32.xlu0 %v1084, 120
  %v1344 = vpop.permute.xlu0 %1343
  %1345 = vrot.lane.b32.xlu0 %v1084, 88
  %v1346 = vpop.permute.xlu0 %1345
  %v1348 = vsel %vm178, %v1344, 0
  %v1351 = vsel %vm178, %v1346, 0
  %1353 = vmatprep.subr.bf16.mxu0 0
  %1354 = vmatpush1.bf16.xpose.msra.mxu0 %v1351
  %1355 = vmatprep.subr.bf16.mxu0 0
  %1356 = vmatpush1.bf16.xpose.msra.mxu0 0
  %1357 = vmatprep.subr.bf16.mxu0 0
  %1358 = vmatpush1.bf16.xpose.msra.mxu0 0
  %1359 = vmatprep.subr.bf16.mxu0 0
  %1360 = vmatpush1.bf16.xpose.msra.mxu0 0
  %1361 = vmatprep.subr.bf16.mxu0 0
  %1362 = vmatpush1.bf16.xpose.msra.mxu0 0
  %1363 = vmatprep.subr.bf16.mxu0 0
  %1364 = vmatpush1.bf16.xpose.msra.mxu0 0
  %1365 = vmatprep.subr.bf16.mxu0 0
  %1366 = vmatpush1.bf16.xpose.msra.mxu0 0
  %1367 = vmatprep.subr.bf16.mxu0 0
  %1368 = vmatpush1.bf16.xpose.msra.mxu0 0
  %1369 = vmatprep.subr.bf16.mxu0 0
  %1370 = vmatpush1.bf16.xpose.msra.mxu0 0
  %1371 = vmatprep.subr.bf16.mxu0 0
  %1372 = vmatpush1.bf16.xpose.msra.mxu0 0
  %1373 = vmatprep.subr.bf16.mxu0 0
  %1374 = vmatpush1.bf16.xpose.msra.mxu0 0
  %1375 = vmatprep.subr.bf16.mxu0 0
  %1376 = vmatpush1.bf16.xpose.msra.mxu0 0
  %1377 = vmatprep.subr.bf16.mxu0 0
  %1378 = vmatpush1.bf16.xpose.msra.mxu0 0
  %1379 = vmatprep.subr.bf16.mxu0 0
  %1380 = vmatpush1.bf16.xpose.msra.mxu0 0
  %1381 = vmatprep.subr.bf16.mxu0 0
  %1382 = vmatpush1.bf16.xpose.msra.mxu0 0
  %1383 = vmatprep.subr.bf16.mxu0 0
  %1384 = vmatpush1.bf16.xpose.msra.mxu0 0
  %1385 = vmatprep.mubr.bf16.mxu0 0
  %1386 = vmatmul.mubr.bf16.gmra.mrb[0].mxu0 %v1348
  %v1387 = vpop.f32.mrb[0].mxu0
  %v1388 = vadd.f32 0.0, %v1387
  %v1389 = vpop.f32.mrb[0].mxu0
  %v1390 = vpop.f32.mrb[0].mxu0
  %v1391 = vpop.f32.mrb[0].mxu0
  %1392 = vdwg.mxu0
  %1394 = vrot.lane.b32.xlu0 %v1085, 120
  %v1395 = vpop.permute.xlu0 %1394
  %1396 = vrot.lane.b32.xlu0 %v1085, 88
  %v1397 = vpop.permute.xlu0 %1396
  %v1399 = vsel %vm178, %v1395, 0
  %v1402 = vsel %vm178, %v1397, 0
  %1404 = vmatprep.subr.bf16.mxu0 0
  %1405 = vmatpush1.bf16.xpose.msra.mxu0 %v1402
  %1406 = vmatprep.subr.bf16.mxu0 0
  %1407 = vmatpush1.bf16.xpose.msra.mxu0 0
  %1408 = vmatprep.subr.bf16.mxu0 0
  %1409 = vmatpush1.bf16.xpose.msra.mxu0 0
  %1410 = vmatprep.subr.bf16.mxu0 0
  %1411 = vmatpush1.bf16.xpose.msra.mxu0 0
  %1412 = vmatprep.subr.bf16.mxu0 0
  %1413 = vmatpush1.bf16.xpose.msra.mxu0 0
  %1414 = vmatprep.subr.bf16.mxu0 0
  %1415 = vmatpush1.bf16.xpose.msra.mxu0 0
  %1416 = vmatprep.subr.bf16.mxu0 0
  %1417 = vmatpush1.bf16.xpose.msra.mxu0 0
  %1418 = vmatprep.subr.bf16.mxu0 0
  %1419 = vmatpush1.bf16.xpose.msra.mxu0 0
  %1420 = vmatprep.subr.bf16.mxu0 0
  %1421 = vmatpush1.bf16.xpose.msra.mxu0 0
  %1422 = vmatprep.subr.bf16.mxu0 0
  %1423 = vmatpush1.bf16.xpose.msra.mxu0 0
  %1424 = vmatprep.subr.bf16.mxu0 0
  %1425 = vmatpush1.bf16.xpose.msra.mxu0 0
  %1426 = vmatprep.subr.bf16.mxu0 0
  %1427 = vmatpush1.bf16.xpose.msra.mxu0 0
  %1428 = vmatprep.subr.bf16.mxu0 0
  %1429 = vmatpush1.bf16.xpose.msra.mxu0 0
  %1430 = vmatprep.subr.bf16.mxu0 0
  %1431 = vmatpush1.bf16.xpose.msra.mxu0 0
  %1432 = vmatprep.subr.bf16.mxu0 0
  %1433 = vmatpush1.bf16.xpose.msra.mxu0 0
  %1434 = vmatprep.subr.bf16.mxu0 0
  %1435 = vmatpush1.bf16.xpose.msra.mxu0 0
  %1436 = vmatprep.mubr.bf16.mxu0 0
  %1437 = vmatmul.mubr.bf16.gmra.mrb[0].mxu0 %v1399
  %v1438 = vpop.f32.mrb[0].mxu0
  %v1439 = vadd.f32 0.0, %v1438
  %v1440 = vpop.f32.mrb[0].mxu0
  %v1441 = vpop.f32.mrb[0].mxu0
  %v1442 = vpop.f32.mrb[0].mxu0
  %1443 = vdwg.mxu0
  %1445 = vrot.lane.b32.xlu0 %v1086, 120
  %v1446 = vpop.permute.xlu0 %1445
  %1447 = vrot.lane.b32.xlu0 %v1086, 88
  %v1448 = vpop.permute.xlu0 %1447
  %v1450 = vsel %vm178, %v1446, 0
  %v1453 = vsel %vm178, %v1448, 0
  %1455 = vmatprep.subr.bf16.mxu0 0
  %1456 = vmatpush1.bf16.xpose.msra.mxu0 %v1453
  %1457 = vmatprep.subr.bf16.mxu0 0
  %1458 = vmatpush1.bf16.xpose.msra.mxu0 0
  %1459 = vmatprep.subr.bf16.mxu0 0
  %1460 = vmatpush1.bf16.xpose.msra.mxu0 0
  %1461 = vmatprep.subr.bf16.mxu0 0
  %1462 = vmatpush1.bf16.xpose.msra.mxu0 0
  %1463 = vmatprep.subr.bf16.mxu0 0
  %1464 = vmatpush1.bf16.xpose.msra.mxu0 0
  %1465 = vmatprep.subr.bf16.mxu0 0
  %1466 = vmatpush1.bf16.xpose.msra.mxu0 0
  %1467 = vmatprep.subr.bf16.mxu0 0
  %1468 = vmatpush1.bf16.xpose.msra.mxu0 0
  %1469 = vmatprep.subr.bf16.mxu0 0
  %1470 = vmatpush1.bf16.xpose.msra.mxu0 0
  %1471 = vmatprep.subr.bf16.mxu0 0
  %1472 = vmatpush1.bf16.xpose.msra.mxu0 0
  %1473 = vmatprep.subr.bf16.mxu0 0
  %1474 = vmatpush1.bf16.xpose.msra.mxu0 0
  %1475 = vmatprep.subr.bf16.mxu0 0
  %1476 = vmatpush1.bf16.xpose.msra.mxu0 0
  %1477 = vmatprep.subr.bf16.mxu0 0
  %1478 = vmatpush1.bf16.xpose.msra.mxu0 0
  %1479 = vmatprep.subr.bf16.mxu0 0
  %1480 = vmatpush1.bf16.xpose.msra.mxu0 0
  %1481 = vmatprep.subr.bf16.mxu0 0
  %1482 = vmatpush1.bf16.xpose.msra.mxu0 0
  %1483 = vmatprep.subr.bf16.mxu0 0
  %1484 = vmatpush1.bf16.xpose.msra.mxu0 0
  %1485 = vmatprep.subr.bf16.mxu0 0
  %1486 = vmatpush1.bf16.xpose.msra.mxu0 0
  %1487 = vmatprep.mubr.bf16.mxu0 0
  %1488 = vmatmul.mubr.bf16.gmra.mrb[0].mxu0 %v1450
  %v1489 = vpop.f32.mrb[0].mxu0
  %v1490 = vadd.f32 0.0, %v1489
  %v1491 = vpop.f32.mrb[0].mxu0
  %v1492 = vpop.f32.mrb[0].mxu0
  %v1493 = vpop.f32.mrb[0].mxu0
  %1494 = vdwg.mxu0
  %v1495 = vmul.f32 %v1133, 0.35355338
  %v1496 = vmul.f32 %v1184, 0.35355338
  %v1497 = vmul.f32 %v1235, 0.35355338
  %v1498 = vmul.f32 %v1286, 0.35355338
  %v1499 = vmul.f32 %v1337, 0.35355338
  %v1500 = vmul.f32 %v1388, 0.35355338
  %v1501 = vmul.f32 %v1439, 0.35355338
  %v1502 = vmul.f32 %v1490, 0.35355338
  %s1503 = scalar_lea.vmem %s14, 64
  %1504 = vst.msk [vmem:[%s1503] sm:$0xff] %vm178, %v1495
  %1505 = vst.msk [vmem:[%s1503 + $0x8] sm:$0xff] %vm178, %v1496
  %1506 = vst.msk [vmem:[%s1503 + $0x10] sm:$0xff] %vm178, %v1497
  %1507 = vst.msk [vmem:[%s1503 + $0x18] sm:$0xff] %vm178, %v1498
  %1508 = vst.msk [vmem:[%s1503 + $0x20] sm:$0xff] %vm178, %v1499
  %1509 = vst.msk [vmem:[%s1503 + $0x28] sm:$0xff] %vm178, %v1500
  %1510 = vst.msk [vmem:[%s1503 + $0x30] sm:$0xff] %vm178, %v1501
  %1511 = vst.msk [vmem:[%s1503 + $0x38] sm:$0xff] %vm178, %v1502
  %v1512 = vsel %vm178, %v1495, -inf
  %1513 = vmax.xlane.f32.xlu0 %v1512
  %v1514 = vpop.xlane.xlu0 %1513
  %v1515 = vsel %vm178, %v1496, -inf
  %1516 = vmax.xlane.f32.xlu0 %v1515
  %v1517 = vpop.xlane.xlu0 %1516
  %v1518 = vsel %vm178, %v1497, -inf
  %1519 = vmax.xlane.f32.xlu0 %v1518
  %v1520 = vpop.xlane.xlu0 %1519
  %v1521 = vsel %vm178, %v1498, -inf
  %1522 = vmax.xlane.f32.xlu0 %v1521
  %v1523 = vpop.xlane.xlu0 %1522
  %v1524 = vsel %vm178, %v1499, -inf
  %1525 = vmax.xlane.f32.xlu0 %v1524
  %v1526 = vpop.xlane.xlu0 %1525
  %v1527 = vsel %vm178, %v1500, -inf
  %1528 = vmax.xlane.f32.xlu0 %v1527
  %v1529 = vpop.xlane.xlu0 %1528
  %v1530 = vsel %vm178, %v1501, -inf
  %1531 = vmax.xlane.f32.xlu0 %v1530
  %v1532 = vpop.xlane.xlu0 %1531
  %v1533 = vsel %vm178, %v1502, -inf
  %1534 = vmax.xlane.f32.xlu0 %v1533
  %v1535 = vpop.xlane.xlu0 %1534
  %v1536 = vsub.f32 %v1495, %v1514
  %v1537 = vsub.f32 %v1496, %v1517
  %v1538 = vsub.f32 %v1497, %v1520
  %v1539 = vsub.f32 %v1498, %v1523
  %v1540 = vsub.f32 %v1499, %v1526
  %v1541 = vsub.f32 %v1500, %v1529
  %v1542 = vsub.f32 %v1501, %v1532
  %v1543 = vsub.f32 %v1502, %v1535
  %v1544 = vmul.f32 %v1536, 1.442695
  %v1545 = vpow.pop %v1544
  %v1546 = vmul.f32 %v1537, 1.442695
  %v1547 = vpow.pop %v1546
  %v1548 = vmul.f32 %v1538, 1.442695
  %v1549 = vpow.pop %v1548
  %v1550 = vmul.f32 %v1539, 1.442695
  %v1551 = vpow.pop %v1550
  %v1552 = vmul.f32 %v1540, 1.442695
  %v1553 = vpow.pop %v1552
  %v1554 = vmul.f32 %v1541, 1.442695
  %v1555 = vpow.pop %v1554
  %v1556 = vmul.f32 %v1542, 1.442695
  %v1557 = vpow.pop %v1556
  %v1558 = vmul.f32 %v1543, 1.442695
  %v1559 = vpow.pop %v1558
  %v1560 = vsel %vm178, %v1545, 0.0
  %1561 = vadd.xlane.f32.xlu0 %v1560
  %v1562 = vpop.xlane.xlu0 %1561
  %v1563 = vsel %vm178, %v1547, 0.0
  %1564 = vadd.xlane.f32.xlu0 %v1563
  %v1565 = vpop.xlane.xlu0 %1564
  %v1566 = vsel %vm178, %v1549, 0.0
  %1567 = vadd.xlane.f32.xlu0 %v1566
  %v1568 = vpop.xlane.xlu0 %1567
  %v1569 = vsel %vm178, %v1551, 0.0
  %1570 = vadd.xlane.f32.xlu0 %v1569
  %v1571 = vpop.xlane.xlu0 %1570
  %v1572 = vsel %vm178, %v1553, 0.0
  %1573 = vadd.xlane.f32.xlu0 %v1572
  %v1574 = vpop.xlane.xlu0 %1573
  %v1575 = vsel %vm178, %v1555, 0.0
  %1576 = vadd.xlane.f32.xlu0 %v1575
  %v1577 = vpop.xlane.xlu0 %1576
  %v1578 = vsel %vm178, %v1557, 0.0
  %1579 = vadd.xlane.f32.xlu0 %v1578
  %v1580 = vpop.xlane.xlu0 %1579
  %v1581 = vsel %vm178, %v1559, 0.0
  %1582 = vadd.xlane.f32.xlu0 %v1581
  %v1583 = vpop.xlane.xlu0 %1582
  %v1584 = vrcp.pop %v1562
  %v1585 = vrcp.pop %v1565
  %v1586 = vrcp.pop %v1568
  %v1587 = vrcp.pop %v1571
  %v1588 = vrcp.pop %v1574
  %v1589 = vrcp.pop %v1577
  %v1590 = vrcp.pop %v1580
  %v1591 = vrcp.pop %v1583
  %v1592 = vmul.f32 %v1545, %v1584
  %v1593 = vmul.f32 %v1547, %v1585
  %v1594 = vmul.f32 %v1549, %v1586
  %v1595 = vmul.f32 %v1551, %v1587
  %v1596 = vmul.f32 %v1553, %v1588
  %v1597 = vmul.f32 %v1555, %v1589
  %v1598 = vmul.f32 %v1557, %v1590
  %v1599 = vmul.f32 %v1559, %v1591
  %v1600 = vpack.c.bf16 %v1592, %v1592
  %v1601 = vpack.c.bf16 %v1593, %v1593
  %v1602 = vpack.c.bf16 %v1594, %v1594
  %v1603 = vpack.c.bf16 %v1595, %v1595
  %v1604 = vpack.c.bf16 %v1596, %v1596
  %v1605 = vpack.c.bf16 %v1597, %v1597
  %v1606 = vpack.c.bf16 %v1598, %v1598
  %v1607 = vpack.c.bf16 %v1599, %v1599
  %1608 = vrot.lane.b32.xlu0 %v1079, 56
  %v1609 = vpop.permute.xlu0 %1608
  %v1611 = vsel %vm178, %v1600, 0
  %v1614 = vsel %vm685, %v1609, 0
  %1616 = vmatprep.subr.bf16.mxu0 0
  %1617 = vmatpush1.bf16.msra.mxu0 %v1614
  %1618 = vmatprep.subr.bf16.mxu0 0
  %1619 = vmatpush1.bf16.msra.mxu0 0
  %1620 = vmatprep.subr.bf16.mxu0 0
  %1621 = vmatpush1.bf16.msra.mxu0 0
  %1622 = vmatprep.subr.bf16.mxu0 0
  %1623 = vmatpush1.bf16.msra.mxu0 0
  %1624 = vmatprep.subr.bf16.mxu0 0
  %1625 = vmatpush1.bf16.msra.mxu0 0
  %1626 = vmatprep.subr.bf16.mxu0 0
  %1627 = vmatpush1.bf16.msra.mxu0 0
  %1628 = vmatprep.subr.bf16.mxu0 0
  %1629 = vmatpush1.bf16.msra.mxu0 0
  %1630 = vmatprep.subr.bf16.mxu0 0
  %1631 = vmatpush1.bf16.msra.mxu0 0
  %1632 = vmatprep.subr.bf16.mxu0 0
  %1633 = vmatpush1.bf16.msra.mxu0 0
  %1634 = vmatprep.subr.bf16.mxu0 0
  %1635 = vmatpush1.bf16.msra.mxu0 0
  %1636 = vmatprep.subr.bf16.mxu0 0
  %1637 = vmatpush1.bf16.msra.mxu0 0
  %1638 = vmatprep.subr.bf16.mxu0 0
  %1639 = vmatpush1.bf16.msra.mxu0 0
  %1640 = vmatprep.subr.bf16.mxu0 0
  %1641 = vmatpush1.bf16.msra.mxu0 0
  %1642 = vmatprep.subr.bf16.mxu0 0
  %1643 = vmatpush1.bf16.msra.mxu0 0
  %1644 = vmatprep.subr.bf16.mxu0 0
  %1645 = vmatpush1.bf16.msra.mxu0 0
  %1646 = vmatprep.subr.bf16.mxu0 0
  %1647 = vmatpush1.bf16.msra.mxu0 0
  %1648 = vmatprep.mubr.bf16.mxu0 0
  %1649 = vmatmul.mubr.bf16.gmra.mrb[0].mxu0 %v1611
  %v1650 = vpop.f32.mrb[0].mxu0
  %v1651 = vadd.f32 0.0, %v1650
  %v1652 = vpop.f32.mrb[0].mxu0
  %v1653 = vpop.f32.mrb[0].mxu0
  %v1654 = vpop.f32.mrb[0].mxu0
  %1655 = vdwg.mxu0
  %1656 = vrot.lane.b32.xlu0 %v1080, 56
  %v1657 = vpop.permute.xlu0 %1656
  %v1659 = vsel %vm178, %v1601, 0
  %v1662 = vsel %vm685, %v1657, 0
  %1664 = vmatprep.subr.bf16.mxu0 0
  %1665 = vmatpush1.bf16.msra.mxu0 %v1662
  %1666 = vmatprep.subr.bf16.mxu0 0
  %1667 = vmatpush1.bf16.msra.mxu0 0
  %1668 = vmatprep.subr.bf16.mxu0 0
  %1669 = vmatpush1.bf16.msra.mxu0 0
  %1670 = vmatprep.subr.bf16.mxu0 0
  %1671 = vmatpush1.bf16.msra.mxu0 0
  %1672 = vmatprep.subr.bf16.mxu0 0
  %1673 = vmatpush1.bf16.msra.mxu0 0
  %1674 = vmatprep.subr.bf16.mxu0 0
  %1675 = vmatpush1.bf16.msra.mxu0 0
  %1676 = vmatprep.subr.bf16.mxu0 0
  %1677 = vmatpush1.bf16.msra.mxu0 0
  %1678 = vmatprep.subr.bf16.mxu0 0
  %1679 = vmatpush1.bf16.msra.mxu0 0
  %1680 = vmatprep.subr.bf16.mxu0 0
  %1681 = vmatpush1.bf16.msra.mxu0 0
  %1682 = vmatprep.subr.bf16.mxu0 0
  %1683 = vmatpush1.bf16.msra.mxu0 0
  %1684 = vmatprep.subr.bf16.mxu0 0
  %1685 = vmatpush1.bf16.msra.mxu0 0
  %1686 = vmatprep.subr.bf16.mxu0 0
  %1687 = vmatpush1.bf16.msra.mxu0 0
  %1688 = vmatprep.subr.bf16.mxu0 0
  %1689 = vmatpush1.bf16.msra.mxu0 0
  %1690 = vmatprep.subr.bf16.mxu0 0
  %1691 = vmatpush1.bf16.msra.mxu0 0
  %1692 = vmatprep.subr.bf16.mxu0 0
  %1693 = vmatpush1.bf16.msra.mxu0 0
  %1694 = vmatprep.subr.bf16.mxu0 0
  %1695 = vmatpush1.bf16.msra.mxu0 0
  %1696 = vmatprep.mubr.bf16.mxu0 0
  %1697 = vmatmul.mubr.bf16.gmra.mrb[0].mxu0 %v1659
  %v1698 = vpop.f32.mrb[0].mxu0
  %v1699 = vadd.f32 0.0, %v1698
  %v1700 = vpop.f32.mrb[0].mxu0
  %v1701 = vpop.f32.mrb[0].mxu0
  %v1702 = vpop.f32.mrb[0].mxu0
  %1703 = vdwg.mxu0
  %1704 = vrot.lane.b32.xlu0 %v1081, 56
  %v1705 = vpop.permute.xlu0 %1704
  %v1707 = vsel %vm178, %v1602, 0
  %v1710 = vsel %vm685, %v1705, 0
  %1712 = vmatprep.subr.bf16.mxu0 0
  %1713 = vmatpush1.bf16.msra.mxu0 %v1710
  %1714 = vmatprep.subr.bf16.mxu0 0
  %1715 = vmatpush1.bf16.msra.mxu0 0
  %1716 = vmatprep.subr.bf16.mxu0 0
  %1717 = vmatpush1.bf16.msra.mxu0 0
  %1718 = vmatprep.subr.bf16.mxu0 0
  %1719 = vmatpush1.bf16.msra.mxu0 0
  %1720 = vmatprep.subr.bf16.mxu0 0
  %1721 = vmatpush1.bf16.msra.mxu0 0
  %1722 = vmatprep.subr.bf16.mxu0 0
  %1723 = vmatpush1.bf16.msra.mxu0 0
  %1724 = vmatprep.subr.bf16.mxu0 0
  %1725 = vmatpush1.bf16.msra.mxu0 0
  %1726 = vmatprep.subr.bf16.mxu0 0
  %1727 = vmatpush1.bf16.msra.mxu0 0
  %1728 = vmatprep.subr.bf16.mxu0 0
  %1729 = vmatpush1.bf16.msra.mxu0 0
  %1730 = vmatprep.subr.bf16.mxu0 0
  %1731 = vmatpush1.bf16.msra.mxu0 0
  %1732 = vmatprep.subr.bf16.mxu0 0
  %1733 = vmatpush1.bf16.msra.mxu0 0
  %1734 = vmatprep.subr.bf16.mxu0 0
  %1735 = vmatpush1.bf16.msra.mxu0 0
  %1736 = vmatprep.subr.bf16.mxu0 0
  %1737 = vmatpush1.bf16.msra.mxu0 0
  %1738 = vmatprep.subr.bf16.mxu0 0
  %1739 = vmatpush1.bf16.msra.mxu0 0
  %1740 = vmatprep.subr.bf16.mxu0 0
  %1741 = vmatpush1.bf16.msra.mxu0 0
  %1742 = vmatprep.subr.bf16.mxu0 0
  %1743 = vmatpush1.bf16.msra.mxu0 0
  %1744 = vmatprep.mubr.bf16.mxu0 0
  %1745 = vmatmul.mubr.bf16.gmra.mrb[0].mxu0 %v1707
  %v1746 = vpop.f32.mrb[0].mxu0
  %v1747 = vadd.f32 0.0, %v1746
  %v1748 = vpop.f32.mrb[0].mxu0
  %v1749 = vpop.f32.mrb[0].mxu0
  %v1750 = vpop.f32.mrb[0].mxu0
  %1751 = vdwg.mxu0
  %1752 = vrot.lane.b32.xlu0 %v1082, 56
  %v1753 = vpop.permute.xlu0 %1752
  %v1755 = vsel %vm178, %v1603, 0
  %v1758 = vsel %vm685, %v1753, 0
  %1760 = vmatprep.subr.bf16.mxu0 0
  %1761 = vmatpush1.bf16.msra.mxu0 %v1758
  %1762 = vmatprep.subr.bf16.mxu0 0
  %1763 = vmatpush1.bf16.msra.mxu0 0
  %1764 = vmatprep.subr.bf16.mxu0 0
  %1765 = vmatpush1.bf16.msra.mxu0 0
  %1766 = vmatprep.subr.bf16.mxu0 0
  %1767 = vmatpush1.bf16.msra.mxu0 0
  %1768 = vmatprep.subr.bf16.mxu0 0
  %1769 = vmatpush1.bf16.msra.mxu0 0
  %1770 = vmatprep.subr.bf16.mxu0 0
  %1771 = vmatpush1.bf16.msra.mxu0 0
  %1772 = vmatprep.subr.bf16.mxu0 0
  %1773 = vmatpush1.bf16.msra.mxu0 0
  %1774 = vmatprep.subr.bf16.mxu0 0
  %1775 = vmatpush1.bf16.msra.mxu0 0
  %1776 = vmatprep.subr.bf16.mxu0 0
  %1777 = vmatpush1.bf16.msra.mxu0 0
  %1778 = vmatprep.subr.bf16.mxu0 0
  %1779 = vmatpush1.bf16.msra.mxu0 0
  %1780 = vmatprep.subr.bf16.mxu0 0
  %1781 = vmatpush1.bf16.msra.mxu0 0
  %1782 = vmatprep.subr.bf16.mxu0 0
  %1783 = vmatpush1.bf16.msra.mxu0 0
  %1784 = vmatprep.subr.bf16.mxu0 0
  %1785 = vmatpush1.bf16.msra.mxu0 0
  %1786 = vmatprep.subr.bf16.mxu0 0
  %1787 = vmatpush1.bf16.msra.mxu0 0
  %1788 = vmatprep.subr.bf16.mxu0 0
  %1789 = vmatpush1.bf16.msra.mxu0 0
  %1790 = vmatprep.subr.bf16.mxu0 0
  %1791 = vmatpush1.bf16.msra.mxu0 0
  %1792 = vmatprep.mubr.bf16.mxu0 0
  %1793 = vmatmul.mubr.bf16.gmra.mrb[0].mxu0 %v1755
  %v1794 = vpop.f32.mrb[0].mxu0
  %v1795 = vadd.f32 0.0, %v1794
  %v1796 = vpop.f32.mrb[0].mxu0
  %v1797 = vpop.f32.mrb[0].mxu0
  %v1798 = vpop.f32.mrb[0].mxu0
  %1799 = vdwg.mxu0
  %1800 = vrot.lane.b32.xlu0 %v1083, 56
  %v1801 = vpop.permute.xlu0 %1800
  %v1803 = vsel %vm178, %v1604, 0
  %v1806 = vsel %vm685, %v1801, 0
  %1808 = vmatprep.subr.bf16.mxu0 0
  %1809 = vmatpush1.bf16.msra.mxu0 %v1806
  %1810 = vmatprep.subr.bf16.mxu0 0
  %1811 = vmatpush1.bf16.msra.mxu0 0
  %1812 = vmatprep.subr.bf16.mxu0 0
  %1813 = vmatpush1.bf16.msra.mxu0 0
  %1814 = vmatprep.subr.bf16.mxu0 0
  %1815 = vmatpush1.bf16.msra.mxu0 0
  %1816 = vmatprep.subr.bf16.mxu0 0
  %1817 = vmatpush1.bf16.msra.mxu0 0
  %1818 = vmatprep.subr.bf16.mxu0 0
  %1819 = vmatpush1.bf16.msra.mxu0 0
  %1820 = vmatprep.subr.bf16.mxu0 0
  %1821 = vmatpush1.bf16.msra.mxu0 0
  %1822 = vmatprep.subr.bf16.mxu0 0
  %1823 = vmatpush1.bf16.msra.mxu0 0
  %1824 = vmatprep.subr.bf16.mxu0 0
  %1825 = vmatpush1.bf16.msra.mxu0 0
  %1826 = vmatprep.subr.bf16.mxu0 0
  %1827 = vmatpush1.bf16.msra.mxu0 0
  %1828 = vmatprep.subr.bf16.mxu0 0
  %1829 = vmatpush1.bf16.msra.mxu0 0
  %1830 = vmatprep.subr.bf16.mxu0 0
  %1831 = vmatpush1.bf16.msra.mxu0 0
  %1832 = vmatprep.subr.bf16.mxu0 0
  %1833 = vmatpush1.bf16.msra.mxu0 0
  %1834 = vmatprep.subr.bf16.mxu0 0
  %1835 = vmatpush1.bf16.msra.mxu0 0
  %1836 = vmatprep.subr.bf16.mxu0 0
  %1837 = vmatpush1.bf16.msra.mxu0 0
  %1838 = vmatprep.subr.bf16.mxu0 0
  %1839 = vmatpush1.bf16.msra.mxu0 0
  %1840 = vmatprep.mubr.bf16.mxu0 0
  %1841 = vmatmul.mubr.bf16.gmra.mrb[0].mxu0 %v1803
  %v1842 = vpop.f32.mrb[0].mxu0
  %v1843 = vadd.f32 0.0, %v1842
  %v1844 = vpop.f32.mrb[0].mxu0
  %v1845 = vpop.f32.mrb[0].mxu0
  %v1846 = vpop.f32.mrb[0].mxu0
  %1847 = vdwg.mxu0
  %1848 = vrot.lane.b32.xlu0 %v1084, 56
  %v1849 = vpop.permute.xlu0 %1848
  %v1851 = vsel %vm178, %v1605, 0
  %v1854 = vsel %vm685, %v1849, 0
  %1856 = vmatprep.subr.bf16.mxu0 0
  %1857 = vmatpush1.bf16.msra.mxu0 %v1854
  %1858 = vmatprep.subr.bf16.mxu0 0
  %1859 = vmatpush1.bf16.msra.mxu0 0
  %1860 = vmatprep.subr.bf16.mxu0 0
  %1861 = vmatpush1.bf16.msra.mxu0 0
  %1862 = vmatprep.subr.bf16.mxu0 0
  %1863 = vmatpush1.bf16.msra.mxu0 0
  %1864 = vmatprep.subr.bf16.mxu0 0
  %1865 = vmatpush1.bf16.msra.mxu0 0
  %1866 = vmatprep.subr.bf16.mxu0 0
  %1867 = vmatpush1.bf16.msra.mxu0 0
  %1868 = vmatprep.subr.bf16.mxu0 0
  %1869 = vmatpush1.bf16.msra.mxu0 0
  %1870 = vmatprep.subr.bf16.mxu0 0
  %1871 = vmatpush1.bf16.msra.mxu0 0
  %1872 = vmatprep.subr.bf16.mxu0 0
  %1873 = vmatpush1.bf16.msra.mxu0 0
  %1874 = vmatprep.subr.bf16.mxu0 0
  %1875 = vmatpush1.bf16.msra.mxu0 0
  %1876 = vmatprep.subr.bf16.mxu0 0
  %1877 = vmatpush1.bf16.msra.mxu0 0
  %1878 = vmatprep.subr.bf16.mxu0 0
  %1879 = vmatpush1.bf16.msra.mxu0 0
  %1880 = vmatprep.subr.bf16.mxu0 0
  %1881 = vmatpush1.bf16.msra.mxu0 0
  %1882 = vmatprep.subr.bf16.mxu0 0
  %1883 = vmatpush1.bf16.msra.mxu0 0
  %1884 = vmatprep.subr.bf16.mxu0 0
  %1885 = vmatpush1.bf16.msra.mxu0 0
  %1886 = vmatprep.subr.bf16.mxu0 0
  %1887 = vmatpush1.bf16.msra.mxu0 0
  %1888 = vmatprep.mubr.bf16.mxu0 0
  %1889 = vmatmul.mubr.bf16.gmra.mrb[0].mxu0 %v1851
  %v1890 = vpop.f32.mrb[0].mxu0
  %v1891 = vadd.f32 0.0, %v1890
  %v1892 = vpop.f32.mrb[0].mxu0
  %v1893 = vpop.f32.mrb[0].mxu0
  %v1894 = vpop.f32.mrb[0].mxu0
  %1895 = vdwg.mxu0
  %1896 = vrot.lane.b32.xlu0 %v1085, 56
  %v1897 = vpop.permute.xlu0 %1896
  %v1899 = vsel %vm178, %v1606, 0
  %v1902 = vsel %vm685, %v1897, 0
  %1904 = vmatprep.subr.bf16.mxu0 0
  %1905 = vmatpush1.bf16.msra.mxu0 %v1902
  %1906 = vmatprep.subr.bf16.mxu0 0
  %1907 = vmatpush1.bf16.msra.mxu0 0
  %1908 = vmatprep.subr.bf16.mxu0 0
  %1909 = vmatpush1.bf16.msra.mxu0 0
  %1910 = vmatprep.subr.bf16.mxu0 0
  %1911 = vmatpush1.bf16.msra.mxu0 0
  %1912 = vmatprep.subr.bf16.mxu0 0
  %1913 = vmatpush1.bf16.msra.mxu0 0
  %1914 = vmatprep.subr.bf16.mxu0 0
  %1915 = vmatpush1.bf16.msra.mxu0 0
  %1916 = vmatprep.subr.bf16.mxu0 0
  %1917 = vmatpush1.bf16.msra.mxu0 0
  %1918 = vmatprep.subr.bf16.mxu0 0
  %1919 = vmatpush1.bf16.msra.mxu0 0
  %1920 = vmatprep.subr.bf16.mxu0 0
  %1921 = vmatpush1.bf16.msra.mxu0 0
  %1922 = vmatprep.subr.bf16.mxu0 0
  %1923 = vmatpush1.bf16.msra.mxu0 0
  %1924 = vmatprep.subr.bf16.mxu0 0
  %1925 = vmatpush1.bf16.msra.mxu0 0
  %1926 = vmatprep.subr.bf16.mxu0 0
  %1927 = vmatpush1.bf16.msra.mxu0 0
  %1928 = vmatprep.subr.bf16.mxu0 0
  %1929 = vmatpush1.bf16.msra.mxu0 0
  %1930 = vmatprep.subr.bf16.mxu0 0
  %1931 = vmatpush1.bf16.msra.mxu0 0
  %1932 = vmatprep.subr.bf16.mxu0 0
  %1933 = vmatpush1.bf16.msra.mxu0 0
  %1934 = vmatprep.subr.bf16.mxu0 0
  %1935 = vmatpush1.bf16.msra.mxu0 0
  %1936 = vmatprep.mubr.bf16.mxu0 0
  %1937 = vmatmul.mubr.bf16.gmra.mrb[0].mxu0 %v1899
  %v1938 = vpop.f32.mrb[0].mxu0
  %v1939 = vadd.f32 0.0, %v1938
  %v1940 = vpop.f32.mrb[0].mxu0
  %v1941 = vpop.f32.mrb[0].mxu0
  %v1942 = vpop.f32.mrb[0].mxu0
  %1943 = vdwg.mxu0
  %1944 = vrot.lane.b32.xlu0 %v1086, 56
  %v1945 = vpop.permute.xlu0 %1944
  %v1947 = vsel %vm178, %v1607, 0
  %v1950 = vsel %vm685, %v1945, 0
  %1952 = vmatprep.subr.bf16.mxu0 0
  %1953 = vmatpush1.bf16.msra.mxu0 %v1950
  %1954 = vmatprep.subr.bf16.mxu0 0
  %1955 = vmatpush1.bf16.msra.mxu0 0
  %1956 = vmatprep.subr.bf16.mxu0 0
  %1957 = vmatpush1.bf16.msra.mxu0 0
  %1958 = vmatprep.subr.bf16.mxu0 0
  %1959 = vmatpush1.bf16.msra.mxu0 0
  %1960 = vmatprep.subr.bf16.mxu0 0
  %1961 = vmatpush1.bf16.msra.mxu0 0
  %1962 = vmatprep.subr.bf16.mxu0 0
  %1963 = vmatpush1.bf16.msra.mxu0 0
  %1964 = vmatprep.subr.bf16.mxu0 0
  %1965 = vmatpush1.bf16.msra.mxu0 0
  %1966 = vmatprep.subr.bf16.mxu0 0
  %1967 = vmatpush1.bf16.msra.mxu0 0
  %1968 = vmatprep.subr.bf16.mxu0 0
  %1969 = vmatpush1.bf16.msra.mxu0 0
  %1970 = vmatprep.subr.bf16.mxu0 0
  %1971 = vmatpush1.bf16.msra.mxu0 0
  %1972 = vmatprep.subr.bf16.mxu0 0
  %1973 = vmatpush1.bf16.msra.mxu0 0
  %1974 = vmatprep.subr.bf16.mxu0 0
  %1975 = vmatpush1.bf16.msra.mxu0 0
  %1976 = vmatprep.subr.bf16.mxu0 0
  %1977 = vmatpush1.bf16.msra.mxu0 0
  %1978 = vmatprep.subr.bf16.mxu0 0
  %1979 = vmatpush1.bf16.msra.mxu0 0
  %1980 = vmatprep.subr.bf16.mxu0 0
  %1981 = vmatpush1.bf16.msra.mxu0 0
  %1982 = vmatprep.subr.bf16.mxu0 0
  %1983 = vmatpush1.bf16.msra.mxu0 0
  %1984 = vmatprep.mubr.bf16.mxu0 0
  %1985 = vmatmul.mubr.bf16.gmra.mrb[0].mxu0 %v1947
  %v1986 = vpop.f32.mrb[0].mxu0
  %v1987 = vadd.f32 0.0, %v1986
  %v1988 = vpop.f32.mrb[0].mxu0
  %v1989 = vpop.f32.mrb[0].mxu0
  %v1990 = vpop.f32.mrb[0].mxu0
  %1991 = vdwg.mxu0
  %v1992 = vpack.c.bf16 %v1699, %v1651
  %v1993 = vpack.c.bf16 %v1795, %v1747
  %v1994 = vpack.c.bf16 %v1891, %v1843
  %v1995 = vpack.c.bf16 %v1987, %v1939
  %v1996 = vld [vmem:[%s3 + $0x8] sm:$0xff]
  %v1997 = vpack.c.bf16 %v1996, %v1996
  %v1999 = vsel %vm178, %v1992, 0
  %v2002 = vsel %vm178, %v1993, 0
  %v2005 = vsel %vm178, %v1994, 0
  %v2008 = vsel %vm178, %v1995, 0
  %v2011 = vsel %vm685, %v1997, 0
  %2013 = vmatprep.subr.bf16.mxu0 0
  %2014 = vmatpush1.bf16.msra.mxu0 %v2011
  %2015 = vmatprep.subr.bf16.mxu0 0
  %2016 = vmatpush1.bf16.msra.mxu0 0
  %2017 = vmatprep.subr.bf16.mxu0 0
  %2018 = vmatpush1.bf16.msra.mxu0 0
  %2019 = vmatprep.subr.bf16.mxu0 0
  %2020 = vmatpush1.bf16.msra.mxu0 0
  %2021 = vmatprep.subr.bf16.mxu0 0
  %2022 = vmatpush1.bf16.msra.mxu0 0
  %2023 = vmatprep.subr.bf16.mxu0 0
  %2024 = vmatpush1.bf16.msra.mxu0 0
  %2025 = vmatprep.subr.bf16.mxu0 0
  %2026 = vmatpush1.bf16.msra.mxu0 0
  %2027 = vmatprep.subr.bf16.mxu0 0
  %2028 = vmatpush1.bf16.msra.mxu0 0
  %2029 = vmatprep.subr.bf16.mxu0 0
  %2030 = vmatpush1.bf16.msra.mxu0 0
  %2031 = vmatprep.subr.bf16.mxu0 0
  %2032 = vmatpush1.bf16.msra.mxu0 0
  %2033 = vmatprep.subr.bf16.mxu0 0
  %2034 = vmatpush1.bf16.msra.mxu0 0
  %2035 = vmatprep.subr.bf16.mxu0 0
  %2036 = vmatpush1.bf16.msra.mxu0 0
  %2037 = vmatprep.subr.bf16.mxu0 0
  %2038 = vmatpush1.bf16.msra.mxu0 0
  %2039 = vmatprep.subr.bf16.mxu0 0
  %2040 = vmatpush1.bf16.msra.mxu0 0
  %2041 = vmatprep.subr.bf16.mxu0 0
  %2042 = vmatpush1.bf16.msra.mxu0 0
  %2043 = vmatprep.subr.bf16.mxu0 0
  %2044 = vmatpush1.bf16.msra.mxu0 0
  %2045 = vmatprep.mubr.bf16.mxu0 0
  %2046 = vmatmul.mubr.bf16.gmra.mrb[0].mxu0 %v1999
  %v2047 = vpop.f32.mrb[0].mxu0
  %v2048 = vadd.f32 0.0, %v2047
  %v2049 = vpop.f32.mrb[0].mxu0
  %v2050 = vpop.f32.mrb[0].mxu0
  %v2051 = vadd.f32 0.0, %v2050
  %v2052 = vpop.f32.mrb[0].mxu0
  %2053 = vmatprep.mubr.bf16.mxu0 0
  %2054 = vmatmul.mubr.bf16.gmra.mrb[0].mxu0 %v2002
  %v2055 = vpop.f32.mrb[0].mxu0
  %v2056 = vadd.f32 0.0, %v2055
  %v2057 = vpop.f32.mrb[0].mxu0
  %v2058 = vpop.f32.mrb[0].mxu0
  %v2059 = vadd.f32 0.0, %v2058
  %v2060 = vpop.f32.mrb[0].mxu0
  %2061 = vmatprep.mubr.bf16.mxu0 0
  %2062 = vmatmul.mubr.bf16.gmra.mrb[0].mxu0 %v2005
  %v2063 = vpop.f32.mrb[0].mxu0
  %v2064 = vadd.f32 0.0, %v2063
  %v2065 = vpop.f32.mrb[0].mxu0
  %v2066 = vpop.f32.mrb[0].mxu0
  %v2067 = vadd.f32 0.0, %v2066
  %v2068 = vpop.f32.mrb[0].mxu0
  %2069 = vmatprep.mubr.bf16.mxu0 0
  %2070 = vmatmul.mubr.bf16.gmra.mrb[0].mxu0 %v2008
  %v2071 = vpop.f32.mrb[0].mxu0
  %v2072 = vadd.f32 0.0, %v2071
  %v2073 = vpop.f32.mrb[0].mxu0
  %v2074 = vpop.f32.mrb[0].mxu0
  %v2075 = vadd.f32 0.0, %v2074
  %v2076 = vpop.f32.mrb[0].mxu0
  %2077 = vdwg.mxu0
  %v2079 = vsel %vm178, %v1065, 0
  %v2082 = vsel %vm178, %v1066, 0
  %v2085 = vsel %vm178, %v1067, 0
  %v2088 = vsel %vm178, %v1068, 0
  %v2091 = vsel %vm685, %v1070, 0
  %2093 = vmatprep.subr.bf16.mxu0 0
  %2094 = vmatpush1.bf16.msra.mxu0 %v2091
  %2095 = vmatprep.subr.bf16.mxu0 0
  %2096 = vmatpush1.bf16.msra.mxu0 0
  %2097 = vmatprep.subr.bf16.mxu0 0
  %2098 = vmatpush1.bf16.msra.mxu0 0
  %2099 = vmatprep.subr.bf16.mxu0 0
  %2100 = vmatpush1.bf16.msra.mxu0 0
  %2101 = vmatprep.subr.bf16.mxu0 0
  %2102 = vmatpush1.bf16.msra.mxu0 0
  %2103 = vmatprep.subr.bf16.mxu0 0
  %2104 = vmatpush1.bf16.msra.mxu0 0
  %2105 = vmatprep.subr.bf16.mxu0 0
  %2106 = vmatpush1.bf16.msra.mxu0 0
  %2107 = vmatprep.subr.bf16.mxu0 0
  %2108 = vmatpush1.bf16.msra.mxu0 0
  %2109 = vmatprep.subr.bf16.mxu0 0
  %2110 = vmatpush1.bf16.msra.mxu0 0
  %2111 = vmatprep.subr.bf16.mxu0 0
  %2112 = vmatpush1.bf16.msra.mxu0 0
  %2113 = vmatprep.subr.bf16.mxu0 0
  %2114 = vmatpush1.bf16.msra.mxu0 0
  %2115 = vmatprep.subr.bf16.mxu0 0
  %2116 = vmatpush1.bf16.msra.mxu0 0
  %2117 = vmatprep.subr.bf16.mxu0 0
  %2118 = vmatpush1.bf16.msra.mxu0 0
  %2119 = vmatprep.subr.bf16.mxu0 0
  %2120 = vmatpush1.bf16.msra.mxu0 0
  %2121 = vmatprep.subr.bf16.mxu0 0
  %2122 = vmatpush1.bf16.msra.mxu0 0
  %2123 = vmatprep.subr.bf16.mxu0 0
  %2124 = vmatpush1.bf16.msra.mxu0 0
  %2125 = vmatprep.mubr.bf16.mxu0 0
  %2126 = vmatmul.mubr.bf16.gmra.mrb[0].mxu0 %v2079
  %v2127 = vpop.f32.mrb[0].mxu0
  %v2128 = vadd.f32 %v2048, %v2127
  %v2129 = vpop.f32.mrb[0].mxu0
  %v2130 = vpop.f32.mrb[0].mxu0
  %v2131 = vadd.f32 %v2051, %v2130
  %v2132 = vpop.f32.mrb[0].mxu0
  %2133 = vmatprep.mubr.bf16.mxu0 0
  %2134 = vmatmul.mubr.bf16.gmra.mrb[0].mxu0 %v2082
  %v2135 = vpop.f32.mrb[0].mxu0
  %v2136 = vadd.f32 %v2056, %v2135
  %v2137 = vpop.f32.mrb[0].mxu0
  %v2138 = vpop.f32.mrb[0].mxu0
  %v2139 = vadd.f32 %v2059, %v2138
  %v2140 = vpop.f32.mrb[0].mxu0
  %2141 = vmatprep.mubr.bf16.mxu0 0
  %2142 = vmatmul.mubr.bf16.gmra.mrb[0].mxu0 %v2085
  %v2143 = vpop.f32.mrb[0].mxu0
  %v2144 = vadd.f32 %v2064, %v2143
  %v2145 = vpop.f32.mrb[0].mxu0
  %v2146 = vpop.f32.mrb[0].mxu0
  %v2147 = vadd.f32 %v2067, %v2146
  %v2148 = vpop.f32.mrb[0].mxu0
  %2149 = vmatprep.mubr.bf16.mxu0 0
  %2150 = vmatmul.mubr.bf16.gmra.mrb[0].mxu0 %v2088
  %v2151 = vpop.f32.mrb[0].mxu0
  %v2152 = vadd.f32 %v2072, %v2151
  %v2153 = vpop.f32.mrb[0].mxu0
  %v2154 = vpop.f32.mrb[0].mxu0
  %v2155 = vadd.f32 %v2075, %v2154
  %v2156 = vpop.f32.mrb[0].mxu0
  %2157 = vdwg.mxu0
  %v2158 = vld [vmem:[#allocation2] sm:$0xff]
  %v2159 = vld [vmem:[#allocation2 + $0x8] sm:$0xff]
  %v2160 = vld [vmem:[#allocation2 + $0x10] sm:$0xff]
  %v2161 = vld [vmem:[#allocation2 + $0x18] sm:$0xff]
  %v2162 = vld [vmem:[#allocation2 + $0x20] sm:$0xff]
  %v2163 = vld [vmem:[#allocation2 + $0x28] sm:$0xff]
  %v2164 = vld [vmem:[#allocation2 + $0x30] sm:$0xff]
  %v2165 = vld [vmem:[#allocation2 + $0x38] sm:$0xff]
  %v2166 = vpack.c.bf16 %v2158, %v2158
  %v2167 = vpack.c.bf16 %v2159, %v2159
  %v2168 = vpack.c.bf16 %v2160, %v2160
  %v2169 = vpack.c.bf16 %v2161, %v2161
  %v2170 = vpack.c.bf16 %v2162, %v2162
  %v2171 = vpack.c.bf16 %v2163, %v2163
  %v2172 = vpack.c.bf16 %v2164, %v2164
  %v2173 = vpack.c.bf16 %v2165, %v2165
  %2175 = vrot.lane.b32.xlu0 %v2166, 112
  %v2176 = vpop.permute.xlu0 %2175
  %2177 = vrot.lane.b32.xlu0 %v2166, 80
  %v2178 = vpop.permute.xlu0 %2177
  %v2180 = vsel %vm178, %v2176, 0
  %v2183 = vsel %vm178, %v2178, 0
  %2185 = vmatprep.subr.bf16.mxu0 0
  %2186 = vmatpush1.bf16.xpose.msra.mxu0 %v2183
  %2187 = vmatprep.subr.bf16.mxu0 0
  %2188 = vmatpush1.bf16.xpose.msra.mxu0 0
  %2189 = vmatprep.subr.bf16.mxu0 0
  %2190 = vmatpush1.bf16.xpose.msra.mxu0 0
  %2191 = vmatprep.subr.bf16.mxu0 0
  %2192 = vmatpush1.bf16.xpose.msra.mxu0 0
  %2193 = vmatprep.subr.bf16.mxu0 0
  %2194 = vmatpush1.bf16.xpose.msra.mxu0 0
  %2195 = vmatprep.subr.bf16.mxu0 0
  %2196 = vmatpush1.bf16.xpose.msra.mxu0 0
  %2197 = vmatprep.subr.bf16.mxu0 0
  %2198 = vmatpush1.bf16.xpose.msra.mxu0 0
  %2199 = vmatprep.subr.bf16.mxu0 0
  %2200 = vmatpush1.bf16.xpose.msra.mxu0 0
  %2201 = vmatprep.subr.bf16.mxu0 0
  %2202 = vmatpush1.bf16.xpose.msra.mxu0 0
  %2203 = vmatprep.subr.bf16.mxu0 0
  %2204 = vmatpush1.bf16.xpose.msra.mxu0 0
  %2205 = vmatprep.subr.bf16.mxu0 0
  %2206 = vmatpush1.bf16.xpose.msra.mxu0 0
  %2207 = vmatprep.subr.bf16.mxu0 0
  %2208 = vmatpush1.bf16.xpose.msra.mxu0 0
  %2209 = vmatprep.subr.bf16.mxu0 0
  %2210 = vmatpush1.bf16.xpose.msra.mxu0 0
  %2211 = vmatprep.subr.bf16.mxu0 0
  %2212 = vmatpush1.bf16.xpose.msra.mxu0 0
  %2213 = vmatprep.subr.bf16.mxu0 0
  %2214 = vmatpush1.bf16.xpose.msra.mxu0 0
  %2215 = vmatprep.subr.bf16.mxu0 0
  %2216 = vmatpush1.bf16.xpose.msra.mxu0 0
  %2217 = vmatprep.mubr.bf16.mxu0 0
  %2218 = vmatmul.mubr.bf16.gmra.mrb[0].mxu0 %v2180
  %v2219 = vpop.f32.mrb[0].mxu0
  %v2220 = vadd.f32 0.0, %v2219
  %v2221 = vpop.f32.mrb[0].mxu0
  %v2222 = vpop.f32.mrb[0].mxu0
  %v2223 = vpop.f32.mrb[0].mxu0
  %2224 = vdwg.mxu0
  %2226 = vrot.lane.b32.xlu0 %v2167, 112
  %v2227 = vpop.permute.xlu0 %2226
  %2228 = vrot.lane.b32.xlu0 %v2167, 80
  %v2229 = vpop.permute.xlu0 %2228
  %v2231 = vsel %vm178, %v2227, 0
  %v2234 = vsel %vm178, %v2229, 0
  %2236 = vmatprep.subr.bf16.mxu0 0
  %2237 = vmatpush1.bf16.xpose.msra.mxu0 %v2234
  %2238 = vmatprep.subr.bf16.mxu0 0
  %2239 = vmatpush1.bf16.xpose.msra.mxu0 0
  %2240 = vmatprep.subr.bf16.mxu0 0
  %2241 = vmatpush1.bf16.xpose.msra.mxu0 0
  %2242 = vmatprep.subr.bf16.mxu0 0
  %2243 = vmatpush1.bf16.xpose.msra.mxu0 0
  %2244 = vmatprep.subr.bf16.mxu0 0
  %2245 = vmatpush1.bf16.xpose.msra.mxu0 0
  %2246 = vmatprep.subr.bf16.mxu0 0
  %2247 = vmatpush1.bf16.xpose.msra.mxu0 0
  %2248 = vmatprep.subr.bf16.mxu0 0
  %2249 = vmatpush1.bf16.xpose.msra.mxu0 0
  %2250 = vmatprep.subr.bf16.mxu0 0
  %2251 = vmatpush1.bf16.xpose.msra.mxu0 0
  %2252 = vmatprep.subr.bf16.mxu0 0
  %2253 = vmatpush1.bf16.xpose.msra.mxu0 0
  %2254 = vmatprep.subr.bf16.mxu0 0
  %2255 = vmatpush1.bf16.xpose.msra.mxu0 0
  %2256 = vmatprep.subr.bf16.mxu0 0
  %2257 = vmatpush1.bf16.xpose.msra.mxu0 0
  %2258 = vmatprep.subr.bf16.mxu0 0
  %2259 = vmatpush1.bf16.xpose.msra.mxu0 0
  %2260 = vmatprep.subr.bf16.mxu0 0
  %2261 = vmatpush1.bf16.xpose.msra.mxu0 0
  %2262 = vmatprep.subr.bf16.mxu0 0
  %2263 = vmatpush1.bf16.xpose.msra.mxu0 0
  %2264 = vmatprep.subr.bf16.mxu0 0
  %2265 = vmatpush1.bf16.xpose.msra.mxu0 0
  %2266 = vmatprep.subr.bf16.mxu0 0
  %2267 = vmatpush1.bf16.xpose.msra.mxu0 0
  %2268 = vmatprep.mubr.bf16.mxu0 0
  %2269 = vmatmul.mubr.bf16.gmra.mrb[0].mxu0 %v2231
  %v2270 = vpop.f32.mrb[0].mxu0
  %v2271 = vadd.f32 0.0, %v2270
  %v2272 = vpop.f32.mrb[0].mxu0
  %v2273 = vpop.f32.mrb[0].mxu0
  %v2274 = vpop.f32.mrb[0].mxu0
  %2275 = vdwg.mxu0
  %2277 = vrot.lane.b32.xlu0 %v2168, 112
  %v2278 = vpop.permute.xlu0 %2277
  %2279 = vrot.lane.b32.xlu0 %v2168, 80
  %v2280 = vpop.permute.xlu0 %2279
  %v2282 = vsel %vm178, %v2278, 0
  %v2285 = vsel %vm178, %v2280, 0
  %2287 = vmatprep.subr.bf16.mxu0 0
  %2288 = vmatpush1.bf16.xpose.msra.mxu0 %v2285
  %2289 = vmatprep.subr.bf16.mxu0 0
  %2290 = vmatpush1.bf16.xpose.msra.mxu0 0
  %2291 = vmatprep.subr.bf16.mxu0 0
  %2292 = vmatpush1.bf16.xpose.msra.mxu0 0
  %2293 = vmatprep.subr.bf16.mxu0 0
  %2294 = vmatpush1.bf16.xpose.msra.mxu0 0
  %2295 = vmatprep.subr.bf16.mxu0 0
  %2296 = vmatpush1.bf16.xpose.msra.mxu0 0
  %2297 = vmatprep.subr.bf16.mxu0 0
  %2298 = vmatpush1.bf16.xpose.msra.mxu0 0
  %2299 = vmatprep.subr.bf16.mxu0 0
  %2300 = vmatpush1.bf16.xpose.msra.mxu0 0
  %2301 = vmatprep.subr.bf16.mxu0 0
  %2302 = vmatpush1.bf16.xpose.msra.mxu0 0
  %2303 = vmatprep.subr.bf16.mxu0 0
  %2304 = vmatpush1.bf16.xpose.msra.mxu0 0
  %2305 = vmatprep.subr.bf16.mxu0 0
  %2306 = vmatpush1.bf16.xpose.msra.mxu0 0
  %2307 = vmatprep.subr.bf16.mxu0 0
  %2308 = vmatpush1.bf16.xpose.msra.mxu0 0
  %2309 = vmatprep.subr.bf16.mxu0 0
  %2310 = vmatpush1.bf16.xpose.msra.mxu0 0
  %2311 = vmatprep.subr.bf16.mxu0 0
  %2312 = vmatpush1.bf16.xpose.msra.mxu0 0
  %2313 = vmatprep.subr.bf16.mxu0 0
  %2314 = vmatpush1.bf16.xpose.msra.mxu0 0
  %2315 = vmatprep.subr.bf16.mxu0 0
  %2316 = vmatpush1.bf16.xpose.msra.mxu0 0
  %2317 = vmatprep.subr.bf16.mxu0 0
  %2318 = vmatpush1.bf16.xpose.msra.mxu0 0
  %2319 = vmatprep.mubr.bf16.mxu0 0
  %2320 = vmatmul.mubr.bf16.gmra.mrb[0].mxu0 %v2282
  %v2321 = vpop.f32.mrb[0].mxu0
  %v2322 = vadd.f32 0.0, %v2321
  %v2323 = vpop.f32.mrb[0].mxu0
  %v2324 = vpop.f32.mrb[0].mxu0
  %v2325 = vpop.f32.mrb[0].mxu0
  %2326 = vdwg.mxu0
  %2328 = vrot.lane.b32.xlu0 %v2169, 112
  %v2329 = vpop.permute.xlu0 %2328
  %2330 = vrot.lane.b32.xlu0 %v2169, 80
  %v2331 = vpop.permute.xlu0 %2330
  %v2333 = vsel %vm178, %v2329, 0
  %v2336 = vsel %vm178, %v2331, 0
  %2338 = vmatprep.subr.bf16.mxu0 0
  %2339 = vmatpush1.bf16.xpose.msra.mxu0 %v2336
  %2340 = vmatprep.subr.bf16.mxu0 0
  %2341 = vmatpush1.bf16.xpose.msra.mxu0 0
  %2342 = vmatprep.subr.bf16.mxu0 0
  %2343 = vmatpush1.bf16.xpose.msra.mxu0 0
  %2344 = vmatprep.subr.bf16.mxu0 0
  %2345 = vmatpush1.bf16.xpose.msra.mxu0 0
  %2346 = vmatprep.subr.bf16.mxu0 0
  %2347 = vmatpush1.bf16.xpose.msra.mxu0 0
  %2348 = vmatprep.subr.bf16.mxu0 0
  %2349 = vmatpush1.bf16.xpose.msra.mxu0 0
  %2350 = vmatprep.subr.bf16.mxu0 0
  %2351 = vmatpush1.bf16.xpose.msra.mxu0 0
  %2352 = vmatprep.subr.bf16.mxu0 0
  %2353 = vmatpush1.bf16.xpose.msra.mxu0 0
  %2354 = vmatprep.subr.bf16.mxu0 0
  %2355 = vmatpush1.bf16.xpose.msra.mxu0 0
  %2356 = vmatprep.subr.bf16.mxu0 0
  %2357 = vmatpush1.bf16.xpose.msra.mxu0 0
  %2358 = vmatprep.subr.bf16.mxu0 0
  %2359 = vmatpush1.bf16.xpose.msra.mxu0 0
  %2360 = vmatprep.subr.bf16.mxu0 0
  %2361 = vmatpush1.bf16.xpose.msra.mxu0 0
  %2362 = vmatprep.subr.bf16.mxu0 0
  %2363 = vmatpush1.bf16.xpose.msra.mxu0 0
  %2364 = vmatprep.subr.bf16.mxu0 0
  %2365 = vmatpush1.bf16.xpose.msra.mxu0 0
  %2366 = vmatprep.subr.bf16.mxu0 0
  %2367 = vmatpush1.bf16.xpose.msra.mxu0 0
  %2368 = vmatprep.subr.bf16.mxu0 0
  %2369 = vmatpush1.bf16.xpose.msra.mxu0 0
  %2370 = vmatprep.mubr.bf16.mxu0 0
  %2371 = vmatmul.mubr.bf16.gmra.mrb[0].mxu0 %v2333
  %v2372 = vpop.f32.mrb[0].mxu0
  %v2373 = vadd.f32 0.0, %v2372
  %v2374 = vpop.f32.mrb[0].mxu0
  %v2375 = vpop.f32.mrb[0].mxu0
  %v2376 = vpop.f32.mrb[0].mxu0
  %2377 = vdwg.mxu0
  %2379 = vrot.lane.b32.xlu0 %v2170, 112
  %v2380 = vpop.permute.xlu0 %2379
  %2381 = vrot.lane.b32.xlu0 %v2170, 80
  %v2382 = vpop.permute.xlu0 %2381
  %v2384 = vsel %vm178, %v2380, 0
  %v2387 = vsel %vm178, %v2382, 0
  %2389 = vmatprep.subr.bf16.mxu0 0
  %2390 = vmatpush1.bf16.xpose.msra.mxu0 %v2387
  %2391 = vmatprep.subr.bf16.mxu0 0
  %2392 = vmatpush1.bf16.xpose.msra.mxu0 0
  %2393 = vmatprep.subr.bf16.mxu0 0
  %2394 = vmatpush1.bf16.xpose.msra.mxu0 0
  %2395 = vmatprep.subr.bf16.mxu0 0
  %2396 = vmatpush1.bf16.xpose.msra.mxu0 0
  %2397 = vmatprep.subr.bf16.mxu0 0
  %2398 = vmatpush1.bf16.xpose.msra.mxu0 0
  %2399 = vmatprep.subr.bf16.mxu0 0
  %2400 = vmatpush1.bf16.xpose.msra.mxu0 0
  %2401 = vmatprep.subr.bf16.mxu0 0
  %2402 = vmatpush1.bf16.xpose.msra.mxu0 0
  %2403 = vmatprep.subr.bf16.mxu0 0
  %2404 = vmatpush1.bf16.xpose.msra.mxu0 0
  %2405 = vmatprep.subr.bf16.mxu0 0
  %2406 = vmatpush1.bf16.xpose.msra.mxu0 0
  %2407 = vmatprep.subr.bf16.mxu0 0
  %2408 = vmatpush1.bf16.xpose.msra.mxu0 0
  %2409 = vmatprep.subr.bf16.mxu0 0
  %2410 = vmatpush1.bf16.xpose.msra.mxu0 0
  %2411 = vmatprep.subr.bf16.mxu0 0
  %2412 = vmatpush1.bf16.xpose.msra.mxu0 0
  %2413 = vmatprep.subr.bf16.mxu0 0
  %2414 = vmatpush1.bf16.xpose.msra.mxu0 0
  %2415 = vmatprep.subr.bf16.mxu0 0
  %2416 = vmatpush1.bf16.xpose.msra.mxu0 0
  %2417 = vmatprep.subr.bf16.mxu0 0
  %2418 = vmatpush1.bf16.xpose.msra.mxu0 0
  %2419 = vmatprep.subr.bf16.mxu0 0
  %2420 = vmatpush1.bf16.xpose.msra.mxu0 0
  %2421 = vmatprep.mubr.bf16.mxu0 0
  %2422 = vmatmul.mubr.bf16.gmra.mrb[0].mxu0 %v2384
  %v2423 = vpop.f32.mrb[0].mxu0
  %v2424 = vadd.f32 0.0, %v2423
  %v2425 = vpop.f32.mrb[0].mxu0
  %v2426 = vpop.f32.mrb[0].mxu0
  %v2427 = vpop.f32.mrb[0].mxu0
  %2428 = vdwg.mxu0
  %2430 = vrot.lane.b32.xlu0 %v2171, 112
  %v2431 = vpop.permute.xlu0 %2430
  %2432 = vrot.lane.b32.xlu0 %v2171, 80
  %v2433 = vpop.permute.xlu0 %2432
  %v2435 = vsel %vm178, %v2431, 0
  %v2438 = vsel %vm178, %v2433, 0
  %2440 = vmatprep.subr.bf16.mxu0 0
  %2441 = vmatpush1.bf16.xpose.msra.mxu0 %v2438
  %2442 = vmatprep.subr.bf16.mxu0 0
  %2443 = vmatpush1.bf16.xpose.msra.mxu0 0
  %2444 = vmatprep.subr.bf16.mxu0 0
  %2445 = vmatpush1.bf16.xpose.msra.mxu0 0
  %2446 = vmatprep.subr.bf16.mxu0 0
  %2447 = vmatpush1.bf16.xpose.msra.mxu0 0
  %2448 = vmatprep.subr.bf16.mxu0 0
  %2449 = vmatpush1.bf16.xpose.msra.mxu0 0
  %2450 = vmatprep.subr.bf16.mxu0 0
  %2451 = vmatpush1.bf16.xpose.msra.mxu0 0
  %2452 = vmatprep.subr.bf16.mxu0 0
  %2453 = vmatpush1.bf16.xpose.msra.mxu0 0
  %2454 = vmatprep.subr.bf16.mxu0 0
  %2455 = vmatpush1.bf16.xpose.msra.mxu0 0
  %2456 = vmatprep.subr.bf16.mxu0 0
  %2457 = vmatpush1.bf16.xpose.msra.mxu0 0
  %2458 = vmatprep.subr.bf16.mxu0 0
  %2459 = vmatpush1.bf16.xpose.msra.mxu0 0
  %2460 = vmatprep.subr.bf16.mxu0 0
  %2461 = vmatpush1.bf16.xpose.msra.mxu0 0
  %2462 = vmatprep.subr.bf16.mxu0 0
  %2463 = vmatpush1.bf16.xpose.msra.mxu0 0
  %2464 = vmatprep.subr.bf16.mxu0 0
  %2465 = vmatpush1.bf16.xpose.msra.mxu0 0
  %2466 = vmatprep.subr.bf16.mxu0 0
  %2467 = vmatpush1.bf16.xpose.msra.mxu0 0
  %2468 = vmatprep.subr.bf16.mxu0 0
  %2469 = vmatpush1.bf16.xpose.msra.mxu0 0
  %2470 = vmatprep.subr.bf16.mxu0 0
  %2471 = vmatpush1.bf16.xpose.msra.mxu0 0
  %2472 = vmatprep.mubr.bf16.mxu0 0
  %2473 = vmatmul.mubr.bf16.gmra.mrb[0].mxu0 %v2435
  %v2474 = vpop.f32.mrb[0].mxu0
  %v2475 = vadd.f32 0.0, %v2474
  %v2476 = vpop.f32.mrb[0].mxu0
  %v2477 = vpop.f32.mrb[0].mxu0
  %v2478 = vpop.f32.mrb[0].mxu0
  %2479 = vdwg.mxu0
  %2481 = vrot.lane.b32.xlu0 %v2172, 112
  %v2482 = vpop.permute.xlu0 %2481
  %2483 = vrot.lane.b32.xlu0 %v2172, 80
  %v2484 = vpop.permute.xlu0 %2483
  %v2486 = vsel %vm178, %v2482, 0
  %v2489 = vsel %vm178, %v2484, 0
  %2491 = vmatprep.subr.bf16.mxu0 0
  %2492 = vmatpush1.bf16.xpose.msra.mxu0 %v2489
  %2493 = vmatprep.subr.bf16.mxu0 0
  %2494 = vmatpush1.bf16.xpose.msra.mxu0 0
  %2495 = vmatprep.subr.bf16.mxu0 0
  %2496 = vmatpush1.bf16.xpose.msra.mxu0 0
  %2497 = vmatprep.subr.bf16.mxu0 0
  %2498 = vmatpush1.bf16.xpose.msra.mxu0 0
  %2499 = vmatprep.subr.bf16.mxu0 0
  %2500 = vmatpush1.bf16.xpose.msra.mxu0 0
  %2501 = vmatprep.subr.bf16.mxu0 0
  %2502 = vmatpush1.bf16.xpose.msra.mxu0 0
  %2503 = vmatprep.subr.bf16.mxu0 0
  %2504 = vmatpush1.bf16.xpose.msra.mxu0 0
  %2505 = vmatprep.subr.bf16.mxu0 0
  %2506 = vmatpush1.bf16.xpose.msra.mxu0 0
  %2507 = vmatprep.subr.bf16.mxu0 0
  %2508 = vmatpush1.bf16.xpose.msra.mxu0 0
  %2509 = vmatprep.subr.bf16.mxu0 0
  %2510 = vmatpush1.bf16.xpose.msra.mxu0 0
  %2511 = vmatprep.subr.bf16.mxu0 0
  %2512 = vmatpush1.bf16.xpose.msra.mxu0 0
  %2513 = vmatprep.subr.bf16.mxu0 0
  %2514 = vmatpush1.bf16.xpose.msra.mxu0 0
  %2515 = vmatprep.subr.bf16.mxu0 0
  %2516 = vmatpush1.bf16.xpose.msra.mxu0 0
  %2517 = vmatprep.subr.bf16.mxu0 0
  %2518 = vmatpush1.bf16.xpose.msra.mxu0 0
  %2519 = vmatprep.subr.bf16.mxu0 0
  %2520 = vmatpush1.bf16.xpose.msra.mxu0 0
  %2521 = vmatprep.subr.bf16.mxu0 0
  %2522 = vmatpush1.bf16.xpose.msra.mxu0 0
  %2523 = vmatprep.mubr.bf16.mxu0 0
  %2524 = vmatmul.mubr.bf16.gmra.mrb[0].mxu0 %v2486
  %v2525 = vpop.f32.mrb[0].mxu0
  %v2526 = vadd.f32 0.0, %v2525
  %v2527 = vpop.f32.mrb[0].mxu0
  %v2528 = vpop.f32.mrb[0].mxu0
  %v2529 = vpop.f32.mrb[0].mxu0
  %2530 = vdwg.mxu0
  %2532 = vrot.lane.b32.xlu0 %v2173, 112
  %v2533 = vpop.permute.xlu0 %2532
  %2534 = vrot.lane.b32.xlu0 %v2173, 80
  %v2535 = vpop.permute.xlu0 %2534
  %v2537 = vsel %vm178, %v2533, 0
  %v2540 = vsel %vm178, %v2535, 0
  %2542 = vmatprep.subr.bf16.mxu0 0
  %2543 = vmatpush1.bf16.xpose.msra.mxu0 %v2540
  %2544 = vmatprep.subr.bf16.mxu0 0
  %2545 = vmatpush1.bf16.xpose.msra.mxu0 0
  %2546 = vmatprep.subr.bf16.mxu0 0
  %2547 = vmatpush1.bf16.xpose.msra.mxu0 0
  %2548 = vmatprep.subr.bf16.mxu0 0
  %2549 = vmatpush1.bf16.xpose.msra.mxu0 0
  %2550 = vmatprep.subr.bf16.mxu0 0
  %2551 = vmatpush1.bf16.xpose.msra.mxu0 0
  %2552 = vmatprep.subr.bf16.mxu0 0
  %2553 = vmatpush1.bf16.xpose.msra.mxu0 0
  %2554 = vmatprep.subr.bf16.mxu0 0
  %2555 = vmatpush1.bf16.xpose.msra.mxu0 0
  %2556 = vmatprep.subr.bf16.mxu0 0
  %2557 = vmatpush1.bf16.xpose.msra.mxu0 0
  %2558 = vmatprep.subr.bf16.mxu0 0
  %2559 = vmatpush1.bf16.xpose.msra.mxu0 0
  %2560 = vmatprep.subr.bf16.mxu0 0
  %2561 = vmatpush1.bf16.xpose.msra.mxu0 0
  %2562 = vmatprep.subr.bf16.mxu0 0
  %2563 = vmatpush1.bf16.xpose.msra.mxu0 0
  %2564 = vmatprep.subr.bf16.mxu0 0
  %2565 = vmatpush1.bf16.xpose.msra.mxu0 0
  %2566 = vmatprep.subr.bf16.mxu0 0
  %2567 = vmatpush1.bf16.xpose.msra.mxu0 0
  %2568 = vmatprep.subr.bf16.mxu0 0
  %2569 = vmatpush1.bf16.xpose.msra.mxu0 0
  %2570 = vmatprep.subr.bf16.mxu0 0
  %2571 = vmatpush1.bf16.xpose.msra.mxu0 0
  %2572 = vmatprep.subr.bf16.mxu0 0
  %2573 = vmatpush1.bf16.xpose.msra.mxu0 0
  %2574 = vmatprep.mubr.bf16.mxu0 0
  %2575 = vmatmul.mubr.bf16.gmra.mrb[0].mxu0 %v2537
  %v2576 = vpop.f32.mrb[0].mxu0
  %v2577 = vadd.f32 0.0, %v2576
  %v2578 = vpop.f32.mrb[0].mxu0
  %v2579 = vpop.f32.mrb[0].mxu0
  %v2580 = vpop.f32.mrb[0].mxu0
  %2581 = vdwg.mxu0
  %v2582 = vmul.f32 %v2220, 0.35355338
  %v2583 = vmul.f32 %v2271, 0.35355338
  %v2584 = vmul.f32 %v2322, 0.35355338
  %v2585 = vmul.f32 %v2373, 0.35355338
  %v2586 = vmul.f32 %v2424, 0.35355338
  %v2587 = vmul.f32 %v2475, 0.35355338
  %v2588 = vmul.f32 %v2526, 0.35355338
  %v2589 = vmul.f32 %v2577, 0.35355338
  %s2590 = scalar_lea.vmem %s14, 128
  %2591 = vst.msk [vmem:[%s2590] sm:$0xff] %vm178, %v2582
  %2592 = vst.msk [vmem:[%s2590 + $0x8] sm:$0xff] %vm178, %v2583
  %2593 = vst.msk [vmem:[%s2590 + $0x10] sm:$0xff] %vm178, %v2584
  %2594 = vst.msk [vmem:[%s2590 + $0x18] sm:$0xff] %vm178, %v2585
  %2595 = vst.msk [vmem:[%s2590 + $0x20] sm:$0xff] %vm178, %v2586
  %2596 = vst.msk [vmem:[%s2590 + $0x28] sm:$0xff] %vm178, %v2587
  %2597 = vst.msk [vmem:[%s2590 + $0x30] sm:$0xff] %vm178, %v2588
  %2598 = vst.msk [vmem:[%s2590 + $0x38] sm:$0xff] %vm178, %v2589
  %v2599 = vsel %vm178, %v2582, -inf
  %2600 = vmax.xlane.f32.xlu0 %v2599
  %v2601 = vpop.xlane.xlu0 %2600
  %v2602 = vsel %vm178, %v2583, -inf
  %2603 = vmax.xlane.f32.xlu0 %v2602
  %v2604 = vpop.xlane.xlu0 %2603
  %v2605 = vsel %vm178, %v2584, -inf
  %2606 = vmax.xlane.f32.xlu0 %v2605
  %v2607 = vpop.xlane.xlu0 %2606
  %v2608 = vsel %vm178, %v2585, -inf
  %2609 = vmax.xlane.f32.xlu0 %v2608
  %v2610 = vpop.xlane.xlu0 %2609
  %v2611 = vsel %vm178, %v2586, -inf
  %2612 = vmax.xlane.f32.xlu0 %v2611
  %v2613 = vpop.xlane.xlu0 %2612
  %v2614 = vsel %vm178, %v2587, -inf
  %2615 = vmax.xlane.f32.xlu0 %v2614
  %v2616 = vpop.xlane.xlu0 %2615
  %v2617 = vsel %vm178, %v2588, -inf
  %2618 = vmax.xlane.f32.xlu0 %v2617
  %v2619 = vpop.xlane.xlu0 %2618
  %v2620 = vsel %vm178, %v2589, -inf
  %2621 = vmax.xlane.f32.xlu0 %v2620
  %v2622 = vpop.xlane.xlu0 %2621
  %v2623 = vsub.f32 %v2582, %v2601
  %v2624 = vsub.f32 %v2583, %v2604
  %v2625 = vsub.f32 %v2584, %v2607
  %v2626 = vsub.f32 %v2585, %v2610
  %v2627 = vsub.f32 %v2586, %v2613
  %v2628 = vsub.f32 %v2587, %v2616
  %v2629 = vsub.f32 %v2588, %v2619
  %v2630 = vsub.f32 %v2589, %v2622
  %v2631 = vmul.f32 %v2623, 1.442695
  %v2632 = vpow.pop %v2631
  %v2633 = vmul.f32 %v2624, 1.442695
  %v2634 = vpow.pop %v2633
  %v2635 = vmul.f32 %v2625, 1.442695
  %v2636 = vpow.pop %v2635
  %v2637 = vmul.f32 %v2626, 1.442695
  %v2638 = vpow.pop %v2637
  %v2639 = vmul.f32 %v2627, 1.442695
  %v2640 = vpow.pop %v2639
  %v2641 = vmul.f32 %v2628, 1.442695
  %v2642 = vpow.pop %v2641
  %v2643 = vmul.f32 %v2629, 1.442695
  %v2644 = vpow.pop %v2643
  %v2645 = vmul.f32 %v2630, 1.442695
  %v2646 = vpow.pop %v2645
  %v2647 = vsel %vm178, %v2632, 0.0
  %2648 = vadd.xlane.f32.xlu0 %v2647
  %v2649 = vpop.xlane.xlu0 %2648
  %v2650 = vsel %vm178, %v2634, 0.0
  %2651 = vadd.xlane.f32.xlu0 %v2650
  %v2652 = vpop.xlane.xlu0 %2651
  %v2653 = vsel %vm178, %v2636, 0.0
  %2654 = vadd.xlane.f32.xlu0 %v2653
  %v2655 = vpop.xlane.xlu0 %2654
  %v2656 = vsel %vm178, %v2638, 0.0
  %2657 = vadd.xlane.f32.xlu0 %v2656
  %v2658 = vpop.xlane.xlu0 %2657
  %v2659 = vsel %vm178, %v2640, 0.0
  %2660 = vadd.xlane.f32.xlu0 %v2659
  %v2661 = vpop.xlane.xlu0 %2660
  %v2662 = vsel %vm178, %v2642, 0.0
  %2663 = vadd.xlane.f32.xlu0 %v2662
  %v2664 = vpop.xlane.xlu0 %2663
  %v2665 = vsel %vm178, %v2644, 0.0
  %2666 = vadd.xlane.f32.xlu0 %v2665
  %v2667 = vpop.xlane.xlu0 %2666
  %v2668 = vsel %vm178, %v2646, 0.0
  %2669 = vadd.xlane.f32.xlu0 %v2668
  %v2670 = vpop.xlane.xlu0 %2669
  %v2671 = vrcp.pop %v2649
  %v2672 = vrcp.pop %v2652
  %v2673 = vrcp.pop %v2655
  %v2674 = vrcp.pop %v2658
  %v2675 = vrcp.pop %v2661
  %v2676 = vrcp.pop %v2664
  %v2677 = vrcp.pop %v2667
  %v2678 = vrcp.pop %v2670
  %v2679 = vmul.f32 %v2632, %v2671
  %v2680 = vmul.f32 %v2634, %v2672
  %v2681 = vmul.f32 %v2636, %v2673
  %v2682 = vmul.f32 %v2638, %v2674
  %v2683 = vmul.f32 %v2640, %v2675
  %v2684 = vmul.f32 %v2642, %v2676
  %v2685 = vmul.f32 %v2644, %v2677
  %v2686 = vmul.f32 %v2646, %v2678
  %v2687 = vpack.c.bf16 %v2679, %v2679
  %v2688 = vpack.c.bf16 %v2680, %v2680
  %v2689 = vpack.c.bf16 %v2681, %v2681
  %v2690 = vpack.c.bf16 %v2682, %v2682
  %v2691 = vpack.c.bf16 %v2683, %v2683
  %v2692 = vpack.c.bf16 %v2684, %v2684
  %v2693 = vpack.c.bf16 %v2685, %v2685
  %v2694 = vpack.c.bf16 %v2686, %v2686
  %2695 = vrot.lane.b32.xlu0 %v2166, 48
  %v2696 = vpop.permute.xlu0 %2695
  %v2698 = vsel %vm178, %v2687, 0
  %v2701 = vsel %vm685, %v2696, 0
  %2703 = vmatprep.subr.bf16.mxu0 0
  %2704 = vmatpush1.bf16.msra.mxu0 %v2701
  %2705 = vmatprep.subr.bf16.mxu0 0
  %2706 = vmatpush1.bf16.msra.mxu0 0
  %2707 = vmatprep.subr.bf16.mxu0 0
  %2708 = vmatpush1.bf16.msra.mxu0 0
  %2709 = vmatprep.subr.bf16.mxu0 0
  %2710 = vmatpush1.bf16.msra.mxu0 0
  %2711 = vmatprep.subr.bf16.mxu0 0
  %2712 = vmatpush1.bf16.msra.mxu0 0
  %2713 = vmatprep.subr.bf16.mxu0 0
  %2714 = vmatpush1.bf16.msra.mxu0 0
  %2715 = vmatprep.subr.bf16.mxu0 0
  %2716 = vmatpush1.bf16.msra.mxu0 0
  %2717 = vmatprep.subr.bf16.mxu0 0
  %2718 = vmatpush1.bf16.msra.mxu0 0
  %2719 = vmatprep.subr.bf16.mxu0 0
  %2720 = vmatpush1.bf16.msra.mxu0 0
  %2721 = vmatprep.subr.bf16.mxu0 0
  %2722 = vmatpush1.bf16.msra.mxu0 0
  %2723 = vmatprep.subr.bf16.mxu0 0
  %2724 = vmatpush1.bf16.msra.mxu0 0
  %2725 = vmatprep.subr.bf16.mxu0 0
  %2726 = vmatpush1.bf16.msra.mxu0 0
  %2727 = vmatprep.subr.bf16.mxu0 0
  %2728 = vmatpush1.bf16.msra.mxu0 0
  %2729 = vmatprep.subr.bf16.mxu0 0
  %2730 = vmatpush1.bf16.msra.mxu0 0
  %2731 = vmatprep.subr.bf16.mxu0 0
  %2732 = vmatpush1.bf16.msra.mxu0 0
  %2733 = vmatprep.subr.bf16.mxu0 0
  %2734 = vmatpush1.bf16.msra.mxu0 0
  %2735 = vmatprep.mubr.bf16.mxu0 0
  %2736 = vmatmul.mubr.bf16.gmra.mrb[0].mxu0 %v2698
  %v2737 = vpop.f32.mrb[0].mxu0
  %v2738 = vadd.f32 0.0, %v2737
  %v2739 = vpop.f32.mrb[0].mxu0
  %v2740 = vpop.f32.mrb[0].mxu0
  %v2741 = vpop.f32.mrb[0].mxu0
  %2742 = vdwg.mxu0
  %2743 = vrot.lane.b32.xlu0 %v2167, 48
  %v2744 = vpop.permute.xlu0 %2743
  %v2746 = vsel %vm178, %v2688, 0
  %v2749 = vsel %vm685, %v2744, 0
  %2751 = vmatprep.subr.bf16.mxu0 0
  %2752 = vmatpush1.bf16.msra.mxu0 %v2749
  %2753 = vmatprep.subr.bf16.mxu0 0
  %2754 = vmatpush1.bf16.msra.mxu0 0
  %2755 = vmatprep.subr.bf16.mxu0 0
  %2756 = vmatpush1.bf16.msra.mxu0 0
  %2757 = vmatprep.subr.bf16.mxu0 0
  %2758 = vmatpush1.bf16.msra.mxu0 0
  %2759 = vmatprep.subr.bf16.mxu0 0
  %2760 = vmatpush1.bf16.msra.mxu0 0
  %2761 = vmatprep.subr.bf16.mxu0 0
  %2762 = vmatpush1.bf16.msra.mxu0 0
  %2763 = vmatprep.subr.bf16.mxu0 0
  %2764 = vmatpush1.bf16.msra.mxu0 0
  %2765 = vmatprep.subr.bf16.mxu0 0
  %2766 = vmatpush1.bf16.msra.mxu0 0
  %2767 = vmatprep.subr.bf16.mxu0 0
  %2768 = vmatpush1.bf16.msra.mxu0 0
  %2769 = vmatprep.subr.bf16.mxu0 0
  %2770 = vmatpush1.bf16.msra.mxu0 0
  %2771 = vmatprep.subr.bf16.mxu0 0
  %2772 = vmatpush1.bf16.msra.mxu0 0
  %2773 = vmatprep.subr.bf16.mxu0 0
  %2774 = vmatpush1.bf16.msra.mxu0 0
  %2775 = vmatprep.subr.bf16.mxu0 0
  %2776 = vmatpush1.bf16.msra.mxu0 0
  %2777 = vmatprep.subr.bf16.mxu0 0
  %2778 = vmatpush1.bf16.msra.mxu0 0
  %2779 = vmatprep.subr.bf16.mxu0 0
  %2780 = vmatpush1.bf16.msra.mxu0 0
  %2781 = vmatprep.subr.bf16.mxu0 0
  %2782 = vmatpush1.bf16.msra.mxu0 0
  %2783 = vmatprep.mubr.bf16.mxu0 0
  %2784 = vmatmul.mubr.bf16.gmra.mrb[0].mxu0 %v2746
  %v2785 = vpop.f32.mrb[0].mxu0
  %v2786 = vadd.f32 0.0, %v2785
  %v2787 = vpop.f32.mrb[0].mxu0
  %v2788 = vpop.f32.mrb[0].mxu0
  %v2789 = vpop.f32.mrb[0].mxu0
  %2790 = vdwg.mxu0
  %2791 = vrot.lane.b32.xlu0 %v2168, 48
  %v2792 = vpop.permute.xlu0 %2791
  %v2794 = vsel %vm178, %v2689, 0
  %v2797 = vsel %vm685, %v2792, 0
  %2799 = vmatprep.subr.bf16.mxu0 0
  %2800 = vmatpush1.bf16.msra.mxu0 %v2797
  %2801 = vmatprep.subr.bf16.mxu0 0
  %2802 = vmatpush1.bf16.msra.mxu0 0
  %2803 = vmatprep.subr.bf16.mxu0 0
  %2804 = vmatpush1.bf16.msra.mxu0 0
  %2805 = vmatprep.subr.bf16.mxu0 0
  %2806 = vmatpush1.bf16.msra.mxu0 0
  %2807 = vmatprep.subr.bf16.mxu0 0
  %2808 = vmatpush1.bf16.msra.mxu0 0
  %2809 = vmatprep.subr.bf16.mxu0 0
  %2810 = vmatpush1.bf16.msra.mxu0 0
  %2811 = vmatprep.subr.bf16.mxu0 0
  %2812 = vmatpush1.bf16.msra.mxu0 0
  %2813 = vmatprep.subr.bf16.mxu0 0
  %2814 = vmatpush1.bf16.msra.mxu0 0
  %2815 = vmatprep.subr.bf16.mxu0 0
  %2816 = vmatpush1.bf16.msra.mxu0 0
  %2817 = vmatprep.subr.bf16.mxu0 0
  %2818 = vmatpush1.bf16.msra.mxu0 0
  %2819 = vmatprep.subr.bf16.mxu0 0
  %2820 = vmatpush1.bf16.msra.mxu0 0
  %2821 = vmatprep.subr.bf16.mxu0 0
  %2822 = vmatpush1.bf16.msra.mxu0 0
  %2823 = vmatprep.subr.bf16.mxu0 0
  %2824 = vmatpush1.bf16.msra.mxu0 0
  %2825 = vmatprep.subr.bf16.mxu0 0
  %2826 = vmatpush1.bf16.msra.mxu0 0
  %2827 = vmatprep.subr.bf16.mxu0 0
  %2828 = vmatpush1.bf16.msra.mxu0 0
  %2829 = vmatprep.subr.bf16.mxu0 0
  %2830 = vmatpush1.bf16.msra.mxu0 0
  %2831 = vmatprep.mubr.bf16.mxu0 0
  %2832 = vmatmul.mubr.bf16.gmra.mrb[0].mxu0 %v2794
  %v2833 = vpop.f32.mrb[0].mxu0
  %v2834 = vadd.f32 0.0, %v2833
  %v2835 = vpop.f32.mrb[0].mxu0
  %v2836 = vpop.f32.mrb[0].mxu0
  %v2837 = vpop.f32.mrb[0].mxu0
  %2838 = vdwg.mxu0
  %2839 = vrot.lane.b32.xlu0 %v2169, 48
  %v2840 = vpop.permute.xlu0 %2839
  %v2842 = vsel %vm178, %v2690, 0
  %v2845 = vsel %vm685, %v2840, 0
  %2847 = vmatprep.subr.bf16.mxu0 0
  %2848 = vmatpush1.bf16.msra.mxu0 %v2845
  %2849 = vmatprep.subr.bf16.mxu0 0
  %2850 = vmatpush1.bf16.msra.mxu0 0
  %2851 = vmatprep.subr.bf16.mxu0 0
  %2852 = vmatpush1.bf16.msra.mxu0 0
  %2853 = vmatprep.subr.bf16.mxu0 0
  %2854 = vmatpush1.bf16.msra.mxu0 0
  %2855 = vmatprep.subr.bf16.mxu0 0
  %2856 = vmatpush1.bf16.msra.mxu0 0
  %2857 = vmatprep.subr.bf16.mxu0 0
  %2858 = vmatpush1.bf16.msra.mxu0 0
  %2859 = vmatprep.subr.bf16.mxu0 0
  %2860 = vmatpush1.bf16.msra.mxu0 0
  %2861 = vmatprep.subr.bf16.mxu0 0
  %2862 = vmatpush1.bf16.msra.mxu0 0
  %2863 = vmatprep.subr.bf16.mxu0 0
  %2864 = vmatpush1.bf16.msra.mxu0 0
  %2865 = vmatprep.subr.bf16.mxu0 0
  %2866 = vmatpush1.bf16.msra.mxu0 0
  %2867 = vmatprep.subr.bf16.mxu0 0
  %2868 = vmatpush1.bf16.msra.mxu0 0
  %2869 = vmatprep.subr.bf16.mxu0 0
  %2870 = vmatpush1.bf16.msra.mxu0 0
  %2871 = vmatprep.subr.bf16.mxu0 0
  %2872 = vmatpush1.bf16.msra.mxu0 0
  %2873 = vmatprep.subr.bf16.mxu0 0
  %2874 = vmatpush1.bf16.msra.mxu0 0
  %2875 = vmatprep.subr.bf16.mxu0 0
  %2876 = vmatpush1.bf16.msra.mxu0 0
  %2877 = vmatprep.subr.bf16.mxu0 0
  %2878 = vmatpush1.bf16.msra.mxu0 0
  %2879 = vmatprep.mubr.bf16.mxu0 0
  %2880 = vmatmul.mubr.bf16.gmra.mrb[0].mxu0 %v2842
  %v2881 = vpop.f32.mrb[0].mxu0
  %v2882 = vadd.f32 0.0, %v2881
  %v2883 = vpop.f32.mrb[0].mxu0
  %v2884 = vpop.f32.mrb[0].mxu0
  %v2885 = vpop.f32.mrb[0].mxu0
  %2886 = vdwg.mxu0
  %2887 = vrot.lane.b32.xlu0 %v2170, 48
  %v2888 = vpop.permute.xlu0 %2887
  %v2890 = vsel %vm178, %v2691, 0
  %v2893 = vsel %vm685, %v2888, 0
  %2895 = vmatprep.subr.bf16.mxu0 0
  %2896 = vmatpush1.bf16.msra.mxu0 %v2893
  %2897 = vmatprep.subr.bf16.mxu0 0
  %2898 = vmatpush1.bf16.msra.mxu0 0
  %2899 = vmatprep.subr.bf16.mxu0 0
  %2900 = vmatpush1.bf16.msra.mxu0 0
  %2901 = vmatprep.subr.bf16.mxu0 0
  %2902 = vmatpush1.bf16.msra.mxu0 0
  %2903 = vmatprep.subr.bf16.mxu0 0
  %2904 = vmatpush1.bf16.msra.mxu0 0
  %2905 = vmatprep.subr.bf16.mxu0 0
  %2906 = vmatpush1.bf16.msra.mxu0 0
  %2907 = vmatprep.subr.bf16.mxu0 0
  %2908 = vmatpush1.bf16.msra.mxu0 0
  %2909 = vmatprep.subr.bf16.mxu0 0
  %2910 = vmatpush1.bf16.msra.mxu0 0
  %2911 = vmatprep.subr.bf16.mxu0 0
  %2912 = vmatpush1.bf16.msra.mxu0 0
  %2913 = vmatprep.subr.bf16.mxu0 0
  %2914 = vmatpush1.bf16.msra.mxu0 0
  %2915 = vmatprep.subr.bf16.mxu0 0
  %2916 = vmatpush1.bf16.msra.mxu0 0
  %2917 = vmatprep.subr.bf16.mxu0 0
  %2918 = vmatpush1.bf16.msra.mxu0 0
  %2919 = vmatprep.subr.bf16.mxu0 0
  %2920 = vmatpush1.bf16.msra.mxu0 0
  %2921 = vmatprep.subr.bf16.mxu0 0
  %2922 = vmatpush1.bf16.msra.mxu0 0
  %2923 = vmatprep.subr.bf16.mxu0 0
  %2924 = vmatpush1.bf16.msra.mxu0 0
  %2925 = vmatprep.subr.bf16.mxu0 0
  %2926 = vmatpush1.bf16.msra.mxu0 0
  %2927 = vmatprep.mubr.bf16.mxu0 0
  %2928 = vmatmul.mubr.bf16.gmra.mrb[0].mxu0 %v2890
  %v2929 = vpop.f32.mrb[0].mxu0
  %v2930 = vadd.f32 0.0, %v2929
  %v2931 = vpop.f32.mrb[0].mxu0
  %v2932 = vpop.f32.mrb[0].mxu0
  %v2933 = vpop.f32.mrb[0].mxu0
  %2934 = vdwg.mxu0
  %2935 = vrot.lane.b32.xlu0 %v2171, 48
  %v2936 = vpop.permute.xlu0 %2935
  %v2938 = vsel %vm178, %v2692, 0
  %v2941 = vsel %vm685, %v2936, 0
  %2943 = vmatprep.subr.bf16.mxu0 0
  %2944 = vmatpush1.bf16.msra.mxu0 %v2941
  %2945 = vmatprep.subr.bf16.mxu0 0
  %2946 = vmatpush1.bf16.msra.mxu0 0
  %2947 = vmatprep.subr.bf16.mxu0 0
  %2948 = vmatpush1.bf16.msra.mxu0 0
  %2949 = vmatprep.subr.bf16.mxu0 0
  %2950 = vmatpush1.bf16.msra.mxu0 0
  %2951 = vmatprep.subr.bf16.mxu0 0
  %2952 = vmatpush1.bf16.msra.mxu0 0
  %2953 = vmatprep.subr.bf16.mxu0 0
  %2954 = vmatpush1.bf16.msra.mxu0 0
  %2955 = vmatprep.subr.bf16.mxu0 0
  %2956 = vmatpush1.bf16.msra.mxu0 0
  %2957 = vmatprep.subr.bf16.mxu0 0
  %2958 = vmatpush1.bf16.msra.mxu0 0
  %2959 = vmatprep.subr.bf16.mxu0 0
  %2960 = vmatpush1.bf16.msra.mxu0 0
  %2961 = vmatprep.subr.bf16.mxu0 0
  %2962 = vmatpush1.bf16.msra.mxu0 0
  %2963 = vmatprep.subr.bf16.mxu0 0
  %2964 = vmatpush1.bf16.msra.mxu0 0
  %2965 = vmatprep.subr.bf16.mxu0 0
  %2966 = vmatpush1.bf16.msra.mxu0 0
  %2967 = vmatprep.subr.bf16.mxu0 0
  %2968 = vmatpush1.bf16.msra.mxu0 0
  %2969 = vmatprep.subr.bf16.mxu0 0
  %2970 = vmatpush1.bf16.msra.mxu0 0
  %2971 = vmatprep.subr.bf16.mxu0 0
  %2972 = vmatpush1.bf16.msra.mxu0 0
  %2973 = vmatprep.subr.bf16.mxu0 0
  %2974 = vmatpush1.bf16.msra.mxu0 0
  %2975 = vmatprep.mubr.bf16.mxu0 0
  %2976 = vmatmul.mubr.bf16.gmra.mrb[0].mxu0 %v2938
  %v2977 = vpop.f32.mrb[0].mxu0
  %v2978 = vadd.f32 0.0, %v2977
  %v2979 = vpop.f32.mrb[0].mxu0
  %v2980 = vpop.f32.mrb[0].mxu0
  %v2981 = vpop.f32.mrb[0].mxu0
  %2982 = vdwg.mxu0
  %2983 = vrot.lane.b32.xlu0 %v2172, 48
  %v2984 = vpop.permute.xlu0 %2983
  %v2986 = vsel %vm178, %v2693, 0
  %v2989 = vsel %vm685, %v2984, 0
  %2991 = vmatprep.subr.bf16.mxu0 0
  %2992 = vmatpush1.bf16.msra.mxu0 %v2989
  %2993 = vmatprep.subr.bf16.mxu0 0
  %2994 = vmatpush1.bf16.msra.mxu0 0
  %2995 = vmatprep.subr.bf16.mxu0 0
  %2996 = vmatpush1.bf16.msra.mxu0 0
  %2997 = vmatprep.subr.bf16.mxu0 0
  %2998 = vmatpush1.bf16.msra.mxu0 0
  %2999 = vmatprep.subr.bf16.mxu0 0
  %3000 = vmatpush1.bf16.msra.mxu0 0
  %3001 = vmatprep.subr.bf16.mxu0 0
  %3002 = vmatpush1.bf16.msra.mxu0 0
  %3003 = vmatprep.subr.bf16.mxu0 0
  %3004 = vmatpush1.bf16.msra.mxu0 0
  %3005 = vmatprep.subr.bf16.mxu0 0
  %3006 = vmatpush1.bf16.msra.mxu0 0
  %3007 = vmatprep.subr.bf16.mxu0 0
  %3008 = vmatpush1.bf16.msra.mxu0 0
  %3009 = vmatprep.subr.bf16.mxu0 0
  %3010 = vmatpush1.bf16.msra.mxu0 0
  %3011 = vmatprep.subr.bf16.mxu0 0
  %3012 = vmatpush1.bf16.msra.mxu0 0
  %3013 = vmatprep.subr.bf16.mxu0 0
  %3014 = vmatpush1.bf16.msra.mxu0 0
  %3015 = vmatprep.subr.bf16.mxu0 0
  %3016 = vmatpush1.bf16.msra.mxu0 0
  %3017 = vmatprep.subr.bf16.mxu0 0
  %3018 = vmatpush1.bf16.msra.mxu0 0
  %3019 = vmatprep.subr.bf16.mxu0 0
  %3020 = vmatpush1.bf16.msra.mxu0 0
  %3021 = vmatprep.subr.bf16.mxu0 0
  %3022 = vmatpush1.bf16.msra.mxu0 0
  %3023 = vmatprep.mubr.bf16.mxu0 0
  %3024 = vmatmul.mubr.bf16.gmra.mrb[0].mxu0 %v2986
  %v3025 = vpop.f32.mrb[0].mxu0
  %v3026 = vadd.f32 0.0, %v3025
  %v3027 = vpop.f32.mrb[0].mxu0
  %v3028 = vpop.f32.mrb[0].mxu0
  %v3029 = vpop.f32.mrb[0].mxu0
  %3030 = vdwg.mxu0
  %3031 = vrot.lane.b32.xlu0 %v2173, 48
  %v3032 = vpop.permute.xlu0 %3031
  %v3034 = vsel %vm178, %v2694, 0
  %v3037 = vsel %vm685, %v3032, 0
  %3039 = vmatprep.subr.bf16.mxu0 0
  %3040 = vmatpush1.bf16.msra.mxu0 %v3037
  %3041 = vmatprep.subr.bf16.mxu0 0
  %3042 = vmatpush1.bf16.msra.mxu0 0
  %3043 = vmatprep.subr.bf16.mxu0 0
  %3044 = vmatpush1.bf16.msra.mxu0 0
  %3045 = vmatprep.subr.bf16.mxu0 0
  %3046 = vmatpush1.bf16.msra.mxu0 0
  %3047 = vmatprep.subr.bf16.mxu0 0
  %3048 = vmatpush1.bf16.msra.mxu0 0
  %3049 = vmatprep.subr.bf16.mxu0 0
  %3050 = vmatpush1.bf16.msra.mxu0 0
  %3051 = vmatprep.subr.bf16.mxu0 0
  %3052 = vmatpush1.bf16.msra.mxu0 0
  %3053 = vmatprep.subr.bf16.mxu0 0
  %3054 = vmatpush1.bf16.msra.mxu0 0
  %3055 = vmatprep.subr.bf16.mxu0 0
  %3056 = vmatpush1.bf16.msra.mxu0 0
  %3057 = vmatprep.subr.bf16.mxu0 0
  %3058 = vmatpush1.bf16.msra.mxu0 0
  %3059 = vmatprep.subr.bf16.mxu0 0
  %3060 = vmatpush1.bf16.msra.mxu0 0
  %3061 = vmatprep.subr.bf16.mxu0 0
  %3062 = vmatpush1.bf16.msra.mxu0 0
  %3063 = vmatprep.subr.bf16.mxu0 0
  %3064 = vmatpush1.bf16.msra.mxu0 0
  %3065 = vmatprep.subr.bf16.mxu0 0
  %3066 = vmatpush1.bf16.msra.mxu0 0
  %3067 = vmatprep.subr.bf16.mxu0 0
  %3068 = vmatpush1.bf16.msra.mxu0 0
  %3069 = vmatprep.subr.bf16.mxu0 0
  %3070 = vmatpush1.bf16.msra.mxu0 0
  %3071 = vmatprep.mubr.bf16.mxu0 0
  %3072 = vmatmul.mubr.bf16.gmra.mrb[0].mxu0 %v3034
  %v3073 = vpop.f32.mrb[0].mxu0
  %v3074 = vadd.f32 0.0, %v3073
  %v3075 = vpop.f32.mrb[0].mxu0
  %v3076 = vpop.f32.mrb[0].mxu0
  %v3077 = vpop.f32.mrb[0].mxu0
  %3078 = vdwg.mxu0
  %v3079 = vpack.c.bf16 %v2786, %v2738
  %v3080 = vpack.c.bf16 %v2882, %v2834
  %v3081 = vpack.c.bf16 %v2978, %v2930
  %v3082 = vpack.c.bf16 %v3074, %v3026
  %v3083 = vld [vmem:[%s3 + $0x10] sm:$0xff]
  %v3084 = vpack.c.bf16 %v3083, %v3083
  %v3086 = vsel %vm178, %v3079, 0
  %v3089 = vsel %vm178, %v3080, 0
  %v3092 = vsel %vm178, %v3081, 0
  %v3095 = vsel %vm178, %v3082, 0
  %v3098 = vsel %vm685, %v3084, 0
  %3100 = vmatprep.subr.bf16.mxu0 0
  %3101 = vmatpush1.bf16.msra.mxu0 %v3098
  %3102 = vmatprep.subr.bf16.mxu0 0
  %3103 = vmatpush1.bf16.msra.mxu0 0
  %3104 = vmatprep.subr.bf16.mxu0 0
  %3105 = vmatpush1.bf16.msra.mxu0 0
  %3106 = vmatprep.subr.bf16.mxu0 0
  %3107 = vmatpush1.bf16.msra.mxu0 0
  %3108 = vmatprep.subr.bf16.mxu0 0
  %3109 = vmatpush1.bf16.msra.mxu0 0
  %3110 = vmatprep.subr.bf16.mxu0 0
  %3111 = vmatpush1.bf16.msra.mxu0 0
  %3112 = vmatprep.subr.bf16.mxu0 0
  %3113 = vmatpush1.bf16.msra.mxu0 0
  %3114 = vmatprep.subr.bf16.mxu0 0
  %3115 = vmatpush1.bf16.msra.mxu0 0
  %3116 = vmatprep.subr.bf16.mxu0 0
  %3117 = vmatpush1.bf16.msra.mxu0 0
  %3118 = vmatprep.subr.bf16.mxu0 0
  %3119 = vmatpush1.bf16.msra.mxu0 0
  %3120 = vmatprep.subr.bf16.mxu0 0
  %3121 = vmatpush1.bf16.msra.mxu0 0
  %3122 = vmatprep.subr.bf16.mxu0 0
  %3123 = vmatpush1.bf16.msra.mxu0 0
  %3124 = vmatprep.subr.bf16.mxu0 0
  %3125 = vmatpush1.bf16.msra.mxu0 0
  %3126 = vmatprep.subr.bf16.mxu0 0
  %3127 = vmatpush1.bf16.msra.mxu0 0
  %3128 = vmatprep.subr.bf16.mxu0 0
  %3129 = vmatpush1.bf16.msra.mxu0 0
  %3130 = vmatprep.subr.bf16.mxu0 0
  %3131 = vmatpush1.bf16.msra.mxu0 0
  %3132 = vmatprep.mubr.bf16.mxu0 0
  %3133 = vmatmul.mubr.bf16.gmra.mrb[0].mxu0 %v3086
  %v3134 = vpop.f32.mrb[0].mxu0
  %v3135 = vadd.f32 0.0, %v3134
  %v3136 = vpop.f32.mrb[0].mxu0
  %v3137 = vpop.f32.mrb[0].mxu0
  %v3138 = vadd.f32 0.0, %v3137
  %v3139 = vpop.f32.mrb[0].mxu0
  %3140 = vmatprep.mubr.bf16.mxu0 0
  %3141 = vmatmul.mubr.bf16.gmra.mrb[0].mxu0 %v3089
  %v3142 = vpop.f32.mrb[0].mxu0
  %v3143 = vadd.f32 0.0, %v3142
  %v3144 = vpop.f32.mrb[0].mxu0
  %v3145 = vpop.f32.mrb[0].mxu0
  %v3146 = vadd.f32 0.0, %v3145
  %v3147 = vpop.f32.mrb[0].mxu0
  %3148 = vmatprep.mubr.bf16.mxu0 0
  %3149 = vmatmul.mubr.bf16.gmra.mrb[0].mxu0 %v3092
  %v3150 = vpop.f32.mrb[0].mxu0
  %v3151 = vadd.f32 0.0, %v3150
  %v3152 = vpop.f32.mrb[0].mxu0
  %v3153 = vpop.f32.mrb[0].mxu0
  %v3154 = vadd.f32 0.0, %v3153
  %v3155 = vpop.f32.mrb[0].mxu0
  %3156 = vmatprep.mubr.bf16.mxu0 0
  %3157 = vmatmul.mubr.bf16.gmra.mrb[0].mxu0 %v3095
  %v3158 = vpop.f32.mrb[0].mxu0
  %v3159 = vadd.f32 0.0, %v3158
  %v3160 = vpop.f32.mrb[0].mxu0
  %v3161 = vpop.f32.mrb[0].mxu0
  %v3162 = vadd.f32 0.0, %v3161
  %v3163 = vpop.f32.mrb[0].mxu0
  %3164 = vdwg.mxu0
  %v3165 = vadd.f32 %v2128, %v3135
  %v3166 = vadd.f32 %v2131, %v3138
  %v3167 = vadd.f32 %v2136, %v3143
  %v3168 = vadd.f32 %v2139, %v3146
  %v3169 = vadd.f32 %v2144, %v3151
  %v3170 = vadd.f32 %v2147, %v3154
  %v3171 = vadd.f32 %v2152, %v3159
  %v3172 = vadd.f32 %v2155, %v3162
  %v3173 = vld [vmem:[#allocation2] sm:$0xff]
  %v3174 = vld [vmem:[#allocation2 + $0x8] sm:$0xff]
  %v3175 = vld [vmem:[#allocation2 + $0x10] sm:$0xff]
  %v3176 = vld [vmem:[#allocation2 + $0x18] sm:$0xff]
  %v3177 = vld [vmem:[#allocation2 + $0x20] sm:$0xff]
  %v3178 = vld [vmem:[#allocation2 + $0x28] sm:$0xff]
  %v3179 = vld [vmem:[#allocation2 + $0x30] sm:$0xff]
  %v3180 = vld [vmem:[#allocation2 + $0x38] sm:$0xff]
  %v3181 = vpack.c.bf16 %v3173, %v3173
  %v3182 = vpack.c.bf16 %v3174, %v3174
  %v3183 = vpack.c.bf16 %v3175, %v3175
  %v3184 = vpack.c.bf16 %v3176, %v3176
  %v3185 = vpack.c.bf16 %v3177, %v3177
  %v3186 = vpack.c.bf16 %v3178, %v3178
  %v3187 = vpack.c.bf16 %v3179, %v3179
  %v3188 = vpack.c.bf16 %v3180, %v3180
  %3190 = vrot.lane.b32.xlu0 %v3181, 104
  %v3191 = vpop.permute.xlu0 %3190
  %3192 = vrot.lane.b32.xlu0 %v3181, 72
  %v3193 = vpop.permute.xlu0 %3192
  %v3195 = vsel %vm178, %v3191, 0
  %v3198 = vsel %vm178, %v3193, 0
  %3200 = vmatprep.subr.bf16.mxu0 0
  %3201 = vmatpush1.bf16.xpose.msra.mxu0 %v3198
  %3202 = vmatprep.subr.bf16.mxu0 0
  %3203 = vmatpush1.bf16.xpose.msra.mxu0 0
  %3204 = vmatprep.subr.bf16.mxu0 0
  %3205 = vmatpush1.bf16.xpose.msra.mxu0 0
  %3206 = vmatprep.subr.bf16.mxu0 0
  %3207 = vmatpush1.bf16.xpose.msra.mxu0 0
  %3208 = vmatprep.subr.bf16.mxu0 0
  %3209 = vmatpush1.bf16.xpose.msra.mxu0 0
  %3210 = vmatprep.subr.bf16.mxu0 0
  %3211 = vmatpush1.bf16.xpose.msra.mxu0 0
  %3212 = vmatprep.subr.bf16.mxu0 0
  %3213 = vmatpush1.bf16.xpose.msra.mxu0 0
  %3214 = vmatprep.subr.bf16.mxu0 0
  %3215 = vmatpush1.bf16.xpose.msra.mxu0 0
  %3216 = vmatprep.subr.bf16.mxu0 0
  %3217 = vmatpush1.bf16.xpose.msra.mxu0 0
  %3218 = vmatprep.subr.bf16.mxu0 0
  %3219 = vmatpush1.bf16.xpose.msra.mxu0 0
  %3220 = vmatprep.subr.bf16.mxu0 0
  %3221 = vmatpush1.bf16.xpose.msra.mxu0 0
  %3222 = vmatprep.subr.bf16.mxu0 0
  %3223 = vmatpush1.bf16.xpose.msra.mxu0 0
  %3224 = vmatprep.subr.bf16.mxu0 0
  %3225 = vmatpush1.bf16.xpose.msra.mxu0 0
  %3226 = vmatprep.subr.bf16.mxu0 0
  %3227 = vmatpush1.bf16.xpose.msra.mxu0 0
  %3228 = vmatprep.subr.bf16.mxu0 0
  %3229 = vmatpush1.bf16.xpose.msra.mxu0 0
  %3230 = vmatprep.subr.bf16.mxu0 0
  %3231 = vmatpush1.bf16.xpose.msra.mxu0 0
  %3232 = vmatprep.mubr.bf16.mxu0 0
  %3233 = vmatmul.mubr.bf16.gmra.mrb[0].mxu0 %v3195
  %v3234 = vpop.f32.mrb[0].mxu0
  %v3235 = vadd.f32 0.0, %v3234
  %v3236 = vpop.f32.mrb[0].mxu0
  %v3237 = vpop.f32.mrb[0].mxu0
  %v3238 = vpop.f32.mrb[0].mxu0
  %3239 = vdwg.mxu0
  %3241 = vrot.lane.b32.xlu0 %v3182, 104
  %v3242 = vpop.permute.xlu0 %3241
  %3243 = vrot.lane.b32.xlu0 %v3182, 72
  %v3244 = vpop.permute.xlu0 %3243
  %v3246 = vsel %vm178, %v3242, 0
  %v3249 = vsel %vm178, %v3244, 0
  %3251 = vmatprep.subr.bf16.mxu0 0
  %3252 = vmatpush1.bf16.xpose.msra.mxu0 %v3249
  %3253 = vmatprep.subr.bf16.mxu0 0
  %3254 = vmatpush1.bf16.xpose.msra.mxu0 0
  %3255 = vmatprep.subr.bf16.mxu0 0
  %3256 = vmatpush1.bf16.xpose.msra.mxu0 0
  %3257 = vmatprep.subr.bf16.mxu0 0
  %3258 = vmatpush1.bf16.xpose.msra.mxu0 0
  %3259 = vmatprep.subr.bf16.mxu0 0
  %3260 = vmatpush1.bf16.xpose.msra.mxu0 0
  %3261 = vmatprep.subr.bf16.mxu0 0
  %3262 = vmatpush1.bf16.xpose.msra.mxu0 0
  %3263 = vmatprep.subr.bf16.mxu0 0
  %3264 = vmatpush1.bf16.xpose.msra.mxu0 0
  %3265 = vmatprep.subr.bf16.mxu0 0
  %3266 = vmatpush1.bf16.xpose.msra.mxu0 0
  %3267 = vmatprep.subr.bf16.mxu0 0
  %3268 = vmatpush1.bf16.xpose.msra.mxu0 0
  %3269 = vmatprep.subr.bf16.mxu0 0
  %3270 = vmatpush1.bf16.xpose.msra.mxu0 0
  %3271 = vmatprep.subr.bf16.mxu0 0
  %3272 = vmatpush1.bf16.xpose.msra.mxu0 0
  %3273 = vmatprep.subr.bf16.mxu0 0
  %3274 = vmatpush1.bf16.xpose.msra.mxu0 0
  %3275 = vmatprep.subr.bf16.mxu0 0
  %3276 = vmatpush1.bf16.xpose.msra.mxu0 0
  %3277 = vmatprep.subr.bf16.mxu0 0
  %3278 = vmatpush1.bf16.xpose.msra.mxu0 0
  %3279 = vmatprep.subr.bf16.mxu0 0
  %3280 = vmatpush1.bf16.xpose.msra.mxu0 0
  %3281 = vmatprep.subr.bf16.mxu0 0
  %3282 = vmatpush1.bf16.xpose.msra.mxu0 0
  %3283 = vmatprep.mubr.bf16.mxu0 0
  %3284 = vmatmul.mubr.bf16.gmra.mrb[0].mxu0 %v3246
  %v3285 = vpop.f32.mrb[0].mxu0
  %v3286 = vadd.f32 0.0, %v3285
  %v3287 = vpop.f32.mrb[0].mxu0
  %v3288 = vpop.f32.mrb[0].mxu0
  %v3289 = vpop.f32.mrb[0].mxu0
  %3290 = vdwg.mxu0
  %3292 = vrot.lane.b32.xlu0 %v3183, 104
  %v3293 = vpop.permute.xlu0 %3292
  %3294 = vrot.lane.b32.xlu0 %v3183, 72
  %v3295 = vpop.permute.xlu0 %3294
  %v3297 = vsel %vm178, %v3293, 0
  %v3300 = vsel %vm178, %v3295, 0
  %3302 = vmatprep.subr.bf16.mxu0 0
  %3303 = vmatpush1.bf16.xpose.msra.mxu0 %v3300
  %3304 = vmatprep.subr.bf16.mxu0 0
  %3305 = vmatpush1.bf16.xpose.msra.mxu0 0
  %3306 = vmatprep.subr.bf16.mxu0 0
  %3307 = vmatpush1.bf16.xpose.msra.mxu0 0
  %3308 = vmatprep.subr.bf16.mxu0 0
  %3309 = vmatpush1.bf16.xpose.msra.mxu0 0
  %3310 = vmatprep.subr.bf16.mxu0 0
  %3311 = vmatpush1.bf16.xpose.msra.mxu0 0
  %3312 = vmatprep.subr.bf16.mxu0 0
  %3313 = vmatpush1.bf16.xpose.msra.mxu0 0
  %3314 = vmatprep.subr.bf16.mxu0 0
  %3315 = vmatpush1.bf16.xpose.msra.mxu0 0
  %3316 = vmatprep.subr.bf16.mxu0 0
  %3317 = vmatpush1.bf16.xpose.msra.mxu0 0
  %3318 = vmatprep.subr.bf16.mxu0 0
  %3319 = vmatpush1.bf16.xpose.msra.mxu0 0
  %3320 = vmatprep.subr.bf16.mxu0 0
  %3321 = vmatpush1.bf16.xpose.msra.mxu0 0
  %3322 = vmatprep.subr.bf16.mxu0 0
  %3323 = vmatpush1.bf16.xpose.msra.mxu0 0
  %3324 = vmatprep.subr.bf16.mxu0 0
  %3325 = vmatpush1.bf16.xpose.msra.mxu0 0
  %3326 = vmatprep.subr.bf16.mxu0 0
  %3327 = vmatpush1.bf16.xpose.msra.mxu0 0
  %3328 = vmatprep.subr.bf16.mxu0 0
  %3329 = vmatpush1.bf16.xpose.msra.mxu0 0
  %3330 = vmatprep.subr.bf16.mxu0 0
  %3331 = vmatpush1.bf16.xpose.msra.mxu0 0
  %3332 = vmatprep.subr.bf16.mxu0 0
  %3333 = vmatpush1.bf16.xpose.msra.mxu0 0
  %3334 = vmatprep.mubr.bf16.mxu0 0
  %3335 = vmatmul.mubr.bf16.gmra.mrb[0].mxu0 %v3297
  %v3336 = vpop.f32.mrb[0].mxu0
  %v3337 = vadd.f32 0.0, %v3336
  %v3338 = vpop.f32.mrb[0].mxu0
  %v3339 = vpop.f32.mrb[0].mxu0
  %v3340 = vpop.f32.mrb[0].mxu0
  %3341 = vdwg.mxu0
  %3343 = vrot.lane.b32.xlu0 %v3184, 104
  %v3344 = vpop.permute.xlu0 %3343
  %3345 = vrot.lane.b32.xlu0 %v3184, 72
  %v3346 = vpop.permute.xlu0 %3345
  %v3348 = vsel %vm178, %v3344, 0
  %v3351 = vsel %vm178, %v3346, 0
  %3353 = vmatprep.subr.bf16.mxu0 0
  %3354 = vmatpush1.bf16.xpose.msra.mxu0 %v3351
  %3355 = vmatprep.subr.bf16.mxu0 0
  %3356 = vmatpush1.bf16.xpose.msra.mxu0 0
  %3357 = vmatprep.subr.bf16.mxu0 0
  %3358 = vmatpush1.bf16.xpose.msra.mxu0 0
  %3359 = vmatprep.subr.bf16.mxu0 0
  %3360 = vmatpush1.bf16.xpose.msra.mxu0 0
  %3361 = vmatprep.subr.bf16.mxu0 0
  %3362 = vmatpush1.bf16.xpose.msra.mxu0 0
  %3363 = vmatprep.subr.bf16.mxu0 0
  %3364 = vmatpush1.bf16.xpose.msra.mxu0 0
  %3365 = vmatprep.subr.bf16.mxu0 0
  %3366 = vmatpush1.bf16.xpose.msra.mxu0 0
  %3367 = vmatprep.subr.bf16.mxu0 0
  %3368 = vmatpush1.bf16.xpose.msra.mxu0 0
  %3369 = vmatprep.subr.bf16.mxu0 0
  %3370 = vmatpush1.bf16.xpose.msra.mxu0 0
  %3371 = vmatprep.subr.bf16.mxu0 0
  %3372 = vmatpush1.bf16.xpose.msra.mxu0 0
  %3373 = vmatprep.subr.bf16.mxu0 0
  %3374 = vmatpush1.bf16.xpose.msra.mxu0 0
  %3375 = vmatprep.subr.bf16.mxu0 0
  %3376 = vmatpush1.bf16.xpose.msra.mxu0 0
  %3377 = vmatprep.subr.bf16.mxu0 0
  %3378 = vmatpush1.bf16.xpose.msra.mxu0 0
  %3379 = vmatprep.subr.bf16.mxu0 0
  %3380 = vmatpush1.bf16.xpose.msra.mxu0 0
  %3381 = vmatprep.subr.bf16.mxu0 0
  %3382 = vmatpush1.bf16.xpose.msra.mxu0 0
  %3383 = vmatprep.subr.bf16.mxu0 0
  %3384 = vmatpush1.bf16.xpose.msra.mxu0 0
  %3385 = vmatprep.mubr.bf16.mxu0 0
  %3386 = vmatmul.mubr.bf16.gmra.mrb[0].mxu0 %v3348
  %v3387 = vpop.f32.mrb[0].mxu0
  %v3388 = vadd.f32 0.0, %v3387
  %v3389 = vpop.f32.mrb[0].mxu0
  %v3390 = vpop.f32.mrb[0].mxu0
  %v3391 = vpop.f32.mrb[0].mxu0
  %3392 = vdwg.mxu0
  %3394 = vrot.lane.b32.xlu0 %v3185, 104
  %v3395 = vpop.permute.xlu0 %3394
  %3396 = vrot.lane.b32.xlu0 %v3185, 72
  %v3397 = vpop.permute.xlu0 %3396
  %v3399 = vsel %vm178, %v3395, 0
  %v3402 = vsel %vm178, %v3397, 0
  %3404 = vmatprep.subr.bf16.mxu0 0
  %3405 = vmatpush1.bf16.xpose.msra.mxu0 %v3402
  %3406 = vmatprep.subr.bf16.mxu0 0
  %3407 = vmatpush1.bf16.xpose.msra.mxu0 0
  %3408 = vmatprep.subr.bf16.mxu0 0
  %3409 = vmatpush1.bf16.xpose.msra.mxu0 0
  %3410 = vmatprep.subr.bf16.mxu0 0
  %3411 = vmatpush1.bf16.xpose.msra.mxu0 0
  %3412 = vmatprep.subr.bf16.mxu0 0
  %3413 = vmatpush1.bf16.xpose.msra.mxu0 0
  %3414 = vmatprep.subr.bf16.mxu0 0
  %3415 = vmatpush1.bf16.xpose.msra.mxu0 0
  %3416 = vmatprep.subr.bf16.mxu0 0
  %3417 = vmatpush1.bf16.xpose.msra.mxu0 0
  %3418 = vmatprep.subr.bf16.mxu0 0
  %3419 = vmatpush1.bf16.xpose.msra.mxu0 0
  %3420 = vmatprep.subr.bf16.mxu0 0
  %3421 = vmatpush1.bf16.xpose.msra.mxu0 0
  %3422 = vmatprep.subr.bf16.mxu0 0
  %3423 = vmatpush1.bf16.xpose.msra.mxu0 0
  %3424 = vmatprep.subr.bf16.mxu0 0
  %3425 = vmatpush1.bf16.xpose.msra.mxu0 0
  %3426 = vmatprep.subr.bf16.mxu0 0
  %3427 = vmatpush1.bf16.xpose.msra.mxu0 0
  %3428 = vmatprep.subr.bf16.mxu0 0
  %3429 = vmatpush1.bf16.xpose.msra.mxu0 0
  %3430 = vmatprep.subr.bf16.mxu0 0
  %3431 = vmatpush1.bf16.xpose.msra.mxu0 0
  %3432 = vmatprep.subr.bf16.mxu0 0
  %3433 = vmatpush1.bf16.xpose.msra.mxu0 0
  %3434 = vmatprep.subr.bf16.mxu0 0
  %3435 = vmatpush1.bf16.xpose.msra.mxu0 0
  %3436 = vmatprep.mubr.bf16.mxu0 0
  %3437 = vmatmul.mubr.bf16.gmra.mrb[0].mxu0 %v3399
  %v3438 = vpop.f32.mrb[0].mxu0
  %v3439 = vadd.f32 0.0, %v3438
  %v3440 = vpop.f32.mrb[0].mxu0
  %v3441 = vpop.f32.mrb[0].mxu0
  %v3442 = vpop.f32.mrb[0].mxu0
  %3443 = vdwg.mxu0
  %3445 = vrot.lane.b32.xlu0 %v3186, 104
  %v3446 = vpop.permute.xlu0 %3445
  %3447 = vrot.lane.b32.xlu0 %v3186, 72
  %v3448 = vpop.permute.xlu0 %3447
  %v3450 = vsel %vm178, %v3446, 0
  %v3453 = vsel %vm178, %v3448, 0
  %3455 = vmatprep.subr.bf16.mxu0 0
  %3456 = vmatpush1.bf16.xpose.msra.mxu0 %v3453
  %3457 = vmatprep.subr.bf16.mxu0 0
  %3458 = vmatpush1.bf16.xpose.msra.mxu0 0
  %3459 = vmatprep.subr.bf16.mxu0 0
  %3460 = vmatpush1.bf16.xpose.msra.mxu0 0
  %3461 = vmatprep.subr.bf16.mxu0 0
  %3462 = vmatpush1.bf16.xpose.msra.mxu0 0
  %3463 = vmatprep.subr.bf16.mxu0 0
  %3464 = vmatpush1.bf16.xpose.msra.mxu0 0
  %3465 = vmatprep.subr.bf16.mxu0 0
  %3466 = vmatpush1.bf16.xpose.msra.mxu0 0
  %3467 = vmatprep.subr.bf16.mxu0 0
  %3468 = vmatpush1.bf16.xpose.msra.mxu0 0
  %3469 = vmatprep.subr.bf16.mxu0 0
  %3470 = vmatpush1.bf16.xpose.msra.mxu0 0
  %3471 = vmatprep.subr.bf16.mxu0 0
  %3472 = vmatpush1.bf16.xpose.msra.mxu0 0
  %3473 = vmatprep.subr.bf16.mxu0 0
  %3474 = vmatpush1.bf16.xpose.msra.mxu0 0
  %3475 = vmatprep.subr.bf16.mxu0 0
  %3476 = vmatpush1.bf16.xpose.msra.mxu0 0
  %3477 = vmatprep.subr.bf16.mxu0 0
  %3478 = vmatpush1.bf16.xpose.msra.mxu0 0
  %3479 = vmatprep.subr.bf16.mxu0 0
  %3480 = vmatpush1.bf16.xpose.msra.mxu0 0
  %3481 = vmatprep.subr.bf16.mxu0 0
  %3482 = vmatpush1.bf16.xpose.msra.mxu0 0
  %3483 = vmatprep.subr.bf16.mxu0 0
  %3484 = vmatpush1.bf16.xpose.msra.mxu0 0
  %3485 = vmatprep.subr.bf16.mxu0 0
  %3486 = vmatpush1.bf16.xpose.msra.mxu0 0
  %3487 = vmatprep.mubr.bf16.mxu0 0
  %3488 = vmatmul.mubr.bf16.gmra.mrb[0].mxu0 %v3450
  %v3489 = vpop.f32.mrb[0].mxu0
  %v3490 = vadd.f32 0.0, %v3489
  %v3491 = vpop.f32.mrb[0].mxu0
  %v3492 = vpop.f32.mrb[0].mxu0
  %v3493 = vpop.f32.mrb[0].mxu0
  %3494 = vdwg.mxu0
  %3496 = vrot.lane.b32.xlu0 %v3187, 104
  %v3497 = vpop.permute.xlu0 %3496
  %3498 = vrot.lane.b32.xlu0 %v3187, 72
  %v3499 = vpop.permute.xlu0 %3498
  %v3501 = vsel %vm178, %v3497, 0
  %v3504 = vsel %vm178, %v3499, 0
  %3506 = vmatprep.subr.bf16.mxu0 0
  %3507 = vmatpush1.bf16.xpose.msra.mxu0 %v3504
  %3508 = vmatprep.subr.bf16.mxu0 0
  %3509 = vmatpush1.bf16.xpose.msra.mxu0 0
  %3510 = vmatprep.subr.bf16.mxu0 0
  %3511 = vmatpush1.bf16.xpose.msra.mxu0 0
  %3512 = vmatprep.subr.bf16.mxu0 0
  %3513 = vmatpush1.bf16.xpose.msra.mxu0 0
  %3514 = vmatprep.subr.bf16.mxu0 0
  %3515 = vmatpush1.bf16.xpose.msra.mxu0 0
  %3516 = vmatprep.subr.bf16.mxu0 0
  %3517 = vmatpush1.bf16.xpose.msra.mxu0 0
  %3518 = vmatprep.subr.bf16.mxu0 0
  %3519 = vmatpush1.bf16.xpose.msra.mxu0 0
  %3520 = vmatprep.subr.bf16.mxu0 0
  %3521 = vmatpush1.bf16.xpose.msra.mxu0 0
  %3522 = vmatprep.subr.bf16.mxu0 0
  %3523 = vmatpush1.bf16.xpose.msra.mxu0 0
  %3524 = vmatprep.subr.bf16.mxu0 0
  %3525 = vmatpush1.bf16.xpose.msra.mxu0 0
  %3526 = vmatprep.subr.bf16.mxu0 0
  %3527 = vmatpush1.bf16.xpose.msra.mxu0 0
  %3528 = vmatprep.subr.bf16.mxu0 0
  %3529 = vmatpush1.bf16.xpose.msra.mxu0 0
  %3530 = vmatprep.subr.bf16.mxu0 0
  %3531 = vmatpush1.bf16.xpose.msra.mxu0 0
  %3532 = vmatprep.subr.bf16.mxu0 0
  %3533 = vmatpush1.bf16.xpose.msra.mxu0 0
  %3534 = vmatprep.subr.bf16.mxu0 0
  %3535 = vmatpush1.bf16.xpose.msra.mxu0 0
  %3536 = vmatprep.subr.bf16.mxu0 0
  %3537 = vmatpush1.bf16.xpose.msra.mxu0 0
  %3538 = vmatprep.mubr.bf16.mxu0 0
  %3539 = vmatmul.mubr.bf16.gmra.mrb[0].mxu0 %v3501
  %v3540 = vpop.f32.mrb[0].mxu0
  %v3541 = vadd.f32 0.0, %v3540
  %v3542 = vpop.f32.mrb[0].mxu0
  %v3543 = vpop.f32.mrb[0].mxu0
  %v3544 = vpop.f32.mrb[0].mxu0
  %3545 = vdwg.mxu0
  %3547 = vrot.lane.b32.xlu0 %v3188, 104
  %v3548 = vpop.permute.xlu0 %3547
  %3549 = vrot.lane.b32.xlu0 %v3188, 72
  %v3550 = vpop.permute.xlu0 %3549
  %v3552 = vsel %vm178, %v3548, 0
  %v3555 = vsel %vm178, %v3550, 0
  %3557 = vmatprep.subr.bf16.mxu0 0
  %3558 = vmatpush1.bf16.xpose.msra.mxu0 %v3555
  %3559 = vmatprep.subr.bf16.mxu0 0
  %3560 = vmatpush1.bf16.xpose.msra.mxu0 0
  %3561 = vmatprep.subr.bf16.mxu0 0
  %3562 = vmatpush1.bf16.xpose.msra.mxu0 0
  %3563 = vmatprep.subr.bf16.mxu0 0
  %3564 = vmatpush1.bf16.xpose.msra.mxu0 0
  %3565 = vmatprep.subr.bf16.mxu0 0
  %3566 = vmatpush1.bf16.xpose.msra.mxu0 0
  %3567 = vmatprep.subr.bf16.mxu0 0
  %3568 = vmatpush1.bf16.xpose.msra.mxu0 0
  %3569 = vmatprep.subr.bf16.mxu0 0
  %3570 = vmatpush1.bf16.xpose.msra.mxu0 0
  %3571 = vmatprep.subr.bf16.mxu0 0
  %3572 = vmatpush1.bf16.xpose.msra.mxu0 0
  %3573 = vmatprep.subr.bf16.mxu0 0
  %3574 = vmatpush1.bf16.xpose.msra.mxu0 0
  %3575 = vmatprep.subr.bf16.mxu0 0
  %3576 = vmatpush1.bf16.xpose.msra.mxu0 0
  %3577 = vmatprep.subr.bf16.mxu0 0
  %3578 = vmatpush1.bf16.xpose.msra.mxu0 0
  %3579 = vmatprep.subr.bf16.mxu0 0
  %3580 = vmatpush1.bf16.xpose.msra.mxu0 0
  %3581 = vmatprep.subr.bf16.mxu0 0
  %3582 = vmatpush1.bf16.xpose.msra.mxu0 0
  %3583 = vmatprep.subr.bf16.mxu0 0
  %3584 = vmatpush1.bf16.xpose.msra.mxu0 0
  %3585 = vmatprep.subr.bf16.mxu0 0
  %3586 = vmatpush1.bf16.xpose.msra.mxu0 0
  %3587 = vmatprep.subr.bf16.mxu0 0
  %3588 = vmatpush1.bf16.xpose.msra.mxu0 0
  %3589 = vmatprep.mubr.bf16.mxu0 0
  %3590 = vmatmul.mubr.bf16.gmra.mrb[0].mxu0 %v3552
  %v3591 = vpop.f32.mrb[0].mxu0
  %v3592 = vadd.f32 0.0, %v3591
  %v3593 = vpop.f32.mrb[0].mxu0
  %v3594 = vpop.f32.mrb[0].mxu0
  %v3595 = vpop.f32.mrb[0].mxu0
  %3596 = vdwg.mxu0
  %v3597 = vmul.f32 %v3235, 0.35355338
  %v3598 = vmul.f32 %v3286, 0.35355338
  %v3599 = vmul.f32 %v3337, 0.35355338
  %v3600 = vmul.f32 %v3388, 0.35355338
  %v3601 = vmul.f32 %v3439, 0.35355338
  %v3602 = vmul.f32 %v3490, 0.35355338
  %v3603 = vmul.f32 %v3541, 0.35355338
  %v3604 = vmul.f32 %v3592, 0.35355338
  %s3605 = scalar_lea.vmem %s14, 192
  %3606 = vst.msk [vmem:[%s3605] sm:$0xff] %vm178, %v3597
  %3607 = vst.msk [vmem:[%s3605 + $0x8] sm:$0xff] %vm178, %v3598
  %3608 = vst.msk [vmem:[%s3605 + $0x10] sm:$0xff] %vm178, %v3599
  %3609 = vst.msk [vmem:[%s3605 + $0x18] sm:$0xff] %vm178, %v3600
  %3610 = vst.msk [vmem:[%s3605 + $0x20] sm:$0xff] %vm178, %v3601
  %3611 = vst.msk [vmem:[%s3605 + $0x28] sm:$0xff] %vm178, %v3602
  %3612 = vst.msk [vmem:[%s3605 + $0x30] sm:$0xff] %vm178, %v3603
  %3613 = vst.msk [vmem:[%s3605 + $0x38] sm:$0xff] %vm178, %v3604
  %v3614 = vsel %vm178, %v3597, -inf
  %3615 = vmax.xlane.f32.xlu0 %v3614
  %v3616 = vpop.xlane.xlu0 %3615
  %v3617 = vsel %vm178, %v3598, -inf
  %3618 = vmax.xlane.f32.xlu0 %v3617
  %v3619 = vpop.xlane.xlu0 %3618
  %v3620 = vsel %vm178, %v3599, -inf
  %3621 = vmax.xlane.f32.xlu0 %v3620
  %v3622 = vpop.xlane.xlu0 %3621
  %v3623 = vsel %vm178, %v3600, -inf
  %3624 = vmax.xlane.f32.xlu0 %v3623
  %v3625 = vpop.xlane.xlu0 %3624
  %v3626 = vsel %vm178, %v3601, -inf
  %3627 = vmax.xlane.f32.xlu0 %v3626
  %v3628 = vpop.xlane.xlu0 %3627
  %v3629 = vsel %vm178, %v3602, -inf
  %3630 = vmax.xlane.f32.xlu0 %v3629
  %v3631 = vpop.xlane.xlu0 %3630
  %v3632 = vsel %vm178, %v3603, -inf
  %3633 = vmax.xlane.f32.xlu0 %v3632
  %v3634 = vpop.xlane.xlu0 %3633
  %v3635 = vsel %vm178, %v3604, -inf
  %3636 = vmax.xlane.f32.xlu0 %v3635
  %v3637 = vpop.xlane.xlu0 %3636
  %v3638 = vsub.f32 %v3597, %v3616
  %v3639 = vsub.f32 %v3598, %v3619
  %v3640 = vsub.f32 %v3599, %v3622
  %v3641 = vsub.f32 %v3600, %v3625
  %v3642 = vsub.f32 %v3601, %v3628
  %v3643 = vsub.f32 %v3602, %v3631
  %v3644 = vsub.f32 %v3603, %v3634
  %v3645 = vsub.f32 %v3604, %v3637
  %v3646 = vmul.f32 %v3638, 1.442695
  %v3647 = vpow.pop %v3646
  %v3648 = vmul.f32 %v3639, 1.442695
  %v3649 = vpow.pop %v3648
  %v3650 = vmul.f32 %v3640, 1.442695
  %v3651 = vpow.pop %v3650
  %v3652 = vmul.f32 %v3641, 1.442695
  %v3653 = vpow.pop %v3652
  %v3654 = vmul.f32 %v3642, 1.442695
  %v3655 = vpow.pop %v3654
  %v3656 = vmul.f32 %v3643, 1.442695
  %v3657 = vpow.pop %v3656
  %v3658 = vmul.f32 %v3644, 1.442695
  %v3659 = vpow.pop %v3658
  %v3660 = vmul.f32 %v3645, 1.442695
  %v3661 = vpow.pop %v3660
  %v3662 = vsel %vm178, %v3647, 0.0
  %3663 = vadd.xlane.f32.xlu0 %v3662
  %v3664 = vpop.xlane.xlu0 %3663
  %v3665 = vsel %vm178, %v3649, 0.0
  %3666 = vadd.xlane.f32.xlu0 %v3665
  %v3667 = vpop.xlane.xlu0 %3666
  %v3668 = vsel %vm178, %v3651, 0.0
  %3669 = vadd.xlane.f32.xlu0 %v3668
  %v3670 = vpop.xlane.xlu0 %3669
  %v3671 = vsel %vm178, %v3653, 0.0
  %3672 = vadd.xlane.f32.xlu0 %v3671
  %v3673 = vpop.xlane.xlu0 %3672
  %v3674 = vsel %vm178, %v3655, 0.0
  %3675 = vadd.xlane.f32.xlu0 %v3674
  %v3676 = vpop.xlane.xlu0 %3675
  %v3677 = vsel %vm178, %v3657, 0.0
  %3678 = vadd.xlane.f32.xlu0 %v3677
  %v3679 = vpop.xlane.xlu0 %3678
  %v3680 = vsel %vm178, %v3659, 0.0
  %3681 = vadd.xlane.f32.xlu0 %v3680
  %v3682 = vpop.xlane.xlu0 %3681
  %v3683 = vsel %vm178, %v3661, 0.0
  %3684 = vadd.xlane.f32.xlu0 %v3683
  %v3685 = vpop.xlane.xlu0 %3684
  %v3686 = vrcp.pop %v3664
  %v3687 = vrcp.pop %v3667
  %v3688 = vrcp.pop %v3670
  %v3689 = vrcp.pop %v3673
  %v3690 = vrcp.pop %v3676
  %v3691 = vrcp.pop %v3679
  %v3692 = vrcp.pop %v3682
  %v3693 = vrcp.pop %v3685
  %v3694 = vmul.f32 %v3647, %v3686
  %v3695 = vmul.f32 %v3649, %v3687
  %v3696 = vmul.f32 %v3651, %v3688
  %v3697 = vmul.f32 %v3653, %v3689
  %v3698 = vmul.f32 %v3655, %v3690
  %v3699 = vmul.f32 %v3657, %v3691
  %v3700 = vmul.f32 %v3659, %v3692
  %v3701 = vmul.f32 %v3661, %v3693
  %v3702 = vpack.c.bf16 %v3694, %v3694
  %v3703 = vpack.c.bf16 %v3695, %v3695
  %v3704 = vpack.c.bf16 %v3696, %v3696
  %v3705 = vpack.c.bf16 %v3697, %v3697
  %v3706 = vpack.c.bf16 %v3698, %v3698
  %v3707 = vpack.c.bf16 %v3699, %v3699
  %v3708 = vpack.c.bf16 %v3700, %v3700
  %v3709 = vpack.c.bf16 %v3701, %v3701
  %3710 = vrot.lane.b32.xlu0 %v3181, 40
  %v3711 = vpop.permute.xlu0 %3710
  %v3713 = vsel %vm178, %v3702, 0
  %v3716 = vsel %vm685, %v3711, 0
  %3718 = vmatprep.subr.bf16.mxu0 0
  %3719 = vmatpush1.bf16.msra.mxu0 %v3716
  %3720 = vmatprep.subr.bf16.mxu0 0
  %3721 = vmatpush1.bf16.msra.mxu0 0
  %3722 = vmatprep.subr.bf16.mxu0 0
  %3723 = vmatpush1.bf16.msra.mxu0 0
  %3724 = vmatprep.subr.bf16.mxu0 0
  %3725 = vmatpush1.bf16.msra.mxu0 0
  %3726 = vmatprep.subr.bf16.mxu0 0
  %3727 = vmatpush1.bf16.msra.mxu0 0
  %3728 = vmatprep.subr.bf16.mxu0 0
  %3729 = vmatpush1.bf16.msra.mxu0 0
  %3730 = vmatprep.subr.bf16.mxu0 0
  %3731 = vmatpush1.bf16.msra.mxu0 0
  %3732 = vmatprep.subr.bf16.mxu0 0
  %3733 = vmatpush1.bf16.msra.mxu0 0
  %3734 = vmatprep.subr.bf16.mxu0 0
  %3735 = vmatpush1.bf16.msra.mxu0 0
  %3736 = vmatprep.subr.bf16.mxu0 0
  %3737 = vmatpush1.bf16.msra.mxu0 0
  %3738 = vmatprep.subr.bf16.mxu0 0
  %3739 = vmatpush1.bf16.msra.mxu0 0
  %3740 = vmatprep.subr.bf16.mxu0 0
  %3741 = vmatpush1.bf16.msra.mxu0 0
  %3742 = vmatprep.subr.bf16.mxu0 0
  %3743 = vmatpush1.bf16.msra.mxu0 0
  %3744 = vmatprep.subr.bf16.mxu0 0
  %3745 = vmatpush1.bf16.msra.mxu0 0
  %3746 = vmatprep.subr.bf16.mxu0 0
  %3747 = vmatpush1.bf16.msra.mxu0 0
  %3748 = vmatprep.subr.bf16.mxu0 0
  %3749 = vmatpush1.bf16.msra.mxu0 0
  %3750 = vmatprep.mubr.bf16.mxu0 0
  %3751 = vmatmul.mubr.bf16.gmra.mrb[0].mxu0 %v3713
  %v3752 = vpop.f32.mrb[0].mxu0
  %v3753 = vadd.f32 0.0, %v3752
  %v3754 = vpop.f32.mrb[0].mxu0
  %v3755 = vpop.f32.mrb[0].mxu0
  %v3756 = vpop.f32.mrb[0].mxu0
  %3757 = vdwg.mxu0
  %3758 = vrot.lane.b32.xlu0 %v3182, 40
  %v3759 = vpop.permute.xlu0 %3758
  %v3761 = vsel %vm178, %v3703, 0
  %v3764 = vsel %vm685, %v3759, 0
  %3766 = vmatprep.subr.bf16.mxu0 0
  %3767 = vmatpush1.bf16.msra.mxu0 %v3764
  %3768 = vmatprep.subr.bf16.mxu0 0
  %3769 = vmatpush1.bf16.msra.mxu0 0
  %3770 = vmatprep.subr.bf16.mxu0 0
  %3771 = vmatpush1.bf16.msra.mxu0 0
  %3772 = vmatprep.subr.bf16.mxu0 0
  %3773 = vmatpush1.bf16.msra.mxu0 0
  %3774 = vmatprep.subr.bf16.mxu0 0
  %3775 = vmatpush1.bf16.msra.mxu0 0
  %3776 = vmatprep.subr.bf16.mxu0 0
  %3777 = vmatpush1.bf16.msra.mxu0 0
  %3778 = vmatprep.subr.bf16.mxu0 0
  %3779 = vmatpush1.bf16.msra.mxu0 0
  %3780 = vmatprep.subr.bf16.mxu0 0
  %3781 = vmatpush1.bf16.msra.mxu0 0
  %3782 = vmatprep.subr.bf16.mxu0 0
  %3783 = vmatpush1.bf16.msra.mxu0 0
  %3784 = vmatprep.subr.bf16.mxu0 0
  %3785 = vmatpush1.bf16.msra.mxu0 0
  %3786 = vmatprep.subr.bf16.mxu0 0
  %3787 = vmatpush1.bf16.msra.mxu0 0
  %3788 = vmatprep.subr.bf16.mxu0 0
  %3789 = vmatpush1.bf16.msra.mxu0 0
  %3790 = vmatprep.subr.bf16.mxu0 0
  %3791 = vmatpush1.bf16.msra.mxu0 0
  %3792 = vmatprep.subr.bf16.mxu0 0
  %3793 = vmatpush1.bf16.msra.mxu0 0
  %3794 = vmatprep.subr.bf16.mxu0 0
  %3795 = vmatpush1.bf16.msra.mxu0 0
  %3796 = vmatprep.subr.bf16.mxu0 0
  %3797 = vmatpush1.bf16.msra.mxu0 0
  %3798 = vmatprep.mubr.bf16.mxu0 0
  %3799 = vmatmul.mubr.bf16.gmra.mrb[0].mxu0 %v3761
  %v3800 = vpop.f32.mrb[0].mxu0
  %v3801 = vadd.f32 0.0, %v3800
  %v3802 = vpop.f32.mrb[0].mxu0
  %v3803 = vpop.f32.mrb[0].mxu0
  %v3804 = vpop.f32.mrb[0].mxu0
  %3805 = vdwg.mxu0
  %3806 = vrot.lane.b32.xlu0 %v3183, 40
  %v3807 = vpop.permute.xlu0 %3806
  %v3809 = vsel %vm178, %v3704, 0
  %v3812 = vsel %vm685, %v3807, 0
  %3814 = vmatprep.subr.bf16.mxu0 0
  %3815 = vmatpush1.bf16.msra.mxu0 %v3812
  %3816 = vmatprep.subr.bf16.mxu0 0
  %3817 = vmatpush1.bf16.msra.mxu0 0
  %3818 = vmatprep.subr.bf16.mxu0 0
  %3819 = vmatpush1.bf16.msra.mxu0 0
  %3820 = vmatprep.subr.bf16.mxu0 0
  %3821 = vmatpush1.bf16.msra.mxu0 0
  %3822 = vmatprep.subr.bf16.mxu0 0
  %3823 = vmatpush1.bf16.msra.mxu0 0
  %3824 = vmatprep.subr.bf16.mxu0 0
  %3825 = vmatpush1.bf16.msra.mxu0 0
  %3826 = vmatprep.subr.bf16.mxu0 0
  %3827 = vmatpush1.bf16.msra.mxu0 0
  %3828 = vmatprep.subr.bf16.mxu0 0
  %3829 = vmatpush1.bf16.msra.mxu0 0
  %3830 = vmatprep.subr.bf16.mxu0 0
  %3831 = vmatpush1.bf16.msra.mxu0 0
  %3832 = vmatprep.subr.bf16.mxu0 0
  %3833 = vmatpush1.bf16.msra.mxu0 0
  %3834 = vmatprep.subr.bf16.mxu0 0
  %3835 = vmatpush1.bf16.msra.mxu0 0
  %3836 = vmatprep.subr.bf16.mxu0 0
  %3837 = vmatpush1.bf16.msra.mxu0 0
  %3838 = vmatprep.subr.bf16.mxu0 0
  %3839 = vmatpush1.bf16.msra.mxu0 0
  %3840 = vmatprep.subr.bf16.mxu0 0
  %3841 = vmatpush1.bf16.msra.mxu0 0
  %3842 = vmatprep.subr.bf16.mxu0 0
  %3843 = vmatpush1.bf16.msra.mxu0 0
  %3844 = vmatprep.subr.bf16.mxu0 0
  %3845 = vmatpush1.bf16.msra.mxu0 0
  %3846 = vmatprep.mubr.bf16.mxu0 0
  %3847 = vmatmul.mubr.bf16.gmra.mrb[0].mxu0 %v3809
  %v3848 = vpop.f32.mrb[0].mxu0
  %v3849 = vadd.f32 0.0, %v3848
  %v3850 = vpop.f32.mrb[0].mxu0
  %v3851 = vpop.f32.mrb[0].mxu0
  %v3852 = vpop.f32.mrb[0].mxu0
  %3853 = vdwg.mxu0
  %3854 = vrot.lane.b32.xlu0 %v3184, 40
  %v3855 = vpop.permute.xlu0 %3854
  %v3857 = vsel %vm178, %v3705, 0
  %v3860 = vsel %vm685, %v3855, 0
  %3862 = vmatprep.subr.bf16.mxu0 0
  %3863 = vmatpush1.bf16.msra.mxu0 %v3860
  %3864 = vmatprep.subr.bf16.mxu0 0
  %3865 = vmatpush1.bf16.msra.mxu0 0
  %3866 = vmatprep.subr.bf16.mxu0 0
  %3867 = vmatpush1.bf16.msra.mxu0 0
  %3868 = vmatprep.subr.bf16.mxu0 0
  %3869 = vmatpush1.bf16.msra.mxu0 0
  %3870 = vmatprep.subr.bf16.mxu0 0
  %3871 = vmatpush1.bf16.msra.mxu0 0
  %3872 = vmatprep.subr.bf16.mxu0 0
  %3873 = vmatpush1.bf16.msra.mxu0 0
  %3874 = vmatprep.subr.bf16.mxu0 0
  %3875 = vmatpush1.bf16.msra.mxu0 0
  %3876 = vmatprep.subr.bf16.mxu0 0
  %3877 = vmatpush1.bf16.msra.mxu0 0
  %3878 = vmatprep.subr.bf16.mxu0 0
  %3879 = vmatpush1.bf16.msra.mxu0 0
  %3880 = vmatprep.subr.bf16.mxu0 0
  %3881 = vmatpush1.bf16.msra.mxu0 0
  %3882 = vmatprep.subr.bf16.mxu0 0
  %3883 = vmatpush1.bf16.msra.mxu0 0
  %3884 = vmatprep.subr.bf16.mxu0 0
  %3885 = vmatpush1.bf16.msra.mxu0 0
  %3886 = vmatprep.subr.bf16.mxu0 0
  %3887 = vmatpush1.bf16.msra.mxu0 0
  %3888 = vmatprep.subr.bf16.mxu0 0
  %3889 = vmatpush1.bf16.msra.mxu0 0
  %3890 = vmatprep.subr.bf16.mxu0 0
  %3891 = vmatpush1.bf16.msra.mxu0 0
  %3892 = vmatprep.subr.bf16.mxu0 0
  %3893 = vmatpush1.bf16.msra.mxu0 0
  %3894 = vmatprep.mubr.bf16.mxu0 0
  %3895 = vmatmul.mubr.bf16.gmra.mrb[0].mxu0 %v3857
  %v3896 = vpop.f32.mrb[0].mxu0
  %v3897 = vadd.f32 0.0, %v3896
  %v3898 = vpop.f32.mrb[0].mxu0
  %v3899 = vpop.f32.mrb[0].mxu0
  %v3900 = vpop.f32.mrb[0].mxu0
  %3901 = vdwg.mxu0
  %3902 = vrot.lane.b32.xlu0 %v3185, 40
  %v3903 = vpop.permute.xlu0 %3902
  %v3905 = vsel %vm178, %v3706, 0
  %v3908 = vsel %vm685, %v3903, 0
  %3910 = vmatprep.subr.bf16.mxu0 0
  %3911 = vmatpush1.bf16.msra.mxu0 %v3908
  %3912 = vmatprep.subr.bf16.mxu0 0
  %3913 = vmatpush1.bf16.msra.mxu0 0
  %3914 = vmatprep.subr.bf16.mxu0 0
  %3915 = vmatpush1.bf16.msra.mxu0 0
  %3916 = vmatprep.subr.bf16.mxu0 0
  %3917 = vmatpush1.bf16.msra.mxu0 0
  %3918 = vmatprep.subr.bf16.mxu0 0
  %3919 = vmatpush1.bf16.msra.mxu0 0
  %3920 = vmatprep.subr.bf16.mxu0 0
  %3921 = vmatpush1.bf16.msra.mxu0 0
  %3922 = vmatprep.subr.bf16.mxu0 0
  %3923 = vmatpush1.bf16.msra.mxu0 0
  %3924 = vmatprep.subr.bf16.mxu0 0
  %3925 = vmatpush1.bf16.msra.mxu0 0
  %3926 = vmatprep.subr.bf16.mxu0 0
  %3927 = vmatpush1.bf16.msra.mxu0 0
  %3928 = vmatprep.subr.bf16.mxu0 0
  %3929 = vmatpush1.bf16.msra.mxu0 0
  %3930 = vmatprep.subr.bf16.mxu0 0
  %3931 = vmatpush1.bf16.msra.mxu0 0
  %3932 = vmatprep.subr.bf16.mxu0 0
  %3933 = vmatpush1.bf16.msra.mxu0 0
  %3934 = vmatprep.subr.bf16.mxu0 0
  %3935 = vmatpush1.bf16.msra.mxu0 0
  %3936 = vmatprep.subr.bf16.mxu0 0
  %3937 = vmatpush1.bf16.msra.mxu0 0
  %3938 = vmatprep.subr.bf16.mxu0 0
  %3939 = vmatpush1.bf16.msra.mxu0 0
  %3940 = vmatprep.subr.bf16.mxu0 0
  %3941 = vmatpush1.bf16.msra.mxu0 0
  %3942 = vmatprep.mubr.bf16.mxu0 0
  %3943 = vmatmul.mubr.bf16.gmra.mrb[0].mxu0 %v3905
  %v3944 = vpop.f32.mrb[0].mxu0
  %v3945 = vadd.f32 0.0, %v3944
  %v3946 = vpop.f32.mrb[0].mxu0
  %v3947 = vpop.f32.mrb[0].mxu0
  %v3948 = vpop.f32.mrb[0].mxu0
  %3949 = vdwg.mxu0
  %3950 = vrot.lane.b32.xlu0 %v3186, 40
  %v3951 = vpop.permute.xlu0 %3950
  %v3953 = vsel %vm178, %v3707, 0
  %v3956 = vsel %vm685, %v3951, 0
  %3958 = vmatprep.subr.bf16.mxu0 0
  %3959 = vmatpush1.bf16.msra.mxu0 %v3956
  %3960 = vmatprep.subr.bf16.mxu0 0
  %3961 = vmatpush1.bf16.msra.mxu0 0
  %3962 = vmatprep.subr.bf16.mxu0 0
  %3963 = vmatpush1.bf16.msra.mxu0 0
  %3964 = vmatprep.subr.bf16.mxu0 0
  %3965 = vmatpush1.bf16.msra.mxu0 0
  %3966 = vmatprep.subr.bf16.mxu0 0
  %3967 = vmatpush1.bf16.msra.mxu0 0
  %3968 = vmatprep.subr.bf16.mxu0 0
  %3969 = vmatpush1.bf16.msra.mxu0 0
  %3970 = vmatprep.subr.bf16.mxu0 0
  %3971 = vmatpush1.bf16.msra.mxu0 0
  %3972 = vmatprep.subr.bf16.mxu0 0
  %3973 = vmatpush1.bf16.msra.mxu0 0
  %3974 = vmatprep.subr.bf16.mxu0 0
  %3975 = vmatpush1.bf16.msra.mxu0 0
  %3976 = vmatprep.subr.bf16.mxu0 0
  %3977 = vmatpush1.bf16.msra.mxu0 0
  %3978 = vmatprep.subr.bf16.mxu0 0
  %3979 = vmatpush1.bf16.msra.mxu0 0
  %3980 = vmatprep.subr.bf16.mxu0 0
  %3981 = vmatpush1.bf16.msra.mxu0 0
  %3982 = vmatprep.subr.bf16.mxu0 0
  %3983 = vmatpush1.bf16.msra.mxu0 0
  %3984 = vmatprep.subr.bf16.mxu0 0
  %3985 = vmatpush1.bf16.msra.mxu0 0
  %3986 = vmatprep.subr.bf16.mxu0 0
  %3987 = vmatpush1.bf16.msra.mxu0 0
  %3988 = vmatprep.subr.bf16.mxu0 0
  %3989 = vmatpush1.bf16.msra.mxu0 0
  %3990 = vmatprep.mubr.bf16.mxu0 0
  %3991 = vmatmul.mubr.bf16.gmra.mrb[0].mxu0 %v3953
  %v3992 = vpop.f32.mrb[0].mxu0
  %v3993 = vadd.f32 0.0, %v3992
  %v3994 = vpop.f32.mrb[0].mxu0
  %v3995 = vpop.f32.mrb[0].mxu0
  %v3996 = vpop.f32.mrb[0].mxu0
  %3997 = vdwg.mxu0
  %3998 = vrot.lane.b32.xlu0 %v3187, 40
  %v3999 = vpop.permute.xlu0 %3998
  %v4001 = vsel %vm178, %v3708, 0
  %v4004 = vsel %vm685, %v3999, 0
  %4006 = vmatprep.subr.bf16.mxu0 0
  %4007 = vmatpush1.bf16.msra.mxu0 %v4004
  %4008 = vmatprep.subr.bf16.mxu0 0
  %4009 = vmatpush1.bf16.msra.mxu0 0
  %4010 = vmatprep.subr.bf16.mxu0 0
  %4011 = vmatpush1.bf16.msra.mxu0 0
  %4012 = vmatprep.subr.bf16.mxu0 0
  %4013 = vmatpush1.bf16.msra.mxu0 0
  %4014 = vmatprep.subr.bf16.mxu0 0
  %4015 = vmatpush1.bf16.msra.mxu0 0
  %4016 = vmatprep.subr.bf16.mxu0 0
  %4017 = vmatpush1.bf16.msra.mxu0 0
  %4018 = vmatprep.subr.bf16.mxu0 0
  %4019 = vmatpush1.bf16.msra.mxu0 0
  %4020 = vmatprep.subr.bf16.mxu0 0
  %4021 = vmatpush1.bf16.msra.mxu0 0
  %4022 = vmatprep.subr.bf16.mxu0 0
  %4023 = vmatpush1.bf16.msra.mxu0 0
  %4024 = vmatprep.subr.bf16.mxu0 0
  %4025 = vmatpush1.bf16.msra.mxu0 0
  %4026 = vmatprep.subr.bf16.mxu0 0
  %4027 = vmatpush1.bf16.msra.mxu0 0
  %4028 = vmatprep.subr.bf16.mxu0 0
  %4029 = vmatpush1.bf16.msra.mxu0 0
  %4030 = vmatprep.subr.bf16.mxu0 0
  %4031 = vmatpush1.bf16.msra.mxu0 0
  %4032 = vmatprep.subr.bf16.mxu0 0
  %4033 = vmatpush1.bf16.msra.mxu0 0
  %4034 = vmatprep.subr.bf16.mxu0 0
  %4035 = vmatpush1.bf16.msra.mxu0 0
  %4036 = vmatprep.subr.bf16.mxu0 0
  %4037 = vmatpush1.bf16.msra.mxu0 0
  %4038 = vmatprep.mubr.bf16.mxu0 0
  %4039 = vmatmul.mubr.bf16.gmra.mrb[0].mxu0 %v4001
  %v4040 = vpop.f32.mrb[0].mxu0
  %v4041 = vadd.f32 0.0, %v4040
  %v4042 = vpop.f32.mrb[0].mxu0
  %v4043 = vpop.f32.mrb[0].mxu0
  %v4044 = vpop.f32.mrb[0].mxu0
  %4045 = vdwg.mxu0
  %4046 = vrot.lane.b32.xlu0 %v3188, 40
  %v4047 = vpop.permute.xlu0 %4046
  %v4049 = vsel %vm178, %v3709, 0
  %v4052 = vsel %vm685, %v4047, 0
  %4054 = vmatprep.subr.bf16.mxu0 0
  %4055 = vmatpush1.bf16.msra.mxu0 %v4052
  %4056 = vmatprep.subr.bf16.mxu0 0
  %4057 = vmatpush1.bf16.msra.mxu0 0
  %4058 = vmatprep.subr.bf16.mxu0 0
  %4059 = vmatpush1.bf16.msra.mxu0 0
  %4060 = vmatprep.subr.bf16.mxu0 0
  %4061 = vmatpush1.bf16.msra.mxu0 0
  %4062 = vmatprep.subr.bf16.mxu0 0
  %4063 = vmatpush1.bf16.msra.mxu0 0
  %4064 = vmatprep.subr.bf16.mxu0 0
  %4065 = vmatpush1.bf16.msra.mxu0 0
  %4066 = vmatprep.subr.bf16.mxu0 0
  %4067 = vmatpush1.bf16.msra.mxu0 0
  %4068 = vmatprep.subr.bf16.mxu0 0
  %4069 = vmatpush1.bf16.msra.mxu0 0
  %4070 = vmatprep.subr.bf16.mxu0 0
  %4071 = vmatpush1.bf16.msra.mxu0 0
  %4072 = vmatprep.subr.bf16.mxu0 0
  %4073 = vmatpush1.bf16.msra.mxu0 0
  %4074 = vmatprep.subr.bf16.mxu0 0
  %4075 = vmatpush1.bf16.msra.mxu0 0
  %4076 = vmatprep.subr.bf16.mxu0 0
  %4077 = vmatpush1.bf16.msra.mxu0 0
  %4078 = vmatprep.subr.bf16.mxu0 0
  %4079 = vmatpush1.bf16.msra.mxu0 0
  %4080 = vmatprep.subr.bf16.mxu0 0
  %4081 = vmatpush1.bf16.msra.mxu0 0
  %4082 = vmatprep.subr.bf16.mxu0 0
  %4083 = vmatpush1.bf16.msra.mxu0 0
  %4084 = vmatprep.subr.bf16.mxu0 0
  %4085 = vmatpush1.bf16.msra.mxu0 0
  %4086 = vmatprep.mubr.bf16.mxu0 0
  %4087 = vmatmul.mubr.bf16.gmra.mrb[0].mxu0 %v4049
  %v4088 = vpop.f32.mrb[0].mxu0
  %v4089 = vadd.f32 0.0, %v4088
  %v4090 = vpop.f32.mrb[0].mxu0
  %v4091 = vpop.f32.mrb[0].mxu0
  %v4092 = vpop.f32.mrb[0].mxu0
  %4093 = vdwg.mxu0
  %v4094 = vpack.c.bf16 %v3801, %v3753
  %v4095 = vpack.c.bf16 %v3897, %v3849
  %v4096 = vpack.c.bf16 %v3993, %v3945
  %v4097 = vpack.c.bf16 %v4089, %v4041
  %v4098 = vld [vmem:[%s3 + $0x18] sm:$0xff]
  %v4099 = vpack.c.bf16 %v4098, %v4098
  %v4101 = vsel %vm178, %v4094, 0
  %v4104 = vsel %vm178, %v4095, 0
  %v4107 = vsel %vm178, %v4096, 0
  %v4110 = vsel %vm178, %v4097, 0
  %v4113 = vsel %vm685, %v4099, 0
  %4115 = vmatprep.subr.bf16.mxu0 0
  %4116 = vmatpush1.bf16.msra.mxu0 %v4113
  %4117 = vmatprep.subr.bf16.mxu0 0
  %4118 = vmatpush1.bf16.msra.mxu0 0
  %4119 = vmatprep.subr.bf16.mxu0 0
  %4120 = vmatpush1.bf16.msra.mxu0 0
  %4121 = vmatprep.subr.bf16.mxu0 0
  %4122 = vmatpush1.bf16.msra.mxu0 0
  %4123 = vmatprep.subr.bf16.mxu0 0
  %4124 = vmatpush1.bf16.msra.mxu0 0
  %4125 = vmatprep.subr.bf16.mxu0 0
  %4126 = vmatpush1.bf16.msra.mxu0 0
  %4127 = vmatprep.subr.bf16.mxu0 0
  %4128 = vmatpush1.bf16.msra.mxu0 0
  %4129 = vmatprep.subr.bf16.mxu0 0
  %4130 = vmatpush1.bf16.msra.mxu0 0
  %4131 = vmatprep.subr.bf16.mxu0 0
  %4132 = vmatpush1.bf16.msra.mxu0 0
  %4133 = vmatprep.subr.bf16.mxu0 0
  %4134 = vmatpush1.bf16.msra.mxu0 0
  %4135 = vmatprep.subr.bf16.mxu0 0
  %4136 = vmatpush1.bf16.msra.mxu0 0
  %4137 = vmatprep.subr.bf16.mxu0 0
  %4138 = vmatpush1.bf16.msra.mxu0 0
  %4139 = vmatprep.subr.bf16.mxu0 0
  %4140 = vmatpush1.bf16.msra.mxu0 0
  %4141 = vmatprep.subr.bf16.mxu0 0
  %4142 = vmatpush1.bf16.msra.mxu0 0
  %4143 = vmatprep.subr.bf16.mxu0 0
  %4144 = vmatpush1.bf16.msra.mxu0 0
  %4145 = vmatprep.subr.bf16.mxu0 0
  %4146 = vmatpush1.bf16.msra.mxu0 0
  %4147 = vmatprep.mubr.bf16.mxu0 0
  %4148 = vmatmul.mubr.bf16.gmra.mrb[0].mxu0 %v4101
  %v4149 = vpop.f32.mrb[0].mxu0
  %v4150 = vadd.f32 0.0, %v4149
  %v4151 = vpop.f32.mrb[0].mxu0
  %v4152 = vpop.f32.mrb[0].mxu0
  %v4153 = vadd.f32 0.0, %v4152
  %v4154 = vpop.f32.mrb[0].mxu0
  %4155 = vmatprep.mubr.bf16.mxu0 0
  %4156 = vmatmul.mubr.bf16.gmra.mrb[0].mxu0 %v4104
  %v4157 = vpop.f32.mrb[0].mxu0
  %v4158 = vadd.f32 0.0, %v4157
  %v4159 = vpop.f32.mrb[0].mxu0
  %v4160 = vpop.f32.mrb[0].mxu0
  %v4161 = vadd.f32 0.0, %v4160
  %v4162 = vpop.f32.mrb[0].mxu0
  %4163 = vmatprep.mubr.bf16.mxu0 0
  %4164 = vmatmul.mubr.bf16.gmra.mrb[0].mxu0 %v4107
  %v4165 = vpop.f32.mrb[0].mxu0
  %v4166 = vadd.f32 0.0, %v4165
  %v4167 = vpop.f32.mrb[0].mxu0
  %v4168 = vpop.f32.mrb[0].mxu0
  %v4169 = vadd.f32 0.0, %v4168
  %v4170 = vpop.f32.mrb[0].mxu0
  %4171 = vmatprep.mubr.bf16.mxu0 0
  %4172 = vmatmul.mubr.bf16.gmra.mrb[0].mxu0 %v4110
  %v4173 = vpop.f32.mrb[0].mxu0
  %v4174 = vadd.f32 0.0, %v4173
  %v4175 = vpop.f32.mrb[0].mxu0
  %v4176 = vpop.f32.mrb[0].mxu0
  %v4177 = vadd.f32 0.0, %v4176
  %v4178 = vpop.f32.mrb[0].mxu0
  %4179 = vdwg.mxu0
  %v4180 = vadd.f32 %v3165, %v4150
  %v4181 = vadd.f32 %v3166, %v4153
  %v4182 = vadd.f32 %v3167, %v4158
  %v4183 = vadd.f32 %v3168, %v4161
  %v4184 = vadd.f32 %v3169, %v4166
  %v4185 = vadd.f32 %v3170, %v4169
  %v4186 = vadd.f32 %v3171, %v4174
  %v4187 = vadd.f32 %v3172, %v4177
  %v4188 = vld [vmem:[%s4] sm:$0x1]
  %v4190 = vlaneseq
  %v4191 = vshrl.u32 %v4190, 7
  %v4192 = vsub.s32 0, %v4191
  %v4193 = vrot.slane %v4188, %v4192
  %v4195 = vadd.f32 %v4180, %v4193
  %v4196 = vadd.f32 %v4181, %v4193
  %v4197 = vadd.f32 %v4182, %v4193
  %v4198 = vadd.f32 %v4183, %v4193
  %v4199 = vadd.f32 %v4184, %v4193
  %v4200 = vadd.f32 %v4185, %v4193
  %v4201 = vadd.f32 %v4186, %v4193
  %v4202 = vadd.f32 %v4187, %v4193
  %v4203 = vadd.f32 %v47, %v4195
  %v4204 = vadd.f32 %v48, %v4196
  %v4205 = vadd.f32 %v49, %v4197
  %v4206 = vadd.f32 %v50, %v4198
  %v4207 = vadd.f32 %v51, %v4199
  %v4208 = vadd.f32 %v52, %v4200
  %v4209 = vadd.f32 %v53, %v4201
  %v4210 = vadd.f32 %v54, %v4202
  %v4211 = vsel %vm72, %v4203, 0.0
  %v4212 = vsel %vm72, %v4204, 0.0
  %v4213 = vadd.f32 %v4211, %v4212
  %v4214 = vsel %vm72, %v4205, 0.0
  %v4215 = vadd.f32 %v4213, %v4214
  %v4216 = vsel %vm72, %v4206, 0.0
  %v4217 = vadd.f32 %v4215, %v4216
  %v4218 = vsel %vm72, %v4207, 0.0
  %v4219 = vadd.f32 %v4217, %v4218
  %v4220 = vsel %vm72, %v4208, 0.0
  %v4221 = vadd.f32 %v4219, %v4220
  %v4222 = vsel %vm72, %v4209, 0.0
  %v4223 = vadd.f32 %v4221, %v4222
  %v4224 = vsel %vm72, %v4210, 0.0
  %v4225 = vadd.f32 %v4223, %v4224
  %v4226 = vrot.slane %v4225, 4
  %v4227 = vadd.f32 %v4225, %v4226
  %v4228 = vrot.slane %v4227, 2
  %v4229 = vadd.f32 %v4227, %v4228
  %v4230 = vrot.slane %v4229, 1
  %v4231 = vadd.f32 %v4229, %v4230
  %v4232 = vrcp.pop 64.0
  %v4233 = vmul.f32 %v4231, %v4232
  %v4234 = vsub.f32 %v4203, %v4233
  %v4235 = vsub.f32 %v4204, %v4233
  %v4236 = vsub.f32 %v4205, %v4233
  %v4237 = vsub.f32 %v4206, %v4233
  %v4238 = vsub.f32 %v4207, %v4233
  %v4239 = vsub.f32 %v4208, %v4233
  %v4240 = vsub.f32 %v4209, %v4233
  %v4241 = vsub.f32 %v4210, %v4233
  %v4242 = vmul.f32 %v4234, %v4234
  %v4243 = vmul.f32 %v4235, %v4235
  %v4244 = vmul.f32 %v4236, %v4236
  %v4245 = vmul.f32 %v4237, %v4237
  %v4246 = vmul.f32 %v4238, %v4238
  %v4247 = vmul.f32 %v4239, %v4239
  %v4248 = vmul.f32 %v4240, %v4240
  %v4249 = vmul.f32 %v4241, %v4241
  %v4250 = vsel %vm72, %v4242, 0.0
  %v4251 = vsel %vm72, %v4243, 0.0
  %v4252 = vadd.f32 %v4250, %v4251
  %v4253 = vsel %vm72, %v4244, 0.0
  %v4254 = vadd.f32 %v4252, %v4253
  %v4255 = vsel %vm72, %v4245, 0.0
  %v4256 = vadd.f32 %v4254, %v4255
  %v4257 = vsel %vm72, %v4246, 0.0
  %v4258 = vadd.f32 %v4256, %v4257
  %v4259 = vsel %vm72, %v4247, 0.0
  %v4260 = vadd.f32 %v4258, %v4259
  %v4261 = vsel %vm72, %v4248, 0.0
  %v4262 = vadd.f32 %v4260, %v4261
  %v4263 = vsel %vm72, %v4249, 0.0
  %v4264 = vadd.f32 %v4262, %v4263
  %v4265 = vrot.slane %v4264, 4
  %v4266 = vadd.f32 %v4264, %v4265
  %v4267 = vrot.slane %v4266, 2
  %v4268 = vadd.f32 %v4266, %v4267
  %v4269 = vrot.slane %v4268, 1
  %v4270 = vadd.f32 %v4268, %v4269
  %v4271 = vmul.f32 %v4270, %v4232
  %v4272 = vadd.f32 %v4271, 1e-05
  %v4273 = vrsqrt.pop %v4272
  %v4274 = vmul.f32 %v4234, %v4273
  %v4275 = vmul.f32 %v4235, %v4273
  %v4276 = vmul.f32 %v4236, %v4273
  %v4277 = vmul.f32 %v4237, %v4273
  %v4278 = vmul.f32 %v4238, %v4273
  %v4279 = vmul.f32 %v4239, %v4273
  %v4280 = vmul.f32 %v4240, %v4273
  %v4281 = vmul.f32 %v4241, %v4273
  %v4282 = vld [vmem:[%s5] sm:$0x1]
  %v4284 = vlaneseq
  %v4285 = vshrl.u32 %v4284, 7
  %v4286 = vsub.s32 0, %v4285
  %v4287 = vrot.slane %v4282, %v4286
  %v4289 = vmul.f32 %v4274, %v4287
  %v4290 = vmul.f32 %v4275, %v4287
  %v4291 = vmul.f32 %v4276, %v4287
  %v4292 = vmul.f32 %v4277, %v4287
  %v4293 = vmul.f32 %v4278, %v4287
  %v4294 = vmul.f32 %v4279, %v4287
  %v4295 = vmul.f32 %v4280, %v4287
  %v4296 = vmul.f32 %v4281, %v4287
  %v4297 = vld [vmem:[%s6] sm:$0x1]
  %v4299 = vlaneseq
  %v4300 = vshrl.u32 %v4299, 7
  %v4301 = vsub.s32 0, %v4300
  %v4302 = vrot.slane %v4297, %v4301
  %v4304 = vadd.f32 %v4289, %v4302
  %v4305 = vadd.f32 %v4290, %v4302
  %v4306 = vadd.f32 %v4291, %v4302
  %v4307 = vadd.f32 %v4292, %v4302
  %v4308 = vadd.f32 %v4293, %v4302
  %v4309 = vadd.f32 %v4294, %v4302
  %v4310 = vadd.f32 %v4295, %v4302
  %v4311 = vadd.f32 %v4296, %v4302
  %v4312 = vpack.c.bf16 %v4305, %v4304
  %v4313 = vpack.c.bf16 %v4307, %v4306
  %v4314 = vpack.c.bf16 %v4309, %v4308
  %v4315 = vpack.c.bf16 %v4311, %v4310
  %v4316 = vld [vmem:[%s7] sm:$0xff]
  %v4317 = vld [vmem:[%s7 + $0x8] sm:$0xff]
  %v4318 = vld [vmem:[%s7 + $0x10] sm:$0xff]
  %v4319 = vld [vmem:[%s7 + $0x18] sm:$0xff]
  %v4320 = vpack.c.bf16 %v4317, %v4316
  %v4321 = vpack.c.bf16 %v4319, %v4318
  %v4322 = vld [vmem:[%s8] sm:$0x1]
  %v4324 = vlaneseq
  %v4325 = vshrl.u32 %v4324, 7
  %v4326 = vsub.s32 0, %v4325
  %v4327 = vrot.slane %v4322, %v4326
  %v4330 = vsel %vm72, %v4312, 0
  %v4333 = vsel %vm72, %v4313, 0
  %v4336 = vsel %vm72, %v4314, 0
  %v4339 = vsel %vm72, %v4315, 0
  %4341 = vmatprep.subr.bf16.mxu0 0
  %4342 = vmatpush1.bf16.msra.mxu0 %v4320
  %4343 = vmatprep.subr.bf16.mxu0 0
  %4344 = vmatpush1.bf16.msra.mxu0 %v4321
  %4345 = vmatprep.subr.bf16.mxu0 0
  %4346 = vmatpush1.bf16.msra.mxu0 0
  %4347 = vmatprep.subr.bf16.mxu0 0
  %4348 = vmatpush1.bf16.msra.mxu0 0
  %4349 = vmatprep.subr.bf16.mxu0 0
  %4350 = vmatpush1.bf16.msra.mxu0 0
  %4351 = vmatprep.subr.bf16.mxu0 0
  %4352 = vmatpush1.bf16.msra.mxu0 0
  %4353 = vmatprep.subr.bf16.mxu0 0
  %4354 = vmatpush1.bf16.msra.mxu0 0
  %4355 = vmatprep.subr.bf16.mxu0 0
  %4356 = vmatpush1.bf16.msra.mxu0 0
  %4357 = vmatprep.subr.bf16.mxu0 0
  %4358 = vmatpush1.bf16.msra.mxu0 0
  %4359 = vmatprep.subr.bf16.mxu0 0
  %4360 = vmatpush1.bf16.msra.mxu0 0
  %4361 = vmatprep.subr.bf16.mxu0 0
  %4362 = vmatpush1.bf16.msra.mxu0 0
  %4363 = vmatprep.subr.bf16.mxu0 0
  %4364 = vmatpush1.bf16.msra.mxu0 0
  %4365 = vmatprep.subr.bf16.mxu0 0
  %4366 = vmatpush1.bf16.msra.mxu0 0
  %4367 = vmatprep.subr.bf16.mxu0 0
  %4368 = vmatpush1.bf16.msra.mxu0 0
  %4369 = vmatprep.subr.bf16.mxu0 0
  %4370 = vmatpush1.bf16.msra.mxu0 0
  %4371 = vmatprep.subr.bf16.mxu0 0
  %4372 = vmatpush1.bf16.msra.mxu0 0
  %4373 = vmatprep.mubr.bf16.mxu0 0
  %4374 = vmatmul.mubr.bf16.gmra.mrb[0].mxu0 %v4330
  %v4375 = vpop.f32.mrb[0].mxu0
  %v4376 = vadd.f32 %v4327, %v4375
  %v4377 = vpop.f32.mrb[0].mxu0
  %v4378 = vpop.f32.mrb[0].mxu0
  %v4379 = vadd.f32 %v4327, %v4378
  %v4380 = vpop.f32.mrb[0].mxu0
  %4381 = vmatprep.mubr.bf16.mxu0 0
  %4382 = vmatmul.mubr.bf16.gmra.mrb[0].mxu0 %v4333
  %v4383 = vpop.f32.mrb[0].mxu0
  %v4384 = vadd.f32 %v4327, %v4383
  %v4385 = vpop.f32.mrb[0].mxu0
  %v4386 = vpop.f32.mrb[0].mxu0
  %v4387 = vadd.f32 %v4327, %v4386
  %v4388 = vpop.f32.mrb[0].mxu0
  %4389 = vmatprep.mubr.bf16.mxu0 0
  %4390 = vmatmul.mubr.bf16.gmra.mrb[0].mxu0 %v4336
  %v4391 = vpop.f32.mrb[0].mxu0
  %v4392 = vadd.f32 %v4327, %v4391
  %v4393 = vpop.f32.mrb[0].mxu0
  %v4394 = vpop.f32.mrb[0].mxu0
  %v4395 = vadd.f32 %v4327, %v4394
  %v4396 = vpop.f32.mrb[0].mxu0
  %4397 = vmatprep.mubr.bf16.mxu0 0
  %4398 = vmatmul.mubr.bf16.gmra.mrb[0].mxu0 %v4339
  %v4399 = vpop.f32.mrb[0].mxu0
  %v4400 = vadd.f32 %v4327, %v4399
  %v4401 = vpop.f32.mrb[0].mxu0
  %v4402 = vpop.f32.mrb[0].mxu0
  %v4403 = vadd.f32 %v4327, %v4402
  %v4404 = vpop.f32.mrb[0].mxu0
  %4405 = vdwg.mxu0
  %v4406 = vmul.f32 %v4376, 0.5
  %v4407 = vmul.f32 %v4379, 0.5
  %v4408 = vmul.f32 %v4384, 0.5
  %v4409 = vmul.f32 %v4387, 0.5
  %v4410 = vmul.f32 %v4392, 0.5
  %v4411 = vmul.f32 %v4395, 0.5
  %v4412 = vmul.f32 %v4400, 0.5
  %v4413 = vmul.f32 %v4403, 0.5
  %v4414 = vmul.f32 %v4376, 0.70710677
  %v4415 = vmul.f32 %v4379, 0.70710677
  %v4416 = vmul.f32 %v4384, 0.70710677
  %v4417 = vmul.f32 %v4387, 0.70710677
  %v4418 = vmul.f32 %v4392, 0.70710677
  %v4419 = vmul.f32 %v4395, 0.70710677
  %v4420 = vmul.f32 %v4400, 0.70710677
  %v4421 = vmul.f32 %v4403, 0.70710677
  %v4422 = verf.f32.pop %v4414
  %v4423 = verf.f32.pop %v4415
  %v4424 = verf.f32.pop %v4416
  %v4425 = verf.f32.pop %v4417
  %v4426 = verf.f32.pop %v4418
  %v4427 = verf.f32.pop %v4419
  %v4428 = verf.f32.pop %v4420
  %v4429 = verf.f32.pop %v4421
  %v4430 = vadd.f32 %v4422, 1.0
  %v4431 = vadd.f32 %v4423, 1.0
  %v4432 = vadd.f32 %v4424, 1.0
  %v4433 = vadd.f32 %v4425, 1.0
  %v4434 = vadd.f32 %v4426, 1.0
  %v4435 = vadd.f32 %v4427, 1.0
  %v4436 = vadd.f32 %v4428, 1.0
  %v4437 = vadd.f32 %v4429, 1.0
  %v4438 = vmul.f32 %v4406, %v4430
  %v4439 = vmul.f32 %v4407, %v4431
  %v4440 = vmul.f32 %v4408, %v4432
  %v4441 = vmul.f32 %v4409, %v4433
  %v4442 = vmul.f32 %v4410, %v4434
  %v4443 = vmul.f32 %v4411, %v4435
  %v4444 = vmul.f32 %v4412, %v4436
  %v4445 = vmul.f32 %v4413, %v4437
  %v4446 = vpack.c.bf16 %v4439, %v4438
  %v4447 = vpack.c.bf16 %v4441, %v4440
  %v4448 = vpack.c.bf16 %v4443, %v4442
  %v4449 = vpack.c.bf16 %v4445, %v4444
  %v4450 = vld [vmem:[%s9] sm:$0xff]
  %v4451 = vld [vmem:[%s9 + $0x8] sm:$0xff]
  %v4452 = vld [vmem:[%s9 + $0x10] sm:$0xff]
  %v4453 = vld [vmem:[%s9 + $0x18] sm:$0xff]
  %v4454 = vld [vmem:[%s9 + $0x20] sm:$0xff]
  %v4455 = vld [vmem:[%s9 + $0x28] sm:$0xff]
  %v4456 = vld [vmem:[%s9 + $0x30] sm:$0xff]
  %v4457 = vld [vmem:[%s9 + $0x38] sm:$0xff]
  %v4458 = vpack.c.bf16 %v4451, %v4450
  %v4459 = vpack.c.bf16 %v4453, %v4452
  %v4460 = vpack.c.bf16 %v4455, %v4454
  %v4461 = vpack.c.bf16 %v4457, %v4456
  %v4462 = vld [vmem:[%s10] sm:$0x1]
  %v4464 = vlaneseq
  %v4465 = vshrl.u32 %v4464, 7
  %v4466 = vsub.s32 0, %v4465
  %v4467 = vrot.slane %v4462, %v4466
  %vm4469 = vcmask 523264
  %v4471 = vsel %vm4469, %v4446, 0
  %v4474 = vsel %vm4469, %v4447, 0
  %v4477 = vsel %vm4469, %v4448, 0
  %v4480 = vsel %vm4469, %v4449, 0
  %4482 = vmatprep.subr.bf16.mxu0 0
  %4483 = vmatpush1.bf16.msra.mxu0 %v4458
  %4484 = vmatprep.subr.bf16.mxu0 0
  %4485 = vmatpush1.bf16.msra.mxu0 %v4459
  %4486 = vmatprep.subr.bf16.mxu0 0
  %4487 = vmatpush1.bf16.msra.mxu0 %v4460
  %4488 = vmatprep.subr.bf16.mxu0 0
  %4489 = vmatpush1.bf16.msra.mxu0 %v4461
  %4490 = vmatprep.subr.bf16.mxu0 0
  %4491 = vmatpush1.bf16.msra.mxu0 0
  %4492 = vmatprep.subr.bf16.mxu0 0
  %4493 = vmatpush1.bf16.msra.mxu0 0
  %4494 = vmatprep.subr.bf16.mxu0 0
  %4495 = vmatpush1.bf16.msra.mxu0 0
  %4496 = vmatprep.subr.bf16.mxu0 0
  %4497 = vmatpush1.bf16.msra.mxu0 0
  %4498 = vmatprep.subr.bf16.mxu0 0
  %4499 = vmatpush1.bf16.msra.mxu0 0
  %4500 = vmatprep.subr.bf16.mxu0 0
  %4501 = vmatpush1.bf16.msra.mxu0 0
  %4502 = vmatprep.subr.bf16.mxu0 0
  %4503 = vmatpush1.bf16.msra.mxu0 0
  %4504 = vmatprep.subr.bf16.mxu0 0
  %4505 = vmatpush1.bf16.msra.mxu0 0
  %4506 = vmatprep.subr.bf16.mxu0 0
  %4507 = vmatpush1.bf16.msra.mxu0 0
  %4508 = vmatprep.subr.bf16.mxu0 0
  %4509 = vmatpush1.bf16.msra.mxu0 0
  %4510 = vmatprep.subr.bf16.mxu0 0
  %4511 = vmatpush1.bf16.msra.mxu0 0
  %4512 = vmatprep.subr.bf16.mxu0 0
  %4513 = vmatpush1.bf16.msra.mxu0 0
  %4514 = vmatprep.mubr.bf16.mxu0 0
  %4515 = vmatmul.mubr.bf16.gmra.mrb[0].mxu0 %v4471
  %v4516 = vpop.f32.mrb[0].mxu0
  %v4517 = vadd.f32 %v4467, %v4516
  %v4518 = vpop.f32.mrb[0].mxu0
  %v4519 = vpop.f32.mrb[0].mxu0
  %v4520 = vadd.f32 %v4467, %v4519
  %v4521 = vpop.f32.mrb[0].mxu0
  %4522 = vmatprep.mubr.bf16.mxu0 0
  %4523 = vmatmul.mubr.bf16.gmra.mrb[0].mxu0 %v4474
  %v4524 = vpop.f32.mrb[0].mxu0
  %v4525 = vadd.f32 %v4467, %v4524
  %v4526 = vpop.f32.mrb[0].mxu0
  %v4527 = vpop.f32.mrb[0].mxu0
  %v4528 = vadd.f32 %v4467, %v4527
  %v4529 = vpop.f32.mrb[0].mxu0
  %4530 = vmatprep.mubr.bf16.mxu0 0
  %4531 = vmatmul.mubr.bf16.gmra.mrb[0].mxu0 %v4477
  %v4532 = vpop.f32.mrb[0].mxu0
  %v4533 = vadd.f32 %v4467, %v4532
  %v4534 = vpop.f32.mrb[0].mxu0
  %v4535 = vpop.f32.mrb[0].mxu0
  %v4536 = vadd.f32 %v4467, %v4535
  %v4537 = vpop.f32.mrb[0].mxu0
  %4538 = vmatprep.mubr.bf16.mxu0 0
  %4539 = vmatmul.mubr.bf16.gmra.mrb[0].mxu0 %v4480
  %v4540 = vpop.f32.mrb[0].mxu0
  %v4541 = vadd.f32 %v4467, %v4540
  %v4542 = vpop.f32.mrb[0].mxu0
  %v4543 = vpop.f32.mrb[0].mxu0
  %v4544 = vadd.f32 %v4467, %v4543
  %v4545 = vpop.f32.mrb[0].mxu0
  %4546 = vdwg.mxu0
  %v4547 = vadd.f32 %v4304, %v4517
  %v4548 = vadd.f32 %v4305, %v4520
  %v4549 = vadd.f32 %v4306, %v4525
  %v4550 = vadd.f32 %v4307, %v4528
  %v4551 = vadd.f32 %v4308, %v4533
  %v4552 = vadd.f32 %v4309, %v4536
  %v4553 = vadd.f32 %v4310, %v4541
  %v4554 = vadd.f32 %v4311, %v4544
  %v4555 = vsel %vm72, %v4547, 0.0
  %v4556 = vsel %vm72, %v4548, 0.0
  %v4557 = vadd.f32 %v4555, %v4556
  %v4558 = vsel %vm72, %v4549, 0.0
  %v4559 = vadd.f32 %v4557, %v4558
  %v4560 = vsel %vm72, %v4550, 0.0
  %v4561 = vadd.f32 %v4559, %v4560
  %v4562 = vsel %vm72, %v4551, 0.0
  %v4563 = vadd.f32 %v4561, %v4562
  %v4564 = vsel %vm72, %v4552, 0.0
  %v4565 = vadd.f32 %v4563, %v4564
  %v4566 = vsel %vm72, %v4553, 0.0
  %v4567 = vadd.f32 %v4565, %v4566
  %v4568 = vsel %vm72, %v4554, 0.0
  %v4569 = vadd.f32 %v4567, %v4568
  %v4570 = vrot.slane %v4569, 4
  %v4571 = vadd.f32 %v4569, %v4570
  %v4572 = vrot.slane %v4571, 2
  %v4573 = vadd.f32 %v4571, %v4572
  %v4574 = vrot.slane %v4573, 1
  %v4575 = vadd.f32 %v4573, %v4574
  %v4576 = vmul.f32 %v4575, %v4232
  %v4577 = vsub.f32 %v4547, %v4576
  %v4578 = vsub.f32 %v4548, %v4576
  %v4579 = vsub.f32 %v4549, %v4576
  %v4580 = vsub.f32 %v4550, %v4576
  %v4581 = vsub.f32 %v4551, %v4576
  %v4582 = vsub.f32 %v4552, %v4576
  %v4583 = vsub.f32 %v4553, %v4576
  %v4584 = vsub.f32 %v4554, %v4576
  %v4585 = vmul.f32 %v4577, %v4577
  %v4586 = vmul.f32 %v4578, %v4578
  %v4587 = vmul.f32 %v4579, %v4579
  %v4588 = vmul.f32 %v4580, %v4580
  %v4589 = vmul.f32 %v4581, %v4581
  %v4590 = vmul.f32 %v4582, %v4582
  %v4591 = vmul.f32 %v4583, %v4583
  %v4592 = vmul.f32 %v4584, %v4584
  %v4593 = vsel %vm72, %v4585, 0.0
  %v4594 = vsel %vm72, %v4586, 0.0
  %v4595 = vadd.f32 %v4593, %v4594
  %v4596 = vsel %vm72, %v4587, 0.0
  %v4597 = vadd.f32 %v4595, %v4596
  %v4598 = vsel %vm72, %v4588, 0.0
  %v4599 = vadd.f32 %v4597, %v4598
  %v4600 = vsel %vm72, %v4589, 0.0
  %v4601 = vadd.f32 %v4599, %v4600
  %v4602 = vsel %vm72, %v4590, 0.0
  %v4603 = vadd.f32 %v4601, %v4602
  %v4604 = vsel %vm72, %v4591, 0.0
  %v4605 = vadd.f32 %v4603, %v4604
  %v4606 = vsel %vm72, %v4592, 0.0
  %v4607 = vadd.f32 %v4605, %v4606
  %v4608 = vrot.slane %v4607, 4
  %v4609 = vadd.f32 %v4607, %v4608
  %v4610 = vrot.slane %v4609, 2
  %v4611 = vadd.f32 %v4609, %v4610
  %v4612 = vrot.slane %v4611, 1
  %v4613 = vadd.f32 %v4611, %v4612
  %v4614 = vmul.f32 %v4613, %v4232
  %v4615 = vadd.f32 %v4614, 1e-05
  %v4616 = vrsqrt.pop %v4615
  %v4617 = vmul.f32 %v4577, %v4616
  %v4618 = vmul.f32 %v4578, %v4616
  %v4619 = vmul.f32 %v4579, %v4616
  %v4620 = vmul.f32 %v4580, %v4616
  %v4621 = vmul.f32 %v4581, %v4616
  %v4622 = vmul.f32 %v4582, %v4616
  %v4623 = vmul.f32 %v4583, %v4616
  %v4624 = vmul.f32 %v4584, %v4616
  %v4625 = vld [vmem:[%s11] sm:$0x1]
  %v4627 = vlaneseq
  %v4628 = vshrl.u32 %v4627, 7
  %v4629 = vsub.s32 0, %v4628
  %v4630 = vrot.slane %v4625, %v4629
  %v4632 = vmul.f32 %v4617, %v4630
  %v4633 = vmul.f32 %v4618, %v4630
  %v4634 = vmul.f32 %v4619, %v4630
  %v4635 = vmul.f32 %v4620, %v4630
  %v4636 = vmul.f32 %v4621, %v4630
  %v4637 = vmul.f32 %v4622, %v4630
  %v4638 = vmul.f32 %v4623, %v4630
  %v4639 = vmul.f32 %v4624, %v4630
  %v4640 = vld [vmem:[%s12] sm:$0x1]
  %v4642 = vlaneseq
  %v4643 = vshrl.u32 %v4642, 7
  %v4644 = vsub.s32 0, %v4643
  %v4645 = vrot.slane %v4640, %v4644
  %v4647 = vadd.f32 %v4632, %v4645
  %v4648 = vadd.f32 %v4633, %v4645
  %v4649 = vadd.f32 %v4634, %v4645
  %v4650 = vadd.f32 %v4635, %v4645
  %v4651 = vadd.f32 %v4636, %v4645
  %v4652 = vadd.f32 %v4637, %v4645
  %v4653 = vadd.f32 %v4638, %v4645
  %v4654 = vadd.f32 %v4639, %v4645
  %4655 = vst.msk [vmem:[%s13] sm:$0xff] %vm72, %v4647
  %4656 = vst.msk [vmem:[%s13 + $0x8] sm:$0xff] %vm72, %v4648
  %4657 = vst.msk [vmem:[%s13 + $0x10] sm:$0xff] %vm72, %v4649
  %4658 = vst.msk [vmem:[%s13 + $0x18] sm:$0xff] %vm72, %v4650
  %4659 = vst.msk [vmem:[%s13 + $0x20] sm:$0xff] %vm72, %v4651
  %4660 = vst.msk [vmem:[%s13 + $0x28] sm:$0xff] %vm72, %v4652
  %4661 = vst.msk [vmem:[%s13 + $0x30] sm:$0xff] %vm72, %v4653
  %4662 = vst.msk [vmem:[%s13 + $0x38] sm:$0xff] %vm72, %v4654
  // Predicated region
  $region54: #{shuffle_mtm_encoder_forward.4} parent=0 // pred_check
    _
  $region55: #{shuffle_mtm_encoder_forward.4} parent=0 // pred_check_branch
    %4664 = sbr.rel (0) target = $region57
  $region56: #{shuffle_mtm_encoder_forward.4} parent=0 // pred_region
    _
  $region57: #{shuffle_mtm_encoder_forward.4} parent=0 // pred_fallthru
    _
  // Predicated region
  $region58: #{shuffle_mtm_encoder_forward.4} parent=0 // pred_check
    _
  $region59: #{shuffle_mtm_encoder_forward.4} parent=0 // pred_check_branch
    %4666 = sbr.rel (0) target = $region61
  $region60: #{shuffle_mtm_encoder_forward.4} parent=0 // pred_region
    _
  $region61: #{shuffle_mtm_encoder_forward.4} parent=0 // pred_fallthru
    _
  // Predicated region
  $region62: #{shuffle_mtm_encoder_forward.4} parent=0 // pred_check
    _
  $region63: #{shuffle_mtm_encoder_forward.4} parent=0 // pred_check_branch
    %4668 = sbr.rel (0) target = $region65
  $region64: #{shuffle_mtm_encoder_forward.4} parent=0 // pred_region
    _
  $region65: #{shuffle_mtm_encoder_forward.4} parent=0 // pred_fallthru
    _
  // Predicated region
  $region66: #{shuffle_mtm_encoder_forward.4} parent=0 // pred_check
    _
  $region67: #{shuffle_mtm_encoder_forward.4} parent=0 // pred_check_branch
    %4670 = sbr.rel (0) target = $region69
  $region68: #{shuffle_mtm_encoder_forward.4} parent=0 // pred_region
    _
  $region69: #{shuffle_mtm_encoder_forward.4} parent=0 // pred_fallthru
    _

// kernel: shuffle_mtm_encoder_forward.5
$region0: #{shuffle_mtm_encoder_forward.5}
  #allocation0 [shape = 'u32[]', space=smem, size = 0x4, offset = 0x4, fixed_abs, tag = 'smem constant byte address 0x4 - core index']
  #allocation1 [shape = 'u32[144,128]{1,0:T(1,128)}', space=vmem, size = 0x12000, scoped, tag = 'internal scratch']
  #allocation2 [shape = 'f32[8,8,96]{2,1,0:T(8,128)}', space=vmem, size = 0x8000, scoped, tag = 'scratch operand']
  %s0 = inlined_call_operand.vmem [shape: f32[64,32], index: 0, kind: input, shape index: {}]
  %s1 = inlined_call_operand.vmem [shape: f32[4,8,8,8], index: 1, kind: input, shape index: {}]
  %s2 = inlined_call_operand.vmem [shape: f32[32,96], index: 2, kind: input, shape index: {}]
  %s3 = inlined_call_operand.vmem [shape: f32[1,96], index: 3, kind: input, shape index: {}]
  %s4 = inlined_call_operand.vmem [shape: f32[32,32], index: 4, kind: input, shape index: {}]
  %s5 = inlined_call_operand.vmem [shape: f32[1,32], index: 5, kind: input, shape index: {}]
  %s6 = inlined_call_operand.vmem [shape: f32[1,32], index: 6, kind: input, shape index: {}]
  %s7 = inlined_call_operand.vmem [shape: f32[1,32], index: 7, kind: input, shape index: {}]
  %s8 = inlined_call_operand.vmem [shape: f32[32,64], index: 8, kind: input, shape index: {}]
  %s9 = inlined_call_operand.vmem [shape: f32[1,64], index: 9, kind: input, shape index: {}]
  %s10 = inlined_call_operand.vmem [shape: f32[64,32], index: 10, kind: input, shape index: {}]
  %s11 = inlined_call_operand.vmem [shape: f32[1,32], index: 11, kind: input, shape index: {}]
  %s12 = inlined_call_operand.vmem [shape: f32[1,32], index: 12, kind: input, shape index: {}]
  %s13 = inlined_call_operand.vmem [shape: f32[1,32], index: 13, kind: input, shape index: {}]
  %s14 = inlined_call_operand.hbm [shape: f32[64,32], index: 14, kind: output, shape index: {0}]
  %s15 = inlined_call_operand.hbm [shape: f32[4,8,8,8], index: 15, kind: output, shape index: {1}]
  %16 = xla_tuple %s14, %s15
  %s17 = sld [smem:[#allocation0]]
  $region74: #{shuffle_mtm_encoder_forward.5} parent=0
    _
  %s19 = ssub.s32 1, %s17
  %s20 = scalar_select 0, %s19, %s17
  $region1: #{shuffle_mtm_encoder_forward.5} parent=0
    #allocation3 [shape = 'u8[32768]{0}', space=vmem, size = 0x8000, scoped, tag = 'output window, operand 0, single buffered']
    #allocation4 [shape = 's32[1]{0}', space=sflag, size = 0x4, scoped, tag = 'scoped memory for shuffle_mtm_encoder_forward.5']
    #allocation5 [shape = 'u8[131072]{0}', space=vmem, size = 0x20000, scoped, tag = 'output window, operand 1, single buffered']
    #allocation6 [shape = 's32[1]{0}', space=sflag, size = 0x4, scoped, tag = 'scoped memory for shuffle_mtm_encoder_forward.5']
    %21 = vsyncpa [#allocation4], 0
    %22 = vsyncpa [#allocation6], 0
    // Predicated region
    $region2: #{shuffle_mtm_encoder_forward.5} parent=1 // pred_check
      _
    $region3: #{shuffle_mtm_encoder_forward.5} parent=1 // pred_check_branch
      %24 = sbr.rel (0) target = $region5
    $region4: #{shuffle_mtm_encoder_forward.5} parent=1 // pred_region
      _
    $region5: #{shuffle_mtm_encoder_forward.5} parent=1 // pred_fallthru
      _
    // Predicated region
    $region6: #{shuffle_mtm_encoder_forward.5} parent=1 // pred_check
      _
    $region7: #{shuffle_mtm_encoder_forward.5} parent=1 // pred_check_branch
      %26 = sbr.rel (0) target = $region9
    $region8: #{shuffle_mtm_encoder_forward.5} parent=1 // pred_region
      _
    $region9: #{shuffle_mtm_encoder_forward.5} parent=1 // pred_fallthru
      _
    // Predicated region
    $region10: #{shuffle_mtm_encoder_forward.5} parent=1 // pred_check
      _
    $region11: #{shuffle_mtm_encoder_forward.5} parent=1 // pred_check_branch
      %28 = sbr.rel (0) target = $region13
    $region12: #{shuffle_mtm_encoder_forward.5} parent=1 // pred_region
      _
    $region13: #{shuffle_mtm_encoder_forward.5} parent=1 // pred_fallthru
      _
    // Predicated region
    $region14: #{shuffle_mtm_encoder_forward.5} parent=1 // pred_check
      _
    $region15: #{shuffle_mtm_encoder_forward.5} parent=1 // pred_check_branch
      %30 = sbr.rel (0) target = $region17
    $region16: #{shuffle_mtm_encoder_forward.5} parent=1 // pred_region
      _
    $region17: #{shuffle_mtm_encoder_forward.5} parent=1 // pred_fallthru
      _
    // Predicated region
    $region18: #{shuffle_mtm_encoder_forward.5} parent=1 // pred_check
      _
    $region19: #{shuffle_mtm_encoder_forward.5} parent=1 // pred_check_branch
      %32 = sbr.rel (0) target = $region21
    $region20: #{shuffle_mtm_encoder_forward.5} parent=1 // pred_region
      _
    $region21: #{shuffle_mtm_encoder_forward.5} parent=1 // pred_fallthru
      _
    // Predicated region
    $region22: #{shuffle_mtm_encoder_forward.5} parent=1 // pred_check
      _
    $region23: #{shuffle_mtm_encoder_forward.5} parent=1 // pred_check_branch
      %34 = sbr.rel (0) target = $region25
    $region24: #{shuffle_mtm_encoder_forward.5} parent=1 // pred_region
      _
    $region25: #{shuffle_mtm_encoder_forward.5} parent=1 // pred_fallthru
      _
    // Predicated region
    $region26: #{shuffle_mtm_encoder_forward.5} parent=1 // pred_check
      _
    $region27: #{shuffle_mtm_encoder_forward.5} parent=1 // pred_check_branch
      %36 = sbr.rel (0) target = $region29
    $region28: #{shuffle_mtm_encoder_forward.5} parent=1 // pred_region
      _
    $region29: #{shuffle_mtm_encoder_forward.5} parent=1 // pred_fallthru
      _
    // Predicated region
    $region30: #{shuffle_mtm_encoder_forward.5} parent=1 // pred_check
      _
    $region31: #{shuffle_mtm_encoder_forward.5} parent=1 // pred_check_branch
      %38 = sbr.rel (0) target = $region33
    $region32: #{shuffle_mtm_encoder_forward.5} parent=1 // pred_region
      _
    $region33: #{shuffle_mtm_encoder_forward.5} parent=1 // pred_fallthru
      _
    // Predicated region
    $region34: #{shuffle_mtm_encoder_forward.5} parent=1 // pred_check
      _
    $region35: #{shuffle_mtm_encoder_forward.5} parent=1 // pred_check_branch
      %40 = sbr.rel (0) target = $region37
    $region36: #{shuffle_mtm_encoder_forward.5} parent=1 // pred_region
      _
    $region37: #{shuffle_mtm_encoder_forward.5} parent=1 // pred_fallthru
      _
    // Predicated region
    $region38: #{shuffle_mtm_encoder_forward.5} parent=1 // pred_check
      _
    $region39: #{shuffle_mtm_encoder_forward.5} parent=1 // pred_check_branch
      %42 = sbr.rel (0) target = $region41
    $region40: #{shuffle_mtm_encoder_forward.5} parent=1 // pred_region
      _
    $region41: #{shuffle_mtm_encoder_forward.5} parent=1 // pred_fallthru
      _
    // Predicated region
    $region42: #{shuffle_mtm_encoder_forward.5} parent=1 // pred_check
      _
    $region43: #{shuffle_mtm_encoder_forward.5} parent=1 // pred_check_branch
      %44 = sbr.rel (0) target = $region45
    $region44: #{shuffle_mtm_encoder_forward.5} parent=1 // pred_region
      _
    $region45: #{shuffle_mtm_encoder_forward.5} parent=1 // pred_fallthru
      _
    // Predicated region
    $region46: #{shuffle_mtm_encoder_forward.5} parent=1 // pred_check
      _
    $region47: #{shuffle_mtm_encoder_forward.5} parent=1 // pred_check_branch
      %46 = sbr.rel (0) target = $region49
    $region48: #{shuffle_mtm_encoder_forward.5} parent=1 // pred_region
      _
    $region49: #{shuffle_mtm_encoder_forward.5} parent=1 // pred_fallthru
      _
    // Predicated region
    $region50: #{shuffle_mtm_encoder_forward.5} parent=1 // pred_check
      _
    $region51: #{shuffle_mtm_encoder_forward.5} parent=1 // pred_check_branch
      %48 = sbr.rel (0) target = $region53
    $region52: #{shuffle_mtm_encoder_forward.5} parent=1 // pred_region
      _
    $region53: #{shuffle_mtm_encoder_forward.5} parent=1 // pred_fallthru
      _
    // Predicated region
    $region54: #{shuffle_mtm_encoder_forward.5} parent=1 // pred_check
      _
    $region55: #{shuffle_mtm_encoder_forward.5} parent=1 // pred_check_branch
      %50 = sbr.rel (0) target = $region57
    $region56: #{shuffle_mtm_encoder_forward.5} parent=1 // pred_region
      _
    $region57: #{shuffle_mtm_encoder_forward.5} parent=1 // pred_fallthru
      _
    %v52 = vld [vmem:[%s0] sm:$0xff]
    %v53 = vld [vmem:[%s0 + $0x8] sm:$0xff]
    %v54 = vld [vmem:[%s0 + $0x10] sm:$0xff]
    %v55 = vld [vmem:[%s0 + $0x18] sm:$0xff]
    %v56 = vld [vmem:[%s0 + $0x20] sm:$0xff]
    %v57 = vld [vmem:[%s0 + $0x28] sm:$0xff]
    %v58 = vld [vmem:[%s0 + $0x30] sm:$0xff]
    %v59 = vld [vmem:[%s0 + $0x38] sm:$0xff]
    %v60 = vpack.c.bf16 %v53, %v52
    %v61 = vpack.c.bf16 %v55, %v54
    %v62 = vpack.c.bf16 %v57, %v56
    %v63 = vpack.c.bf16 %v59, %v58
    %v64 = vld [vmem:[%s2] sm:$0xff]
    %v65 = vld [vmem:[%s2 + $0x8] sm:$0xff]
    %v66 = vld [vmem:[%s2 + $0x10] sm:$0xff]
    %v67 = vld [vmem:[%s2 + $0x18] sm:$0xff]
    %v68 = vpack.c.bf16 %v65, %v64
    %v69 = vpack.c.bf16 %v67, %v66
    %v70 = vld [vmem:[%s3] sm:$0x1]
    %v72 = vlaneseq
    %v73 = vshrl.u32 %v72, 7
    %v74 = vsub.s32 0, %v73
    %v75 = vrot.slane %v70, %v74
    %vm77 = vcmask 261120
    %v79 = vsel %vm77, %v60, 0
    %v82 = vsel %vm77, %v61, 0
    %v85 = vsel %vm77, %v62, 0
    %v88 = vsel %vm77, %v63, 0
    %90 = vmatprep.subr.bf16.mxu0 0
    %91 = vmatpush1.bf16.msra.mxu0 %v68
    %92 = vmatprep.subr.bf16.mxu0 0
    %93 = vmatpush1.bf16.msra.mxu0 %v69
    %94 = vmatprep.subr.bf16.mxu0 0
    %95 = vmatpush1.bf16.msra.mxu0 0
    %96 = vmatprep.subr.bf16.mxu0 0
    %97 = vmatpush1.bf16.msra.mxu0 0
    %98 = vmatprep.subr.bf16.mxu0 0
    %99 = vmatpush1.bf16.msra.mxu0 0
    %100 = vmatprep.subr.bf16.mxu0 0
    %101 = vmatpush1.bf16.msra.mxu0 0
    %102 = vmatprep.subr.bf16.mxu0 0
    %103 = vmatpush1.bf16.msra.mxu0 0
    %104 = vmatprep.subr.bf16.mxu0 0
    %105 = vmatpush1.bf16.msra.mxu0 0
    %106 = vmatprep.subr.bf16.mxu0 0
    %107 = vmatpush1.bf16.msra.mxu0 0
    %108 = vmatprep.subr.bf16.mxu0 0
    %109 = vmatpush1.bf16.msra.mxu0 0
    %110 = vmatprep.subr.bf16.mxu0 0
    %111 = vmatpush1.bf16.msra.mxu0 0
    %112 = vmatprep.subr.bf16.mxu0 0
    %113 = vmatpush1.bf16.msra.mxu0 0
    %114 = vmatprep.subr.bf16.mxu0 0
    %115 = vmatpush1.bf16.msra.mxu0 0
    %116 = vmatprep.subr.bf16.mxu0 0
    %117 = vmatpush1.bf16.msra.mxu0 0
    %118 = vmatprep.subr.bf16.mxu0 0
    %119 = vmatpush1.bf16.msra.mxu0 0
    %120 = vmatprep.subr.bf16.mxu0 0
    %121 = vmatpush1.bf16.msra.mxu0 0
    %122 = vmatprep.mubr.bf16.mxu0 0
    %123 = vmatmul.mubr.bf16.gmra.mrb[0].mxu0 %v79
    %v124 = vpop.f32.mrb[0].mxu0
    %v125 = vadd.f32 %v75, %v124
    %v126 = vpop.f32.mrb[0].mxu0
    %v127 = vpop.f32.mrb[0].mxu0
    %v128 = vadd.f32 %v75, %v127
    %v129 = vpop.f32.mrb[0].mxu0
    %130 = vmatprep.mubr.bf16.mxu0 0
    %131 = vmatmul.mubr.bf16.gmra.mrb[0].mxu0 %v82
    %v132 = vpop.f32.mrb[0].mxu0
    %v133 = vadd.f32 %v75, %v132
    %v134 = vpop.f32.mrb[0].mxu0
    %v135 = vpop.f32.mrb[0].mxu0
    %v136 = vadd.f32 %v75, %v135
    %v137 = vpop.f32.mrb[0].mxu0
    %138 = vmatprep.mubr.bf16.mxu0 0
    %139 = vmatmul.mubr.bf16.gmra.mrb[0].mxu0 %v85
    %v140 = vpop.f32.mrb[0].mxu0
    %v141 = vadd.f32 %v75, %v140
    %v142 = vpop.f32.mrb[0].mxu0
    %v143 = vpop.f32.mrb[0].mxu0
    %v144 = vadd.f32 %v75, %v143
    %v145 = vpop.f32.mrb[0].mxu0
    %146 = vmatprep.mubr.bf16.mxu0 0
    %147 = vmatmul.mubr.bf16.gmra.mrb[0].mxu0 %v88
    %v148 = vpop.f32.mrb[0].mxu0
    %v149 = vadd.f32 %v75, %v148
    %v150 = vpop.f32.mrb[0].mxu0
    %v151 = vpop.f32.mrb[0].mxu0
    %v152 = vadd.f32 %v75, %v151
    %v153 = vpop.f32.mrb[0].mxu0
    %154 = vdwg.mxu0
    %vm155 = vcmask 785408
    %156 = vst.msk [vmem:[#allocation2] sm:$0xff] %vm155, %v125
    %157 = vst.msk [vmem:[#allocation2 + $0x8] sm:$0xff] %vm155, %v128
    %158 = vst.msk [vmem:[#allocation2 + $0x10] sm:$0xff] %vm155, %v133
    %159 = vst.msk [vmem:[#allocation2 + $0x18] sm:$0xff] %vm155, %v136
    %160 = vst.msk [vmem:[#allocation2 + $0x20] sm:$0xff] %vm155, %v141
    %161 = vst.msk [vmem:[#allocation2 + $0x28] sm:$0xff] %vm155, %v144
    %162 = vst.msk [vmem:[#allocation2 + $0x30] sm:$0xff] %vm155, %v149
    %163 = vst.msk [vmem:[#allocation2 + $0x38] sm:$0xff] %vm155, %v152
    %v164 = vld [vmem:[#allocation2] sm:$0xff]
    %v165 = vld [vmem:[#allocation2 + $0x8] sm:$0xff]
    %v166 = vld [vmem:[#allocation2 + $0x10] sm:$0xff]
    %v167 = vld [vmem:[#allocation2 + $0x18] sm:$0xff]
    %v168 = vld [vmem:[#allocation2 + $0x20] sm:$0xff]
    %v169 = vld [vmem:[#allocation2 + $0x28] sm:$0xff]
    %v170 = vld [vmem:[#allocation2 + $0x30] sm:$0xff]
    %v171 = vld [vmem:[#allocation2 + $0x38] sm:$0xff]
    %v172 = vpack.c.bf16 %v164, %v164
    %v173 = vpack.c.bf16 %v165, %v165
    %v174 = vpack.c.bf16 %v166, %v166
    %v175 = vpack.c.bf16 %v167, %v167
    %v176 = vpack.c.bf16 %v168, %v168
    %v177 = vpack.c.bf16 %v169, %v169
    %v178 = vpack.c.bf16 %v170, %v170
    %v179 = vpack.c.bf16 %v171, %v171
    %181 = vrot.lane.b32.xlu0 %v172, 96
    %v182 = vpop.permute.xlu0 %181
    %vm183 = vcmask 64512
    %v185 = vsel %vm183, %v172, 0
    %v188 = vsel %vm183, %v182, 0
    %190 = vmatprep.subr.bf16.mxu0 0
    %191 = vmatpush1.bf16.xpose.msra.mxu0 %v188
    %192 = vmatprep.subr.bf16.mxu0 0
    %193 = vmatpush1.bf16.xpose.msra.mxu0 0
    %194 = vmatprep.subr.bf16.mxu0 0
    %195 = vmatpush1.bf16.xpose.msra.mxu0 0
    %196 = vmatprep.subr.bf16.mxu0 0
    %197 = vmatpush1.bf16.xpose.msra.mxu0 0
    %198 = vmatprep.subr.bf16.mxu0 0
    %199 = vmatpush1.bf16.xpose.msra.mxu0 0
    %200 = vmatprep.subr.bf16.mxu0 0
    %201 = vmatpush1.bf16.xpose.msra.mxu0 0
    %202 = vmatprep.subr.bf16.mxu0 0
    %203 = vmatpush1.bf16.xpose.msra.mxu0 0
    %204 = vmatprep.subr.bf16.mxu0 0
    %205 = vmatpush1.bf16.xpose.msra.mxu0 0
    %206 = vmatprep.subr.bf16.mxu0 0
    %207 = vmatpush1.bf16.xpose.msra.mxu0 0
    %208 = vmatprep.subr.bf16.mxu0 0
    %209 = vmatpush1.bf16.xpose.msra.mxu0 0
    %210 = vmatprep.subr.bf16.mxu0 0
    %211 = vmatpush1.bf16.xpose.msra.mxu0 0
    %212 = vmatprep.subr.bf16.mxu0 0
    %213 = vmatpush1.bf16.xpose.msra.mxu0 0
    %214 = vmatprep.subr.bf16.mxu0 0
    %215 = vmatpush1.bf16.xpose.msra.mxu0 0
    %216 = vmatprep.subr.bf16.mxu0 0
    %217 = vmatpush1.bf16.xpose.msra.mxu0 0
    %218 = vmatprep.subr.bf16.mxu0 0
    %219 = vmatpush1.bf16.xpose.msra.mxu0 0
    %220 = vmatprep.subr.bf16.mxu0 0
    %221 = vmatpush1.bf16.xpose.msra.mxu0 0
    %222 = vmatprep.mubr.bf16.mxu0 0
    %223 = vmatmul.mubr.bf16.gmra.mrb[0].mxu0 %v185
    %v224 = vpop.f32.mrb[0].mxu0
    %v225 = vadd.f32 0.0, %v224
    %v226 = vpop.f32.mrb[0].mxu0
    %v227 = vpop.f32.mrb[0].mxu0
    %v228 = vpop.f32.mrb[0].mxu0
    %229 = vdwg.mxu0
    %231 = vrot.lane.b32.xlu0 %v173, 96
    %v232 = vpop.permute.xlu0 %231
    %v234 = vsel %vm183, %v173, 0
    %v237 = vsel %vm183, %v232, 0
    %239 = vmatprep.subr.bf16.mxu0 0
    %240 = vmatpush1.bf16.xpose.msra.mxu0 %v237
    %241 = vmatprep.subr.bf16.mxu0 0
    %242 = vmatpush1.bf16.xpose.msra.mxu0 0
    %243 = vmatprep.subr.bf16.mxu0 0
    %244 = vmatpush1.bf16.xpose.msra.mxu0 0
    %245 = vmatprep.subr.bf16.mxu0 0
    %246 = vmatpush1.bf16.xpose.msra.mxu0 0
    %247 = vmatprep.subr.bf16.mxu0 0
    %248 = vmatpush1.bf16.xpose.msra.mxu0 0
    %249 = vmatprep.subr.bf16.mxu0 0
    %250 = vmatpush1.bf16.xpose.msra.mxu0 0
    %251 = vmatprep.subr.bf16.mxu0 0
    %252 = vmatpush1.bf16.xpose.msra.mxu0 0
    %253 = vmatprep.subr.bf16.mxu0 0
    %254 = vmatpush1.bf16.xpose.msra.mxu0 0
    %255 = vmatprep.subr.bf16.mxu0 0
    %256 = vmatpush1.bf16.xpose.msra.mxu0 0
    %257 = vmatprep.subr.bf16.mxu0 0
    %258 = vmatpush1.bf16.xpose.msra.mxu0 0
    %259 = vmatprep.subr.bf16.mxu0 0
    %260 = vmatpush1.bf16.xpose.msra.mxu0 0
    %261 = vmatprep.subr.bf16.mxu0 0
    %262 = vmatpush1.bf16.xpose.msra.mxu0 0
    %263 = vmatprep.subr.bf16.mxu0 0
    %264 = vmatpush1.bf16.xpose.msra.mxu0 0
    %265 = vmatprep.subr.bf16.mxu0 0
    %266 = vmatpush1.bf16.xpose.msra.mxu0 0
    %267 = vmatprep.subr.bf16.mxu0 0
    %268 = vmatpush1.bf16.xpose.msra.mxu0 0
    %269 = vmatprep.subr.bf16.mxu0 0
    %270 = vmatpush1.bf16.xpose.msra.mxu0 0
    %271 = vmatprep.mubr.bf16.mxu0 0
    %272 = vmatmul.mubr.bf16.gmra.mrb[0].mxu0 %v234
    %v273 = vpop.f32.mrb[0].mxu0
    %v274 = vadd.f32 0.0, %v273
    %v275 = vpop.f32.mrb[0].mxu0
    %v276 = vpop.f32.mrb[0].mxu0
    %v277 = vpop.f32.mrb[0].mxu0
    %278 = vdwg.mxu0
    %280 = vrot.lane.b32.xlu0 %v174, 96
    %v281 = vpop.permute.xlu0 %280
    %v283 = vsel %vm183, %v174, 0
    %v286 = vsel %vm183, %v281, 0
    %288 = vmatprep.subr.bf16.mxu0 0
    %289 = vmatpush1.bf16.xpose.msra.mxu0 %v286
    %290 = vmatprep.subr.bf16.mxu0 0
    %291 = vmatpush1.bf16.xpose.msra.mxu0 0
    %292 = vmatprep.subr.bf16.mxu0 0
    %293 = vmatpush1.bf16.xpose.msra.mxu0 0
    %294 = vmatprep.subr.bf16.mxu0 0
    %295 = vmatpush1.bf16.xpose.msra.mxu0 0
    %296 = vmatprep.subr.bf16.mxu0 0
    %297 = vmatpush1.bf16.xpose.msra.mxu0 0
    %298 = vmatprep.subr.bf16.mxu0 0
    %299 = vmatpush1.bf16.xpose.msra.mxu0 0
    %300 = vmatprep.subr.bf16.mxu0 0
    %301 = vmatpush1.bf16.xpose.msra.mxu0 0
    %302 = vmatprep.subr.bf16.mxu0 0
    %303 = vmatpush1.bf16.xpose.msra.mxu0 0
    %304 = vmatprep.subr.bf16.mxu0 0
    %305 = vmatpush1.bf16.xpose.msra.mxu0 0
    %306 = vmatprep.subr.bf16.mxu0 0
    %307 = vmatpush1.bf16.xpose.msra.mxu0 0
    %308 = vmatprep.subr.bf16.mxu0 0
    %309 = vmatpush1.bf16.xpose.msra.mxu0 0
    %310 = vmatprep.subr.bf16.mxu0 0
    %311 = vmatpush1.bf16.xpose.msra.mxu0 0
    %312 = vmatprep.subr.bf16.mxu0 0
    %313 = vmatpush1.bf16.xpose.msra.mxu0 0
    %314 = vmatprep.subr.bf16.mxu0 0
    %315 = vmatpush1.bf16.xpose.msra.mxu0 0
    %316 = vmatprep.subr.bf16.mxu0 0
    %317 = vmatpush1.bf16.xpose.msra.mxu0 0
    %318 = vmatprep.subr.bf16.mxu0 0
    %319 = vmatpush1.bf16.xpose.msra.mxu0 0
    %320 = vmatprep.mubr.bf16.mxu0 0
    %321 = vmatmul.mubr.bf16.gmra.mrb[0].mxu0 %v283
    %v322 = vpop.f32.mrb[0].mxu0
    %v323 = vadd.f32 0.0, %v322
    %v324 = vpop.f32.mrb[0].mxu0
    %v325 = vpop.f32.mrb[0].mxu0
    %v326 = vpop.f32.mrb[0].mxu0
    %327 = vdwg.mxu0
    %329 = vrot.lane.b32.xlu0 %v175, 96
    %v330 = vpop.permute.xlu0 %329
    %v332 = vsel %vm183, %v175, 0
    %v335 = vsel %vm183, %v330, 0
    %337 = vmatprep.subr.bf16.mxu0 0
    %338 = vmatpush1.bf16.xpose.msra.mxu0 %v335
    %339 = vmatprep.subr.bf16.mxu0 0
    %340 = vmatpush1.bf16.xpose.msra.mxu0 0
    %341 = vmatprep.subr.bf16.mxu0 0
    %342 = vmatpush1.bf16.xpose.msra.mxu0 0
    %343 = vmatprep.subr.bf16.mxu0 0
    %344 = vmatpush1.bf16.xpose.msra.mxu0 0
    %345 = vmatprep.subr.bf16.mxu0 0
    %346 = vmatpush1.bf16.xpose.msra.mxu0 0
    %347 = vmatprep.subr.bf16.mxu0 0
    %348 = vmatpush1.bf16.xpose.msra.mxu0 0
    %349 = vmatprep.subr.bf16.mxu0 0
    %350 = vmatpush1.bf16.xpose.msra.mxu0 0
    %351 = vmatprep.subr.bf16.mxu0 0
    %352 = vmatpush1.bf16.xpose.msra.mxu0 0
    %353 = vmatprep.subr.bf16.mxu0 0
    %354 = vmatpush1.bf16.xpose.msra.mxu0 0
    %355 = vmatprep.subr.bf16.mxu0 0
    %356 = vmatpush1.bf16.xpose.msra.mxu0 0
    %357 = vmatprep.subr.bf16.mxu0 0
    %358 = vmatpush1.bf16.xpose.msra.mxu0 0
    %359 = vmatprep.subr.bf16.mxu0 0
    %360 = vmatpush1.bf16.xpose.msra.mxu0 0
    %361 = vmatprep.subr.bf16.mxu0 0
    %362 = vmatpush1.bf16.xpose.msra.mxu0 0
    %363 = vmatprep.subr.bf16.mxu0 0
    %364 = vmatpush1.bf16.xpose.msra.mxu0 0
    %365 = vmatprep.subr.bf16.mxu0 0
    %366 = vmatpush1.bf16.xpose.msra.mxu0 0
    %367 = vmatprep.subr.bf16.mxu0 0
    %368 = vmatpush1.bf16.xpose.msra.mxu0 0
    %369 = vmatprep.mubr.bf16.mxu0 0
    %370 = vmatmul.mubr.bf16.gmra.mrb[0].mxu0 %v332
    %v371 = vpop.f32.mrb[0].mxu0
    %v372 = vadd.f32 0.0, %v371
    %v373 = vpop.f32.mrb[0].mxu0
    %v374 = vpop.f32.mrb[0].mxu0
    %v375 = vpop.f32.mrb[0].mxu0
    %376 = vdwg.mxu0
    %378 = vrot.lane.b32.xlu0 %v176, 96
    %v379 = vpop.permute.xlu0 %378
    %v381 = vsel %vm183, %v176, 0
    %v384 = vsel %vm183, %v379, 0
    %386 = vmatprep.subr.bf16.mxu0 0
    %387 = vmatpush1.bf16.xpose.msra.mxu0 %v384
    %388 = vmatprep.subr.bf16.mxu0 0
    %389 = vmatpush1.bf16.xpose.msra.mxu0 0
    %390 = vmatprep.subr.bf16.mxu0 0
    %391 = vmatpush1.bf16.xpose.msra.mxu0 0
    %392 = vmatprep.subr.bf16.mxu0 0
    %393 = vmatpush1.bf16.xpose.msra.mxu0 0
    %394 = vmatprep.subr.bf16.mxu0 0
    %395 = vmatpush1.bf16.xpose.msra.mxu0 0
    %396 = vmatprep.subr.bf16.mxu0 0
    %397 = vmatpush1.bf16.xpose.msra.mxu0 0
    %398 = vmatprep.subr.bf16.mxu0 0
    %399 = vmatpush1.bf16.xpose.msra.mxu0 0
    %400 = vmatprep.subr.bf16.mxu0 0
    %401 = vmatpush1.bf16.xpose.msra.mxu0 0
    %402 = vmatprep.subr.bf16.mxu0 0
    %403 = vmatpush1.bf16.xpose.msra.mxu0 0
    %404 = vmatprep.subr.bf16.mxu0 0
    %405 = vmatpush1.bf16.xpose.msra.mxu0 0
    %406 = vmatprep.subr.bf16.mxu0 0
    %407 = vmatpush1.bf16.xpose.msra.mxu0 0
    %408 = vmatprep.subr.bf16.mxu0 0
    %409 = vmatpush1.bf16.xpose.msra.mxu0 0
    %410 = vmatprep.subr.bf16.mxu0 0
    %411 = vmatpush1.bf16.xpose.msra.mxu0 0
    %412 = vmatprep.subr.bf16.mxu0 0
    %413 = vmatpush1.bf16.xpose.msra.mxu0 0
    %414 = vmatprep.subr.bf16.mxu0 0
    %415 = vmatpush1.bf16.xpose.msra.mxu0 0
    %416 = vmatprep.subr.bf16.mxu0 0
    %417 = vmatpush1.bf16.xpose.msra.mxu0 0
    %418 = vmatprep.mubr.bf16.mxu0 0
    %419 = vmatmul.mubr.bf16.gmra.mrb[0].mxu0 %v381
    %v420 = vpop.f32.mrb[0].mxu0
    %v421 = vadd.f32 0.0, %v420
    %v422 = vpop.f32.mrb[0].mxu0
    %v423 = vpop.f32.mrb[0].mxu0
    %v424 = vpop.f32.mrb[0].mxu0
    %425 = vdwg.mxu0
    %427 = vrot.lane.b32.xlu0 %v177, 96
    %v428 = vpop.permute.xlu0 %427
    %v430 = vsel %vm183, %v177, 0
    %v433 = vsel %vm183, %v428, 0
    %435 = vmatprep.subr.bf16.mxu0 0
    %436 = vmatpush1.bf16.xpose.msra.mxu0 %v433
    %437 = vmatprep.subr.bf16.mxu0 0
    %438 = vmatpush1.bf16.xpose.msra.mxu0 0
    %439 = vmatprep.subr.bf16.mxu0 0
    %440 = vmatpush1.bf16.xpose.msra.mxu0 0
    %441 = vmatprep.subr.bf16.mxu0 0
    %442 = vmatpush1.bf16.xpose.msra.mxu0 0
    %443 = vmatprep.subr.bf16.mxu0 0
    %444 = vmatpush1.bf16.xpose.msra.mxu0 0
    %445 = vmatprep.subr.bf16.mxu0 0
    %446 = vmatpush1.bf16.xpose.msra.mxu0 0
    %447 = vmatprep.subr.bf16.mxu0 0
    %448 = vmatpush1.bf16.xpose.msra.mxu0 0
    %449 = vmatprep.subr.bf16.mxu0 0
    %450 = vmatpush1.bf16.xpose.msra.mxu0 0
    %451 = vmatprep.subr.bf16.mxu0 0
    %452 = vmatpush1.bf16.xpose.msra.mxu0 0
    %453 = vmatprep.subr.bf16.mxu0 0
    %454 = vmatpush1.bf16.xpose.msra.mxu0 0
    %455 = vmatprep.subr.bf16.mxu0 0
    %456 = vmatpush1.bf16.xpose.msra.mxu0 0
    %457 = vmatprep.subr.bf16.mxu0 0
    %458 = vmatpush1.bf16.xpose.msra.mxu0 0
    %459 = vmatprep.subr.bf16.mxu0 0
    %460 = vmatpush1.bf16.xpose.msra.mxu0 0
    %461 = vmatprep.subr.bf16.mxu0 0
    %462 = vmatpush1.bf16.xpose.msra.mxu0 0
    %463 = vmatprep.subr.bf16.mxu0 0
    %464 = vmatpush1.bf16.xpose.msra.mxu0 0
    %465 = vmatprep.subr.bf16.mxu0 0
    %466 = vmatpush1.bf16.xpose.msra.mxu0 0
    %467 = vmatprep.mubr.bf16.mxu0 0
    %468 = vmatmul.mubr.bf16.gmra.mrb[0].mxu0 %v430
    %v469 = vpop.f32.mrb[0].mxu0
    %v470 = vadd.f32 0.0, %v469
    %v471 = vpop.f32.mrb[0].mxu0
    %v472 = vpop.f32.mrb[0].mxu0
    %v473 = vpop.f32.mrb[0].mxu0
    %474 = vdwg.mxu0
    %476 = vrot.lane.b32.xlu0 %v178, 96
    %v477 = vpop.permute.xlu0 %476
    %v479 = vsel %vm183, %v178, 0
    %v482 = vsel %vm183, %v477, 0
    %484 = vmatprep.subr.bf16.mxu0 0
    %485 = vmatpush1.bf16.xpose.msra.mxu0 %v482
    %486 = vmatprep.subr.bf16.mxu0 0
    %487 = vmatpush1.bf16.xpose.msra.mxu0 0
    %488 = vmatprep.subr.bf16.mxu0 0
    %489 = vmatpush1.bf16.xpose.msra.mxu0 0
    %490 = vmatprep.subr.bf16.mxu0 0
    %491 = vmatpush1.bf16.xpose.msra.mxu0 0
    %492 = vmatprep.subr.bf16.mxu0 0
    %493 = vmatpush1.bf16.xpose.msra.mxu0 0
    %494 = vmatprep.subr.bf16.mxu0 0
    %495 = vmatpush1.bf16.xpose.msra.mxu0 0
    %496 = vmatprep.subr.bf16.mxu0 0
    %497 = vmatpush1.bf16.xpose.msra.mxu0 0
    %498 = vmatprep.subr.bf16.mxu0 0
    %499 = vmatpush1.bf16.xpose.msra.mxu0 0
    %500 = vmatprep.subr.bf16.mxu0 0
    %501 = vmatpush1.bf16.xpose.msra.mxu0 0
    %502 = vmatprep.subr.bf16.mxu0 0
    %503 = vmatpush1.bf16.xpose.msra.mxu0 0
    %504 = vmatprep.subr.bf16.mxu0 0
    %505 = vmatpush1.bf16.xpose.msra.mxu0 0
    %506 = vmatprep.subr.bf16.mxu0 0
    %507 = vmatpush1.bf16.xpose.msra.mxu0 0
    %508 = vmatprep.subr.bf16.mxu0 0
    %509 = vmatpush1.bf16.xpose.msra.mxu0 0
    %510 = vmatprep.subr.bf16.mxu0 0
    %511 = vmatpush1.bf16.xpose.msra.mxu0 0
    %512 = vmatprep.subr.bf16.mxu0 0
    %513 = vmatpush1.bf16.xpose.msra.mxu0 0
    %514 = vmatprep.subr.bf16.mxu0 0
    %515 = vmatpush1.bf16.xpose.msra.mxu0 0
    %516 = vmatprep.mubr.bf16.mxu0 0
    %517 = vmatmul.mubr.bf16.gmra.mrb[0].mxu0 %v479
    %v518 = vpop.f32.mrb[0].mxu0
    %v519 = vadd.f32 0.0, %v518
    %v520 = vpop.f32.mrb[0].mxu0
    %v521 = vpop.f32.mrb[0].mxu0
    %v522 = vpop.f32.mrb[0].mxu0
    %523 = vdwg.mxu0
    %525 = vrot.lane.b32.xlu0 %v179, 96
    %v526 = vpop.permute.xlu0 %525
    %v528 = vsel %vm183, %v179, 0
    %v531 = vsel %vm183, %v526, 0
    %533 = vmatprep.subr.bf16.mxu0 0
    %534 = vmatpush1.bf16.xpose.msra.mxu0 %v531
    %535 = vmatprep.subr.bf16.mxu0 0
    %536 = vmatpush1.bf16.xpose.msra.mxu0 0
    %537 = vmatprep.subr.bf16.mxu0 0
    %538 = vmatpush1.bf16.xpose.msra.mxu0 0
    %539 = vmatprep.subr.bf16.mxu0 0
    %540 = vmatpush1.bf16.xpose.msra.mxu0 0
    %541 = vmatprep.subr.bf16.mxu0 0
    %542 = vmatpush1.bf16.xpose.msra.mxu0 0
    %543 = vmatprep.subr.bf16.mxu0 0
    %544 = vmatpush1.bf16.xpose.msra.mxu0 0
    %545 = vmatprep.subr.bf16.mxu0 0
    %546 = vmatpush1.bf16.xpose.msra.mxu0 0
    %547 = vmatprep.subr.bf16.mxu0 0
    %548 = vmatpush1.bf16.xpose.msra.mxu0 0
    %549 = vmatprep.subr.bf16.mxu0 0
    %550 = vmatpush1.bf16.xpose.msra.mxu0 0
    %551 = vmatprep.subr.bf16.mxu0 0
    %552 = vmatpush1.bf16.xpose.msra.mxu0 0
    %553 = vmatprep.subr.bf16.mxu0 0
    %554 = vmatpush1.bf16.xpose.msra.mxu0 0
    %555 = vmatprep.subr.bf16.mxu0 0
    %556 = vmatpush1.bf16.xpose.msra.mxu0 0
    %557 = vmatprep.subr.bf16.mxu0 0
    %558 = vmatpush1.bf16.xpose.msra.mxu0 0
    %559 = vmatprep.subr.bf16.mxu0 0
    %560 = vmatpush1.bf16.xpose.msra.mxu0 0
    %561 = vmatprep.subr.bf16.mxu0 0
    %562 = vmatpush1.bf16.xpose.msra.mxu0 0
    %563 = vmatprep.subr.bf16.mxu0 0
    %564 = vmatpush1.bf16.xpose.msra.mxu0 0
    %565 = vmatprep.mubr.bf16.mxu0 0
    %566 = vmatmul.mubr.bf16.gmra.mrb[0].mxu0 %v528
    %v567 = vpop.f32.mrb[0].mxu0
    %v568 = vadd.f32 0.0, %v567
    %v569 = vpop.f32.mrb[0].mxu0
    %v570 = vpop.f32.mrb[0].mxu0
    %v571 = vpop.f32.mrb[0].mxu0
    %572 = vdwg.mxu0
    %v573 = vmul.f32 %v225, 0.35355338
    %v574 = vmul.f32 %v274, 0.35355338
    %v575 = vmul.f32 %v323, 0.35355338
    %v576 = vmul.f32 %v372, 0.35355338
    %v577 = vmul.f32 %v421, 0.35355338
    %v578 = vmul.f32 %v470, 0.35355338
    %v579 = vmul.f32 %v519, 0.35355338
    %v580 = vmul.f32 %v568, 0.35355338
    %v581 = vld [vmem:[%s1] sm:$0xff]
    %v582 = vld [vmem:[%s1 + $0x8] sm:$0xff]
    %v583 = vld [vmem:[%s1 + $0x10] sm:$0xff]
    %v584 = vld [vmem:[%s1 + $0x18] sm:$0xff]
    %v585 = vld [vmem:[%s1 + $0x20] sm:$0xff]
    %v586 = vld [vmem:[%s1 + $0x28] sm:$0xff]
    %v587 = vld [vmem:[%s1 + $0x30] sm:$0xff]
    %v588 = vld [vmem:[%s1 + $0x38] sm:$0xff]
    %v589 = vadd.f32 %v573, %v581
    %v590 = vadd.f32 %v574, %v582
    %v591 = vadd.f32 %v575, %v583
    %v592 = vadd.f32 %v576, %v584
    %v593 = vadd.f32 %v577, %v585
    %v594 = vadd.f32 %v578, %v586
    %v595 = vadd.f32 %v579, %v587
    %v596 = vadd.f32 %v580, %v588
    %597 = vst.msk [vmem:[#allocation5] sm:$0xff] %vm183, %v589
    %598 = vst.msk [vmem:[#allocation5 + $0x8] sm:$0xff] %vm183, %v590
    %599 = vst.msk [vmem:[#allocation5 + $0x10] sm:$0xff] %vm183, %v591
    %600 = vst.msk [vmem:[#allocation5 + $0x18] sm:$0xff] %vm183, %v592
    %601 = vst.msk [vmem:[#allocation5 + $0x20] sm:$0xff] %vm183, %v593
    %602 = vst.msk [vmem:[#allocation5 + $0x28] sm:$0xff] %vm183, %v594
    %603 = vst.msk [vmem:[#allocation5 + $0x30] sm:$0xff] %vm183, %v595
    %604 = vst.msk [vmem:[#allocation5 + $0x38] sm:$0xff] %vm183, %v596
    %v605 = vsel %vm183, %v589, -inf
    %606 = vmax.xlane.f32.xlu0 %v605
    %v607 = vpop.xlane.xlu0 %606
    %v608 = vsel %vm183, %v590, -inf
    %609 = vmax.xlane.f32.xlu0 %v608
    %v610 = vpop.xlane.xlu0 %609
    %v611 = vsel %vm183, %v591, -inf
    %612 = vmax.xlane.f32.xlu0 %v611
    %v613 = vpop.xlane.xlu0 %612
    %v614 = vsel %vm183, %v592, -inf
    %615 = vmax.xlane.f32.xlu0 %v614
    %v616 = vpop.xlane.xlu0 %615
    %v617 = vsel %vm183, %v593, -inf
    %618 = vmax.xlane.f32.xlu0 %v617
    %v619 = vpop.xlane.xlu0 %618
    %v620 = vsel %vm183, %v594, -inf
    %621 = vmax.xlane.f32.xlu0 %v620
    %v622 = vpop.xlane.xlu0 %621
    %v623 = vsel %vm183, %v595, -inf
    %624 = vmax.xlane.f32.xlu0 %v623
    %v625 = vpop.xlane.xlu0 %624
    %v626 = vsel %vm183, %v596, -inf
    %627 = vmax.xlane.f32.xlu0 %v626
    %v628 = vpop.xlane.xlu0 %627
    %v629 = vsub.f32 %v589, %v607
    %v630 = vsub.f32 %v590, %v610
    %v631 = vsub.f32 %v591, %v613
    %v632 = vsub.f32 %v592, %v616
    %v633 = vsub.f32 %v593, %v619
    %v634 = vsub.f32 %v594, %v622
    %v635 = vsub.f32 %v595, %v625
    %v636 = vsub.f32 %v596, %v628
    %v637 = vmul.f32 %v629, 1.442695
    %v638 = vpow.pop %v637
    %v639 = vmul.f32 %v630, 1.442695
    %v640 = vpow.pop %v639
    %v641 = vmul.f32 %v631, 1.442695
    %v642 = vpow.pop %v641
    %v643 = vmul.f32 %v632, 1.442695
    %v644 = vpow.pop %v643
    %v645 = vmul.f32 %v633, 1.442695
    %v646 = vpow.pop %v645
    %v647 = vmul.f32 %v634, 1.442695
    %v648 = vpow.pop %v647
    %v649 = vmul.f32 %v635, 1.442695
    %v650 = vpow.pop %v649
    %v651 = vmul.f32 %v636, 1.442695
    %v652 = vpow.pop %v651
    %v653 = vsel %vm183, %v638, 0.0
    %654 = vadd.xlane.f32.xlu0 %v653
    %v655 = vpop.xlane.xlu0 %654
    %v656 = vsel %vm183, %v640, 0.0
    %657 = vadd.xlane.f32.xlu0 %v656
    %v658 = vpop.xlane.xlu0 %657
    %v659 = vsel %vm183, %v642, 0.0
    %660 = vadd.xlane.f32.xlu0 %v659
    %v661 = vpop.xlane.xlu0 %660
    %v662 = vsel %vm183, %v644, 0.0
    %663 = vadd.xlane.f32.xlu0 %v662
    %v664 = vpop.xlane.xlu0 %663
    %v665 = vsel %vm183, %v646, 0.0
    %666 = vadd.xlane.f32.xlu0 %v665
    %v667 = vpop.xlane.xlu0 %666
    %v668 = vsel %vm183, %v648, 0.0
    %669 = vadd.xlane.f32.xlu0 %v668
    %v670 = vpop.xlane.xlu0 %669
    %v671 = vsel %vm183, %v650, 0.0
    %672 = vadd.xlane.f32.xlu0 %v671
    %v673 = vpop.xlane.xlu0 %672
    %v674 = vsel %vm183, %v652, 0.0
    %675 = vadd.xlane.f32.xlu0 %v674
    %v676 = vpop.xlane.xlu0 %675
    %v677 = vrcp.pop %v655
    %v678 = vrcp.pop %v658
    %v679 = vrcp.pop %v661
    %v680 = vrcp.pop %v664
    %v681 = vrcp.pop %v667
    %v682 = vrcp.pop %v670
    %v683 = vrcp.pop %v673
    %v684 = vrcp.pop %v676
    %v685 = vmul.f32 %v638, %v677
    %v686 = vmul.f32 %v640, %v678
    %v687 = vmul.f32 %v642, %v679
    %v688 = vmul.f32 %v644, %v680
    %v689 = vmul.f32 %v646, %v681
    %v690 = vmul.f32 %v648, %v682
    %v691 = vmul.f32 %v650, %v683
    %v692 = vmul.f32 %v652, %v684
    %v693 = vpack.c.bf16 %v685, %v685
    %v694 = vpack.c.bf16 %v686, %v686
    %v695 = vpack.c.bf16 %v687, %v687
    %v696 = vpack.c.bf16 %v688, %v688
    %v697 = vpack.c.bf16 %v689, %v689
    %v698 = vpack.c.bf16 %v690, %v690
    %v699 = vpack.c.bf16 %v691, %v691
    %v700 = vpack.c.bf16 %v692, %v692
    %701 = vrot.lane.b32.xlu0 %v172, 64
    %v702 = vpop.permute.xlu0 %701
    %v704 = vsel %vm183, %v693, 0
    %vm706 = vcmask 1043456
    %v708 = vsel %vm706, %v702, 0
    %710 = vmatprep.subr.bf16.mxu0 0
    %711 = vmatpush1.bf16.msra.mxu0 %v708
    %712 = vmatprep.subr.bf16.mxu0 0
    %713 = vmatpush1.bf16.msra.mxu0 0
    %714 = vmatprep.subr.bf16.mxu0 0
    %715 = vmatpush1.bf16.msra.mxu0 0
    %716 = vmatprep.subr.bf16.mxu0 0
    %717 = vmatpush1.bf16.msra.mxu0 0
    %718 = vmatprep.subr.bf16.mxu0 0
    %719 = vmatpush1.bf16.msra.mxu0 0
    %720 = vmatprep.subr.bf16.mxu0 0
    %721 = vmatpush1.bf16.msra.mxu0 0
    %722 = vmatprep.subr.bf16.mxu0 0
    %723 = vmatpush1.bf16.msra.mxu0 0
    %724 = vmatprep.subr.bf16.mxu0 0
    %725 = vmatpush1.bf16.msra.mxu0 0
    %726 = vmatprep.subr.bf16.mxu0 0
    %727 = vmatpush1.bf16.msra.mxu0 0
    %728 = vmatprep.subr.bf16.mxu0 0
    %729 = vmatpush1.bf16.msra.mxu0 0
    %730 = vmatprep.subr.bf16.mxu0 0
    %731 = vmatpush1.bf16.msra.mxu0 0
    %732 = vmatprep.subr.bf16.mxu0 0
    %733 = vmatpush1.bf16.msra.mxu0 0
    %734 = vmatprep.subr.bf16.mxu0 0
    %735 = vmatpush1.bf16.msra.mxu0 0
    %736 = vmatprep.subr.bf16.mxu0 0
    %737 = vmatpush1.bf16.msra.mxu0 0
    %738 = vmatprep.subr.bf16.mxu0 0
    %739 = vmatpush1.bf16.msra.mxu0 0
    %740 = vmatprep.subr.bf16.mxu0 0
    %741 = vmatpush1.bf16.msra.mxu0 0
    %742 = vmatprep.mubr.bf16.mxu0 0
    %743 = vmatmul.mubr.bf16.gmra.mrb[0].mxu0 %v704
    %v744 = vpop.f32.mrb[0].mxu0
    %v745 = vadd.f32 0.0, %v744
    %v746 = vpop.f32.mrb[0].mxu0
    %v747 = vpop.f32.mrb[0].mxu0
    %v748 = vpop.f32.mrb[0].mxu0
    %749 = vdwg.mxu0
    %750 = vrot.lane.b32.xlu0 %v173, 64
    %v751 = vpop.permute.xlu0 %750
    %v753 = vsel %vm183, %v694, 0
    %v756 = vsel %vm706, %v751, 0
    %758 = vmatprep.subr.bf16.mxu0 0
    %759 = vmatpush1.bf16.msra.mxu0 %v756
    %760 = vmatprep.subr.bf16.mxu0 0
    %761 = vmatpush1.bf16.msra.mxu0 0
    %762 = vmatprep.subr.bf16.mxu0 0
    %763 = vmatpush1.bf16.msra.mxu0 0
    %764 = vmatprep.subr.bf16.mxu0 0
    %765 = vmatpush1.bf16.msra.mxu0 0
    %766 = vmatprep.subr.bf16.mxu0 0
    %767 = vmatpush1.bf16.msra.mxu0 0
    %768 = vmatprep.subr.bf16.mxu0 0
    %769 = vmatpush1.bf16.msra.mxu0 0
    %770 = vmatprep.subr.bf16.mxu0 0
    %771 = vmatpush1.bf16.msra.mxu0 0
    %772 = vmatprep.subr.bf16.mxu0 0
    %773 = vmatpush1.bf16.msra.mxu0 0
    %774 = vmatprep.subr.bf16.mxu0 0
    %775 = vmatpush1.bf16.msra.mxu0 0
    %776 = vmatprep.subr.bf16.mxu0 0
    %777 = vmatpush1.bf16.msra.mxu0 0
    %778 = vmatprep.subr.bf16.mxu0 0
    %779 = vmatpush1.bf16.msra.mxu0 0
    %780 = vmatprep.subr.bf16.mxu0 0
    %781 = vmatpush1.bf16.msra.mxu0 0
    %782 = vmatprep.subr.bf16.mxu0 0
    %783 = vmatpush1.bf16.msra.mxu0 0
    %784 = vmatprep.subr.bf16.mxu0 0
    %785 = vmatpush1.bf16.msra.mxu0 0
    %786 = vmatprep.subr.bf16.mxu0 0
    %787 = vmatpush1.bf16.msra.mxu0 0
    %788 = vmatprep.subr.bf16.mxu0 0
    %789 = vmatpush1.bf16.msra.mxu0 0
    %790 = vmatprep.mubr.bf16.mxu0 0
    %791 = vmatmul.mubr.bf16.gmra.mrb[0].mxu0 %v753
    %v792 = vpop.f32.mrb[0].mxu0
    %v793 = vadd.f32 0.0, %v792
    %v794 = vpop.f32.mrb[0].mxu0
    %v795 = vpop.f32.mrb[0].mxu0
    %v796 = vpop.f32.mrb[0].mxu0
    %797 = vdwg.mxu0
    %798 = vrot.lane.b32.xlu0 %v174, 64
    %v799 = vpop.permute.xlu0 %798
    %v801 = vsel %vm183, %v695, 0
    %v804 = vsel %vm706, %v799, 0
    %806 = vmatprep.subr.bf16.mxu0 0
    %807 = vmatpush1.bf16.msra.mxu0 %v804
    %808 = vmatprep.subr.bf16.mxu0 0
    %809 = vmatpush1.bf16.msra.mxu0 0
    %810 = vmatprep.subr.bf16.mxu0 0
    %811 = vmatpush1.bf16.msra.mxu0 0
    %812 = vmatprep.subr.bf16.mxu0 0
    %813 = vmatpush1.bf16.msra.mxu0 0
    %814 = vmatprep.subr.bf16.mxu0 0
    %815 = vmatpush1.bf16.msra.mxu0 0
    %816 = vmatprep.subr.bf16.mxu0 0
    %817 = vmatpush1.bf16.msra.mxu0 0
    %818 = vmatprep.subr.bf16.mxu0 0
    %819 = vmatpush1.bf16.msra.mxu0 0
    %820 = vmatprep.subr.bf16.mxu0 0
    %821 = vmatpush1.bf16.msra.mxu0 0
    %822 = vmatprep.subr.bf16.mxu0 0
    %823 = vmatpush1.bf16.msra.mxu0 0
    %824 = vmatprep.subr.bf16.mxu0 0
    %825 = vmatpush1.bf16.msra.mxu0 0
    %826 = vmatprep.subr.bf16.mxu0 0
    %827 = vmatpush1.bf16.msra.mxu0 0
    %828 = vmatprep.subr.bf16.mxu0 0
    %829 = vmatpush1.bf16.msra.mxu0 0
    %830 = vmatprep.subr.bf16.mxu0 0
    %831 = vmatpush1.bf16.msra.mxu0 0
    %832 = vmatprep.subr.bf16.mxu0 0
    %833 = vmatpush1.bf16.msra.mxu0 0
    %834 = vmatprep.subr.bf16.mxu0 0
    %835 = vmatpush1.bf16.msra.mxu0 0
    %836 = vmatprep.subr.bf16.mxu0 0
    %837 = vmatpush1.bf16.msra.mxu0 0
    %838 = vmatprep.mubr.bf16.mxu0 0
    %839 = vmatmul.mubr.bf16.gmra.mrb[0].mxu0 %v801
    %v840 = vpop.f32.mrb[0].mxu0
    %v841 = vadd.f32 0.0, %v840
    %v842 = vpop.f32.mrb[0].mxu0
    %v843 = vpop.f32.mrb[0].mxu0
    %v844 = vpop.f32.mrb[0].mxu0
    %845 = vdwg.mxu0
    %846 = vrot.lane.b32.xlu0 %v175, 64
    %v847 = vpop.permute.xlu0 %846
    %v849 = vsel %vm183, %v696, 0
    %v852 = vsel %vm706, %v847, 0
    %854 = vmatprep.subr.bf16.mxu0 0
    %855 = vmatpush1.bf16.msra.mxu0 %v852
    %856 = vmatprep.subr.bf16.mxu0 0
    %857 = vmatpush1.bf16.msra.mxu0 0
    %858 = vmatprep.subr.bf16.mxu0 0
    %859 = vmatpush1.bf16.msra.mxu0 0
    %860 = vmatprep.subr.bf16.mxu0 0
    %861 = vmatpush1.bf16.msra.mxu0 0
    %862 = vmatprep.subr.bf16.mxu0 0
    %863 = vmatpush1.bf16.msra.mxu0 0
    %864 = vmatprep.subr.bf16.mxu0 0
    %865 = vmatpush1.bf16.msra.mxu0 0
    %866 = vmatprep.subr.bf16.mxu0 0
    %867 = vmatpush1.bf16.msra.mxu0 0
    %868 = vmatprep.subr.bf16.mxu0 0
    %869 = vmatpush1.bf16.msra.mxu0 0
    %870 = vmatprep.subr.bf16.mxu0 0
    %871 = vmatpush1.bf16.msra.mxu0 0
    %872 = vmatprep.subr.bf16.mxu0 0
    %873 = vmatpush1.bf16.msra.mxu0 0
    %874 = vmatprep.subr.bf16.mxu0 0
    %875 = vmatpush1.bf16.msra.mxu0 0
    %876 = vmatprep.subr.bf16.mxu0 0
    %877 = vmatpush1.bf16.msra.mxu0 0
    %878 = vmatprep.subr.bf16.mxu0 0
    %879 = vmatpush1.bf16.msra.mxu0 0
    %880 = vmatprep.subr.bf16.mxu0 0
    %881 = vmatpush1.bf16.msra.mxu0 0
    %882 = vmatprep.subr.bf16.mxu0 0
    %883 = vmatpush1.bf16.msra.mxu0 0
    %884 = vmatprep.subr.bf16.mxu0 0
    %885 = vmatpush1.bf16.msra.mxu0 0
    %886 = vmatprep.mubr.bf16.mxu0 0
    %887 = vmatmul.mubr.bf16.gmra.mrb[0].mxu0 %v849
    %v888 = vpop.f32.mrb[0].mxu0
    %v889 = vadd.f32 0.0, %v888
    %v890 = vpop.f32.mrb[0].mxu0
    %v891 = vpop.f32.mrb[0].mxu0
    %v892 = vpop.f32.mrb[0].mxu0
    %893 = vdwg.mxu0
    %894 = vrot.lane.b32.xlu0 %v176, 64
    %v895 = vpop.permute.xlu0 %894
    %v897 = vsel %vm183, %v697, 0
    %v900 = vsel %vm706, %v895, 0
    %902 = vmatprep.subr.bf16.mxu0 0
    %903 = vmatpush1.bf16.msra.mxu0 %v900
    %904 = vmatprep.subr.bf16.mxu0 0
    %905 = vmatpush1.bf16.msra.mxu0 0
    %906 = vmatprep.subr.bf16.mxu0 0
    %907 = vmatpush1.bf16.msra.mxu0 0
    %908 = vmatprep.subr.bf16.mxu0 0
    %909 = vmatpush1.bf16.msra.mxu0 0
    %910 = vmatprep.subr.bf16.mxu0 0
    %911 = vmatpush1.bf16.msra.mxu0 0
    %912 = vmatprep.subr.bf16.mxu0 0
    %913 = vmatpush1.bf16.msra.mxu0 0
    %914 = vmatprep.subr.bf16.mxu0 0
    %915 = vmatpush1.bf16.msra.mxu0 0
    %916 = vmatprep.subr.bf16.mxu0 0
    %917 = vmatpush1.bf16.msra.mxu0 0
    %918 = vmatprep.subr.bf16.mxu0 0
    %919 = vmatpush1.bf16.msra.mxu0 0
    %920 = vmatprep.subr.bf16.mxu0 0
    %921 = vmatpush1.bf16.msra.mxu0 0
    %922 = vmatprep.subr.bf16.mxu0 0
    %923 = vmatpush1.bf16.msra.mxu0 0
    %924 = vmatprep.subr.bf16.mxu0 0
    %925 = vmatpush1.bf16.msra.mxu0 0
    %926 = vmatprep.subr.bf16.mxu0 0
    %927 = vmatpush1.bf16.msra.mxu0 0
    %928 = vmatprep.subr.bf16.mxu0 0
    %929 = vmatpush1.bf16.msra.mxu0 0
    %930 = vmatprep.subr.bf16.mxu0 0
    %931 = vmatpush1.bf16.msra.mxu0 0
    %932 = vmatprep.subr.bf16.mxu0 0
    %933 = vmatpush1.bf16.msra.mxu0 0
    %934 = vmatprep.mubr.bf16.mxu0 0
    %935 = vmatmul.mubr.bf16.gmra.mrb[0].mxu0 %v897
    %v936 = vpop.f32.mrb[0].mxu0
    %v937 = vadd.f32 0.0, %v936
    %v938 = vpop.f32.mrb[0].mxu0
    %v939 = vpop.f32.mrb[0].mxu0
    %v940 = vpop.f32.mrb[0].mxu0
    %941 = vdwg.mxu0
    %942 = vrot.lane.b32.xlu0 %v177, 64
    %v943 = vpop.permute.xlu0 %942
    %v945 = vsel %vm183, %v698, 0
    %v948 = vsel %vm706, %v943, 0
    %950 = vmatprep.subr.bf16.mxu0 0
    %951 = vmatpush1.bf16.msra.mxu0 %v948
    %952 = vmatprep.subr.bf16.mxu0 0
    %953 = vmatpush1.bf16.msra.mxu0 0
    %954 = vmatprep.subr.bf16.mxu0 0
    %955 = vmatpush1.bf16.msra.mxu0 0
    %956 = vmatprep.subr.bf16.mxu0 0
    %957 = vmatpush1.bf16.msra.mxu0 0
    %958 = vmatprep.subr.bf16.mxu0 0
    %959 = vmatpush1.bf16.msra.mxu0 0
    %960 = vmatprep.subr.bf16.mxu0 0
    %961 = vmatpush1.bf16.msra.mxu0 0
    %962 = vmatprep.subr.bf16.mxu0 0
    %963 = vmatpush1.bf16.msra.mxu0 0
    %964 = vmatprep.subr.bf16.mxu0 0
    %965 = vmatpush1.bf16.msra.mxu0 0
    %966 = vmatprep.subr.bf16.mxu0 0
    %967 = vmatpush1.bf16.msra.mxu0 0
    %968 = vmatprep.subr.bf16.mxu0 0
    %969 = vmatpush1.bf16.msra.mxu0 0
    %970 = vmatprep.subr.bf16.mxu0 0
    %971 = vmatpush1.bf16.msra.mxu0 0
    %972 = vmatprep.subr.bf16.mxu0 0
    %973 = vmatpush1.bf16.msra.mxu0 0
    %974 = vmatprep.subr.bf16.mxu0 0
    %975 = vmatpush1.bf16.msra.mxu0 0
    %976 = vmatprep.subr.bf16.mxu0 0
    %977 = vmatpush1.bf16.msra.mxu0 0
    %978 = vmatprep.subr.bf16.mxu0 0
    %979 = vmatpush1.bf16.msra.mxu0 0
    %980 = vmatprep.subr.bf16.mxu0 0
    %981 = vmatpush1.bf16.msra.mxu0 0
    %982 = vmatprep.mubr.bf16.mxu0 0
    %983 = vmatmul.mubr.bf16.gmra.mrb[0].mxu0 %v945
    %v984 = vpop.f32.mrb[0].mxu0
    %v985 = vadd.f32 0.0, %v984
    %v986 = vpop.f32.mrb[0].mxu0
    %v987 = vpop.f32.mrb[0].mxu0
    %v988 = vpop.f32.mrb[0].mxu0
    %989 = vdwg.mxu0
    %990 = vrot.lane.b32.xlu0 %v178, 64
    %v991 = vpop.permute.xlu0 %990
    %v993 = vsel %vm183, %v699, 0
    %v996 = vsel %vm706, %v991, 0
    %998 = vmatprep.subr.bf16.mxu0 0
    %999 = vmatpush1.bf16.msra.mxu0 %v996
    %1000 = vmatprep.subr.bf16.mxu0 0
    %1001 = vmatpush1.bf16.msra.mxu0 0
    %1002 = vmatprep.subr.bf16.mxu0 0
    %1003 = vmatpush1.bf16.msra.mxu0 0
    %1004 = vmatprep.subr.bf16.mxu0 0
    %1005 = vmatpush1.bf16.msra.mxu0 0
    %1006 = vmatprep.subr.bf16.mxu0 0
    %1007 = vmatpush1.bf16.msra.mxu0 0
    %1008 = vmatprep.subr.bf16.mxu0 0
    %1009 = vmatpush1.bf16.msra.mxu0 0
    %1010 = vmatprep.subr.bf16.mxu0 0
    %1011 = vmatpush1.bf16.msra.mxu0 0
    %1012 = vmatprep.subr.bf16.mxu0 0
    %1013 = vmatpush1.bf16.msra.mxu0 0
    %1014 = vmatprep.subr.bf16.mxu0 0
    %1015 = vmatpush1.bf16.msra.mxu0 0
    %1016 = vmatprep.subr.bf16.mxu0 0
    %1017 = vmatpush1.bf16.msra.mxu0 0
    %1018 = vmatprep.subr.bf16.mxu0 0
    %1019 = vmatpush1.bf16.msra.mxu0 0
    %1020 = vmatprep.subr.bf16.mxu0 0
    %1021 = vmatpush1.bf16.msra.mxu0 0
    %1022 = vmatprep.subr.bf16.mxu0 0
    %1023 = vmatpush1.bf16.msra.mxu0 0
    %1024 = vmatprep.subr.bf16.mxu0 0
    %1025 = vmatpush1.bf16.msra.mxu0 0
    %1026 = vmatprep.subr.bf16.mxu0 0
    %1027 = vmatpush1.bf16.msra.mxu0 0
    %1028 = vmatprep.subr.bf16.mxu0 0
    %1029 = vmatpush1.bf16.msra.mxu0 0
    %1030 = vmatprep.mubr.bf16.mxu0 0
    %1031 = vmatmul.mubr.bf16.gmra.mrb[0].mxu0 %v993
    %v1032 = vpop.f32.mrb[0].mxu0
    %v1033 = vadd.f32 0.0, %v1032
    %v1034 = vpop.f32.mrb[0].mxu0
    %v1035 = vpop.f32.mrb[0].mxu0
    %v1036 = vpop.f32.mrb[0].mxu0
    %1037 = vdwg.mxu0
    %1038 = vrot.lane.b32.xlu0 %v179, 64
    %v1039 = vpop.permute.xlu0 %1038
    %v1041 = vsel %vm183, %v700, 0
    %v1044 = vsel %vm706, %v1039, 0
    %1046 = vmatprep.subr.bf16.mxu0 0
    %1047 = vmatpush1.bf16.msra.mxu0 %v1044
    %1048 = vmatprep.subr.bf16.mxu0 0
    %1049 = vmatpush1.bf16.msra.mxu0 0
    %1050 = vmatprep.subr.bf16.mxu0 0
    %1051 = vmatpush1.bf16.msra.mxu0 0
    %1052 = vmatprep.subr.bf16.mxu0 0
    %1053 = vmatpush1.bf16.msra.mxu0 0
    %1054 = vmatprep.subr.bf16.mxu0 0
    %1055 = vmatpush1.bf16.msra.mxu0 0
    %1056 = vmatprep.subr.bf16.mxu0 0
    %1057 = vmatpush1.bf16.msra.mxu0 0
    %1058 = vmatprep.subr.bf16.mxu0 0
    %1059 = vmatpush1.bf16.msra.mxu0 0
    %1060 = vmatprep.subr.bf16.mxu0 0
    %1061 = vmatpush1.bf16.msra.mxu0 0
    %1062 = vmatprep.subr.bf16.mxu0 0
    %1063 = vmatpush1.bf16.msra.mxu0 0
    %1064 = vmatprep.subr.bf16.mxu0 0
    %1065 = vmatpush1.bf16.msra.mxu0 0
    %1066 = vmatprep.subr.bf16.mxu0 0
    %1067 = vmatpush1.bf16.msra.mxu0 0
    %1068 = vmatprep.subr.bf16.mxu0 0
    %1069 = vmatpush1.bf16.msra.mxu0 0
    %1070 = vmatprep.subr.bf16.mxu0 0
    %1071 = vmatpush1.bf16.msra.mxu0 0
    %1072 = vmatprep.subr.bf16.mxu0 0
    %1073 = vmatpush1.bf16.msra.mxu0 0
    %1074 = vmatprep.subr.bf16.mxu0 0
    %1075 = vmatpush1.bf16.msra.mxu0 0
    %1076 = vmatprep.subr.bf16.mxu0 0
    %1077 = vmatpush1.bf16.msra.mxu0 0
    %1078 = vmatprep.mubr.bf16.mxu0 0
    %1079 = vmatmul.mubr.bf16.gmra.mrb[0].mxu0 %v1041
    %v1080 = vpop.f32.mrb[0].mxu0
    %v1081 = vadd.f32 0.0, %v1080
    %v1082 = vpop.f32.mrb[0].mxu0
    %v1083 = vpop.f32.mrb[0].mxu0
    %v1084 = vpop.f32.mrb[0].mxu0
    %1085 = vdwg.mxu0
    %v1086 = vpack.c.bf16 %v793, %v745
    %v1087 = vpack.c.bf16 %v889, %v841
    %v1088 = vpack.c.bf16 %v985, %v937
    %v1089 = vpack.c.bf16 %v1081, %v1033
    %v1090 = vld [vmem:[%s4] sm:$0xff]
    %v1091 = vpack.c.bf16 %v1090, %v1090
    %v1092 = vld [vmem:[#allocation2] sm:$0xff]
    %v1093 = vld [vmem:[#allocation2 + $0x8] sm:$0xff]
    %v1094 = vld [vmem:[#allocation2 + $0x10] sm:$0xff]
    %v1095 = vld [vmem:[#allocation2 + $0x18] sm:$0xff]
    %v1096 = vld [vmem:[#allocation2 + $0x20] sm:$0xff]
    %v1097 = vld [vmem:[#allocation2 + $0x28] sm:$0xff]
    %v1098 = vld [vmem:[#allocation2 + $0x30] sm:$0xff]
    %v1099 = vld [vmem:[#allocation2 + $0x38] sm:$0xff]
    %v1100 = vpack.c.bf16 %v1092, %v1092
    %v1101 = vpack.c.bf16 %v1093, %v1093
    %v1102 = vpack.c.bf16 %v1094, %v1094
    %v1103 = vpack.c.bf16 %v1095, %v1095
    %v1104 = vpack.c.bf16 %v1096, %v1096
    %v1105 = vpack.c.bf16 %v1097, %v1097
    %v1106 = vpack.c.bf16 %v1098, %v1098
    %v1107 = vpack.c.bf16 %v1099, %v1099
    %1109 = vrot.lane.b32.xlu0 %v1100, 120
    %v1110 = vpop.permute.xlu0 %1109
    %1111 = vrot.lane.b32.xlu0 %v1100, 88
    %v1112 = vpop.permute.xlu0 %1111
    %v1114 = vsel %vm183, %v1110, 0
    %v1117 = vsel %vm183, %v1112, 0
    %1119 = vmatprep.subr.bf16.mxu0 0
    %1120 = vmatpush1.bf16.xpose.msra.mxu0 %v1117
    %1121 = vmatprep.subr.bf16.mxu0 0
    %1122 = vmatpush1.bf16.xpose.msra.mxu0 0
    %1123 = vmatprep.subr.bf16.mxu0 0
    %1124 = vmatpush1.bf16.xpose.msra.mxu0 0
    %1125 = vmatprep.subr.bf16.mxu0 0
    %1126 = vmatpush1.bf16.xpose.msra.mxu0 0
    %1127 = vmatprep.subr.bf16.mxu0 0
    %1128 = vmatpush1.bf16.xpose.msra.mxu0 0
    %1129 = vmatprep.subr.bf16.mxu0 0
    %1130 = vmatpush1.bf16.xpose.msra.mxu0 0
    %1131 = vmatprep.subr.bf16.mxu0 0
    %1132 = vmatpush1.bf16.xpose.msra.mxu0 0
    %1133 = vmatprep.subr.bf16.mxu0 0
    %1134 = vmatpush1.bf16.xpose.msra.mxu0 0
    %1135 = vmatprep.subr.bf16.mxu0 0
    %1136 = vmatpush1.bf16.xpose.msra.mxu0 0
    %1137 = vmatprep.subr.bf16.mxu0 0
    %1138 = vmatpush1.bf16.xpose.msra.mxu0 0
    %1139 = vmatprep.subr.bf16.mxu0 0
    %1140 = vmatpush1.bf16.xpose.msra.mxu0 0
    %1141 = vmatprep.subr.bf16.mxu0 0
    %1142 = vmatpush1.bf16.xpose.msra.mxu0 0
    %1143 = vmatprep.subr.bf16.mxu0 0
    %1144 = vmatpush1.bf16.xpose.msra.mxu0 0
    %1145 = vmatprep.subr.bf16.mxu0 0
    %1146 = vmatpush1.bf16.xpose.msra.mxu0 0
    %1147 = vmatprep.subr.bf16.mxu0 0
    %1148 = vmatpush1.bf16.xpose.msra.mxu0 0
    %1149 = vmatprep.subr.bf16.mxu0 0
    %1150 = vmatpush1.bf16.xpose.msra.mxu0 0
    %1151 = vmatprep.mubr.bf16.mxu0 0
    %1152 = vmatmul.mubr.bf16.gmra.mrb[0].mxu0 %v1114
    %v1153 = vpop.f32.mrb[0].mxu0
    %v1154 = vadd.f32 0.0, %v1153
    %v1155 = vpop.f32.mrb[0].mxu0
    %v1156 = vpop.f32.mrb[0].mxu0
    %v1157 = vpop.f32.mrb[0].mxu0
    %1158 = vdwg.mxu0
    %1160 = vrot.lane.b32.xlu0 %v1101, 120
    %v1161 = vpop.permute.xlu0 %1160
    %1162 = vrot.lane.b32.xlu0 %v1101, 88
    %v1163 = vpop.permute.xlu0 %1162
    %v1165 = vsel %vm183, %v1161, 0
    %v1168 = vsel %vm183, %v1163, 0
    %1170 = vmatprep.subr.bf16.mxu0 0
    %1171 = vmatpush1.bf16.xpose.msra.mxu0 %v1168
    %1172 = vmatprep.subr.bf16.mxu0 0
    %1173 = vmatpush1.bf16.xpose.msra.mxu0 0
    %1174 = vmatprep.subr.bf16.mxu0 0
    %1175 = vmatpush1.bf16.xpose.msra.mxu0 0
    %1176 = vmatprep.subr.bf16.mxu0 0
    %1177 = vmatpush1.bf16.xpose.msra.mxu0 0
    %1178 = vmatprep.subr.bf16.mxu0 0
    %1179 = vmatpush1.bf16.xpose.msra.mxu0 0
    %1180 = vmatprep.subr.bf16.mxu0 0
    %1181 = vmatpush1.bf16.xpose.msra.mxu0 0
    %1182 = vmatprep.subr.bf16.mxu0 0
    %1183 = vmatpush1.bf16.xpose.msra.mxu0 0
    %1184 = vmatprep.subr.bf16.mxu0 0
    %1185 = vmatpush1.bf16.xpose.msra.mxu0 0
    %1186 = vmatprep.subr.bf16.mxu0 0
    %1187 = vmatpush1.bf16.xpose.msra.mxu0 0
    %1188 = vmatprep.subr.bf16.mxu0 0
    %1189 = vmatpush1.bf16.xpose.msra.mxu0 0
    %1190 = vmatprep.subr.bf16.mxu0 0
    %1191 = vmatpush1.bf16.xpose.msra.mxu0 0
    %1192 = vmatprep.subr.bf16.mxu0 0
    %1193 = vmatpush1.bf16.xpose.msra.mxu0 0
    %1194 = vmatprep.subr.bf16.mxu0 0
    %1195 = vmatpush1.bf16.xpose.msra.mxu0 0
    %1196 = vmatprep.subr.bf16.mxu0 0
    %1197 = vmatpush1.bf16.xpose.msra.mxu0 0
    %1198 = vmatprep.subr.bf16.mxu0 0
    %1199 = vmatpush1.bf16.xpose.msra.mxu0 0
    %1200 = vmatprep.subr.bf16.mxu0 0
    %1201 = vmatpush1.bf16.xpose.msra.mxu0 0
    %1202 = vmatprep.mubr.bf16.mxu0 0
    %1203 = vmatmul.mubr.bf16.gmra.mrb[0].mxu0 %v1165
    %v1204 = vpop.f32.mrb[0].mxu0
    %v1205 = vadd.f32 0.0, %v1204
    %v1206 = vpop.f32.mrb[0].mxu0
    %v1207 = vpop.f32.mrb[0].mxu0
    %v1208 = vpop.f32.mrb[0].mxu0
    %1209 = vdwg.mxu0
    %1211 = vrot.lane.b32.xlu0 %v1102, 120
    %v1212 = vpop.permute.xlu0 %1211
    %1213 = vrot.lane.b32.xlu0 %v1102, 88
    %v1214 = vpop.permute.xlu0 %1213
    %v1216 = vsel %vm183, %v1212, 0
    %v1219 = vsel %vm183, %v1214, 0
    %1221 = vmatprep.subr.bf16.mxu0 0
    %1222 = vmatpush1.bf16.xpose.msra.mxu0 %v1219
    %1223 = vmatprep.subr.bf16.mxu0 0
    %1224 = vmatpush1.bf16.xpose.msra.mxu0 0
    %1225 = vmatprep.subr.bf16.mxu0 0
    %1226 = vmatpush1.bf16.xpose.msra.mxu0 0
    %1227 = vmatprep.subr.bf16.mxu0 0
    %1228 = vmatpush1.bf16.xpose.msra.mxu0 0
    %1229 = vmatprep.subr.bf16.mxu0 0
    %1230 = vmatpush1.bf16.xpose.msra.mxu0 0
    %1231 = vmatprep.subr.bf16.mxu0 0
    %1232 = vmatpush1.bf16.xpose.msra.mxu0 0
    %1233 = vmatprep.subr.bf16.mxu0 0
    %1234 = vmatpush1.bf16.xpose.msra.mxu0 0
    %1235 = vmatprep.subr.bf16.mxu0 0
    %1236 = vmatpush1.bf16.xpose.msra.mxu0 0
    %1237 = vmatprep.subr.bf16.mxu0 0
    %1238 = vmatpush1.bf16.xpose.msra.mxu0 0
    %1239 = vmatprep.subr.bf16.mxu0 0
    %1240 = vmatpush1.bf16.xpose.msra.mxu0 0
    %1241 = vmatprep.subr.bf16.mxu0 0
    %1242 = vmatpush1.bf16.xpose.msra.mxu0 0
    %1243 = vmatprep.subr.bf16.mxu0 0
    %1244 = vmatpush1.bf16.xpose.msra.mxu0 0
    %1245 = vmatprep.subr.bf16.mxu0 0
    %1246 = vmatpush1.bf16.xpose.msra.mxu0 0
    %1247 = vmatprep.subr.bf16.mxu0 0
    %1248 = vmatpush1.bf16.xpose.msra.mxu0 0
    %1249 = vmatprep.subr.bf16.mxu0 0
    %1250 = vmatpush1.bf16.xpose.msra.mxu0 0
    %1251 = vmatprep.subr.bf16.mxu0 0
    %1252 = vmatpush1.bf16.xpose.msra.mxu0 0
    %1253 = vmatprep.mubr.bf16.mxu0 0
    %1254 = vmatmul.mubr.bf16.gmra.mrb[0].mxu0 %v1216
    %v1255 = vpop.f32.mrb[0].mxu0
    %v1256 = vadd.f32 0.0, %v1255
    %v1257 = vpop.f32.mrb[0].mxu0
    %v1258 = vpop.f32.mrb[0].mxu0
    %v1259 = vpop.f32.mrb[0].mxu0
    %1260 = vdwg.mxu0
    %1262 = vrot.lane.b32.xlu0 %v1103, 120
    %v1263 = vpop.permute.xlu0 %1262
    %1264 = vrot.lane.b32.xlu0 %v1103, 88
    %v1265 = vpop.permute.xlu0 %1264
    %v1267 = vsel %vm183, %v1263, 0
    %v1270 = vsel %vm183, %v1265, 0
    %1272 = vmatprep.subr.bf16.mxu0 0
    %1273 = vmatpush1.bf16.xpose.msra.mxu0 %v1270
    %1274 = vmatprep.subr.bf16.mxu0 0
    %1275 = vmatpush1.bf16.xpose.msra.mxu0 0
    %1276 = vmatprep.subr.bf16.mxu0 0
    %1277 = vmatpush1.bf16.xpose.msra.mxu0 0
    %1278 = vmatprep.subr.bf16.mxu0 0
    %1279 = vmatpush1.bf16.xpose.msra.mxu0 0
    %1280 = vmatprep.subr.bf16.mxu0 0
    %1281 = vmatpush1.bf16.xpose.msra.mxu0 0
    %1282 = vmatprep.subr.bf16.mxu0 0
    %1283 = vmatpush1.bf16.xpose.msra.mxu0 0
    %1284 = vmatprep.subr.bf16.mxu0 0
    %1285 = vmatpush1.bf16.xpose.msra.mxu0 0
    %1286 = vmatprep.subr.bf16.mxu0 0
    %1287 = vmatpush1.bf16.xpose.msra.mxu0 0
    %1288 = vmatprep.subr.bf16.mxu0 0
    %1289 = vmatpush1.bf16.xpose.msra.mxu0 0
    %1290 = vmatprep.subr.bf16.mxu0 0
    %1291 = vmatpush1.bf16.xpose.msra.mxu0 0
    %1292 = vmatprep.subr.bf16.mxu0 0
    %1293 = vmatpush1.bf16.xpose.msra.mxu0 0
    %1294 = vmatprep.subr.bf16.mxu0 0
    %1295 = vmatpush1.bf16.xpose.msra.mxu0 0
    %1296 = vmatprep.subr.bf16.mxu0 0
    %1297 = vmatpush1.bf16.xpose.msra.mxu0 0
    %1298 = vmatprep.subr.bf16.mxu0 0
    %1299 = vmatpush1.bf16.xpose.msra.mxu0 0
    %1300 = vmatprep.subr.bf16.mxu0 0
    %1301 = vmatpush1.bf16.xpose.msra.mxu0 0
    %1302 = vmatprep.subr.bf16.mxu0 0
    %1303 = vmatpush1.bf16.xpose.msra.mxu0 0
    %1304 = vmatprep.mubr.bf16.mxu0 0
    %1305 = vmatmul.mubr.bf16.gmra.mrb[0].mxu0 %v1267
    %v1306 = vpop.f32.mrb[0].mxu0
    %v1307 = vadd.f32 0.0, %v1306
    %v1308 = vpop.f32.mrb[0].mxu0
    %v1309 = vpop.f32.mrb[0].mxu0
    %v1310 = vpop.f32.mrb[0].mxu0
    %1311 = vdwg.mxu0
    %1313 = vrot.lane.b32.xlu0 %v1104, 120
    %v1314 = vpop.permute.xlu0 %1313
    %1315 = vrot.lane.b32.xlu0 %v1104, 88
    %v1316 = vpop.permute.xlu0 %1315
    %v1318 = vsel %vm183, %v1314, 0
    %v1321 = vsel %vm183, %v1316, 0
    %1323 = vmatprep.subr.bf16.mxu0 0
    %1324 = vmatpush1.bf16.xpose.msra.mxu0 %v1321
    %1325 = vmatprep.subr.bf16.mxu0 0
    %1326 = vmatpush1.bf16.xpose.msra.mxu0 0
    %1327 = vmatprep.subr.bf16.mxu0 0
    %1328 = vmatpush1.bf16.xpose.msra.mxu0 0
    %1329 = vmatprep.subr.bf16.mxu0 0
    %1330 = vmatpush1.bf16.xpose.msra.mxu0 0
    %1331 = vmatprep.subr.bf16.mxu0 0
    %1332 = vmatpush1.bf16.xpose.msra.mxu0 0
    %1333 = vmatprep.subr.bf16.mxu0 0
    %1334 = vmatpush1.bf16.xpose.msra.mxu0 0
    %1335 = vmatprep.subr.bf16.mxu0 0
    %1336 = vmatpush1.bf16.xpose.msra.mxu0 0
    %1337 = vmatprep.subr.bf16.mxu0 0
    %1338 = vmatpush1.bf16.xpose.msra.mxu0 0
    %1339 = vmatprep.subr.bf16.mxu0 0
    %1340 = vmatpush1.bf16.xpose.msra.mxu0 0
    %1341 = vmatprep.subr.bf16.mxu0 0
    %1342 = vmatpush1.bf16.xpose.msra.mxu0 0
    %1343 = vmatprep.subr.bf16.mxu0 0
    %1344 = vmatpush1.bf16.xpose.msra.mxu0 0
    %1345 = vmatprep.subr.bf16.mxu0 0
    %1346 = vmatpush1.bf16.xpose.msra.mxu0 0
    %1347 = vmatprep.subr.bf16.mxu0 0
    %1348 = vmatpush1.bf16.xpose.msra.mxu0 0
    %1349 = vmatprep.subr.bf16.mxu0 0
    %1350 = vmatpush1.bf16.xpose.msra.mxu0 0
    %1351 = vmatprep.subr.bf16.mxu0 0
    %1352 = vmatpush1.bf16.xpose.msra.mxu0 0
    %1353 = vmatprep.subr.bf16.mxu0 0
    %1354 = vmatpush1.bf16.xpose.msra.mxu0 0
    %1355 = vmatprep.mubr.bf16.mxu0 0
    %1356 = vmatmul.mubr.bf16.gmra.mrb[0].mxu0 %v1318
    %v1357 = vpop.f32.mrb[0].mxu0
    %v1358 = vadd.f32 0.0, %v1357
    %v1359 = vpop.f32.mrb[0].mxu0
    %v1360 = vpop.f32.mrb[0].mxu0
    %v1361 = vpop.f32.mrb[0].mxu0
    %1362 = vdwg.mxu0
    %1364 = vrot.lane.b32.xlu0 %v1105, 120
    %v1365 = vpop.permute.xlu0 %1364
    %1366 = vrot.lane.b32.xlu0 %v1105, 88
    %v1367 = vpop.permute.xlu0 %1366
    %v1369 = vsel %vm183, %v1365, 0
    %v1372 = vsel %vm183, %v1367, 0
    %1374 = vmatprep.subr.bf16.mxu0 0
    %1375 = vmatpush1.bf16.xpose.msra.mxu0 %v1372
    %1376 = vmatprep.subr.bf16.mxu0 0
    %1377 = vmatpush1.bf16.xpose.msra.mxu0 0
    %1378 = vmatprep.subr.bf16.mxu0 0
    %1379 = vmatpush1.bf16.xpose.msra.mxu0 0
    %1380 = vmatprep.subr.bf16.mxu0 0
    %1381 = vmatpush1.bf16.xpose.msra.mxu0 0
    %1382 = vmatprep.subr.bf16.mxu0 0
    %1383 = vmatpush1.bf16.xpose.msra.mxu0 0
    %1384 = vmatprep.subr.bf16.mxu0 0
    %1385 = vmatpush1.bf16.xpose.msra.mxu0 0
    %1386 = vmatprep.subr.bf16.mxu0 0
    %1387 = vmatpush1.bf16.xpose.msra.mxu0 0
    %1388 = vmatprep.subr.bf16.mxu0 0
    %1389 = vmatpush1.bf16.xpose.msra.mxu0 0
    %1390 = vmatprep.subr.bf16.mxu0 0
    %1391 = vmatpush1.bf16.xpose.msra.mxu0 0
    %1392 = vmatprep.subr.bf16.mxu0 0
    %1393 = vmatpush1.bf16.xpose.msra.mxu0 0
    %1394 = vmatprep.subr.bf16.mxu0 0
    %1395 = vmatpush1.bf16.xpose.msra.mxu0 0
    %1396 = vmatprep.subr.bf16.mxu0 0
    %1397 = vmatpush1.bf16.xpose.msra.mxu0 0
    %1398 = vmatprep.subr.bf16.mxu0 0
    %1399 = vmatpush1.bf16.xpose.msra.mxu0 0
    %1400 = vmatprep.subr.bf16.mxu0 0
    %1401 = vmatpush1.bf16.xpose.msra.mxu0 0
    %1402 = vmatprep.subr.bf16.mxu0 0
    %1403 = vmatpush1.bf16.xpose.msra.mxu0 0
    %1404 = vmatprep.subr.bf16.mxu0 0
    %1405 = vmatpush1.bf16.xpose.msra.mxu0 0
    %1406 = vmatprep.mubr.bf16.mxu0 0
    %1407 = vmatmul.mubr.bf16.gmra.mrb[0].mxu0 %v1369
    %v1408 = vpop.f32.mrb[0].mxu0
    %v1409 = vadd.f32 0.0, %v1408
    %v1410 = vpop.f32.mrb[0].mxu0
    %v1411 = vpop.f32.mrb[0].mxu0
    %v1412 = vpop.f32.mrb[0].mxu0
    %1413 = vdwg.mxu0
    %1415 = vrot.lane.b32.xlu0 %v1106, 120
    %v1416 = vpop.permute.xlu0 %1415
    %1417 = vrot.lane.b32.xlu0 %v1106, 88
    %v1418 = vpop.permute.xlu0 %1417
    %v1420 = vsel %vm183, %v1416, 0
    %v1423 = vsel %vm183, %v1418, 0
    %1425 = vmatprep.subr.bf16.mxu0 0
    %1426 = vmatpush1.bf16.xpose.msra.mxu0 %v1423
    %1427 = vmatprep.subr.bf16.mxu0 0
    %1428 = vmatpush1.bf16.xpose.msra.mxu0 0
    %1429 = vmatprep.subr.bf16.mxu0 0
    %1430 = vmatpush1.bf16.xpose.msra.mxu0 0
    %1431 = vmatprep.subr.bf16.mxu0 0
    %1432 = vmatpush1.bf16.xpose.msra.mxu0 0
    %1433 = vmatprep.subr.bf16.mxu0 0
    %1434 = vmatpush1.bf16.xpose.msra.mxu0 0
    %1435 = vmatprep.subr.bf16.mxu0 0
    %1436 = vmatpush1.bf16.xpose.msra.mxu0 0
    %1437 = vmatprep.subr.bf16.mxu0 0
    %1438 = vmatpush1.bf16.xpose.msra.mxu0 0
    %1439 = vmatprep.subr.bf16.mxu0 0
    %1440 = vmatpush1.bf16.xpose.msra.mxu0 0
    %1441 = vmatprep.subr.bf16.mxu0 0
    %1442 = vmatpush1.bf16.xpose.msra.mxu0 0
    %1443 = vmatprep.subr.bf16.mxu0 0
    %1444 = vmatpush1.bf16.xpose.msra.mxu0 0
    %1445 = vmatprep.subr.bf16.mxu0 0
    %1446 = vmatpush1.bf16.xpose.msra.mxu0 0
    %1447 = vmatprep.subr.bf16.mxu0 0
    %1448 = vmatpush1.bf16.xpose.msra.mxu0 0
    %1449 = vmatprep.subr.bf16.mxu0 0
    %1450 = vmatpush1.bf16.xpose.msra.mxu0 0
    %1451 = vmatprep.subr.bf16.mxu0 0
    %1452 = vmatpush1.bf16.xpose.msra.mxu0 0
    %1453 = vmatprep.subr.bf16.mxu0 0
    %1454 = vmatpush1.bf16.xpose.msra.mxu0 0
    %1455 = vmatprep.subr.bf16.mxu0 0
    %1456 = vmatpush1.bf16.xpose.msra.mxu0 0
    %1457 = vmatprep.mubr.bf16.mxu0 0
    %1458 = vmatmul.mubr.bf16.gmra.mrb[0].mxu0 %v1420
    %v1459 = vpop.f32.mrb[0].mxu0
    %v1460 = vadd.f32 0.0, %v1459
    %v1461 = vpop.f32.mrb[0].mxu0
    %v1462 = vpop.f32.mrb[0].mxu0
    %v1463 = vpop.f32.mrb[0].mxu0
    %1464 = vdwg.mxu0
    %1466 = vrot.lane.b32.xlu0 %v1107, 120
    %v1467 = vpop.permute.xlu0 %1466
    %1468 = vrot.lane.b32.xlu0 %v1107, 88
    %v1469 = vpop.permute.xlu0 %1468
    %v1471 = vsel %vm183, %v1467, 0
    %v1474 = vsel %vm183, %v1469, 0
    %1476 = vmatprep.subr.bf16.mxu0 0
    %1477 = vmatpush1.bf16.xpose.msra.mxu0 %v1474
    %1478 = vmatprep.subr.bf16.mxu0 0
    %1479 = vmatpush1.bf16.xpose.msra.mxu0 0
    %1480 = vmatprep.subr.bf16.mxu0 0
    %1481 = vmatpush1.bf16.xpose.msra.mxu0 0
    %1482 = vmatprep.subr.bf16.mxu0 0
    %1483 = vmatpush1.bf16.xpose.msra.mxu0 0
    %1484 = vmatprep.subr.bf16.mxu0 0
    %1485 = vmatpush1.bf16.xpose.msra.mxu0 0
    %1486 = vmatprep.subr.bf16.mxu0 0
    %1487 = vmatpush1.bf16.xpose.msra.mxu0 0
    %1488 = vmatprep.subr.bf16.mxu0 0
    %1489 = vmatpush1.bf16.xpose.msra.mxu0 0
    %1490 = vmatprep.subr.bf16.mxu0 0
    %1491 = vmatpush1.bf16.xpose.msra.mxu0 0
    %1492 = vmatprep.subr.bf16.mxu0 0
    %1493 = vmatpush1.bf16.xpose.msra.mxu0 0
    %1494 = vmatprep.subr.bf16.mxu0 0
    %1495 = vmatpush1.bf16.xpose.msra.mxu0 0
    %1496 = vmatprep.subr.bf16.mxu0 0
    %1497 = vmatpush1.bf16.xpose.msra.mxu0 0
    %1498 = vmatprep.subr.bf16.mxu0 0
    %1499 = vmatpush1.bf16.xpose.msra.mxu0 0
    %1500 = vmatprep.subr.bf16.mxu0 0
    %1501 = vmatpush1.bf16.xpose.msra.mxu0 0
    %1502 = vmatprep.subr.bf16.mxu0 0
    %1503 = vmatpush1.bf16.xpose.msra.mxu0 0
    %1504 = vmatprep.subr.bf16.mxu0 0
    %1505 = vmatpush1.bf16.xpose.msra.mxu0 0
    %1506 = vmatprep.subr.bf16.mxu0 0
    %1507 = vmatpush1.bf16.xpose.msra.mxu0 0
    %1508 = vmatprep.mubr.bf16.mxu0 0
    %1509 = vmatmul.mubr.bf16.gmra.mrb[0].mxu0 %v1471
    %v1510 = vpop.f32.mrb[0].mxu0
    %v1511 = vadd.f32 0.0, %v1510
    %v1512 = vpop.f32.mrb[0].mxu0
    %v1513 = vpop.f32.mrb[0].mxu0
    %v1514 = vpop.f32.mrb[0].mxu0
    %1515 = vdwg.mxu0
    %v1516 = vmul.f32 %v1154, 0.35355338
    %v1517 = vmul.f32 %v1205, 0.35355338
    %v1518 = vmul.f32 %v1256, 0.35355338
    %v1519 = vmul.f32 %v1307, 0.35355338
    %v1520 = vmul.f32 %v1358, 0.35355338
    %v1521 = vmul.f32 %v1409, 0.35355338
    %v1522 = vmul.f32 %v1460, 0.35355338
    %v1523 = vmul.f32 %v1511, 0.35355338
    %s1524 = scalar_lea.vmem %s1, 64
    %v1525 = vld [vmem:[%s1524] sm:$0xff]
    %v1526 = vld [vmem:[%s1524 + $0x8] sm:$0xff]
    %v1527 = vld [vmem:[%s1524 + $0x10] sm:$0xff]
    %v1528 = vld [vmem:[%s1524 + $0x18] sm:$0xff]
    %v1529 = vld [vmem:[%s1524 + $0x20] sm:$0xff]
    %v1530 = vld [vmem:[%s1524 + $0x28] sm:$0xff]
    %v1531 = vld [vmem:[%s1524 + $0x30] sm:$0xff]
    %v1532 = vld [vmem:[%s1524 + $0x38] sm:$0xff]
    %v1533 = vadd.f32 %v1516, %v1525
    %v1534 = vadd.f32 %v1517, %v1526
    %v1535 = vadd.f32 %v1518, %v1527
    %v1536 = vadd.f32 %v1519, %v1528
    %v1537 = vadd.f32 %v1520, %v1529
    %v1538 = vadd.f32 %v1521, %v1530
    %v1539 = vadd.f32 %v1522, %v1531
    %v1540 = vadd.f32 %v1523, %v1532
    %s1541 = scalar_lea.vmem [#allocation5], 64
    %1542 = vst.msk [vmem:[%s1541] sm:$0xff] %vm183, %v1533
    %1543 = vst.msk [vmem:[%s1541 + $0x8] sm:$0xff] %vm183, %v1534
    %1544 = vst.msk [vmem:[%s1541 + $0x10] sm:$0xff] %vm183, %v1535
    %1545 = vst.msk [vmem:[%s1541 + $0x18] sm:$0xff] %vm183, %v1536
    %1546 = vst.msk [vmem:[%s1541 + $0x20] sm:$0xff] %vm183, %v1537
    %1547 = vst.msk [vmem:[%s1541 + $0x28] sm:$0xff] %vm183, %v1538
    %1548 = vst.msk [vmem:[%s1541 + $0x30] sm:$0xff] %vm183, %v1539
    %1549 = vst.msk [vmem:[%s1541 + $0x38] sm:$0xff] %vm183, %v1540
    %v1550 = vsel %vm183, %v1533, -inf
    %1551 = vmax.xlane.f32.xlu0 %v1550
    %v1552 = vpop.xlane.xlu0 %1551
    %v1553 = vsel %vm183, %v1534, -inf
    %1554 = vmax.xlane.f32.xlu0 %v1553
    %v1555 = vpop.xlane.xlu0 %1554
    %v1556 = vsel %vm183, %v1535, -inf
    %1557 = vmax.xlane.f32.xlu0 %v1556
    %v1558 = vpop.xlane.xlu0 %1557
    %v1559 = vsel %vm183, %v1536, -inf
    %1560 = vmax.xlane.f32.xlu0 %v1559
    %v1561 = vpop.xlane.xlu0 %1560
    %v1562 = vsel %vm183, %v1537, -inf
    %1563 = vmax.xlane.f32.xlu0 %v1562
    %v1564 = vpop.xlane.xlu0 %1563
    %v1565 = vsel %vm183, %v1538, -inf
    %1566 = vmax.xlane.f32.xlu0 %v1565
    %v1567 = vpop.xlane.xlu0 %1566
    %v1568 = vsel %vm183, %v1539, -inf
    %1569 = vmax.xlane.f32.xlu0 %v1568
    %v1570 = vpop.xlane.xlu0 %1569
    %v1571 = vsel %vm183, %v1540, -inf
    %1572 = vmax.xlane.f32.xlu0 %v1571
    %v1573 = vpop.xlane.xlu0 %1572
    %v1574 = vsub.f32 %v1533, %v1552
    %v1575 = vsub.f32 %v1534, %v1555
    %v1576 = vsub.f32 %v1535, %v1558
    %v1577 = vsub.f32 %v1536, %v1561
    %v1578 = vsub.f32 %v1537, %v1564
    %v1579 = vsub.f32 %v1538, %v1567
    %v1580 = vsub.f32 %v1539, %v1570
    %v1581 = vsub.f32 %v1540, %v1573
    %v1582 = vmul.f32 %v1574, 1.442695
    %v1583 = vpow.pop %v1582
    %v1584 = vmul.f32 %v1575, 1.442695
    %v1585 = vpow.pop %v1584
    %v1586 = vmul.f32 %v1576, 1.442695
    %v1587 = vpow.pop %v1586
    %v1588 = vmul.f32 %v1577, 1.442695
    %v1589 = vpow.pop %v1588
    %v1590 = vmul.f32 %v1578, 1.442695
    %v1591 = vpow.pop %v1590
    %v1592 = vmul.f32 %v1579, 1.442695
    %v1593 = vpow.pop %v1592
    %v1594 = vmul.f32 %v1580, 1.442695
    %v1595 = vpow.pop %v1594
    %v1596 = vmul.f32 %v1581, 1.442695
    %v1597 = vpow.pop %v1596
    %v1598 = vsel %vm183, %v1583, 0.0
    %1599 = vadd.xlane.f32.xlu0 %v1598
    %v1600 = vpop.xlane.xlu0 %1599
    %v1601 = vsel %vm183, %v1585, 0.0
    %1602 = vadd.xlane.f32.xlu0 %v1601
    %v1603 = vpop.xlane.xlu0 %1602
    %v1604 = vsel %vm183, %v1587, 0.0
    %1605 = vadd.xlane.f32.xlu0 %v1604
    %v1606 = vpop.xlane.xlu0 %1605
    %v1607 = vsel %vm183, %v1589, 0.0
    %1608 = vadd.xlane.f32.xlu0 %v1607
    %v1609 = vpop.xlane.xlu0 %1608
    %v1610 = vsel %vm183, %v1591, 0.0
    %1611 = vadd.xlane.f32.xlu0 %v1610
    %v1612 = vpop.xlane.xlu0 %1611
    %v1613 = vsel %vm183, %v1593, 0.0
    %1614 = vadd.xlane.f32.xlu0 %v1613
    %v1615 = vpop.xlane.xlu0 %1614
    %v1616 = vsel %vm183, %v1595, 0.0
    %1617 = vadd.xlane.f32.xlu0 %v1616
    %v1618 = vpop.xlane.xlu0 %1617
    %v1619 = vsel %vm183, %v1597, 0.0
    %1620 = vadd.xlane.f32.xlu0 %v1619
    %v1621 = vpop.xlane.xlu0 %1620
    %v1622 = vrcp.pop %v1600
    %v1623 = vrcp.pop %v1603
    %v1624 = vrcp.pop %v1606
    %v1625 = vrcp.pop %v1609
    %v1626 = vrcp.pop %v1612
    %v1627 = vrcp.pop %v1615
    %v1628 = vrcp.pop %v1618
    %v1629 = vrcp.pop %v1621
    %v1630 = vmul.f32 %v1583, %v1622
    %v1631 = vmul.f32 %v1585, %v1623
    %v1632 = vmul.f32 %v1587, %v1624
    %v1633 = vmul.f32 %v1589, %v1625
    %v1634 = vmul.f32 %v1591, %v1626
    %v1635 = vmul.f32 %v1593, %v1627
    %v1636 = vmul.f32 %v1595, %v1628
    %v1637 = vmul.f32 %v1597, %v1629
    %v1638 = vpack.c.bf16 %v1630, %v1630
    %v1639 = vpack.c.bf16 %v1631, %v1631
    %v1640 = vpack.c.bf16 %v1632, %v1632
    %v1641 = vpack.c.bf16 %v1633, %v1633
    %v1642 = vpack.c.bf16 %v1634, %v1634
    %v1643 = vpack.c.bf16 %v1635, %v1635
    %v1644 = vpack.c.bf16 %v1636, %v1636
    %v1645 = vpack.c.bf16 %v1637, %v1637
    %1646 = vrot.lane.b32.xlu0 %v1100, 56
    %v1647 = vpop.permute.xlu0 %1646
    %v1649 = vsel %vm183, %v1638, 0
    %v1652 = vsel %vm706, %v1647, 0
    %1654 = vmatprep.subr.bf16.mxu0 0
    %1655 = vmatpush1.bf16.msra.mxu0 %v1652
    %1656 = vmatprep.subr.bf16.mxu0 0
    %1657 = vmatpush1.bf16.msra.mxu0 0
    %1658 = vmatprep.subr.bf16.mxu0 0
    %1659 = vmatpush1.bf16.msra.mxu0 0
    %1660 = vmatprep.subr.bf16.mxu0 0
    %1661 = vmatpush1.bf16.msra.mxu0 0
    %1662 = vmatprep.subr.bf16.mxu0 0
    %1663 = vmatpush1.bf16.msra.mxu0 0
    %1664 = vmatprep.subr.bf16.mxu0 0
    %1665 = vmatpush1.bf16.msra.mxu0 0
    %1666 = vmatprep.subr.bf16.mxu0 0
    %1667 = vmatpush1.bf16.msra.mxu0 0
    %1668 = vmatprep.subr.bf16.mxu0 0
    %1669 = vmatpush1.bf16.msra.mxu0 0
    %1670 = vmatprep.subr.bf16.mxu0 0
    %1671 = vmatpush1.bf16.msra.mxu0 0
    %1672 = vmatprep.subr.bf16.mxu0 0
    %1673 = vmatpush1.bf16.msra.mxu0 0
    %1674 = vmatprep.subr.bf16.mxu0 0
    %1675 = vmatpush1.bf16.msra.mxu0 0
    %1676 = vmatprep.subr.bf16.mxu0 0
    %1677 = vmatpush1.bf16.msra.mxu0 0
    %1678 = vmatprep.subr.bf16.mxu0 0
    %1679 = vmatpush1.bf16.msra.mxu0 0
    %1680 = vmatprep.subr.bf16.mxu0 0
    %1681 = vmatpush1.bf16.msra.mxu0 0
    %1682 = vmatprep.subr.bf16.mxu0 0
    %1683 = vmatpush1.bf16.msra.mxu0 0
    %1684 = vmatprep.subr.bf16.mxu0 0
    %1685 = vmatpush1.bf16.msra.mxu0 0
    %1686 = vmatprep.mubr.bf16.mxu0 0
    %1687 = vmatmul.mubr.bf16.gmra.mrb[0].mxu0 %v1649
    %v1688 = vpop.f32.mrb[0].mxu0
    %v1689 = vadd.f32 0.0, %v1688
    %v1690 = vpop.f32.mrb[0].mxu0
    %v1691 = vpop.f32.mrb[0].mxu0
    %v1692 = vpop.f32.mrb[0].mxu0
    %1693 = vdwg.mxu0
    %1694 = vrot.lane.b32.xlu0 %v1101, 56
    %v1695 = vpop.permute.xlu0 %1694
    %v1697 = vsel %vm183, %v1639, 0
    %v1700 = vsel %vm706, %v1695, 0
    %1702 = vmatprep.subr.bf16.mxu0 0
    %1703 = vmatpush1.bf16.msra.mxu0 %v1700
    %1704 = vmatprep.subr.bf16.mxu0 0
    %1705 = vmatpush1.bf16.msra.mxu0 0
    %1706 = vmatprep.subr.bf16.mxu0 0
    %1707 = vmatpush1.bf16.msra.mxu0 0
    %1708 = vmatprep.subr.bf16.mxu0 0
    %1709 = vmatpush1.bf16.msra.mxu0 0
    %1710 = vmatprep.subr.bf16.mxu0 0
    %1711 = vmatpush1.bf16.msra.mxu0 0
    %1712 = vmatprep.subr.bf16.mxu0 0
    %1713 = vmatpush1.bf16.msra.mxu0 0
    %1714 = vmatprep.subr.bf16.mxu0 0
    %1715 = vmatpush1.bf16.msra.mxu0 0
    %1716 = vmatprep.subr.bf16.mxu0 0
    %1717 = vmatpush1.bf16.msra.mxu0 0
    %1718 = vmatprep.subr.bf16.mxu0 0
    %1719 = vmatpush1.bf16.msra.mxu0 0
    %1720 = vmatprep.subr.bf16.mxu0 0
    %1721 = vmatpush1.bf16.msra.mxu0 0
    %1722 = vmatprep.subr.bf16.mxu0 0
    %1723 = vmatpush1.bf16.msra.mxu0 0
    %1724 = vmatprep.subr.bf16.mxu0 0
    %1725 = vmatpush1.bf16.msra.mxu0 0
    %1726 = vmatprep.subr.bf16.mxu0 0
    %1727 = vmatpush1.bf16.msra.mxu0 0
    %1728 = vmatprep.subr.bf16.mxu0 0
    %1729 = vmatpush1.bf16.msra.mxu0 0
    %1730 = vmatprep.subr.bf16.mxu0 0
    %1731 = vmatpush1.bf16.msra.mxu0 0
    %1732 = vmatprep.subr.bf16.mxu0 0
    %1733 = vmatpush1.bf16.msra.mxu0 0
    %1734 = vmatprep.mubr.bf16.mxu0 0
    %1735 = vmatmul.mubr.bf16.gmra.mrb[0].mxu0 %v1697
    %v1736 = vpop.f32.mrb[0].mxu0
    %v1737 = vadd.f32 0.0, %v1736
    %v1738 = vpop.f32.mrb[0].mxu0
    %v1739 = vpop.f32.mrb[0].mxu0
    %v1740 = vpop.f32.mrb[0].mxu0
    %1741 = vdwg.mxu0
    %1742 = vrot.lane.b32.xlu0 %v1102, 56
    %v1743 = vpop.permute.xlu0 %1742
    %v1745 = vsel %vm183, %v1640, 0
    %v1748 = vsel %vm706, %v1743, 0
    %1750 = vmatprep.subr.bf16.mxu0 0
    %1751 = vmatpush1.bf16.msra.mxu0 %v1748
    %1752 = vmatprep.subr.bf16.mxu0 0
    %1753 = vmatpush1.bf16.msra.mxu0 0
    %1754 = vmatprep.subr.bf16.mxu0 0
    %1755 = vmatpush1.bf16.msra.mxu0 0
    %1756 = vmatprep.subr.bf16.mxu0 0
    %1757 = vmatpush1.bf16.msra.mxu0 0
    %1758 = vmatprep.subr.bf16.mxu0 0
    %1759 = vmatpush1.bf16.msra.mxu0 0
    %1760 = vmatprep.subr.bf16.mxu0 0
    %1761 = vmatpush1.bf16.msra.mxu0 0
    %1762 = vmatprep.subr.bf16.mxu0 0
    %1763 = vmatpush1.bf16.msra.mxu0 0
    %1764 = vmatprep.subr.bf16.mxu0 0
    %1765 = vmatpush1.bf16.msra.mxu0 0
    %1766 = vmatprep.subr.bf16.mxu0 0
    %1767 = vmatpush1.bf16.msra.mxu0 0
    %1768 = vmatprep.subr.bf16.mxu0 0
    %1769 = vmatpush1.bf16.msra.mxu0 0
    %1770 = vmatprep.subr.bf16.mxu0 0
    %1771 = vmatpush1.bf16.msra.mxu0 0
    %1772 = vmatprep.subr.bf16.mxu0 0
    %1773 = vmatpush1.bf16.msra.mxu0 0
    %1774 = vmatprep.subr.bf16.mxu0 0
    %1775 = vmatpush1.bf16.msra.mxu0 0
    %1776 = vmatprep.subr.bf16.mxu0 0
    %1777 = vmatpush1.bf16.msra.mxu0 0
    %1778 = vmatprep.subr.bf16.mxu0 0
    %1779 = vmatpush1.bf16.msra.mxu0 0
    %1780 = vmatprep.subr.bf16.mxu0 0
    %1781 = vmatpush1.bf16.msra.mxu0 0
    %1782 = vmatprep.mubr.bf16.mxu0 0
    %1783 = vmatmul.mubr.bf16.gmra.mrb[0].mxu0 %v1745
    %v1784 = vpop.f32.mrb[0].mxu0
    %v1785 = vadd.f32 0.0, %v1784
    %v1786 = vpop.f32.mrb[0].mxu0
    %v1787 = vpop.f32.mrb[0].mxu0
    %v1788 = vpop.f32.mrb[0].mxu0
    %1789 = vdwg.mxu0
    %1790 = vrot.lane.b32.xlu0 %v1103, 56
    %v1791 = vpop.permute.xlu0 %1790
    %v1793 = vsel %vm183, %v1641, 0
    %v1796 = vsel %vm706, %v1791, 0
    %1798 = vmatprep.subr.bf16.mxu0 0
    %1799 = vmatpush1.bf16.msra.mxu0 %v1796
    %1800 = vmatprep.subr.bf16.mxu0 0
    %1801 = vmatpush1.bf16.msra.mxu0 0
    %1802 = vmatprep.subr.bf16.mxu0 0
    %1803 = vmatpush1.bf16.msra.mxu0 0
    %1804 = vmatprep.subr.bf16.mxu0 0
    %1805 = vmatpush1.bf16.msra.mxu0 0
    %1806 = vmatprep.subr.bf16.mxu0 0
    %1807 = vmatpush1.bf16.msra.mxu0 0
    %1808 = vmatprep.subr.bf16.mxu0 0
    %1809 = vmatpush1.bf16.msra.mxu0 0
    %1810 = vmatprep.subr.bf16.mxu0 0
    %1811 = vmatpush1.bf16.msra.mxu0 0
    %1812 = vmatprep.subr.bf16.mxu0 0
    %1813 = vmatpush1.bf16.msra.mxu0 0
    %1814 = vmatprep.subr.bf16.mxu0 0
    %1815 = vmatpush1.bf16.msra.mxu0 0
    %1816 = vmatprep.subr.bf16.mxu0 0
    %1817 = vmatpush1.bf16.msra.mxu0 0
    %1818 = vmatprep.subr.bf16.mxu0 0
    %1819 = vmatpush1.bf16.msra.mxu0 0
    %1820 = vmatprep.subr.bf16.mxu0 0
    %1821 = vmatpush1.bf16.msra.mxu0 0
    %1822 = vmatprep.subr.bf16.mxu0 0
    %1823 = vmatpush1.bf16.msra.mxu0 0
    %1824 = vmatprep.subr.bf16.mxu0 0
    %1825 = vmatpush1.bf16.msra.mxu0 0
    %1826 = vmatprep.subr.bf16.mxu0 0
    %1827 = vmatpush1.bf16.msra.mxu0 0
    %1828 = vmatprep.subr.bf16.mxu0 0
    %1829 = vmatpush1.bf16.msra.mxu0 0
    %1830 = vmatprep.mubr.bf16.mxu0 0
    %1831 = vmatmul.mubr.bf16.gmra.mrb[0].mxu0 %v1793
    %v1832 = vpop.f32.mrb[0].mxu0
    %v1833 = vadd.f32 0.0, %v1832
    %v1834 = vpop.f32.mrb[0].mxu0
    %v1835 = vpop.f32.mrb[0].mxu0
    %v1836 = vpop.f32.mrb[0].mxu0
    %1837 = vdwg.mxu0
    %1838 = vrot.lane.b32.xlu0 %v1104, 56
    %v1839 = vpop.permute.xlu0 %1838
    %v1841 = vsel %vm183, %v1642, 0
    %v1844 = vsel %vm706, %v1839, 0
    %1846 = vmatprep.subr.bf16.mxu0 0
    %1847 = vmatpush1.bf16.msra.mxu0 %v1844
    %1848 = vmatprep.subr.bf16.mxu0 0
    %1849 = vmatpush1.bf16.msra.mxu0 0
    %1850 = vmatprep.subr.bf16.mxu0 0
    %1851 = vmatpush1.bf16.msra.mxu0 0
    %1852 = vmatprep.subr.bf16.mxu0 0
    %1853 = vmatpush1.bf16.msra.mxu0 0
    %1854 = vmatprep.subr.bf16.mxu0 0
    %1855 = vmatpush1.bf16.msra.mxu0 0
    %1856 = vmatprep.subr.bf16.mxu0 0
    %1857 = vmatpush1.bf16.msra.mxu0 0
    %1858 = vmatprep.subr.bf16.mxu0 0
    %1859 = vmatpush1.bf16.msra.mxu0 0
    %1860 = vmatprep.subr.bf16.mxu0 0
    %1861 = vmatpush1.bf16.msra.mxu0 0
    %1862 = vmatprep.subr.bf16.mxu0 0
    %1863 = vmatpush1.bf16.msra.mxu0 0
    %1864 = vmatprep.subr.bf16.mxu0 0
    %1865 = vmatpush1.bf16.msra.mxu0 0
    %1866 = vmatprep.subr.bf16.mxu0 0
    %1867 = vmatpush1.bf16.msra.mxu0 0
    %1868 = vmatprep.subr.bf16.mxu0 0
    %1869 = vmatpush1.bf16.msra.mxu0 0
    %1870 = vmatprep.subr.bf16.mxu0 0
    %1871 = vmatpush1.bf16.msra.mxu0 0
    %1872 = vmatprep.subr.bf16.mxu0 0
    %1873 = vmatpush1.bf16.msra.mxu0 0
    %1874 = vmatprep.subr.bf16.mxu0 0
    %1875 = vmatpush1.bf16.msra.mxu0 0
    %1876 = vmatprep.subr.bf16.mxu0 0
    %1877 = vmatpush1.bf16.msra.mxu0 0
    %1878 = vmatprep.mubr.bf16.mxu0 0
    %1879 = vmatmul.mubr.bf16.gmra.mrb[0].mxu0 %v1841
    %v1880 = vpop.f32.mrb[0].mxu0
    %v1881 = vadd.f32 0.0, %v1880
    %v1882 = vpop.f32.mrb[0].mxu0
    %v1883 = vpop.f32.mrb[0].mxu0
    %v1884 = vpop.f32.mrb[0].mxu0
    %1885 = vdwg.mxu0
    %1886 = vrot.lane.b32.xlu0 %v1105, 56
    %v1887 = vpop.permute.xlu0 %1886
    %v1889 = vsel %vm183, %v1643, 0
    %v1892 = vsel %vm706, %v1887, 0
    %1894 = vmatprep.subr.bf16.mxu0 0
    %1895 = vmatpush1.bf16.msra.mxu0 %v1892
    %1896 = vmatprep.subr.bf16.mxu0 0
    %1897 = vmatpush1.bf16.msra.mxu0 0
    %1898 = vmatprep.subr.bf16.mxu0 0
    %1899 = vmatpush1.bf16.msra.mxu0 0
    %1900 = vmatprep.subr.bf16.mxu0 0
    %1901 = vmatpush1.bf16.msra.mxu0 0
    %1902 = vmatprep.subr.bf16.mxu0 0
    %1903 = vmatpush1.bf16.msra.mxu0 0
    %1904 = vmatprep.subr.bf16.mxu0 0
    %1905 = vmatpush1.bf16.msra.mxu0 0
    %1906 = vmatprep.subr.bf16.mxu0 0
    %1907 = vmatpush1.bf16.msra.mxu0 0
    %1908 = vmatprep.subr.bf16.mxu0 0
    %1909 = vmatpush1.bf16.msra.mxu0 0
    %1910 = vmatprep.subr.bf16.mxu0 0
    %1911 = vmatpush1.bf16.msra.mxu0 0
    %1912 = vmatprep.subr.bf16.mxu0 0
    %1913 = vmatpush1.bf16.msra.mxu0 0
    %1914 = vmatprep.subr.bf16.mxu0 0
    %1915 = vmatpush1.bf16.msra.mxu0 0
    %1916 = vmatprep.subr.bf16.mxu0 0
    %1917 = vmatpush1.bf16.msra.mxu0 0
    %1918 = vmatprep.subr.bf16.mxu0 0
    %1919 = vmatpush1.bf16.msra.mxu0 0
    %1920 = vmatprep.subr.bf16.mxu0 0
    %1921 = vmatpush1.bf16.msra.mxu0 0
    %1922 = vmatprep.subr.bf16.mxu0 0
    %1923 = vmatpush1.bf16.msra.mxu0 0
    %1924 = vmatprep.subr.bf16.mxu0 0
    %1925 = vmatpush1.bf16.msra.mxu0 0
    %1926 = vmatprep.mubr.bf16.mxu0 0
    %1927 = vmatmul.mubr.bf16.gmra.mrb[0].mxu0 %v1889
    %v1928 = vpop.f32.mrb[0].mxu0
    %v1929 = vadd.f32 0.0, %v1928
    %v1930 = vpop.f32.mrb[0].mxu0
    %v1931 = vpop.f32.mrb[0].mxu0
    %v1932 = vpop.f32.mrb[0].mxu0
    %1933 = vdwg.mxu0
    %1934 = vrot.lane.b32.xlu0 %v1106, 56
    %v1935 = vpop.permute.xlu0 %1934
    %v1937 = vsel %vm183, %v1644, 0
    %v1940 = vsel %vm706, %v1935, 0
    %1942 = vmatprep.subr.bf16.mxu0 0
    %1943 = vmatpush1.bf16.msra.mxu0 %v1940
    %1944 = vmatprep.subr.bf16.mxu0 0
    %1945 = vmatpush1.bf16.msra.mxu0 0
    %1946 = vmatprep.subr.bf16.mxu0 0
    %1947 = vmatpush1.bf16.msra.mxu0 0
    %1948 = vmatprep.subr.bf16.mxu0 0
    %1949 = vmatpush1.bf16.msra.mxu0 0
    %1950 = vmatprep.subr.bf16.mxu0 0
    %1951 = vmatpush1.bf16.msra.mxu0 0
    %1952 = vmatprep.subr.bf16.mxu0 0
    %1953 = vmatpush1.bf16.msra.mxu0 0
    %1954 = vmatprep.subr.bf16.mxu0 0
    %1955 = vmatpush1.bf16.msra.mxu0 0
    %1956 = vmatprep.subr.bf16.mxu0 0
    %1957 = vmatpush1.bf16.msra.mxu0 0
    %1958 = vmatprep.subr.bf16.mxu0 0
    %1959 = vmatpush1.bf16.msra.mxu0 0
    %1960 = vmatprep.subr.bf16.mxu0 0
    %1961 = vmatpush1.bf16.msra.mxu0 0
    %1962 = vmatprep.subr.bf16.mxu0 0
    %1963 = vmatpush1.bf16.msra.mxu0 0
    %1964 = vmatprep.subr.bf16.mxu0 0
    %1965 = vmatpush1.bf16.msra.mxu0 0
    %1966 = vmatprep.subr.bf16.mxu0 0
    %1967 = vmatpush1.bf16.msra.mxu0 0
    %1968 = vmatprep.subr.bf16.mxu0 0
    %1969 = vmatpush1.bf16.msra.mxu0 0
    %1970 = vmatprep.subr.bf16.mxu0 0
    %1971 = vmatpush1.bf16.msra.mxu0 0
    %1972 = vmatprep.subr.bf16.mxu0 0
    %1973 = vmatpush1.bf16.msra.mxu0 0
    %1974 = vmatprep.mubr.bf16.mxu0 0
    %1975 = vmatmul.mubr.bf16.gmra.mrb[0].mxu0 %v1937
    %v1976 = vpop.f32.mrb[0].mxu0
    %v1977 = vadd.f32 0.0, %v1976
    %v1978 = vpop.f32.mrb[0].mxu0
    %v1979 = vpop.f32.mrb[0].mxu0
    %v1980 = vpop.f32.mrb[0].mxu0
    %1981 = vdwg.mxu0
    %1982 = vrot.lane.b32.xlu0 %v1107, 56
    %v1983 = vpop.permute.xlu0 %1982
    %v1985 = vsel %vm183, %v1645, 0
    %v1988 = vsel %vm706, %v1983, 0
    %1990 = vmatprep.subr.bf16.mxu0 0
    %1991 = vmatpush1.bf16.msra.mxu0 %v1988
    %1992 = vmatprep.subr.bf16.mxu0 0
    %1993 = vmatpush1.bf16.msra.mxu0 0
    %1994 = vmatprep.subr.bf16.mxu0 0
    %1995 = vmatpush1.bf16.msra.mxu0 0
    %1996 = vmatprep.subr.bf16.mxu0 0
    %1997 = vmatpush1.bf16.msra.mxu0 0
    %1998 = vmatprep.subr.bf16.mxu0 0
    %1999 = vmatpush1.bf16.msra.mxu0 0
    %2000 = vmatprep.subr.bf16.mxu0 0
    %2001 = vmatpush1.bf16.msra.mxu0 0
    %2002 = vmatprep.subr.bf16.mxu0 0
    %2003 = vmatpush1.bf16.msra.mxu0 0
    %2004 = vmatprep.subr.bf16.mxu0 0
    %2005 = vmatpush1.bf16.msra.mxu0 0
    %2006 = vmatprep.subr.bf16.mxu0 0
    %2007 = vmatpush1.bf16.msra.mxu0 0
    %2008 = vmatprep.subr.bf16.mxu0 0
    %2009 = vmatpush1.bf16.msra.mxu0 0
    %2010 = vmatprep.subr.bf16.mxu0 0
    %2011 = vmatpush1.bf16.msra.mxu0 0
    %2012 = vmatprep.subr.bf16.mxu0 0
    %2013 = vmatpush1.bf16.msra.mxu0 0
    %2014 = vmatprep.subr.bf16.mxu0 0
    %2015 = vmatpush1.bf16.msra.mxu0 0
    %2016 = vmatprep.subr.bf16.mxu0 0
    %2017 = vmatpush1.bf16.msra.mxu0 0
    %2018 = vmatprep.subr.bf16.mxu0 0
    %2019 = vmatpush1.bf16.msra.mxu0 0
    %2020 = vmatprep.subr.bf16.mxu0 0
    %2021 = vmatpush1.bf16.msra.mxu0 0
    %2022 = vmatprep.mubr.bf16.mxu0 0
    %2023 = vmatmul.mubr.bf16.gmra.mrb[0].mxu0 %v1985
    %v2024 = vpop.f32.mrb[0].mxu0
    %v2025 = vadd.f32 0.0, %v2024
    %v2026 = vpop.f32.mrb[0].mxu0
    %v2027 = vpop.f32.mrb[0].mxu0
    %v2028 = vpop.f32.mrb[0].mxu0
    %2029 = vdwg.mxu0
    %v2030 = vpack.c.bf16 %v1737, %v1689
    %v2031 = vpack.c.bf16 %v1833, %v1785
    %v2032 = vpack.c.bf16 %v1929, %v1881
    %v2033 = vpack.c.bf16 %v2025, %v1977
    %v2034 = vld [vmem:[%s4 + $0x8] sm:$0xff]
    %v2035 = vpack.c.bf16 %v2034, %v2034
    %v2037 = vsel %vm183, %v2030, 0
    %v2040 = vsel %vm183, %v2031, 0
    %v2043 = vsel %vm183, %v2032, 0
    %v2046 = vsel %vm183, %v2033, 0
    %v2049 = vsel %vm706, %v2035, 0
    %2051 = vmatprep.subr.bf16.mxu0 0
    %2052 = vmatpush1.bf16.msra.mxu0 %v2049
    %2053 = vmatprep.subr.bf16.mxu0 0
    %2054 = vmatpush1.bf16.msra.mxu0 0
    %2055 = vmatprep.subr.bf16.mxu0 0
    %2056 = vmatpush1.bf16.msra.mxu0 0
    %2057 = vmatprep.subr.bf16.mxu0 0
    %2058 = vmatpush1.bf16.msra.mxu0 0
    %2059 = vmatprep.subr.bf16.mxu0 0
    %2060 = vmatpush1.bf16.msra.mxu0 0
    %2061 = vmatprep.subr.bf16.mxu0 0
    %2062 = vmatpush1.bf16.msra.mxu0 0
    %2063 = vmatprep.subr.bf16.mxu0 0
    %2064 = vmatpush1.bf16.msra.mxu0 0
    %2065 = vmatprep.subr.bf16.mxu0 0
    %2066 = vmatpush1.bf16.msra.mxu0 0
    %2067 = vmatprep.subr.bf16.mxu0 0
    %2068 = vmatpush1.bf16.msra.mxu0 0
    %2069 = vmatprep.subr.bf16.mxu0 0
    %2070 = vmatpush1.bf16.msra.mxu0 0
    %2071 = vmatprep.subr.bf16.mxu0 0
    %2072 = vmatpush1.bf16.msra.mxu0 0
    %2073 = vmatprep.subr.bf16.mxu0 0
    %2074 = vmatpush1.bf16.msra.mxu0 0
    %2075 = vmatprep.subr.bf16.mxu0 0
    %2076 = vmatpush1.bf16.msra.mxu0 0
    %2077 = vmatprep.subr.bf16.mxu0 0
    %2078 = vmatpush1.bf16.msra.mxu0 0
    %2079 = vmatprep.subr.bf16.mxu0 0
    %2080 = vmatpush1.bf16.msra.mxu0 0
    %2081 = vmatprep.subr.bf16.mxu0 0
    %2082 = vmatpush1.bf16.msra.mxu0 0
    %2083 = vmatprep.mubr.bf16.mxu0 0
    %2084 = vmatmul.mubr.bf16.gmra.mrb[0].mxu0 %v2037
    %v2085 = vpop.f32.mrb[0].mxu0
    %v2086 = vadd.f32 0.0, %v2085
    %v2087 = vpop.f32.mrb[0].mxu0
    %v2088 = vpop.f32.mrb[0].mxu0
    %v2089 = vadd.f32 0.0, %v2088
    %v2090 = vpop.f32.mrb[0].mxu0
    %2091 = vmatprep.mubr.bf16.mxu0 0
    %2092 = vmatmul.mubr.bf16.gmra.mrb[0].mxu0 %v2040
    %v2093 = vpop.f32.mrb[0].mxu0
    %v2094 = vadd.f32 0.0, %v2093
    %v2095 = vpop.f32.mrb[0].mxu0
    %v2096 = vpop.f32.mrb[0].mxu0
    %v2097 = vadd.f32 0.0, %v2096
    %v2098 = vpop.f32.mrb[0].mxu0
    %2099 = vmatprep.mubr.bf16.mxu0 0
    %2100 = vmatmul.mubr.bf16.gmra.mrb[0].mxu0 %v2043
    %v2101 = vpop.f32.mrb[0].mxu0
    %v2102 = vadd.f32 0.0, %v2101
    %v2103 = vpop.f32.mrb[0].mxu0
    %v2104 = vpop.f32.mrb[0].mxu0
    %v2105 = vadd.f32 0.0, %v2104
    %v2106 = vpop.f32.mrb[0].mxu0
    %2107 = vmatprep.mubr.bf16.mxu0 0
    %2108 = vmatmul.mubr.bf16.gmra.mrb[0].mxu0 %v2046
    %v2109 = vpop.f32.mrb[0].mxu0
    %v2110 = vadd.f32 0.0, %v2109
    %v2111 = vpop.f32.mrb[0].mxu0
    %v2112 = vpop.f32.mrb[0].mxu0
    %v2113 = vadd.f32 0.0, %v2112
    %v2114 = vpop.f32.mrb[0].mxu0
    %2115 = vdwg.mxu0
    %v2117 = vsel %vm183, %v1086, 0
    %v2120 = vsel %vm183, %v1087, 0
    %v2123 = vsel %vm183, %v1088, 0
    %v2126 = vsel %vm183, %v1089, 0
    %v2129 = vsel %vm706, %v1091, 0
    %2131 = vmatprep.subr.bf16.mxu0 0
    %2132 = vmatpush1.bf16.msra.mxu0 %v2129
    %2133 = vmatprep.subr.bf16.mxu0 0
    %2134 = vmatpush1.bf16.msra.mxu0 0
    %2135 = vmatprep.subr.bf16.mxu0 0
    %2136 = vmatpush1.bf16.msra.mxu0 0
    %2137 = vmatprep.subr.bf16.mxu0 0
    %2138 = vmatpush1.bf16.msra.mxu0 0
    %2139 = vmatprep.subr.bf16.mxu0 0
    %2140 = vmatpush1.bf16.msra.mxu0 0
    %2141 = vmatprep.subr.bf16.mxu0 0
    %2142 = vmatpush1.bf16.msra.mxu0 0
    %2143 = vmatprep.subr.bf16.mxu0 0
    %2144 = vmatpush1.bf16.msra.mxu0 0
    %2145 = vmatprep.subr.bf16.mxu0 0
    %2146 = vmatpush1.bf16.msra.mxu0 0
    %2147 = vmatprep.subr.bf16.mxu0 0
    %2148 = vmatpush1.bf16.msra.mxu0 0
    %2149 = vmatprep.subr.bf16.mxu0 0
    %2150 = vmatpush1.bf16.msra.mxu0 0
    %2151 = vmatprep.subr.bf16.mxu0 0
    %2152 = vmatpush1.bf16.msra.mxu0 0
    %2153 = vmatprep.subr.bf16.mxu0 0
    %2154 = vmatpush1.bf16.msra.mxu0 0
    %2155 = vmatprep.subr.bf16.mxu0 0
    %2156 = vmatpush1.bf16.msra.mxu0 0
    %2157 = vmatprep.subr.bf16.mxu0 0
    %2158 = vmatpush1.bf16.msra.mxu0 0
    %2159 = vmatprep.subr.bf16.mxu0 0
    %2160 = vmatpush1.bf16.msra.mxu0 0
    %2161 = vmatprep.subr.bf16.mxu0 0
    %2162 = vmatpush1.bf16.msra.mxu0 0
    %2163 = vmatprep.mubr.bf16.mxu0 0
    %2164 = vmatmul.mubr.bf16.gmra.mrb[0].mxu0 %v2117
    %v2165 = vpop.f32.mrb[0].mxu0
    %v2166 = vadd.f32 %v2086, %v2165
    %v2167 = vpop.f32.mrb[0].mxu0
    %v2168 = vpop.f32.mrb[0].mxu0
    %v2169 = vadd.f32 %v2089, %v2168
    %v2170 = vpop.f32.mrb[0].mxu0
    %2171 = vmatprep.mubr.bf16.mxu0 0
    %2172 = vmatmul.mubr.bf16.gmra.mrb[0].mxu0 %v2120
    %v2173 = vpop.f32.mrb[0].mxu0
    %v2174 = vadd.f32 %v2094, %v2173
    %v2175 = vpop.f32.mrb[0].mxu0
    %v2176 = vpop.f32.mrb[0].mxu0
    %v2177 = vadd.f32 %v2097, %v2176
    %v2178 = vpop.f32.mrb[0].mxu0
    %2179 = vmatprep.mubr.bf16.mxu0 0
    %2180 = vmatmul.mubr.bf16.gmra.mrb[0].mxu0 %v2123
    %v2181 = vpop.f32.mrb[0].mxu0
    %v2182 = vadd.f32 %v2102, %v2181
    %v2183 = vpop.f32.mrb[0].mxu0
    %v2184 = vpop.f32.mrb[0].mxu0
    %v2185 = vadd.f32 %v2105, %v2184
    %v2186 = vpop.f32.mrb[0].mxu0
    %2187 = vmatprep.mubr.bf16.mxu0 0
    %2188 = vmatmul.mubr.bf16.gmra.mrb[0].mxu0 %v2126
    %v2189 = vpop.f32.mrb[0].mxu0
    %v2190 = vadd.f32 %v2110, %v2189
    %v2191 = vpop.f32.mrb[0].mxu0
    %v2192 = vpop.f32.mrb[0].mxu0
    %v2193 = vadd.f32 %v2113, %v2192
    %v2194 = vpop.f32.mrb[0].mxu0
    %2195 = vdwg.mxu0
    %v2196 = vld [vmem:[#allocation2] sm:$0xff]
    %v2197 = vld [vmem:[#allocation2 + $0x8] sm:$0xff]
    %v2198 = vld [vmem:[#allocation2 + $0x10] sm:$0xff]
    %v2199 = vld [vmem:[#allocation2 + $0x18] sm:$0xff]
    %v2200 = vld [vmem:[#allocation2 + $0x20] sm:$0xff]
    %v2201 = vld [vmem:[#allocation2 + $0x28] sm:$0xff]
    %v2202 = vld [vmem:[#allocation2 + $0x30] sm:$0xff]
    %v2203 = vld [vmem:[#allocation2 + $0x38] sm:$0xff]
    %v2204 = vpack.c.bf16 %v2196, %v2196
    %v2205 = vpack.c.bf16 %v2197, %v2197
    %v2206 = vpack.c.bf16 %v2198, %v2198
    %v2207 = vpack.c.bf16 %v2199, %v2199
    %v2208 = vpack.c.bf16 %v2200, %v2200
    %v2209 = vpack.c.bf16 %v2201, %v2201
    %v2210 = vpack.c.bf16 %v2202, %v2202
    %v2211 = vpack.c.bf16 %v2203, %v2203
    %2213 = vrot.lane.b32.xlu0 %v2204, 112
    %v2214 = vpop.permute.xlu0 %2213
    %2215 = vrot.lane.b32.xlu0 %v2204, 80
    %v2216 = vpop.permute.xlu0 %2215
    %v2218 = vsel %vm183, %v2214, 0
    %v2221 = vsel %vm183, %v2216, 0
    %2223 = vmatprep.subr.bf16.mxu0 0
    %2224 = vmatpush1.bf16.xpose.msra.mxu0 %v2221
    %2225 = vmatprep.subr.bf16.mxu0 0
    %2226 = vmatpush1.bf16.xpose.msra.mxu0 0
    %2227 = vmatprep.subr.bf16.mxu0 0
    %2228 = vmatpush1.bf16.xpose.msra.mxu0 0
    %2229 = vmatprep.subr.bf16.mxu0 0
    %2230 = vmatpush1.bf16.xpose.msra.mxu0 0
    %2231 = vmatprep.subr.bf16.mxu0 0
    %2232 = vmatpush1.bf16.xpose.msra.mxu0 0
    %2233 = vmatprep.subr.bf16.mxu0 0
    %2234 = vmatpush1.bf16.xpose.msra.mxu0 0
    %2235 = vmatprep.subr.bf16.mxu0 0
    %2236 = vmatpush1.bf16.xpose.msra.mxu0 0
    %2237 = vmatprep.subr.bf16.mxu0 0
    %2238 = vmatpush1.bf16.xpose.msra.mxu0 0
    %2239 = vmatprep.subr.bf16.mxu0 0
    %2240 = vmatpush1.bf16.xpose.msra.mxu0 0
    %2241 = vmatprep.subr.bf16.mxu0 0
    %2242 = vmatpush1.bf16.xpose.msra.mxu0 0
    %2243 = vmatprep.subr.bf16.mxu0 0
    %2244 = vmatpush1.bf16.xpose.msra.mxu0 0
    %2245 = vmatprep.subr.bf16.mxu0 0
    %2246 = vmatpush1.bf16.xpose.msra.mxu0 0
    %2247 = vmatprep.subr.bf16.mxu0 0
    %2248 = vmatpush1.bf16.xpose.msra.mxu0 0
    %2249 = vmatprep.subr.bf16.mxu0 0
    %2250 = vmatpush1.bf16.xpose.msra.mxu0 0
    %2251 = vmatprep.subr.bf16.mxu0 0
    %2252 = vmatpush1.bf16.xpose.msra.mxu0 0
    %2253 = vmatprep.subr.bf16.mxu0 0
    %2254 = vmatpush1.bf16.xpose.msra.mxu0 0
    %2255 = vmatprep.mubr.bf16.mxu0 0
    %2256 = vmatmul.mubr.bf16.gmra.mrb[0].mxu0 %v2218
    %v2257 = vpop.f32.mrb[0].mxu0
    %v2258 = vadd.f32 0.0, %v2257
    %v2259 = vpop.f32.mrb[0].mxu0
    %v2260 = vpop.f32.mrb[0].mxu0
    %v2261 = vpop.f32.mrb[0].mxu0
    %2262 = vdwg.mxu0
    %2264 = vrot.lane.b32.xlu0 %v2205, 112
    %v2265 = vpop.permute.xlu0 %2264
    %2266 = vrot.lane.b32.xlu0 %v2205, 80
    %v2267 = vpop.permute.xlu0 %2266
    %v2269 = vsel %vm183, %v2265, 0
    %v2272 = vsel %vm183, %v2267, 0
    %2274 = vmatprep.subr.bf16.mxu0 0
    %2275 = vmatpush1.bf16.xpose.msra.mxu0 %v2272
    %2276 = vmatprep.subr.bf16.mxu0 0
    %2277 = vmatpush1.bf16.xpose.msra.mxu0 0
    %2278 = vmatprep.subr.bf16.mxu0 0
    %2279 = vmatpush1.bf16.xpose.msra.mxu0 0
    %2280 = vmatprep.subr.bf16.mxu0 0
    %2281 = vmatpush1.bf16.xpose.msra.mxu0 0
    %2282 = vmatprep.subr.bf16.mxu0 0
    %2283 = vmatpush1.bf16.xpose.msra.mxu0 0
    %2284 = vmatprep.subr.bf16.mxu0 0
    %2285 = vmatpush1.bf16.xpose.msra.mxu0 0
    %2286 = vmatprep.subr.bf16.mxu0 0
    %2287 = vmatpush1.bf16.xpose.msra.mxu0 0
    %2288 = vmatprep.subr.bf16.mxu0 0
    %2289 = vmatpush1.bf16.xpose.msra.mxu0 0
    %2290 = vmatprep.subr.bf16.mxu0 0
    %2291 = vmatpush1.bf16.xpose.msra.mxu0 0
    %2292 = vmatprep.subr.bf16.mxu0 0
    %2293 = vmatpush1.bf16.xpose.msra.mxu0 0
    %2294 = vmatprep.subr.bf16.mxu0 0
    %2295 = vmatpush1.bf16.xpose.msra.mxu0 0
    %2296 = vmatprep.subr.bf16.mxu0 0
    %2297 = vmatpush1.bf16.xpose.msra.mxu0 0
    %2298 = vmatprep.subr.bf16.mxu0 0
    %2299 = vmatpush1.bf16.xpose.msra.mxu0 0
    %2300 = vmatprep.subr.bf16.mxu0 0
    %2301 = vmatpush1.bf16.xpose.msra.mxu0 0
    %2302 = vmatprep.subr.bf16.mxu0 0
    %2303 = vmatpush1.bf16.xpose.msra.mxu0 0
    %2304 = vmatprep.subr.bf16.mxu0 0
    %2305 = vmatpush1.bf16.xpose.msra.mxu0 0
    %2306 = vmatprep.mubr.bf16.mxu0 0
    %2307 = vmatmul.mubr.bf16.gmra.mrb[0].mxu0 %v2269
    %v2308 = vpop.f32.mrb[0].mxu0
    %v2309 = vadd.f32 0.0, %v2308
    %v2310 = vpop.f32.mrb[0].mxu0
    %v2311 = vpop.f32.mrb[0].mxu0
    %v2312 = vpop.f32.mrb[0].mxu0
    %2313 = vdwg.mxu0
    %2315 = vrot.lane.b32.xlu0 %v2206, 112
    %v2316 = vpop.permute.xlu0 %2315
    %2317 = vrot.lane.b32.xlu0 %v2206, 80
    %v2318 = vpop.permute.xlu0 %2317
    %v2320 = vsel %vm183, %v2316, 0
    %v2323 = vsel %vm183, %v2318, 0
    %2325 = vmatprep.subr.bf16.mxu0 0
    %2326 = vmatpush1.bf16.xpose.msra.mxu0 %v2323
    %2327 = vmatprep.subr.bf16.mxu0 0
    %2328 = vmatpush1.bf16.xpose.msra.mxu0 0
    %2329 = vmatprep.subr.bf16.mxu0 0
    %2330 = vmatpush1.bf16.xpose.msra.mxu0 0
    %2331 = vmatprep.subr.bf16.mxu0 0
    %2332 = vmatpush1.bf16.xpose.msra.mxu0 0
    %2333 = vmatprep.subr.bf16.mxu0 0
    %2334 = vmatpush1.bf16.xpose.msra.mxu0 0
    %2335 = vmatprep.subr.bf16.mxu0 0
    %2336 = vmatpush1.bf16.xpose.msra.mxu0 0
    %2337 = vmatprep.subr.bf16.mxu0 0
    %2338 = vmatpush1.bf16.xpose.msra.mxu0 0
    %2339 = vmatprep.subr.bf16.mxu0 0
    %2340 = vmatpush1.bf16.xpose.msra.mxu0 0
    %2341 = vmatprep.subr.bf16.mxu0 0
    %2342 = vmatpush1.bf16.xpose.msra.mxu0 0
    %2343 = vmatprep.subr.bf16.mxu0 0
    %2344 = vmatpush1.bf16.xpose.msra.mxu0 0
    %2345 = vmatprep.subr.bf16.mxu0 0
    %2346 = vmatpush1.bf16.xpose.msra.mxu0 0
    %2347 = vmatprep.subr.bf16.mxu0 0
    %2348 = vmatpush1.bf16.xpose.msra.mxu0 0
    %2349 = vmatprep.subr.bf16.mxu0 0
    %2350 = vmatpush1.bf16.xpose.msra.mxu0 0
    %2351 = vmatprep.subr.bf16.mxu0 0
    %2352 = vmatpush1.bf16.xpose.msra.mxu0 0
    %2353 = vmatprep.subr.bf16.mxu0 0
    %2354 = vmatpush1.bf16.xpose.msra.mxu0 0
    %2355 = vmatprep.subr.bf16.mxu0 0
    %2356 = vmatpush1.bf16.xpose.msra.mxu0 0
    %2357 = vmatprep.mubr.bf16.mxu0 0
    %2358 = vmatmul.mubr.bf16.gmra.mrb[0].mxu0 %v2320
    %v2359 = vpop.f32.mrb[0].mxu0
    %v2360 = vadd.f32 0.0, %v2359
    %v2361 = vpop.f32.mrb[0].mxu0
    %v2362 = vpop.f32.mrb[0].mxu0
    %v2363 = vpop.f32.mrb[0].mxu0
    %2364 = vdwg.mxu0
    %2366 = vrot.lane.b32.xlu0 %v2207, 112
    %v2367 = vpop.permute.xlu0 %2366
    %2368 = vrot.lane.b32.xlu0 %v2207, 80
    %v2369 = vpop.permute.xlu0 %2368
    %v2371 = vsel %vm183, %v2367, 0
    %v2374 = vsel %vm183, %v2369, 0
    %2376 = vmatprep.subr.bf16.mxu0 0
    %2377 = vmatpush1.bf16.xpose.msra.mxu0 %v2374
    %2378 = vmatprep.subr.bf16.mxu0 0
    %2379 = vmatpush1.bf16.xpose.msra.mxu0 0
    %2380 = vmatprep.subr.bf16.mxu0 0
    %2381 = vmatpush1.bf16.xpose.msra.mxu0 0
    %2382 = vmatprep.subr.bf16.mxu0 0
    %2383 = vmatpush1.bf16.xpose.msra.mxu0 0
    %2384 = vmatprep.subr.bf16.mxu0 0
    %2385 = vmatpush1.bf16.xpose.msra.mxu0 0
    %2386 = vmatprep.subr.bf16.mxu0 0
    %2387 = vmatpush1.bf16.xpose.msra.mxu0 0
    %2388 = vmatprep.subr.bf16.mxu0 0
    %2389 = vmatpush1.bf16.xpose.msra.mxu0 0
    %2390 = vmatprep.subr.bf16.mxu0 0
    %2391 = vmatpush1.bf16.xpose.msra.mxu0 0
    %2392 = vmatprep.subr.bf16.mxu0 0
    %2393 = vmatpush1.bf16.xpose.msra.mxu0 0
    %2394 = vmatprep.subr.bf16.mxu0 0
    %2395 = vmatpush1.bf16.xpose.msra.mxu0 0
    %2396 = vmatprep.subr.bf16.mxu0 0
    %2397 = vmatpush1.bf16.xpose.msra.mxu0 0
    %2398 = vmatprep.subr.bf16.mxu0 0
    %2399 = vmatpush1.bf16.xpose.msra.mxu0 0
    %2400 = vmatprep.subr.bf16.mxu0 0
    %2401 = vmatpush1.bf16.xpose.msra.mxu0 0
    %2402 = vmatprep.subr.bf16.mxu0 0
    %2403 = vmatpush1.bf16.xpose.msra.mxu0 0
    %2404 = vmatprep.subr.bf16.mxu0 0
    %2405 = vmatpush1.bf16.xpose.msra.mxu0 0
    %2406 = vmatprep.subr.bf16.mxu0 0
    %2407 = vmatpush1.bf16.xpose.msra.mxu0 0
    %2408 = vmatprep.mubr.bf16.mxu0 0
    %2409 = vmatmul.mubr.bf16.gmra.mrb[0].mxu0 %v2371
    %v2410 = vpop.f32.mrb[0].mxu0
    %v2411 = vadd.f32 0.0, %v2410
    %v2412 = vpop.f32.mrb[0].mxu0
    %v2413 = vpop.f32.mrb[0].mxu0
    %v2414 = vpop.f32.mrb[0].mxu0
    %2415 = vdwg.mxu0
    %2417 = vrot.lane.b32.xlu0 %v2208, 112
    %v2418 = vpop.permute.xlu0 %2417
    %2419 = vrot.lane.b32.xlu0 %v2208, 80
    %v2420 = vpop.permute.xlu0 %2419
    %v2422 = vsel %vm183, %v2418, 0
    %v2425 = vsel %vm183, %v2420, 0
    %2427 = vmatprep.subr.bf16.mxu0 0
    %2428 = vmatpush1.bf16.xpose.msra.mxu0 %v2425
    %2429 = vmatprep.subr.bf16.mxu0 0
    %2430 = vmatpush1.bf16.xpose.msra.mxu0 0
    %2431 = vmatprep.subr.bf16.mxu0 0
    %2432 = vmatpush1.bf16.xpose.msra.mxu0 0
    %2433 = vmatprep.subr.bf16.mxu0 0
    %2434 = vmatpush1.bf16.xpose.msra.mxu0 0
    %2435 = vmatprep.subr.bf16.mxu0 0
    %2436 = vmatpush1.bf16.xpose.msra.mxu0 0
    %2437 = vmatprep.subr.bf16.mxu0 0
    %2438 = vmatpush1.bf16.xpose.msra.mxu0 0
    %2439 = vmatprep.subr.bf16.mxu0 0
    %2440 = vmatpush1.bf16.xpose.msra.mxu0 0
    %2441 = vmatprep.subr.bf16.mxu0 0
    %2442 = vmatpush1.bf16.xpose.msra.mxu0 0
    %2443 = vmatprep.subr.bf16.mxu0 0
    %2444 = vmatpush1.bf16.xpose.msra.mxu0 0
    %2445 = vmatprep.subr.bf16.mxu0 0
    %2446 = vmatpush1.bf16.xpose.msra.mxu0 0
    %2447 = vmatprep.subr.bf16.mxu0 0
    %2448 = vmatpush1.bf16.xpose.msra.mxu0 0
    %2449 = vmatprep.subr.bf16.mxu0 0
    %2450 = vmatpush1.bf16.xpose.msra.mxu0 0
    %2451 = vmatprep.subr.bf16.mxu0 0
    %2452 = vmatpush1.bf16.xpose.msra.mxu0 0
    %2453 = vmatprep.subr.bf16.mxu0 0
    %2454 = vmatpush1.bf16.xpose.msra.mxu0 0
    %2455 = vmatprep.subr.bf16.mxu0 0
    %2456 = vmatpush1.bf16.xpose.msra.mxu0 0
    %2457 = vmatprep.subr.bf16.mxu0 0
    %2458 = vmatpush1.bf16.xpose.msra.mxu0 0
    %2459 = vmatprep.mubr.bf16.mxu0 0
    %2460 = vmatmul.mubr.bf16.gmra.mrb[0].mxu0 %v2422
    %v2461 = vpop.f32.mrb[0].mxu0
    %v2462 = vadd.f32 0.0, %v2461
    %v2463 = vpop.f32.mrb[0].mxu0
    %v2464 = vpop.f32.mrb[0].mxu0
    %v2465 = vpop.f32.mrb[0].mxu0
    %2466 = vdwg.mxu0
    %2468 = vrot.lane.b32.xlu0 %v2209, 112
    %v2469 = vpop.permute.xlu0 %2468
    %2470 = vrot.lane.b32.xlu0 %v2209, 80
    %v2471 = vpop.permute.xlu0 %2470
    %v2473 = vsel %vm183, %v2469, 0
    %v2476 = vsel %vm183, %v2471, 0
    %2478 = vmatprep.subr.bf16.mxu0 0
    %2479 = vmatpush1.bf16.xpose.msra.mxu0 %v2476
    %2480 = vmatprep.subr.bf16.mxu0 0
    %2481 = vmatpush1.bf16.xpose.msra.mxu0 0
    %2482 = vmatprep.subr.bf16.mxu0 0
    %2483 = vmatpush1.bf16.xpose.msra.mxu0 0
    %2484 = vmatprep.subr.bf16.mxu0 0
    %2485 = vmatpush1.bf16.xpose.msra.mxu0 0
    %2486 = vmatprep.subr.bf16.mxu0 0
    %2487 = vmatpush1.bf16.xpose.msra.mxu0 0
    %2488 = vmatprep.subr.bf16.mxu0 0
    %2489 = vmatpush1.bf16.xpose.msra.mxu0 0
    %2490 = vmatprep.subr.bf16.mxu0 0
    %2491 = vmatpush1.bf16.xpose.msra.mxu0 0
    %2492 = vmatprep.subr.bf16.mxu0 0
    %2493 = vmatpush1.bf16.xpose.msra.mxu0 0
    %2494 = vmatprep.subr.bf16.mxu0 0
    %2495 = vmatpush1.bf16.xpose.msra.mxu0 0
    %2496 = vmatprep.subr.bf16.mxu0 0
    %2497 = vmatpush1.bf16.xpose.msra.mxu0 0
    %2498 = vmatprep.subr.bf16.mxu0 0
    %2499 = vmatpush1.bf16.xpose.msra.mxu0 0
    %2500 = vmatprep.subr.bf16.mxu0 0
    %2501 = vmatpush1.bf16.xpose.msra.mxu0 0
    %2502 = vmatprep.subr.bf16.mxu0 0
    %2503 = vmatpush1.bf16.xpose.msra.mxu0 0
    %2504 = vmatprep.subr.bf16.mxu0 0
    %2505 = vmatpush1.bf16.xpose.msra.mxu0 0
    %2506 = vmatprep.subr.bf16.mxu0 0
    %2507 = vmatpush1.bf16.xpose.msra.mxu0 0
    %2508 = vmatprep.subr.bf16.mxu0 0
    %2509 = vmatpush1.bf16.xpose.msra.mxu0 0
    %2510 = vmatprep.mubr.bf16.mxu0 0
    %2511 = vmatmul.mubr.bf16.gmra.mrb[0].mxu0 %v2473
    %v2512 = vpop.f32.mrb[0].mxu0
    %v2513 = vadd.f32 0.0, %v2512
    %v2514 = vpop.f32.mrb[0].mxu0
    %v2515 = vpop.f32.mrb[0].mxu0
    %v2516 = vpop.f32.mrb[0].mxu0
    %2517 = vdwg.mxu0
    %2519 = vrot.lane.b32.xlu0 %v2210, 112
    %v2520 = vpop.permute.xlu0 %2519
    %2521 = vrot.lane.b32.xlu0 %v2210, 80
    %v2522 = vpop.permute.xlu0 %2521
    %v2524 = vsel %vm183, %v2520, 0
    %v2527 = vsel %vm183, %v2522, 0
    %2529 = vmatprep.subr.bf16.mxu0 0
    %2530 = vmatpush1.bf16.xpose.msra.mxu0 %v2527
    %2531 = vmatprep.subr.bf16.mxu0 0
    %2532 = vmatpush1.bf16.xpose.msra.mxu0 0
    %2533 = vmatprep.subr.bf16.mxu0 0
    %2534 = vmatpush1.bf16.xpose.msra.mxu0 0
    %2535 = vmatprep.subr.bf16.mxu0 0
    %2536 = vmatpush1.bf16.xpose.msra.mxu0 0
    %2537 = vmatprep.subr.bf16.mxu0 0
    %2538 = vmatpush1.bf16.xpose.msra.mxu0 0
    %2539 = vmatprep.subr.bf16.mxu0 0
    %2540 = vmatpush1.bf16.xpose.msra.mxu0 0
    %2541 = vmatprep.subr.bf16.mxu0 0
    %2542 = vmatpush1.bf16.xpose.msra.mxu0 0
    %2543 = vmatprep.subr.bf16.mxu0 0
    %2544 = vmatpush1.bf16.xpose.msra.mxu0 0
    %2545 = vmatprep.subr.bf16.mxu0 0
    %2546 = vmatpush1.bf16.xpose.msra.mxu0 0
    %2547 = vmatprep.subr.bf16.mxu0 0
    %2548 = vmatpush1.bf16.xpose.msra.mxu0 0
    %2549 = vmatprep.subr.bf16.mxu0 0
    %2550 = vmatpush1.bf16.xpose.msra.mxu0 0
    %2551 = vmatprep.subr.bf16.mxu0 0
    %2552 = vmatpush1.bf16.xpose.msra.mxu0 0
    %2553 = vmatprep.subr.bf16.mxu0 0
    %2554 = vmatpush1.bf16.xpose.msra.mxu0 0
    %2555 = vmatprep.subr.bf16.mxu0 0
    %2556 = vmatpush1.bf16.xpose.msra.mxu0 0
    %2557 = vmatprep.subr.bf16.mxu0 0
    %2558 = vmatpush1.bf16.xpose.msra.mxu0 0
    %2559 = vmatprep.subr.bf16.mxu0 0
    %2560 = vmatpush1.bf16.xpose.msra.mxu0 0
    %2561 = vmatprep.mubr.bf16.mxu0 0
    %2562 = vmatmul.mubr.bf16.gmra.mrb[0].mxu0 %v2524
    %v2563 = vpop.f32.mrb[0].mxu0
    %v2564 = vadd.f32 0.0, %v2563
    %v2565 = vpop.f32.mrb[0].mxu0
    %v2566 = vpop.f32.mrb[0].mxu0
    %v2567 = vpop.f32.mrb[0].mxu0
    %2568 = vdwg.mxu0
    %2570 = vrot.lane.b32.xlu0 %v2211, 112
    %v2571 = vpop.permute.xlu0 %2570
    %2572 = vrot.lane.b32.xlu0 %v2211, 80
    %v2573 = vpop.permute.xlu0 %2572
    %v2575 = vsel %vm183, %v2571, 0
    %v2578 = vsel %vm183, %v2573, 0
    %2580 = vmatprep.subr.bf16.mxu0 0
    %2581 = vmatpush1.bf16.xpose.msra.mxu0 %v2578
    %2582 = vmatprep.subr.bf16.mxu0 0
    %2583 = vmatpush1.bf16.xpose.msra.mxu0 0
    %2584 = vmatprep.subr.bf16.mxu0 0
    %2585 = vmatpush1.bf16.xpose.msra.mxu0 0
    %2586 = vmatprep.subr.bf16.mxu0 0
    %2587 = vmatpush1.bf16.xpose.msra.mxu0 0
    %2588 = vmatprep.subr.bf16.mxu0 0
    %2589 = vmatpush1.bf16.xpose.msra.mxu0 0
    %2590 = vmatprep.subr.bf16.mxu0 0
    %2591 = vmatpush1.bf16.xpose.msra.mxu0 0
    %2592 = vmatprep.subr.bf16.mxu0 0
    %2593 = vmatpush1.bf16.xpose.msra.mxu0 0
    %2594 = vmatprep.subr.bf16.mxu0 0
    %2595 = vmatpush1.bf16.xpose.msra.mxu0 0
    %2596 = vmatprep.subr.bf16.mxu0 0
    %2597 = vmatpush1.bf16.xpose.msra.mxu0 0
    %2598 = vmatprep.subr.bf16.mxu0 0
    %2599 = vmatpush1.bf16.xpose.msra.mxu0 0
    %2600 = vmatprep.subr.bf16.mxu0 0
    %2601 = vmatpush1.bf16.xpose.msra.mxu0 0
    %2602 = vmatprep.subr.bf16.mxu0 0
    %2603 = vmatpush1.bf16.xpose.msra.mxu0 0
    %2604 = vmatprep.subr.bf16.mxu0 0
    %2605 = vmatpush1.bf16.xpose.msra.mxu0 0
    %2606 = vmatprep.subr.bf16.mxu0 0
    %2607 = vmatpush1.bf16.xpose.msra.mxu0 0
    %2608 = vmatprep.subr.bf16.mxu0 0
    %2609 = vmatpush1.bf16.xpose.msra.mxu0 0
    %2610 = vmatprep.subr.bf16.mxu0 0
    %2611 = vmatpush1.bf16.xpose.msra.mxu0 0
    %2612 = vmatprep.mubr.bf16.mxu0 0
    %2613 = vmatmul.mubr.bf16.gmra.mrb[0].mxu0 %v2575
    %v2614 = vpop.f32.mrb[0].mxu0
    %v2615 = vadd.f32 0.0, %v2614
    %v2616 = vpop.f32.mrb[0].mxu0
    %v2617 = vpop.f32.mrb[0].mxu0
    %v2618 = vpop.f32.mrb[0].mxu0
    %2619 = vdwg.mxu0
    %v2620 = vmul.f32 %v2258, 0.35355338
    %v2621 = vmul.f32 %v2309, 0.35355338
    %v2622 = vmul.f32 %v2360, 0.35355338
    %v2623 = vmul.f32 %v2411, 0.35355338
    %v2624 = vmul.f32 %v2462, 0.35355338
    %v2625 = vmul.f32 %v2513, 0.35355338
    %v2626 = vmul.f32 %v2564, 0.35355338
    %v2627 = vmul.f32 %v2615, 0.35355338
    %s2628 = scalar_lea.vmem %s1, 128
    %v2629 = vld [vmem:[%s2628] sm:$0xff]
    %v2630 = vld [vmem:[%s2628 + $0x8] sm:$0xff]
    %v2631 = vld [vmem:[%s2628 + $0x10] sm:$0xff]
    %v2632 = vld [vmem:[%s2628 + $0x18] sm:$0xff]
    %v2633 = vld [vmem:[%s2628 + $0x20] sm:$0xff]
    %v2634 = vld [vmem:[%s2628 + $0x28] sm:$0xff]
    %v2635 = vld [vmem:[%s2628 + $0x30] sm:$0xff]
    %v2636 = vld [vmem:[%s2628 + $0x38] sm:$0xff]
    %v2637 = vadd.f32 %v2620, %v2629
    %v2638 = vadd.f32 %v2621, %v2630
    %v2639 = vadd.f32 %v2622, %v2631
    %v2640 = vadd.f32 %v2623, %v2632
    %v2641 = vadd.f32 %v2624, %v2633
    %v2642 = vadd.f32 %v2625, %v2634
    %v2643 = vadd.f32 %v2626, %v2635
    %v2644 = vadd.f32 %v2627, %v2636
    %s2645 = scalar_lea.vmem [#allocation5], 128
    %2646 = vst.msk [vmem:[%s2645] sm:$0xff] %vm183, %v2637
    %2647 = vst.msk [vmem:[%s2645 + $0x8] sm:$0xff] %vm183, %v2638
    %2648 = vst.msk [vmem:[%s2645 + $0x10] sm:$0xff] %vm183, %v2639
    %2649 = vst.msk [vmem:[%s2645 + $0x18] sm:$0xff] %vm183, %v2640
    %2650 = vst.msk [vmem:[%s2645 + $0x20] sm:$0xff] %vm183, %v2641
    %2651 = vst.msk [vmem:[%s2645 + $0x28] sm:$0xff] %vm183, %v2642
    %2652 = vst.msk [vmem:[%s2645 + $0x30] sm:$0xff] %vm183, %v2643
    %2653 = vst.msk [vmem:[%s2645 + $0x38] sm:$0xff] %vm183, %v2644
    %v2654 = vsel %vm183, %v2637, -inf
    %2655 = vmax.xlane.f32.xlu0 %v2654
    %v2656 = vpop.xlane.xlu0 %2655
    %v2657 = vsel %vm183, %v2638, -inf
    %2658 = vmax.xlane.f32.xlu0 %v2657
    %v2659 = vpop.xlane.xlu0 %2658
    %v2660 = vsel %vm183, %v2639, -inf
    %2661 = vmax.xlane.f32.xlu0 %v2660
    %v2662 = vpop.xlane.xlu0 %2661
    %v2663 = vsel %vm183, %v2640, -inf
    %2664 = vmax.xlane.f32.xlu0 %v2663
    %v2665 = vpop.xlane.xlu0 %2664
    %v2666 = vsel %vm183, %v2641, -inf
    %2667 = vmax.xlane.f32.xlu0 %v2666
    %v2668 = vpop.xlane.xlu0 %2667
    %v2669 = vsel %vm183, %v2642, -inf
    %2670 = vmax.xlane.f32.xlu0 %v2669
    %v2671 = vpop.xlane.xlu0 %2670
    %v2672 = vsel %vm183, %v2643, -inf
    %2673 = vmax.xlane.f32.xlu0 %v2672
    %v2674 = vpop.xlane.xlu0 %2673
    %v2675 = vsel %vm183, %v2644, -inf
    %2676 = vmax.xlane.f32.xlu0 %v2675
    %v2677 = vpop.xlane.xlu0 %2676
    %v2678 = vsub.f32 %v2637, %v2656
    %v2679 = vsub.f32 %v2638, %v2659
    %v2680 = vsub.f32 %v2639, %v2662
    %v2681 = vsub.f32 %v2640, %v2665
    %v2682 = vsub.f32 %v2641, %v2668
    %v2683 = vsub.f32 %v2642, %v2671
    %v2684 = vsub.f32 %v2643, %v2674
    %v2685 = vsub.f32 %v2644, %v2677
    %v2686 = vmul.f32 %v2678, 1.442695
    %v2687 = vpow.pop %v2686
    %v2688 = vmul.f32 %v2679, 1.442695
    %v2689 = vpow.pop %v2688
    %v2690 = vmul.f32 %v2680, 1.442695
    %v2691 = vpow.pop %v2690
    %v2692 = vmul.f32 %v2681, 1.442695
    %v2693 = vpow.pop %v2692
    %v2694 = vmul.f32 %v2682, 1.442695
    %v2695 = vpow.pop %v2694
    %v2696 = vmul.f32 %v2683, 1.442695
    %v2697 = vpow.pop %v2696
    %v2698 = vmul.f32 %v2684, 1.442695
    %v2699 = vpow.pop %v2698
    %v2700 = vmul.f32 %v2685, 1.442695
    %v2701 = vpow.pop %v2700
    %v2702 = vsel %vm183, %v2687, 0.0
    %2703 = vadd.xlane.f32.xlu0 %v2702
    %v2704 = vpop.xlane.xlu0 %2703
    %v2705 = vsel %vm183, %v2689, 0.0
    %2706 = vadd.xlane.f32.xlu0 %v2705
    %v2707 = vpop.xlane.xlu0 %2706
    %v2708 = vsel %vm183, %v2691, 0.0
    %2709 = vadd.xlane.f32.xlu0 %v2708
    %v2710 = vpop.xlane.xlu0 %2709
    %v2711 = vsel %vm183, %v2693, 0.0
    %2712 = vadd.xlane.f32.xlu0 %v2711
    %v2713 = vpop.xlane.xlu0 %2712
    %v2714 = vsel %vm183, %v2695, 0.0
    %2715 = vadd.xlane.f32.xlu0 %v2714
    %v2716 = vpop.xlane.xlu0 %2715
    %v2717 = vsel %vm183, %v2697, 0.0
    %2718 = vadd.xlane.f32.xlu0 %v2717
    %v2719 = vpop.xlane.xlu0 %2718
    %v2720 = vsel %vm183, %v2699, 0.0
    %2721 = vadd.xlane.f32.xlu0 %v2720
    %v2722 = vpop.xlane.xlu0 %2721
    %v2723 = vsel %vm183, %v2701, 0.0
    %2724 = vadd.xlane.f32.xlu0 %v2723
    %v2725 = vpop.xlane.xlu0 %2724
    %v2726 = vrcp.pop %v2704
    %v2727 = vrcp.pop %v2707
    %v2728 = vrcp.pop %v2710
    %v2729 = vrcp.pop %v2713
    %v2730 = vrcp.pop %v2716
    %v2731 = vrcp.pop %v2719
    %v2732 = vrcp.pop %v2722
    %v2733 = vrcp.pop %v2725
    %v2734 = vmul.f32 %v2687, %v2726
    %v2735 = vmul.f32 %v2689, %v2727
    %v2736 = vmul.f32 %v2691, %v2728
    %v2737 = vmul.f32 %v2693, %v2729
    %v2738 = vmul.f32 %v2695, %v2730
    %v2739 = vmul.f32 %v2697, %v2731
    %v2740 = vmul.f32 %v2699, %v2732
    %v2741 = vmul.f32 %v2701, %v2733
    %v2742 = vpack.c.bf16 %v2734, %v2734
    %v2743 = vpack.c.bf16 %v2735, %v2735
    %v2744 = vpack.c.bf16 %v2736, %v2736
    %v2745 = vpack.c.bf16 %v2737, %v2737
    %v2746 = vpack.c.bf16 %v2738, %v2738
    %v2747 = vpack.c.bf16 %v2739, %v2739
    %v2748 = vpack.c.bf16 %v2740, %v2740
    %v2749 = vpack.c.bf16 %v2741, %v2741
    %2750 = vrot.lane.b32.xlu0 %v2204, 48
    %v2751 = vpop.permute.xlu0 %2750
    %v2753 = vsel %vm183, %v2742, 0
    %v2756 = vsel %vm706, %v2751, 0
    %2758 = vmatprep.subr.bf16.mxu0 0
    %2759 = vmatpush1.bf16.msra.mxu0 %v2756
    %2760 = vmatprep.subr.bf16.mxu0 0
    %2761 = vmatpush1.bf16.msra.mxu0 0
    %2762 = vmatprep.subr.bf16.mxu0 0
    %2763 = vmatpush1.bf16.msra.mxu0 0
    %2764 = vmatprep.subr.bf16.mxu0 0
    %2765 = vmatpush1.bf16.msra.mxu0 0
    %2766 = vmatprep.subr.bf16.mxu0 0
    %2767 = vmatpush1.bf16.msra.mxu0 0
    %2768 = vmatprep.subr.bf16.mxu0 0
    %2769 = vmatpush1.bf16.msra.mxu0 0
    %2770 = vmatprep.subr.bf16.mxu0 0
    %2771 = vmatpush1.bf16.msra.mxu0 0
    %2772 = vmatprep.subr.bf16.mxu0 0
    %2773 = vmatpush1.bf16.msra.mxu0 0
    %2774 = vmatprep.subr.bf16.mxu0 0
    %2775 = vmatpush1.bf16.msra.mxu0 0
    %2776 = vmatprep.subr.bf16.mxu0 0
    %2777 = vmatpush1.bf16.msra.mxu0 0
    %2778 = vmatprep.subr.bf16.mxu0 0
    %2779 = vmatpush1.bf16.msra.mxu0 0
    %2780 = vmatprep.subr.bf16.mxu0 0
    %2781 = vmatpush1.bf16.msra.mxu0 0
    %2782 = vmatprep.subr.bf16.mxu0 0
    %2783 = vmatpush1.bf16.msra.mxu0 0
    %2784 = vmatprep.subr.bf16.mxu0 0
    %2785 = vmatpush1.bf16.msra.mxu0 0
    %2786 = vmatprep.subr.bf16.mxu0 0
    %2787 = vmatpush1.bf16.msra.mxu0 0
    %2788 = vmatprep.subr.bf16.mxu0 0
    %2789 = vmatpush1.bf16.msra.mxu0 0
    %2790 = vmatprep.mubr.bf16.mxu0 0
    %2791 = vmatmul.mubr.bf16.gmra.mrb[0].mxu0 %v2753
    %v2792 = vpop.f32.mrb[0].mxu0
    %v2793 = vadd.f32 0.0, %v2792
    %v2794 = vpop.f32.mrb[0].mxu0
    %v2795 = vpop.f32.mrb[0].mxu0
    %v2796 = vpop.f32.mrb[0].mxu0
    %2797 = vdwg.mxu0
    %2798 = vrot.lane.b32.xlu0 %v2205, 48
    %v2799 = vpop.permute.xlu0 %2798
    %v2801 = vsel %vm183, %v2743, 0
    %v2804 = vsel %vm706, %v2799, 0
    %2806 = vmatprep.subr.bf16.mxu0 0
    %2807 = vmatpush1.bf16.msra.mxu0 %v2804
    %2808 = vmatprep.subr.bf16.mxu0 0
    %2809 = vmatpush1.bf16.msra.mxu0 0
    %2810 = vmatprep.subr.bf16.mxu0 0
    %2811 = vmatpush1.bf16.msra.mxu0 0
    %2812 = vmatprep.subr.bf16.mxu0 0
    %2813 = vmatpush1.bf16.msra.mxu0 0
    %2814 = vmatprep.subr.bf16.mxu0 0
    %2815 = vmatpush1.bf16.msra.mxu0 0
    %2816 = vmatprep.subr.bf16.mxu0 0
    %2817 = vmatpush1.bf16.msra.mxu0 0
    %2818 = vmatprep.subr.bf16.mxu0 0
    %2819 = vmatpush1.bf16.msra.mxu0 0
    %2820 = vmatprep.subr.bf16.mxu0 0
    %2821 = vmatpush1.bf16.msra.mxu0 0
    %2822 = vmatprep.subr.bf16.mxu0 0
    %2823 = vmatpush1.bf16.msra.mxu0 0
    %2824 = vmatprep.subr.bf16.mxu0 0
    %2825 = vmatpush1.bf16.msra.mxu0 0
    %2826 = vmatprep.subr.bf16.mxu0 0
    %2827 = vmatpush1.bf16.msra.mxu0 0
    %2828 = vmatprep.subr.bf16.mxu0 0
    %2829 = vmatpush1.bf16.msra.mxu0 0
    %2830 = vmatprep.subr.bf16.mxu0 0
    %2831 = vmatpush1.bf16.msra.mxu0 0
    %2832 = vmatprep.subr.bf16.mxu0 0
    %2833 = vmatpush1.bf16.msra.mxu0 0
    %2834 = vmatprep.subr.bf16.mxu0 0
    %2835 = vmatpush1.bf16.msra.mxu0 0
    %2836 = vmatprep.subr.bf16.mxu0 0
    %2837 = vmatpush1.bf16.msra.mxu0 0
    %2838 = vmatprep.mubr.bf16.mxu0 0
    %2839 = vmatmul.mubr.bf16.gmra.mrb[0].mxu0 %v2801
    %v2840 = vpop.f32.mrb[0].mxu0
    %v2841 = vadd.f32 0.0, %v2840
    %v2842 = vpop.f32.mrb[0].mxu0
    %v2843 = vpop.f32.mrb[0].mxu0
    %v2844 = vpop.f32.mrb[0].mxu0
    %2845 = vdwg.mxu0
    %2846 = vrot.lane.b32.xlu0 %v2206, 48
    %v2847 = vpop.permute.xlu0 %2846
    %v2849 = vsel %vm183, %v2744, 0
    %v2852 = vsel %vm706, %v2847, 0
    %2854 = vmatprep.subr.bf16.mxu0 0
    %2855 = vmatpush1.bf16.msra.mxu0 %v2852
    %2856 = vmatprep.subr.bf16.mxu0 0
    %2857 = vmatpush1.bf16.msra.mxu0 0
    %2858 = vmatprep.subr.bf16.mxu0 0
    %2859 = vmatpush1.bf16.msra.mxu0 0
    %2860 = vmatprep.subr.bf16.mxu0 0
    %2861 = vmatpush1.bf16.msra.mxu0 0
    %2862 = vmatprep.subr.bf16.mxu0 0
    %2863 = vmatpush1.bf16.msra.mxu0 0
    %2864 = vmatprep.subr.bf16.mxu0 0
    %2865 = vmatpush1.bf16.msra.mxu0 0
    %2866 = vmatprep.subr.bf16.mxu0 0
    %2867 = vmatpush1.bf16.msra.mxu0 0
    %2868 = vmatprep.subr.bf16.mxu0 0
    %2869 = vmatpush1.bf16.msra.mxu0 0
    %2870 = vmatprep.subr.bf16.mxu0 0
    %2871 = vmatpush1.bf16.msra.mxu0 0
    %2872 = vmatprep.subr.bf16.mxu0 0
    %2873 = vmatpush1.bf16.msra.mxu0 0
    %2874 = vmatprep.subr.bf16.mxu0 0
    %2875 = vmatpush1.bf16.msra.mxu0 0
    %2876 = vmatprep.subr.bf16.mxu0 0
    %2877 = vmatpush1.bf16.msra.mxu0 0
    %2878 = vmatprep.subr.bf16.mxu0 0
    %2879 = vmatpush1.bf16.msra.mxu0 0
    %2880 = vmatprep.subr.bf16.mxu0 0
    %2881 = vmatpush1.bf16.msra.mxu0 0
    %2882 = vmatprep.subr.bf16.mxu0 0
    %2883 = vmatpush1.bf16.msra.mxu0 0
    %2884 = vmatprep.subr.bf16.mxu0 0
    %2885 = vmatpush1.bf16.msra.mxu0 0
    %2886 = vmatprep.mubr.bf16.mxu0 0
    %2887 = vmatmul.mubr.bf16.gmra.mrb[0].mxu0 %v2849
    %v2888 = vpop.f32.mrb[0].mxu0
    %v2889 = vadd.f32 0.0, %v2888
    %v2890 = vpop.f32.mrb[0].mxu0
    %v2891 = vpop.f32.mrb[0].mxu0
    %v2892 = vpop.f32.mrb[0].mxu0
    %2893 = vdwg.mxu0
    %2894 = vrot.lane.b32.xlu0 %v2207, 48
    %v2895 = vpop.permute.xlu0 %2894
    %v2897 = vsel %vm183, %v2745, 0
    %v2900 = vsel %vm706, %v2895, 0
    %2902 = vmatprep.subr.bf16.mxu0 0
    %2903 = vmatpush1.bf16.msra.mxu0 %v2900
    %2904 = vmatprep.subr.bf16.mxu0 0
    %2905 = vmatpush1.bf16.msra.mxu0 0
    %2906 = vmatprep.subr.bf16.mxu0 0
    %2907 = vmatpush1.bf16.msra.mxu0 0
    %2908 = vmatprep.subr.bf16.mxu0 0
    %2909 = vmatpush1.bf16.msra.mxu0 0
    %2910 = vmatprep.subr.bf16.mxu0 0
    %2911 = vmatpush1.bf16.msra.mxu0 0
    %2912 = vmatprep.subr.bf16.mxu0 0
    %2913 = vmatpush1.bf16.msra.mxu0 0
    %2914 = vmatprep.subr.bf16.mxu0 0
    %2915 = vmatpush1.bf16.msra.mxu0 0
    %2916 = vmatprep.subr.bf16.mxu0 0
    %2917 = vmatpush1.bf16.msra.mxu0 0
    %2918 = vmatprep.subr.bf16.mxu0 0
    %2919 = vmatpush1.bf16.msra.mxu0 0
    %2920 = vmatprep.subr.bf16.mxu0 0
    %2921 = vmatpush1.bf16.msra.mxu0 0
    %2922 = vmatprep.subr.bf16.mxu0 0
    %2923 = vmatpush1.bf16.msra.mxu0 0
    %2924 = vmatprep.subr.bf16.mxu0 0
    %2925 = vmatpush1.bf16.msra.mxu0 0
    %2926 = vmatprep.subr.bf16.mxu0 0
    %2927 = vmatpush1.bf16.msra.mxu0 0
    %2928 = vmatprep.subr.bf16.mxu0 0
    %2929 = vmatpush1.bf16.msra.mxu0 0
    %2930 = vmatprep.subr.bf16.mxu0 0
    %2931 = vmatpush1.bf16.msra.mxu0 0
    %2932 = vmatprep.subr.bf16.mxu0 0
    %2933 = vmatpush1.bf16.msra.mxu0 0
    %2934 = vmatprep.mubr.bf16.mxu0 0
    %2935 = vmatmul.mubr.bf16.gmra.mrb[0].mxu0 %v2897
    %v2936 = vpop.f32.mrb[0].mxu0
    %v2937 = vadd.f32 0.0, %v2936
    %v2938 = vpop.f32.mrb[0].mxu0
    %v2939 = vpop.f32.mrb[0].mxu0
    %v2940 = vpop.f32.mrb[0].mxu0
    %2941 = vdwg.mxu0
    %2942 = vrot.lane.b32.xlu0 %v2208, 48
    %v2943 = vpop.permute.xlu0 %2942
    %v2945 = vsel %vm183, %v2746, 0
    %v2948 = vsel %vm706, %v2943, 0
    %2950 = vmatprep.subr.bf16.mxu0 0
    %2951 = vmatpush1.bf16.msra.mxu0 %v2948
    %2952 = vmatprep.subr.bf16.mxu0 0
    %2953 = vmatpush1.bf16.msra.mxu0 0
    %2954 = vmatprep.subr.bf16.mxu0 0
    %2955 = vmatpush1.bf16.msra.mxu0 0
    %2956 = vmatprep.subr.bf16.mxu0 0
    %2957 = vmatpush1.bf16.msra.mxu0 0
    %2958 = vmatprep.subr.bf16.mxu0 0
    %2959 = vmatpush1.bf16.msra.mxu0 0
    %2960 = vmatprep.subr.bf16.mxu0 0
    %2961 = vmatpush1.bf16.msra.mxu0 0
    %2962 = vmatprep.subr.bf16.mxu0 0
    %2963 = vmatpush1.bf16.msra.mxu0 0
    %2964 = vmatprep.subr.bf16.mxu0 0
    %2965 = vmatpush1.bf16.msra.mxu0 0
    %2966 = vmatprep.subr.bf16.mxu0 0
    %2967 = vmatpush1.bf16.msra.mxu0 0
    %2968 = vmatprep.subr.bf16.mxu0 0
    %2969 = vmatpush1.bf16.msra.mxu0 0
    %2970 = vmatprep.subr.bf16.mxu0 0
    %2971 = vmatpush1.bf16.msra.mxu0 0
    %2972 = vmatprep.subr.bf16.mxu0 0
    %2973 = vmatpush1.bf16.msra.mxu0 0
    %2974 = vmatprep.subr.bf16.mxu0 0
    %2975 = vmatpush1.bf16.msra.mxu0 0
    %2976 = vmatprep.subr.bf16.mxu0 0
    %2977 = vmatpush1.bf16.msra.mxu0 0
    %2978 = vmatprep.subr.bf16.mxu0 0
    %2979 = vmatpush1.bf16.msra.mxu0 0
    %2980 = vmatprep.subr.bf16.mxu0 0
    %2981 = vmatpush1.bf16.msra.mxu0 0
    %2982 = vmatprep.mubr.bf16.mxu0 0
    %2983 = vmatmul.mubr.bf16.gmra.mrb[0].mxu0 %v2945
    %v2984 = vpop.f32.mrb[0].mxu0
    %v2985 = vadd.f32 0.0, %v2984
    %v2986 = vpop.f32.mrb[0].mxu0
    %v2987 = vpop.f32.mrb[0].mxu0
    %v2988 = vpop.f32.mrb[0].mxu0
    %2989 = vdwg.mxu0
    %2990 = vrot.lane.b32.xlu0 %v2209, 48
    %v2991 = vpop.permute.xlu0 %2990
    %v2993 = vsel %vm183, %v2747, 0
    %v2996 = vsel %vm706, %v2991, 0
    %2998 = vmatprep.subr.bf16.mxu0 0
    %2999 = vmatpush1.bf16.msra.mxu0 %v2996
    %3000 = vmatprep.subr.bf16.mxu0 0
    %3001 = vmatpush1.bf16.msra.mxu0 0
    %3002 = vmatprep.subr.bf16.mxu0 0
    %3003 = vmatpush1.bf16.msra.mxu0 0
    %3004 = vmatprep.subr.bf16.mxu0 0
    %3005 = vmatpush1.bf16.msra.mxu0 0
    %3006 = vmatprep.subr.bf16.mxu0 0
    %3007 = vmatpush1.bf16.msra.mxu0 0
    %3008 = vmatprep.subr.bf16.mxu0 0
    %3009 = vmatpush1.bf16.msra.mxu0 0
    %3010 = vmatprep.subr.bf16.mxu0 0
    %3011 = vmatpush1.bf16.msra.mxu0 0
    %3012 = vmatprep.subr.bf16.mxu0 0
    %3013 = vmatpush1.bf16.msra.mxu0 0
    %3014 = vmatprep.subr.bf16.mxu0 0
    %3015 = vmatpush1.bf16.msra.mxu0 0
    %3016 = vmatprep.subr.bf16.mxu0 0
    %3017 = vmatpush1.bf16.msra.mxu0 0
    %3018 = vmatprep.subr.bf16.mxu0 0
    %3019 = vmatpush1.bf16.msra.mxu0 0
    %3020 = vmatprep.subr.bf16.mxu0 0
    %3021 = vmatpush1.bf16.msra.mxu0 0
    %3022 = vmatprep.subr.bf16.mxu0 0
    %3023 = vmatpush1.bf16.msra.mxu0 0
    %3024 = vmatprep.subr.bf16.mxu0 0
    %3025 = vmatpush1.bf16.msra.mxu0 0
    %3026 = vmatprep.subr.bf16.mxu0 0
    %3027 = vmatpush1.bf16.msra.mxu0 0
    %3028 = vmatprep.subr.bf16.mxu0 0
    %3029 = vmatpush1.bf16.msra.mxu0 0
    %3030 = vmatprep.mubr.bf16.mxu0 0
    %3031 = vmatmul.mubr.bf16.gmra.mrb[0].mxu0 %v2993
    %v3032 = vpop.f32.mrb[0].mxu0
    %v3033 = vadd.f32 0.0, %v3032
    %v3034 = vpop.f32.mrb[0].mxu0
    %v3035 = vpop.f32.mrb[0].mxu0
    %v3036 = vpop.f32.mrb[0].mxu0
    %3037 = vdwg.mxu0
    %3038 = vrot.lane.b32.xlu0 %v2210, 48
    %v3039 = vpop.permute.xlu0 %3038
    %v3041 = vsel %vm183, %v2748, 0
    %v3044 = vsel %vm706, %v3039, 0
    %3046 = vmatprep.subr.bf16.mxu0 0
    %3047 = vmatpush1.bf16.msra.mxu0 %v3044
    %3048 = vmatprep.subr.bf16.mxu0 0
    %3049 = vmatpush1.bf16.msra.mxu0 0
    %3050 = vmatprep.subr.bf16.mxu0 0
    %3051 = vmatpush1.bf16.msra.mxu0 0
    %3052 = vmatprep.subr.bf16.mxu0 0
    %3053 = vmatpush1.bf16.msra.mxu0 0
    %3054 = vmatprep.subr.bf16.mxu0 0
    %3055 = vmatpush1.bf16.msra.mxu0 0
    %3056 = vmatprep.subr.bf16.mxu0 0
    %3057 = vmatpush1.bf16.msra.mxu0 0
    %3058 = vmatprep.subr.bf16.mxu0 0
    %3059 = vmatpush1.bf16.msra.mxu0 0
    %3060 = vmatprep.subr.bf16.mxu0 0
    %3061 = vmatpush1.bf16.msra.mxu0 0
    %3062 = vmatprep.subr.bf16.mxu0 0
    %3063 = vmatpush1.bf16.msra.mxu0 0
    %3064 = vmatprep.subr.bf16.mxu0 0
    %3065 = vmatpush1.bf16.msra.mxu0 0
    %3066 = vmatprep.subr.bf16.mxu0 0
    %3067 = vmatpush1.bf16.msra.mxu0 0
    %3068 = vmatprep.subr.bf16.mxu0 0
    %3069 = vmatpush1.bf16.msra.mxu0 0
    %3070 = vmatprep.subr.bf16.mxu0 0
    %3071 = vmatpush1.bf16.msra.mxu0 0
    %3072 = vmatprep.subr.bf16.mxu0 0
    %3073 = vmatpush1.bf16.msra.mxu0 0
    %3074 = vmatprep.subr.bf16.mxu0 0
    %3075 = vmatpush1.bf16.msra.mxu0 0
    %3076 = vmatprep.subr.bf16.mxu0 0
    %3077 = vmatpush1.bf16.msra.mxu0 0
    %3078 = vmatprep.mubr.bf16.mxu0 0
    %3079 = vmatmul.mubr.bf16.gmra.mrb[0].mxu0 %v3041
    %v3080 = vpop.f32.mrb[0].mxu0
    %v3081 = vadd.f32 0.0, %v3080
    %v3082 = vpop.f32.mrb[0].mxu0
    %v3083 = vpop.f32.mrb[0].mxu0
    %v3084 = vpop.f32.mrb[0].mxu0
    %3085 = vdwg.mxu0
    %3086 = vrot.lane.b32.xlu0 %v2211, 48
    %v3087 = vpop.permute.xlu0 %3086
    %v3089 = vsel %vm183, %v2749, 0
    %v3092 = vsel %vm706, %v3087, 0
    %3094 = vmatprep.subr.bf16.mxu0 0
    %3095 = vmatpush1.bf16.msra.mxu0 %v3092
    %3096 = vmatprep.subr.bf16.mxu0 0
    %3097 = vmatpush1.bf16.msra.mxu0 0
    %3098 = vmatprep.subr.bf16.mxu0 0
    %3099 = vmatpush1.bf16.msra.mxu0 0
    %3100 = vmatprep.subr.bf16.mxu0 0
    %3101 = vmatpush1.bf16.msra.mxu0 0
    %3102 = vmatprep.subr.bf16.mxu0 0
    %3103 = vmatpush1.bf16.msra.mxu0 0
    %3104 = vmatprep.subr.bf16.mxu0 0
    %3105 = vmatpush1.bf16.msra.mxu0 0
    %3106 = vmatprep.subr.bf16.mxu0 0
    %3107 = vmatpush1.bf16.msra.mxu0 0
    %3108 = vmatprep.subr.bf16.mxu0 0
    %3109 = vmatpush1.bf16.msra.mxu0 0
    %3110 = vmatprep.subr.bf16.mxu0 0
    %3111 = vmatpush1.bf16.msra.mxu0 0
    %3112 = vmatprep.subr.bf16.mxu0 0
    %3113 = vmatpush1.bf16.msra.mxu0 0
    %3114 = vmatprep.subr.bf16.mxu0 0
    %3115 = vmatpush1.bf16.msra.mxu0 0
    %3116 = vmatprep.subr.bf16.mxu0 0
    %3117 = vmatpush1.bf16.msra.mxu0 0
    %3118 = vmatprep.subr.bf16.mxu0 0
    %3119 = vmatpush1.bf16.msra.mxu0 0
    %3120 = vmatprep.subr.bf16.mxu0 0
    %3121 = vmatpush1.bf16.msra.mxu0 0
    %3122 = vmatprep.subr.bf16.mxu0 0
    %3123 = vmatpush1.bf16.msra.mxu0 0
    %3124 = vmatprep.subr.bf16.mxu0 0
    %3125 = vmatpush1.bf16.msra.mxu0 0
    %3126 = vmatprep.mubr.bf16.mxu0 0
    %3127 = vmatmul.mubr.bf16.gmra.mrb[0].mxu0 %v3089
    %v3128 = vpop.f32.mrb[0].mxu0
    %v3129 = vadd.f32 0.0, %v3128
    %v3130 = vpop.f32.mrb[0].mxu0
    %v3131 = vpop.f32.mrb[0].mxu0
    %v3132 = vpop.f32.mrb[0].mxu0
    %3133 = vdwg.mxu0
    %v3134 = vpack.c.bf16 %v2841, %v2793
    %v3135 = vpack.c.bf16 %v2937, %v2889
    %v3136 = vpack.c.bf16 %v3033, %v2985
    %v3137 = vpack.c.bf16 %v3129, %v3081
    %v3138 = vld [vmem:[%s4 + $0x10] sm:$0xff]
    %v3139 = vpack.c.bf16 %v3138, %v3138
    %v3141 = vsel %vm183, %v3134, 0
    %v3144 = vsel %vm183, %v3135, 0
    %v3147 = vsel %vm183, %v3136, 0
    %v3150 = vsel %vm183, %v3137, 0
    %v3153 = vsel %vm706, %v3139, 0
    %3155 = vmatprep.subr.bf16.mxu0 0
    %3156 = vmatpush1.bf16.msra.mxu0 %v3153
    %3157 = vmatprep.subr.bf16.mxu0 0
    %3158 = vmatpush1.bf16.msra.mxu0 0
    %3159 = vmatprep.subr.bf16.mxu0 0
    %3160 = vmatpush1.bf16.msra.mxu0 0
    %3161 = vmatprep.subr.bf16.mxu0 0
    %3162 = vmatpush1.bf16.msra.mxu0 0
    %3163 = vmatprep.subr.bf16.mxu0 0
    %3164 = vmatpush1.bf16.msra.mxu0 0
    %3165 = vmatprep.subr.bf16.mxu0 0
    %3166 = vmatpush1.bf16.msra.mxu0 0
    %3167 = vmatprep.subr.bf16.mxu0 0
    %3168 = vmatpush1.bf16.msra.mxu0 0
    %3169 = vmatprep.subr.bf16.mxu0 0
    %3170 = vmatpush1.bf16.msra.mxu0 0
    %3171 = vmatprep.subr.bf16.mxu0 0
    %3172 = vmatpush1.bf16.msra.mxu0 0
    %3173 = vmatprep.subr.bf16.mxu0 0
    %3174 = vmatpush1.bf16.msra.mxu0 0
    %3175 = vmatprep.subr.bf16.mxu0 0
    %3176 = vmatpush1.bf16.msra.mxu0 0
    %3177 = vmatprep.subr.bf16.mxu0 0
    %3178 = vmatpush1.bf16.msra.mxu0 0
    %3179 = vmatprep.subr.bf16.mxu0 0
    %3180 = vmatpush1.bf16.msra.mxu0 0
    %3181 = vmatprep.subr.bf16.mxu0 0
    %3182 = vmatpush1.bf16.msra.mxu0 0
    %3183 = vmatprep.subr.bf16.mxu0 0
    %3184 = vmatpush1.bf16.msra.mxu0 0
    %3185 = vmatprep.subr.bf16.mxu0 0
    %3186 = vmatpush1.bf16.msra.mxu0 0
    %3187 = vmatprep.mubr.bf16.mxu0 0
    %3188 = vmatmul.mubr.bf16.gmra.mrb[0].mxu0 %v3141
    %v3189 = vpop.f32.mrb[0].mxu0
    %v3190 = vadd.f32 0.0, %v3189
    %v3191 = vpop.f32.mrb[0].mxu0
    %v3192 = vpop.f32.mrb[0].mxu0
    %v3193 = vadd.f32 0.0, %v3192
    %v3194 = vpop.f32.mrb[0].mxu0
    %3195 = vmatprep.mubr.bf16.mxu0 0
    %3196 = vmatmul.mubr.bf16.gmra.mrb[0].mxu0 %v3144
    %v3197 = vpop.f32.mrb[0].mxu0
    %v3198 = vadd.f32 0.0, %v3197
    %v3199 = vpop.f32.mrb[0].mxu0
    %v3200 = vpop.f32.mrb[0].mxu0
    %v3201 = vadd.f32 0.0, %v3200
    %v3202 = vpop.f32.mrb[0].mxu0
    %3203 = vmatprep.mubr.bf16.mxu0 0
    %3204 = vmatmul.mubr.bf16.gmra.mrb[0].mxu0 %v3147
    %v3205 = vpop.f32.mrb[0].mxu0
    %v3206 = vadd.f32 0.0, %v3205
    %v3207 = vpop.f32.mrb[0].mxu0
    %v3208 = vpop.f32.mrb[0].mxu0
    %v3209 = vadd.f32 0.0, %v3208
    %v3210 = vpop.f32.mrb[0].mxu0
    %3211 = vmatprep.mubr.bf16.mxu0 0
    %3212 = vmatmul.mubr.bf16.gmra.mrb[0].mxu0 %v3150
    %v3213 = vpop.f32.mrb[0].mxu0
    %v3214 = vadd.f32 0.0, %v3213
    %v3215 = vpop.f32.mrb[0].mxu0
    %v3216 = vpop.f32.mrb[0].mxu0
    %v3217 = vadd.f32 0.0, %v3216
    %v3218 = vpop.f32.mrb[0].mxu0
    %3219 = vdwg.mxu0
    %v3220 = vadd.f32 %v2166, %v3190
    %v3221 = vadd.f32 %v2169, %v3193
    %v3222 = vadd.f32 %v2174, %v3198
    %v3223 = vadd.f32 %v2177, %v3201
    %v3224 = vadd.f32 %v2182, %v3206
    %v3225 = vadd.f32 %v2185, %v3209
    %v3226 = vadd.f32 %v2190, %v3214
    %v3227 = vadd.f32 %v2193, %v3217
    %v3228 = vld [vmem:[#allocation2] sm:$0xff]
    %v3229 = vld [vmem:[#allocation2 + $0x8] sm:$0xff]
    %v3230 = vld [vmem:[#allocation2 + $0x10] sm:$0xff]
    %v3231 = vld [vmem:[#allocation2 + $0x18] sm:$0xff]
    %v3232 = vld [vmem:[#allocation2 + $0x20] sm:$0xff]
    %v3233 = vld [vmem:[#allocation2 + $0x28] sm:$0xff]
    %v3234 = vld [vmem:[#allocation2 + $0x30] sm:$0xff]
    %v3235 = vld [vmem:[#allocation2 + $0x38] sm:$0xff]
    %v3236 = vpack.c.bf16 %v3228, %v3228
    %v3237 = vpack.c.bf16 %v3229, %v3229
    %v3238 = vpack.c.bf16 %v3230, %v3230
    %v3239 = vpack.c.bf16 %v3231, %v3231
    %v3240 = vpack.c.bf16 %v3232, %v3232
    %v3241 = vpack.c.bf16 %v3233, %v3233
    %v3242 = vpack.c.bf16 %v3234, %v3234
    %v3243 = vpack.c.bf16 %v3235, %v3235
    %3245 = vrot.lane.b32.xlu0 %v3236, 104
    %v3246 = vpop.permute.xlu0 %3245
    %3247 = vrot.lane.b32.xlu0 %v3236, 72
    %v3248 = vpop.permute.xlu0 %3247
    %v3250 = vsel %vm183, %v3246, 0
    %v3253 = vsel %vm183, %v3248, 0
    %3255 = vmatprep.subr.bf16.mxu0 0
    %3256 = vmatpush1.bf16.xpose.msra.mxu0 %v3253
    %3257 = vmatprep.subr.bf16.mxu0 0
    %3258 = vmatpush1.bf16.xpose.msra.mxu0 0
    %3259 = vmatprep.subr.bf16.mxu0 0
    %3260 = vmatpush1.bf16.xpose.msra.mxu0 0
    %3261 = vmatprep.subr.bf16.mxu0 0
    %3262 = vmatpush1.bf16.xpose.msra.mxu0 0
    %3263 = vmatprep.subr.bf16.mxu0 0
    %3264 = vmatpush1.bf16.xpose.msra.mxu0 0
    %3265 = vmatprep.subr.bf16.mxu0 0
    %3266 = vmatpush1.bf16.xpose.msra.mxu0 0
    %3267 = vmatprep.subr.bf16.mxu0 0
    %3268 = vmatpush1.bf16.xpose.msra.mxu0 0
    %3269 = vmatprep.subr.bf16.mxu0 0
    %3270 = vmatpush1.bf16.xpose.msra.mxu0 0
    %3271 = vmatprep.subr.bf16.mxu0 0
    %3272 = vmatpush1.bf16.xpose.msra.mxu0 0
    %3273 = vmatprep.subr.bf16.mxu0 0
    %3274 = vmatpush1.bf16.xpose.msra.mxu0 0
    %3275 = vmatprep.subr.bf16.mxu0 0
    %3276 = vmatpush1.bf16.xpose.msra.mxu0 0
    %3277 = vmatprep.subr.bf16.mxu0 0
    %3278 = vmatpush1.bf16.xpose.msra.mxu0 0
    %3279 = vmatprep.subr.bf16.mxu0 0
    %3280 = vmatpush1.bf16.xpose.msra.mxu0 0
    %3281 = vmatprep.subr.bf16.mxu0 0
    %3282 = vmatpush1.bf16.xpose.msra.mxu0 0
    %3283 = vmatprep.subr.bf16.mxu0 0
    %3284 = vmatpush1.bf16.xpose.msra.mxu0 0
    %3285 = vmatprep.subr.bf16.mxu0 0
    %3286 = vmatpush1.bf16.xpose.msra.mxu0 0
    %3287 = vmatprep.mubr.bf16.mxu0 0
    %3288 = vmatmul.mubr.bf16.gmra.mrb[0].mxu0 %v3250
    %v3289 = vpop.f32.mrb[0].mxu0
    %v3290 = vadd.f32 0.0, %v3289
    %v3291 = vpop.f32.mrb[0].mxu0
    %v3292 = vpop.f32.mrb[0].mxu0
    %v3293 = vpop.f32.mrb[0].mxu0
    %3294 = vdwg.mxu0
    %3296 = vrot.lane.b32.xlu0 %v3237, 104
    %v3297 = vpop.permute.xlu0 %3296
    %3298 = vrot.lane.b32.xlu0 %v3237, 72
    %v3299 = vpop.permute.xlu0 %3298
    %v3301 = vsel %vm183, %v3297, 0
    %v3304 = vsel %vm183, %v3299, 0
    %3306 = vmatprep.subr.bf16.mxu0 0
    %3307 = vmatpush1.bf16.xpose.msra.mxu0 %v3304
    %3308 = vmatprep.subr.bf16.mxu0 0
    %3309 = vmatpush1.bf16.xpose.msra.mxu0 0
    %3310 = vmatprep.subr.bf16.mxu0 0
    %3311 = vmatpush1.bf16.xpose.msra.mxu0 0
    %3312 = vmatprep.subr.bf16.mxu0 0
    %3313 = vmatpush1.bf16.xpose.msra.mxu0 0
    %3314 = vmatprep.subr.bf16.mxu0 0
    %3315 = vmatpush1.bf16.xpose.msra.mxu0 0
    %3316 = vmatprep.subr.bf16.mxu0 0
    %3317 = vmatpush1.bf16.xpose.msra.mxu0 0
    %3318 = vmatprep.subr.bf16.mxu0 0
    %3319 = vmatpush1.bf16.xpose.msra.mxu0 0
    %3320 = vmatprep.subr.bf16.mxu0 0
    %3321 = vmatpush1.bf16.xpose.msra.mxu0 0
    %3322 = vmatprep.subr.bf16.mxu0 0
    %3323 = vmatpush1.bf16.xpose.msra.mxu0 0
    %3324 = vmatprep.subr.bf16.mxu0 0
    %3325 = vmatpush1.bf16.xpose.msra.mxu0 0
    %3326 = vmatprep.subr.bf16.mxu0 0
    %3327 = vmatpush1.bf16.xpose.msra.mxu0 0
    %3328 = vmatprep.subr.bf16.mxu0 0
    %3329 = vmatpush1.bf16.xpose.msra.mxu0 0
    %3330 = vmatprep.subr.bf16.mxu0 0
    %3331 = vmatpush1.bf16.xpose.msra.mxu0 0
    %3332 = vmatprep.subr.bf16.mxu0 0
    %3333 = vmatpush1.bf16.xpose.msra.mxu0 0
    %3334 = vmatprep.subr.bf16.mxu0 0
    %3335 = vmatpush1.bf16.xpose.msra.mxu0 0
    %3336 = vmatprep.subr.bf16.mxu0 0
    %3337 = vmatpush1.bf16.xpose.msra.mxu0 0
    %3338 = vmatprep.mubr.bf16.mxu0 0
    %3339 = vmatmul.mubr.bf16.gmra.mrb[0].mxu0 %v3301
    %v3340 = vpop.f32.mrb[0].mxu0
    %v3341 = vadd.f32 0.0, %v3340
    %v3342 = vpop.f32.mrb[0].mxu0
    %v3343 = vpop.f32.mrb[0].mxu0
    %v3344 = vpop.f32.mrb[0].mxu0
    %3345 = vdwg.mxu0
    %3347 = vrot.lane.b32.xlu0 %v3238, 104
    %v3348 = vpop.permute.xlu0 %3347
    %3349 = vrot.lane.b32.xlu0 %v3238, 72
    %v3350 = vpop.permute.xlu0 %3349
    %v3352 = vsel %vm183, %v3348, 0
    %v3355 = vsel %vm183, %v3350, 0
    %3357 = vmatprep.subr.bf16.mxu0 0
    %3358 = vmatpush1.bf16.xpose.msra.mxu0 %v3355
    %3359 = vmatprep.subr.bf16.mxu0 0
    %3360 = vmatpush1.bf16.xpose.msra.mxu0 0
    %3361 = vmatprep.subr.bf16.mxu0 0
    %3362 = vmatpush1.bf16.xpose.msra.mxu0 0
    %3363 = vmatprep.subr.bf16.mxu0 0
    %3364 = vmatpush1.bf16.xpose.msra.mxu0 0
    %3365 = vmatprep.subr.bf16.mxu0 0
    %3366 = vmatpush1.bf16.xpose.msra.mxu0 0
    %3367 = vmatprep.subr.bf16.mxu0 0
    %3368 = vmatpush1.bf16.xpose.msra.mxu0 0
    %3369 = vmatprep.subr.bf16.mxu0 0
    %3370 = vmatpush1.bf16.xpose.msra.mxu0 0
    %3371 = vmatprep.subr.bf16.mxu0 0
    %3372 = vmatpush1.bf16.xpose.msra.mxu0 0
    %3373 = vmatprep.subr.bf16.mxu0 0
    %3374 = vmatpush1.bf16.xpose.msra.mxu0 0
    %3375 = vmatprep.subr.bf16.mxu0 0
    %3376 = vmatpush1.bf16.xpose.msra.mxu0 0
    %3377 = vmatprep.subr.bf16.mxu0 0
    %3378 = vmatpush1.bf16.xpose.msra.mxu0 0
    %3379 = vmatprep.subr.bf16.mxu0 0
    %3380 = vmatpush1.bf16.xpose.msra.mxu0 0
    %3381 = vmatprep.subr.bf16.mxu0 0
    %3382 = vmatpush1.bf16.xpose.msra.mxu0 0
    %3383 = vmatprep.subr.bf16.mxu0 0
    %3384 = vmatpush1.bf16.xpose.msra.mxu0 0
    %3385 = vmatprep.subr.bf16.mxu0 0
    %3386 = vmatpush1.bf16.xpose.msra.mxu0 0
    %3387 = vmatprep.subr.bf16.mxu0 0
    %3388 = vmatpush1.bf16.xpose.msra.mxu0 0
    %3389 = vmatprep.mubr.bf16.mxu0 0
    %3390 = vmatmul.mubr.bf16.gmra.mrb[0].mxu0 %v3352
    %v3391 = vpop.f32.mrb[0].mxu0
    %v3392 = vadd.f32 0.0, %v3391
    %v3393 = vpop.f32.mrb[0].mxu0
    %v3394 = vpop.f32.mrb[0].mxu0
    %v3395 = vpop.f32.mrb[0].mxu0
    %3396 = vdwg.mxu0
    %3398 = vrot.lane.b32.xlu0 %v3239, 104
    %v3399 = vpop.permute.xlu0 %3398
    %3400 = vrot.lane.b32.xlu0 %v3239, 72
    %v3401 = vpop.permute.xlu0 %3400
    %v3403 = vsel %vm183, %v3399, 0
    %v3406 = vsel %vm183, %v3401, 0
    %3408 = vmatprep.subr.bf16.mxu0 0
    %3409 = vmatpush1.bf16.xpose.msra.mxu0 %v3406
    %3410 = vmatprep.subr.bf16.mxu0 0
    %3411 = vmatpush1.bf16.xpose.msra.mxu0 0
    %3412 = vmatprep.subr.bf16.mxu0 0
    %3413 = vmatpush1.bf16.xpose.msra.mxu0 0
    %3414 = vmatprep.subr.bf16.mxu0 0
    %3415 = vmatpush1.bf16.xpose.msra.mxu0 0
    %3416 = vmatprep.subr.bf16.mxu0 0
    %3417 = vmatpush1.bf16.xpose.msra.mxu0 0
    %3418 = vmatprep.subr.bf16.mxu0 0
    %3419 = vmatpush1.bf16.xpose.msra.mxu0 0
    %3420 = vmatprep.subr.bf16.mxu0 0
    %3421 = vmatpush1.bf16.xpose.msra.mxu0 0
    %3422 = vmatprep.subr.bf16.mxu0 0
    %3423 = vmatpush1.bf16.xpose.msra.mxu0 0
    %3424 = vmatprep.subr.bf16.mxu0 0
    %3425 = vmatpush1.bf16.xpose.msra.mxu0 0
    %3426 = vmatprep.subr.bf16.mxu0 0
    %3427 = vmatpush1.bf16.xpose.msra.mxu0 0
    %3428 = vmatprep.subr.bf16.mxu0 0
    %3429 = vmatpush1.bf16.xpose.msra.mxu0 0
    %3430 = vmatprep.subr.bf16.mxu0 0
    %3431 = vmatpush1.bf16.xpose.msra.mxu0 0
    %3432 = vmatprep.subr.bf16.mxu0 0
    %3433 = vmatpush1.bf16.xpose.msra.mxu0 0
    %3434 = vmatprep.subr.bf16.mxu0 0
    %3435 = vmatpush1.bf16.xpose.msra.mxu0 0
    %3436 = vmatprep.subr.bf16.mxu0 0
    %3437 = vmatpush1.bf16.xpose.msra.mxu0 0
    %3438 = vmatprep.subr.bf16.mxu0 0
    %3439 = vmatpush1.bf16.xpose.msra.mxu0 0
    %3440 = vmatprep.mubr.bf16.mxu0 0
    %3441 = vmatmul.mubr.bf16.gmra.mrb[0].mxu0 %v3403
    %v3442 = vpop.f32.mrb[0].mxu0
    %v3443 = vadd.f32 0.0, %v3442
    %v3444 = vpop.f32.mrb[0].mxu0
    %v3445 = vpop.f32.mrb[0].mxu0
    %v3446 = vpop.f32.mrb[0].mxu0
    %3447 = vdwg.mxu0
    %3449 = vrot.lane.b32.xlu0 %v3240, 104
    %v3450 = vpop.permute.xlu0 %3449
    %3451 = vrot.lane.b32.xlu0 %v3240, 72
    %v3452 = vpop.permute.xlu0 %3451
    %v3454 = vsel %vm183, %v3450, 0
    %v3457 = vsel %vm183, %v3452, 0
    %3459 = vmatprep.subr.bf16.mxu0 0
    %3460 = vmatpush1.bf16.xpose.msra.mxu0 %v3457
    %3461 = vmatprep.subr.bf16.mxu0 0
    %3462 = vmatpush1.bf16.xpose.msra.mxu0 0
    %3463 = vmatprep.subr.bf16.mxu0 0
    %3464 = vmatpush1.bf16.xpose.msra.mxu0 0
    %3465 = vmatprep.subr.bf16.mxu0 0
    %3466 = vmatpush1.bf16.xpose.msra.mxu0 0
    %3467 = vmatprep.subr.bf16.mxu0 0
    %3468 = vmatpush1.bf16.xpose.msra.mxu0 0
    %3469 = vmatprep.subr.bf16.mxu0 0
    %3470 = vmatpush1.bf16.xpose.msra.mxu0 0
    %3471 = vmatprep.subr.bf16.mxu0 0
    %3472 = vmatpush1.bf16.xpose.msra.mxu0 0
    %3473 = vmatprep.subr.bf16.mxu0 0
    %3474 = vmatpush1.bf16.xpose.msra.mxu0 0
    %3475 = vmatprep.subr.bf16.mxu0 0
    %3476 = vmatpush1.bf16.xpose.msra.mxu0 0
    %3477 = vmatprep.subr.bf16.mxu0 0
    %3478 = vmatpush1.bf16.xpose.msra.mxu0 0
    %3479 = vmatprep.subr.bf16.mxu0 0
    %3480 = vmatpush1.bf16.xpose.msra.mxu0 0
    %3481 = vmatprep.subr.bf16.mxu0 0
    %3482 = vmatpush1.bf16.xpose.msra.mxu0 0
    %3483 = vmatprep.subr.bf16.mxu0 0
    %3484 = vmatpush1.bf16.xpose.msra.mxu0 0
    %3485 = vmatprep.subr.bf16.mxu0 0
    %3486 = vmatpush1.bf16.xpose.msra.mxu0 0
    %3487 = vmatprep.subr.bf16.mxu0 0
    %3488 = vmatpush1.bf16.xpose.msra.mxu0 0
    %3489 = vmatprep.subr.bf16.mxu0 0
    %3490 = vmatpush1.bf16.xpose.msra.mxu0 0
    %3491 = vmatprep.mubr.bf16.mxu0 0
    %3492 = vmatmul.mubr.bf16.gmra.mrb[0].mxu0 %v3454
    %v3493 = vpop.f32.mrb[0].mxu0
    %v3494 = vadd.f32 0.0, %v3493
    %v3495 = vpop.f32.mrb[0].mxu0
    %v3496 = vpop.f32.mrb[0].mxu0
    %v3497 = vpop.f32.mrb[0].mxu0
    %3498 = vdwg.mxu0
    %3500 = vrot.lane.b32.xlu0 %v3241, 104
    %v3501 = vpop.permute.xlu0 %3500
    %3502 = vrot.lane.b32.xlu0 %v3241, 72
    %v3503 = vpop.permute.xlu0 %3502
    %v3505 = vsel %vm183, %v3501, 0
    %v3508 = vsel %vm183, %v3503, 0
    %3510 = vmatprep.subr.bf16.mxu0 0
    %3511 = vmatpush1.bf16.xpose.msra.mxu0 %v3508
    %3512 = vmatprep.subr.bf16.mxu0 0
    %3513 = vmatpush1.bf16.xpose.msra.mxu0 0
    %3514 = vmatprep.subr.bf16.mxu0 0
    %3515 = vmatpush1.bf16.xpose.msra.mxu0 0
    %3516 = vmatprep.subr.bf16.mxu0 0
    %3517 = vmatpush1.bf16.xpose.msra.mxu0 0
    %3518 = vmatprep.subr.bf16.mxu0 0
    %3519 = vmatpush1.bf16.xpose.msra.mxu0 0
    %3520 = vmatprep.subr.bf16.mxu0 0
    %3521 = vmatpush1.bf16.xpose.msra.mxu0 0
    %3522 = vmatprep.subr.bf16.mxu0 0
    %3523 = vmatpush1.bf16.xpose.msra.mxu0 0
    %3524 = vmatprep.subr.bf16.mxu0 0
    %3525 = vmatpush1.bf16.xpose.msra.mxu0 0
    %3526 = vmatprep.subr.bf16.mxu0 0
    %3527 = vmatpush1.bf16.xpose.msra.mxu0 0
    %3528 = vmatprep.subr.bf16.mxu0 0
    %3529 = vmatpush1.bf16.xpose.msra.mxu0 0
    %3530 = vmatprep.subr.bf16.mxu0 0
    %3531 = vmatpush1.bf16.xpose.msra.mxu0 0
    %3532 = vmatprep.subr.bf16.mxu0 0
    %3533 = vmatpush1.bf16.xpose.msra.mxu0 0
    %3534 = vmatprep.subr.bf16.mxu0 0
    %3535 = vmatpush1.bf16.xpose.msra.mxu0 0
    %3536 = vmatprep.subr.bf16.mxu0 0
    %3537 = vmatpush1.bf16.xpose.msra.mxu0 0
    %3538 = vmatprep.subr.bf16.mxu0 0
    %3539 = vmatpush1.bf16.xpose.msra.mxu0 0
    %3540 = vmatprep.subr.bf16.mxu0 0
    %3541 = vmatpush1.bf16.xpose.msra.mxu0 0
    %3542 = vmatprep.mubr.bf16.mxu0 0
    %3543 = vmatmul.mubr.bf16.gmra.mrb[0].mxu0 %v3505
    %v3544 = vpop.f32.mrb[0].mxu0
    %v3545 = vadd.f32 0.0, %v3544
    %v3546 = vpop.f32.mrb[0].mxu0
    %v3547 = vpop.f32.mrb[0].mxu0
    %v3548 = vpop.f32.mrb[0].mxu0
    %3549 = vdwg.mxu0
    %3551 = vrot.lane.b32.xlu0 %v3242, 104
    %v3552 = vpop.permute.xlu0 %3551
    %3553 = vrot.lane.b32.xlu0 %v3242, 72
    %v3554 = vpop.permute.xlu0 %3553
    %v3556 = vsel %vm183, %v3552, 0
    %v3559 = vsel %vm183, %v3554, 0
    %3561 = vmatprep.subr.bf16.mxu0 0
    %3562 = vmatpush1.bf16.xpose.msra.mxu0 %v3559
    %3563 = vmatprep.subr.bf16.mxu0 0
    %3564 = vmatpush1.bf16.xpose.msra.mxu0 0
    %3565 = vmatprep.subr.bf16.mxu0 0
    %3566 = vmatpush1.bf16.xpose.msra.mxu0 0
    %3567 = vmatprep.subr.bf16.mxu0 0
    %3568 = vmatpush1.bf16.xpose.msra.mxu0 0
    %3569 = vmatprep.subr.bf16.mxu0 0
    %3570 = vmatpush1.bf16.xpose.msra.mxu0 0
    %3571 = vmatprep.subr.bf16.mxu0 0
    %3572 = vmatpush1.bf16.xpose.msra.mxu0 0
    %3573 = vmatprep.subr.bf16.mxu0 0
    %3574 = vmatpush1.bf16.xpose.msra.mxu0 0
    %3575 = vmatprep.subr.bf16.mxu0 0
    %3576 = vmatpush1.bf16.xpose.msra.mxu0 0
    %3577 = vmatprep.subr.bf16.mxu0 0
    %3578 = vmatpush1.bf16.xpose.msra.mxu0 0
    %3579 = vmatprep.subr.bf16.mxu0 0
    %3580 = vmatpush1.bf16.xpose.msra.mxu0 0
    %3581 = vmatprep.subr.bf16.mxu0 0
    %3582 = vmatpush1.bf16.xpose.msra.mxu0 0
    %3583 = vmatprep.subr.bf16.mxu0 0
    %3584 = vmatpush1.bf16.xpose.msra.mxu0 0
    %3585 = vmatprep.subr.bf16.mxu0 0
    %3586 = vmatpush1.bf16.xpose.msra.mxu0 0
    %3587 = vmatprep.subr.bf16.mxu0 0
    %3588 = vmatpush1.bf16.xpose.msra.mxu0 0
    %3589 = vmatprep.subr.bf16.mxu0 0
    %3590 = vmatpush1.bf16.xpose.msra.mxu0 0
    %3591 = vmatprep.subr.bf16.mxu0 0
    %3592 = vmatpush1.bf16.xpose.msra.mxu0 0
    %3593 = vmatprep.mubr.bf16.mxu0 0
    %3594 = vmatmul.mubr.bf16.gmra.mrb[0].mxu0 %v3556
    %v3595 = vpop.f32.mrb[0].mxu0
    %v3596 = vadd.f32 0.0, %v3595
    %v3597 = vpop.f32.mrb[0].mxu0
    %v3598 = vpop.f32.mrb[0].mxu0
    %v3599 = vpop.f32.mrb[0].mxu0
    %3600 = vdwg.mxu0
    %3602 = vrot.lane.b32.xlu0 %v3243, 104
    %v3603 = vpop.permute.xlu0 %3602
    %3604 = vrot.lane.b32.xlu0 %v3243, 72
    %v3605 = vpop.permute.xlu0 %3604
    %v3607 = vsel %vm183, %v3603, 0
    %v3610 = vsel %vm183, %v3605, 0
    %3612 = vmatprep.subr.bf16.mxu0 0
    %3613 = vmatpush1.bf16.xpose.msra.mxu0 %v3610
    %3614 = vmatprep.subr.bf16.mxu0 0
    %3615 = vmatpush1.bf16.xpose.msra.mxu0 0
    %3616 = vmatprep.subr.bf16.mxu0 0
    %3617 = vmatpush1.bf16.xpose.msra.mxu0 0
    %3618 = vmatprep.subr.bf16.mxu0 0
    %3619 = vmatpush1.bf16.xpose.msra.mxu0 0
    %3620 = vmatprep.subr.bf16.mxu0 0
    %3621 = vmatpush1.bf16.xpose.msra.mxu0 0
    %3622 = vmatprep.subr.bf16.mxu0 0
    %3623 = vmatpush1.bf16.xpose.msra.mxu0 0
    %3624 = vmatprep.subr.bf16.mxu0 0
    %3625 = vmatpush1.bf16.xpose.msra.mxu0 0
    %3626 = vmatprep.subr.bf16.mxu0 0
    %3627 = vmatpush1.bf16.xpose.msra.mxu0 0
    %3628 = vmatprep.subr.bf16.mxu0 0
    %3629 = vmatpush1.bf16.xpose.msra.mxu0 0
    %3630 = vmatprep.subr.bf16.mxu0 0
    %3631 = vmatpush1.bf16.xpose.msra.mxu0 0
    %3632 = vmatprep.subr.bf16.mxu0 0
    %3633 = vmatpush1.bf16.xpose.msra.mxu0 0
    %3634 = vmatprep.subr.bf16.mxu0 0
    %3635 = vmatpush1.bf16.xpose.msra.mxu0 0
    %3636 = vmatprep.subr.bf16.mxu0 0
    %3637 = vmatpush1.bf16.xpose.msra.mxu0 0
    %3638 = vmatprep.subr.bf16.mxu0 0
    %3639 = vmatpush1.bf16.xpose.msra.mxu0 0
    %3640 = vmatprep.subr.bf16.mxu0 0
    %3641 = vmatpush1.bf16.xpose.msra.mxu0 0
    %3642 = vmatprep.subr.bf16.mxu0 0
    %3643 = vmatpush1.bf16.xpose.msra.mxu0 0
    %3644 = vmatprep.mubr.bf16.mxu0 0
    %3645 = vmatmul.mubr.bf16.gmra.mrb[0].mxu0 %v3607
    %v3646 = vpop.f32.mrb[0].mxu0
    %v3647 = vadd.f32 0.0, %v3646
    %v3648 = vpop.f32.mrb[0].mxu0
    %v3649 = vpop.f32.mrb[0].mxu0
    %v3650 = vpop.f32.mrb[0].mxu0
    %3651 = vdwg.mxu0
    %v3652 = vmul.f32 %v3290, 0.35355338
    %v3653 = vmul.f32 %v3341, 0.35355338
    %v3654 = vmul.f32 %v3392, 0.35355338
    %v3655 = vmul.f32 %v3443, 0.35355338
    %v3656 = vmul.f32 %v3494, 0.35355338
    %v3657 = vmul.f32 %v3545, 0.35355338
    %v3658 = vmul.f32 %v3596, 0.35355338
    %v3659 = vmul.f32 %v3647, 0.35355338
    %s3660 = scalar_lea.vmem %s1, 192
    %v3661 = vld [vmem:[%s3660] sm:$0xff]
    %v3662 = vld [vmem:[%s3660 + $0x8] sm:$0xff]
    %v3663 = vld [vmem:[%s3660 + $0x10] sm:$0xff]
    %v3664 = vld [vmem:[%s3660 + $0x18] sm:$0xff]
    %v3665 = vld [vmem:[%s3660 + $0x20] sm:$0xff]
    %v3666 = vld [vmem:[%s3660 + $0x28] sm:$0xff]
    %v3667 = vld [vmem:[%s3660 + $0x30] sm:$0xff]
    %v3668 = vld [vmem:[%s3660 + $0x38] sm:$0xff]
    %v3669 = vadd.f32 %v3652, %v3661
    %v3670 = vadd.f32 %v3653, %v3662
    %v3671 = vadd.f32 %v3654, %v3663
    %v3672 = vadd.f32 %v3655, %v3664
    %v3673 = vadd.f32 %v3656, %v3665
    %v3674 = vadd.f32 %v3657, %v3666
    %v3675 = vadd.f32 %v3658, %v3667
    %v3676 = vadd.f32 %v3659, %v3668
    %s3677 = scalar_lea.vmem [#allocation5], 192
    %3678 = vst.msk [vmem:[%s3677] sm:$0xff] %vm183, %v3669
    %3679 = vst.msk [vmem:[%s3677 + $0x8] sm:$0xff] %vm183, %v3670
    %3680 = vst.msk [vmem:[%s3677 + $0x10] sm:$0xff] %vm183, %v3671
    %3681 = vst.msk [vmem:[%s3677 + $0x18] sm:$0xff] %vm183, %v3672
    %3682 = vst.msk [vmem:[%s3677 + $0x20] sm:$0xff] %vm183, %v3673
    %3683 = vst.msk [vmem:[%s3677 + $0x28] sm:$0xff] %vm183, %v3674
    %3684 = vst.msk [vmem:[%s3677 + $0x30] sm:$0xff] %vm183, %v3675
    %3685 = vst.msk [vmem:[%s3677 + $0x38] sm:$0xff] %vm183, %v3676
    %v3686 = vsel %vm183, %v3669, -inf
    %3687 = vmax.xlane.f32.xlu0 %v3686
    %v3688 = vpop.xlane.xlu0 %3687
    %v3689 = vsel %vm183, %v3670, -inf
    %3690 = vmax.xlane.f32.xlu0 %v3689
    %v3691 = vpop.xlane.xlu0 %3690
    %v3692 = vsel %vm183, %v3671, -inf
    %3693 = vmax.xlane.f32.xlu0 %v3692
    %v3694 = vpop.xlane.xlu0 %3693
    %v3695 = vsel %vm183, %v3672, -inf
    %3696 = vmax.xlane.f32.xlu0 %v3695
    %v3697 = vpop.xlane.xlu0 %3696
    %v3698 = vsel %vm183, %v3673, -inf
    %3699 = vmax.xlane.f32.xlu0 %v3698
    %v3700 = vpop.xlane.xlu0 %3699
    %v3701 = vsel %vm183, %v3674, -inf
    %3702 = vmax.xlane.f32.xlu0 %v3701
    %v3703 = vpop.xlane.xlu0 %3702
    %v3704 = vsel %vm183, %v3675, -inf
    %3705 = vmax.xlane.f32.xlu0 %v3704
    %v3706 = vpop.xlane.xlu0 %3705
    %v3707 = vsel %vm183, %v3676, -inf
    %3708 = vmax.xlane.f32.xlu0 %v3707
    %v3709 = vpop.xlane.xlu0 %3708
    %v3710 = vsub.f32 %v3669, %v3688
    %v3711 = vsub.f32 %v3670, %v3691
    %v3712 = vsub.f32 %v3671, %v3694
    %v3713 = vsub.f32 %v3672, %v3697
    %v3714 = vsub.f32 %v3673, %v3700
    %v3715 = vsub.f32 %v3674, %v3703
    %v3716 = vsub.f32 %v3675, %v3706
    %v3717 = vsub.f32 %v3676, %v3709
    %v3718 = vmul.f32 %v3710, 1.442695
    %v3719 = vpow.pop %v3718
    %v3720 = vmul.f32 %v3711, 1.442695
    %v3721 = vpow.pop %v3720
    %v3722 = vmul.f32 %v3712, 1.442695
    %v3723 = vpow.pop %v3722
    %v3724 = vmul.f32 %v3713, 1.442695
    %v3725 = vpow.pop %v3724
    %v3726 = vmul.f32 %v3714, 1.442695
    %v3727 = vpow.pop %v3726
    %v3728 = vmul.f32 %v3715, 1.442695
    %v3729 = vpow.pop %v3728
    %v3730 = vmul.f32 %v3716, 1.442695
    %v3731 = vpow.pop %v3730
    %v3732 = vmul.f32 %v3717, 1.442695
    %v3733 = vpow.pop %v3732
    %v3734 = vsel %vm183, %v3719, 0.0
    %3735 = vadd.xlane.f32.xlu0 %v3734
    %v3736 = vpop.xlane.xlu0 %3735
    %v3737 = vsel %vm183, %v3721, 0.0
    %3738 = vadd.xlane.f32.xlu0 %v3737
    %v3739 = vpop.xlane.xlu0 %3738
    %v3740 = vsel %vm183, %v3723, 0.0
    %3741 = vadd.xlane.f32.xlu0 %v3740
    %v3742 = vpop.xlane.xlu0 %3741
    %v3743 = vsel %vm183, %v3725, 0.0
    %3744 = vadd.xlane.f32.xlu0 %v3743
    %v3745 = vpop.xlane.xlu0 %3744
    %v3746 = vsel %vm183, %v3727, 0.0
    %3747 = vadd.xlane.f32.xlu0 %v3746
    %v3748 = vpop.xlane.xlu0 %3747
    %v3749 = vsel %vm183, %v3729, 0.0
    %3750 = vadd.xlane.f32.xlu0 %v3749
    %v3751 = vpop.xlane.xlu0 %3750
    %v3752 = vsel %vm183, %v3731, 0.0
    %3753 = vadd.xlane.f32.xlu0 %v3752
    %v3754 = vpop.xlane.xlu0 %3753
    %v3755 = vsel %vm183, %v3733, 0.0
    %3756 = vadd.xlane.f32.xlu0 %v3755
    %v3757 = vpop.xlane.xlu0 %3756
    %v3758 = vrcp.pop %v3736
    %v3759 = vrcp.pop %v3739
    %v3760 = vrcp.pop %v3742
    %v3761 = vrcp.pop %v3745
    %v3762 = vrcp.pop %v3748
    %v3763 = vrcp.pop %v3751
    %v3764 = vrcp.pop %v3754
    %v3765 = vrcp.pop %v3757
    %v3766 = vmul.f32 %v3719, %v3758
    %v3767 = vmul.f32 %v3721, %v3759
    %v3768 = vmul.f32 %v3723, %v3760
    %v3769 = vmul.f32 %v3725, %v3761
    %v3770 = vmul.f32 %v3727, %v3762
    %v3771 = vmul.f32 %v3729, %v3763
    %v3772 = vmul.f32 %v3731, %v3764
    %v3773 = vmul.f32 %v3733, %v3765
    %v3774 = vpack.c.bf16 %v3766, %v3766
    %v3775 = vpack.c.bf16 %v3767, %v3767
    %v3776 = vpack.c.bf16 %v3768, %v3768
    %v3777 = vpack.c.bf16 %v3769, %v3769
    %v3778 = vpack.c.bf16 %v3770, %v3770
    %v3779 = vpack.c.bf16 %v3771, %v3771
    %v3780 = vpack.c.bf16 %v3772, %v3772
    %v3781 = vpack.c.bf16 %v3773, %v3773
    %3782 = vrot.lane.b32.xlu0 %v3236, 40
    %v3783 = vpop.permute.xlu0 %3782
    %v3785 = vsel %vm183, %v3774, 0
    %v3788 = vsel %vm706, %v3783, 0
    %3790 = vmatprep.subr.bf16.mxu0 0
    %3791 = vmatpush1.bf16.msra.mxu0 %v3788
    %3792 = vmatprep.subr.bf16.mxu0 0
    %3793 = vmatpush1.bf16.msra.mxu0 0
    %3794 = vmatprep.subr.bf16.mxu0 0
    %3795 = vmatpush1.bf16.msra.mxu0 0
    %3796 = vmatprep.subr.bf16.mxu0 0
    %3797 = vmatpush1.bf16.msra.mxu0 0
    %3798 = vmatprep.subr.bf16.mxu0 0
    %3799 = vmatpush1.bf16.msra.mxu0 0
    %3800 = vmatprep.subr.bf16.mxu0 0
    %3801 = vmatpush1.bf16.msra.mxu0 0
    %3802 = vmatprep.subr.bf16.mxu0 0
    %3803 = vmatpush1.bf16.msra.mxu0 0
    %3804 = vmatprep.subr.bf16.mxu0 0
    %3805 = vmatpush1.bf16.msra.mxu0 0
    %3806 = vmatprep.subr.bf16.mxu0 0
    %3807 = vmatpush1.bf16.msra.mxu0 0
    %3808 = vmatprep.subr.bf16.mxu0 0
    %3809 = vmatpush1.bf16.msra.mxu0 0
    %3810 = vmatprep.subr.bf16.mxu0 0
    %3811 = vmatpush1.bf16.msra.mxu0 0
    %3812 = vmatprep.subr.bf16.mxu0 0
    %3813 = vmatpush1.bf16.msra.mxu0 0
    %3814 = vmatprep.subr.bf16.mxu0 0
    %3815 = vmatpush1.bf16.msra.mxu0 0
    %3816 = vmatprep.subr.bf16.mxu0 0
    %3817 = vmatpush1.bf16.msra.mxu0 0
    %3818 = vmatprep.subr.bf16.mxu0 0
    %3819 = vmatpush1.bf16.msra.mxu0 0
    %3820 = vmatprep.subr.bf16.mxu0 0
    %3821 = vmatpush1.bf16.msra.mxu0 0
    %3822 = vmatprep.mubr.bf16.mxu0 0
    %3823 = vmatmul.mubr.bf16.gmra.mrb[0].mxu0 %v3785
    %v3824 = vpop.f32.mrb[0].mxu0
    %v3825 = vadd.f32 0.0, %v3824
    %v3826 = vpop.f32.mrb[0].mxu0
    %v3827 = vpop.f32.mrb[0].mxu0
    %v3828 = vpop.f32.mrb[0].mxu0
    %3829 = vdwg.mxu0
    %3830 = vrot.lane.b32.xlu0 %v3237, 40
    %v3831 = vpop.permute.xlu0 %3830
    %v3833 = vsel %vm183, %v3775, 0
    %v3836 = vsel %vm706, %v3831, 0
    %3838 = vmatprep.subr.bf16.mxu0 0
    %3839 = vmatpush1.bf16.msra.mxu0 %v3836
    %3840 = vmatprep.subr.bf16.mxu0 0
    %3841 = vmatpush1.bf16.msra.mxu0 0
    %3842 = vmatprep.subr.bf16.mxu0 0
    %3843 = vmatpush1.bf16.msra.mxu0 0
    %3844 = vmatprep.subr.bf16.mxu0 0
    %3845 = vmatpush1.bf16.msra.mxu0 0
    %3846 = vmatprep.subr.bf16.mxu0 0
    %3847 = vmatpush1.bf16.msra.mxu0 0
    %3848 = vmatprep.subr.bf16.mxu0 0
    %3849 = vmatpush1.bf16.msra.mxu0 0
    %3850 = vmatprep.subr.bf16.mxu0 0
    %3851 = vmatpush1.bf16.msra.mxu0 0
    %3852 = vmatprep.subr.bf16.mxu0 0
    %3853 = vmatpush1.bf16.msra.mxu0 0
    %3854 = vmatprep.subr.bf16.mxu0 0
    %3855 = vmatpush1.bf16.msra.mxu0 0
    %3856 = vmatprep.subr.bf16.mxu0 0
    %3857 = vmatpush1.bf16.msra.mxu0 0
    %3858 = vmatprep.subr.bf16.mxu0 0
    %3859 = vmatpush1.bf16.msra.mxu0 0
    %3860 = vmatprep.subr.bf16.mxu0 0
    %3861 = vmatpush1.bf16.msra.mxu0 0
    %3862 = vmatprep.subr.bf16.mxu0 0
    %3863 = vmatpush1.bf16.msra.mxu0 0
    %3864 = vmatprep.subr.bf16.mxu0 0
    %3865 = vmatpush1.bf16.msra.mxu0 0
    %3866 = vmatprep.subr.bf16.mxu0 0
    %3867 = vmatpush1.bf16.msra.mxu0 0
    %3868 = vmatprep.subr.bf16.mxu0 0
    %3869 = vmatpush1.bf16.msra.mxu0 0
    %3870 = vmatprep.mubr.bf16.mxu0 0
    %3871 = vmatmul.mubr.bf16.gmra.mrb[0].mxu0 %v3833
    %v3872 = vpop.f32.mrb[0].mxu0
    %v3873 = vadd.f32 0.0, %v3872
    %v3874 = vpop.f32.mrb[0].mxu0
    %v3875 = vpop.f32.mrb[0].mxu0
    %v3876 = vpop.f32.mrb[0].mxu0
    %3877 = vdwg.mxu0
    %3878 = vrot.lane.b32.xlu0 %v3238, 40
    %v3879 = vpop.permute.xlu0 %3878
    %v3881 = vsel %vm183, %v3776, 0
    %v3884 = vsel %vm706, %v3879, 0
    %3886 = vmatprep.subr.bf16.mxu0 0
    %3887 = vmatpush1.bf16.msra.mxu0 %v3884
    %3888 = vmatprep.subr.bf16.mxu0 0
    %3889 = vmatpush1.bf16.msra.mxu0 0
    %3890 = vmatprep.subr.bf16.mxu0 0
    %3891 = vmatpush1.bf16.msra.mxu0 0
    %3892 = vmatprep.subr.bf16.mxu0 0
    %3893 = vmatpush1.bf16.msra.mxu0 0
    %3894 = vmatprep.subr.bf16.mxu0 0
    %3895 = vmatpush1.bf16.msra.mxu0 0
    %3896 = vmatprep.subr.bf16.mxu0 0
    %3897 = vmatpush1.bf16.msra.mxu0 0
    %3898 = vmatprep.subr.bf16.mxu0 0
    %3899 = vmatpush1.bf16.msra.mxu0 0
    %3900 = vmatprep.subr.bf16.mxu0 0
    %3901 = vmatpush1.bf16.msra.mxu0 0
    %3902 = vmatprep.subr.bf16.mxu0 0
    %3903 = vmatpush1.bf16.msra.mxu0 0
    %3904 = vmatprep.subr.bf16.mxu0 0
    %3905 = vmatpush1.bf16.msra.mxu0 0
    %3906 = vmatprep.subr.bf16.mxu0 0
    %3907 = vmatpush1.bf16.msra.mxu0 0
    %3908 = vmatprep.subr.bf16.mxu0 0
    %3909 = vmatpush1.bf16.msra.mxu0 0
    %3910 = vmatprep.subr.bf16.mxu0 0
    %3911 = vmatpush1.bf16.msra.mxu0 0
    %3912 = vmatprep.subr.bf16.mxu0 0
    %3913 = vmatpush1.bf16.msra.mxu0 0
    %3914 = vmatprep.subr.bf16.mxu0 0
    %3915 = vmatpush1.bf16.msra.mxu0 0
    %3916 = vmatprep.subr.bf16.mxu0 0
    %3917 = vmatpush1.bf16.msra.mxu0 0
    %3918 = vmatprep.mubr.bf16.mxu0 0
    %3919 = vmatmul.mubr.bf16.gmra.mrb[0].mxu0 %v3881
    %v3920 = vpop.f32.mrb[0].mxu0
    %v3921 = vadd.f32 0.0, %v3920
    %v3922 = vpop.f32.mrb[0].mxu0
    %v3923 = vpop.f32.mrb[0].mxu0
    %v3924 = vpop.f32.mrb[0].mxu0
    %3925 = vdwg.mxu0
    %3926 = vrot.lane.b32.xlu0 %v3239, 40
    %v3927 = vpop.permute.xlu0 %3926
    %v3929 = vsel %vm183, %v3777, 0
    %v3932 = vsel %vm706, %v3927, 0
    %3934 = vmatprep.subr.bf16.mxu0 0
    %3935 = vmatpush1.bf16.msra.mxu0 %v3932
    %3936 = vmatprep.subr.bf16.mxu0 0
    %3937 = vmatpush1.bf16.msra.mxu0 0
    %3938 = vmatprep.subr.bf16.mxu0 0
    %3939 = vmatpush1.bf16.msra.mxu0 0
    %3940 = vmatprep.subr.bf16.mxu0 0
    %3941 = vmatpush1.bf16.msra.mxu0 0
    %3942 = vmatprep.subr.bf16.mxu0 0
    %3943 = vmatpush1.bf16.msra.mxu0 0
    %3944 = vmatprep.subr.bf16.mxu0 0
    %3945 = vmatpush1.bf16.msra.mxu0 0
    %3946 = vmatprep.subr.bf16.mxu0 0
    %3947 = vmatpush1.bf16.msra.mxu0 0
    %3948 = vmatprep.subr.bf16.mxu0 0
    %3949 = vmatpush1.bf16.msra.mxu0 0
    %3950 = vmatprep.subr.bf16.mxu0 0
    %3951 = vmatpush1.bf16.msra.mxu0 0
    %3952 = vmatprep.subr.bf16.mxu0 0
    %3953 = vmatpush1.bf16.msra.mxu0 0
    %3954 = vmatprep.subr.bf16.mxu0 0
    %3955 = vmatpush1.bf16.msra.mxu0 0
    %3956 = vmatprep.subr.bf16.mxu0 0
    %3957 = vmatpush1.bf16.msra.mxu0 0
    %3958 = vmatprep.subr.bf16.mxu0 0
    %3959 = vmatpush1.bf16.msra.mxu0 0
    %3960 = vmatprep.subr.bf16.mxu0 0
    %3961 = vmatpush1.bf16.msra.mxu0 0
    %3962 = vmatprep.subr.bf16.mxu0 0
    %3963 = vmatpush1.bf16.msra.mxu0 0
    %3964 = vmatprep.subr.bf16.mxu0 0
    %3965 = vmatpush1.bf16.msra.mxu0 0
    %3966 = vmatprep.mubr.bf16.mxu0 0
    %3967 = vmatmul.mubr.bf16.gmra.mrb[0].mxu0 %v3929
    %v3968 = vpop.f32.mrb[0].mxu0
    %v3969 = vadd.f32 0.0, %v3968
    %v3970 = vpop.f32.mrb[0].mxu0
    %v3971 = vpop.f32.mrb[0].mxu0
    %v3972 = vpop.f32.mrb[0].mxu0
    %3973 = vdwg.mxu0
    %3974 = vrot.lane.b32.xlu0 %v3240, 40
    %v3975 = vpop.permute.xlu0 %3974
    %v3977 = vsel %vm183, %v3778, 0
    %v3980 = vsel %vm706, %v3975, 0
    %3982 = vmatprep.subr.bf16.mxu0 0
    %3983 = vmatpush1.bf16.msra.mxu0 %v3980
    %3984 = vmatprep.subr.bf16.mxu0 0
    %3985 = vmatpush1.bf16.msra.mxu0 0
    %3986 = vmatprep.subr.bf16.mxu0 0
    %3987 = vmatpush1.bf16.msra.mxu0 0
    %3988 = vmatprep.subr.bf16.mxu0 0
    %3989 = vmatpush1.bf16.msra.mxu0 0
    %3990 = vmatprep.subr.bf16.mxu0 0
    %3991 = vmatpush1.bf16.msra.mxu0 0
    %3992 = vmatprep.subr.bf16.mxu0 0
    %3993 = vmatpush1.bf16.msra.mxu0 0
    %3994 = vmatprep.subr.bf16.mxu0 0
    %3995 = vmatpush1.bf16.msra.mxu0 0
    %3996 = vmatprep.subr.bf16.mxu0 0
    %3997 = vmatpush1.bf16.msra.mxu0 0
    %3998 = vmatprep.subr.bf16.mxu0 0
    %3999 = vmatpush1.bf16.msra.mxu0 0
    %4000 = vmatprep.subr.bf16.mxu0 0
    %4001 = vmatpush1.bf16.msra.mxu0 0
    %4002 = vmatprep.subr.bf16.mxu0 0
    %4003 = vmatpush1.bf16.msra.mxu0 0
    %4004 = vmatprep.subr.bf16.mxu0 0
    %4005 = vmatpush1.bf16.msra.mxu0 0
    %4006 = vmatprep.subr.bf16.mxu0 0
    %4007 = vmatpush1.bf16.msra.mxu0 0
    %4008 = vmatprep.subr.bf16.mxu0 0
    %4009 = vmatpush1.bf16.msra.mxu0 0
    %4010 = vmatprep.subr.bf16.mxu0 0
    %4011 = vmatpush1.bf16.msra.mxu0 0
    %4012 = vmatprep.subr.bf16.mxu0 0
    %4013 = vmatpush1.bf16.msra.mxu0 0
    %4014 = vmatprep.mubr.bf16.mxu0 0
    %4015 = vmatmul.mubr.bf16.gmra.mrb[0].mxu0 %v3977
    %v4016 = vpop.f32.mrb[0].mxu0
    %v4017 = vadd.f32 0.0, %v4016
    %v4018 = vpop.f32.mrb[0].mxu0
    %v4019 = vpop.f32.mrb[0].mxu0
    %v4020 = vpop.f32.mrb[0].mxu0
    %4021 = vdwg.mxu0
    %4022 = vrot.lane.b32.xlu0 %v3241, 40
    %v4023 = vpop.permute.xlu0 %4022
    %v4025 = vsel %vm183, %v3779, 0
    %v4028 = vsel %vm706, %v4023, 0
    %4030 = vmatprep.subr.bf16.mxu0 0
    %4031 = vmatpush1.bf16.msra.mxu0 %v4028
    %4032 = vmatprep.subr.bf16.mxu0 0
    %4033 = vmatpush1.bf16.msra.mxu0 0
    %4034 = vmatprep.subr.bf16.mxu0 0
    %4035 = vmatpush1.bf16.msra.mxu0 0
    %4036 = vmatprep.subr.bf16.mxu0 0
    %4037 = vmatpush1.bf16.msra.mxu0 0
    %4038 = vmatprep.subr.bf16.mxu0 0
    %4039 = vmatpush1.bf16.msra.mxu0 0
    %4040 = vmatprep.subr.bf16.mxu0 0
    %4041 = vmatpush1.bf16.msra.mxu0 0
    %4042 = vmatprep.subr.bf16.mxu0 0
    %4043 = vmatpush1.bf16.msra.mxu0 0
    %4044 = vmatprep.subr.bf16.mxu0 0
    %4045 = vmatpush1.bf16.msra.mxu0 0
    %4046 = vmatprep.subr.bf16.mxu0 0
    %4047 = vmatpush1.bf16.msra.mxu0 0
    %4048 = vmatprep.subr.bf16.mxu0 0
    %4049 = vmatpush1.bf16.msra.mxu0 0
    %4050 = vmatprep.subr.bf16.mxu0 0
    %4051 = vmatpush1.bf16.msra.mxu0 0
    %4052 = vmatprep.subr.bf16.mxu0 0
    %4053 = vmatpush1.bf16.msra.mxu0 0
    %4054 = vmatprep.subr.bf16.mxu0 0
    %4055 = vmatpush1.bf16.msra.mxu0 0
    %4056 = vmatprep.subr.bf16.mxu0 0
    %4057 = vmatpush1.bf16.msra.mxu0 0
    %4058 = vmatprep.subr.bf16.mxu0 0
    %4059 = vmatpush1.bf16.msra.mxu0 0
    %4060 = vmatprep.subr.bf16.mxu0 0
    %4061 = vmatpush1.bf16.msra.mxu0 0
    %4062 = vmatprep.mubr.bf16.mxu0 0
    %4063 = vmatmul.mubr.bf16.gmra.mrb[0].mxu0 %v4025
    %v4064 = vpop.f32.mrb[0].mxu0
    %v4065 = vadd.f32 0.0, %v4064
    %v4066 = vpop.f32.mrb[0].mxu0
    %v4067 = vpop.f32.mrb[0].mxu0
    %v4068 = vpop.f32.mrb[0].mxu0
    %4069 = vdwg.mxu0
    %4070 = vrot.lane.b32.xlu0 %v3242, 40
    %v4071 = vpop.permute.xlu0 %4070
    %v4073 = vsel %vm183, %v3780, 0
    %v4076 = vsel %vm706, %v4071, 0
    %4078 = vmatprep.subr.bf16.mxu0 0
    %4079 = vmatpush1.bf16.msra.mxu0 %v4076
    %4080 = vmatprep.subr.bf16.mxu0 0
    %4081 = vmatpush1.bf16.msra.mxu0 0
    %4082 = vmatprep.subr.bf16.mxu0 0
    %4083 = vmatpush1.bf16.msra.mxu0 0
    %4084 = vmatprep.subr.bf16.mxu0 0
    %4085 = vmatpush1.bf16.msra.mxu0 0
    %4086 = vmatprep.subr.bf16.mxu0 0
    %4087 = vmatpush1.bf16.msra.mxu0 0
    %4088 = vmatprep.subr.bf16.mxu0 0
    %4089 = vmatpush1.bf16.msra.mxu0 0
    %4090 = vmatprep.subr.bf16.mxu0 0
    %4091 = vmatpush1.bf16.msra.mxu0 0
    %4092 = vmatprep.subr.bf16.mxu0 0
    %4093 = vmatpush1.bf16.msra.mxu0 0
    %4094 = vmatprep.subr.bf16.mxu0 0
    %4095 = vmatpush1.bf16.msra.mxu0 0
    %4096 = vmatprep.subr.bf16.mxu0 0
    %4097 = vmatpush1.bf16.msra.mxu0 0
    %4098 = vmatprep.subr.bf16.mxu0 0
    %4099 = vmatpush1.bf16.msra.mxu0 0
    %4100 = vmatprep.subr.bf16.mxu0 0
    %4101 = vmatpush1.bf16.msra.mxu0 0
    %4102 = vmatprep.subr.bf16.mxu0 0
    %4103 = vmatpush1.bf16.msra.mxu0 0
    %4104 = vmatprep.subr.bf16.mxu0 0
    %4105 = vmatpush1.bf16.msra.mxu0 0
    %4106 = vmatprep.subr.bf16.mxu0 0
    %4107 = vmatpush1.bf16.msra.mxu0 0
    %4108 = vmatprep.subr.bf16.mxu0 0
    %4109 = vmatpush1.bf16.msra.mxu0 0
    %4110 = vmatprep.mubr.bf16.mxu0 0
    %4111 = vmatmul.mubr.bf16.gmra.mrb[0].mxu0 %v4073
    %v4112 = vpop.f32.mrb[0].mxu0
    %v4113 = vadd.f32 0.0, %v4112
    %v4114 = vpop.f32.mrb[0].mxu0
    %v4115 = vpop.f32.mrb[0].mxu0
    %v4116 = vpop.f32.mrb[0].mxu0
    %4117 = vdwg.mxu0
    %4118 = vrot.lane.b32.xlu0 %v3243, 40
    %v4119 = vpop.permute.xlu0 %4118
    %v4121 = vsel %vm183, %v3781, 0
    %v4124 = vsel %vm706, %v4119, 0
    %4126 = vmatprep.subr.bf16.mxu0 0
    %4127 = vmatpush1.bf16.msra.mxu0 %v4124
    %4128 = vmatprep.subr.bf16.mxu0 0
    %4129 = vmatpush1.bf16.msra.mxu0 0
    %4130 = vmatprep.subr.bf16.mxu0 0
    %4131 = vmatpush1.bf16.msra.mxu0 0
    %4132 = vmatprep.subr.bf16.mxu0 0
    %4133 = vmatpush1.bf16.msra.mxu0 0
    %4134 = vmatprep.subr.bf16.mxu0 0
    %4135 = vmatpush1.bf16.msra.mxu0 0
    %4136 = vmatprep.subr.bf16.mxu0 0
    %4137 = vmatpush1.bf16.msra.mxu0 0
    %4138 = vmatprep.subr.bf16.mxu0 0
    %4139 = vmatpush1.bf16.msra.mxu0 0
    %4140 = vmatprep.subr.bf16.mxu0 0
    %4141 = vmatpush1.bf16.msra.mxu0 0
    %4142 = vmatprep.subr.bf16.mxu0 0
    %4143 = vmatpush1.bf16.msra.mxu0 0
    %4144 = vmatprep.subr.bf16.mxu0 0
    %4145 = vmatpush1.bf16.msra.mxu0 0
    %4146 = vmatprep.subr.bf16.mxu0 0
    %4147 = vmatpush1.bf16.msra.mxu0 0
    %4148 = vmatprep.subr.bf16.mxu0 0
    %4149 = vmatpush1.bf16.msra.mxu0 0
    %4150 = vmatprep.subr.bf16.mxu0 0
    %4151 = vmatpush1.bf16.msra.mxu0 0
    %4152 = vmatprep.subr.bf16.mxu0 0
    %4153 = vmatpush1.bf16.msra.mxu0 0
    %4154 = vmatprep.subr.bf16.mxu0 0
    %4155 = vmatpush1.bf16.msra.mxu0 0
    %4156 = vmatprep.subr.bf16.mxu0 0
    %4157 = vmatpush1.bf16.msra.mxu0 0
    %4158 = vmatprep.mubr.bf16.mxu0 0
    %4159 = vmatmul.mubr.bf16.gmra.mrb[0].mxu0 %v4121
    %v4160 = vpop.f32.mrb[0].mxu0
    %v4161 = vadd.f32 0.0, %v4160
    %v4162 = vpop.f32.mrb[0].mxu0
    %v4163 = vpop.f32.mrb[0].mxu0
    %v4164 = vpop.f32.mrb[0].mxu0
    %4165 = vdwg.mxu0
    %v4166 = vpack.c.bf16 %v3873, %v3825
    %v4167 = vpack.c.bf16 %v3969, %v3921
    %v4168 = vpack.c.bf16 %v4065, %v4017
    %v4169 = vpack.c.bf16 %v4161, %v4113
    %v4170 = vld [vmem:[%s4 + $0x18] sm:$0xff]
    %v4171 = vpack.c.bf16 %v4170, %v4170
    %v4173 = vsel %vm183, %v4166, 0
    %v4176 = vsel %vm183, %v4167, 0
    %v4179 = vsel %vm183, %v4168, 0
    %v4182 = vsel %vm183, %v4169, 0
    %v4185 = vsel %vm706, %v4171, 0
    %4187 = vmatprep.subr.bf16.mxu0 0
    %4188 = vmatpush1.bf16.msra.mxu0 %v4185
    %4189 = vmatprep.subr.bf16.mxu0 0
    %4190 = vmatpush1.bf16.msra.mxu0 0
    %4191 = vmatprep.subr.bf16.mxu0 0
    %4192 = vmatpush1.bf16.msra.mxu0 0
    %4193 = vmatprep.subr.bf16.mxu0 0
    %4194 = vmatpush1.bf16.msra.mxu0 0
    %4195 = vmatprep.subr.bf16.mxu0 0
    %4196 = vmatpush1.bf16.msra.mxu0 0
    %4197 = vmatprep.subr.bf16.mxu0 0
    %4198 = vmatpush1.bf16.msra.mxu0 0
    %4199 = vmatprep.subr.bf16.mxu0 0
    %4200 = vmatpush1.bf16.msra.mxu0 0
    %4201 = vmatprep.subr.bf16.mxu0 0
    %4202 = vmatpush1.bf16.msra.mxu0 0
    %4203 = vmatprep.subr.bf16.mxu0 0
    %4204 = vmatpush1.bf16.msra.mxu0 0
    %4205 = vmatprep.subr.bf16.mxu0 0
    %4206 = vmatpush1.bf16.msra.mxu0 0
    %4207 = vmatprep.subr.bf16.mxu0 0
    %4208 = vmatpush1.bf16.msra.mxu0 0
    %4209 = vmatprep.subr.bf16.mxu0 0
    %4210 = vmatpush1.bf16.msra.mxu0 0
    %4211 = vmatprep.subr.bf16.mxu0 0
    %4212 = vmatpush1.bf16.msra.mxu0 0
    %4213 = vmatprep.subr.bf16.mxu0 0
    %4214 = vmatpush1.bf16.msra.mxu0 0
    %4215 = vmatprep.subr.bf16.mxu0 0
    %4216 = vmatpush1.bf16.msra.mxu0 0
    %4217 = vmatprep.subr.bf16.mxu0 0
    %4218 = vmatpush1.bf16.msra.mxu0 0
    %4219 = vmatprep.mubr.bf16.mxu0 0
    %4220 = vmatmul.mubr.bf16.gmra.mrb[0].mxu0 %v4173
    %v4221 = vpop.f32.mrb[0].mxu0
    %v4222 = vadd.f32 0.0, %v4221
    %v4223 = vpop.f32.mrb[0].mxu0
    %v4224 = vpop.f32.mrb[0].mxu0
    %v4225 = vadd.f32 0.0, %v4224
    %v4226 = vpop.f32.mrb[0].mxu0
    %4227 = vmatprep.mubr.bf16.mxu0 0
    %4228 = vmatmul.mubr.bf16.gmra.mrb[0].mxu0 %v4176
    %v4229 = vpop.f32.mrb[0].mxu0
    %v4230 = vadd.f32 0.0, %v4229
    %v4231 = vpop.f32.mrb[0].mxu0
    %v4232 = vpop.f32.mrb[0].mxu0
    %v4233 = vadd.f32 0.0, %v4232
    %v4234 = vpop.f32.mrb[0].mxu0
    %4235 = vmatprep.mubr.bf16.mxu0 0
    %4236 = vmatmul.mubr.bf16.gmra.mrb[0].mxu0 %v4179
    %v4237 = vpop.f32.mrb[0].mxu0
    %v4238 = vadd.f32 0.0, %v4237
    %v4239 = vpop.f32.mrb[0].mxu0
    %v4240 = vpop.f32.mrb[0].mxu0
    %v4241 = vadd.f32 0.0, %v4240
    %v4242 = vpop.f32.mrb[0].mxu0
    %4243 = vmatprep.mubr.bf16.mxu0 0
    %4244 = vmatmul.mubr.bf16.gmra.mrb[0].mxu0 %v4182
    %v4245 = vpop.f32.mrb[0].mxu0
    %v4246 = vadd.f32 0.0, %v4245
    %v4247 = vpop.f32.mrb[0].mxu0
    %v4248 = vpop.f32.mrb[0].mxu0
    %v4249 = vadd.f32 0.0, %v4248
    %v4250 = vpop.f32.mrb[0].mxu0
    %4251 = vdwg.mxu0
    %v4252 = vadd.f32 %v3220, %v4222
    %v4253 = vadd.f32 %v3221, %v4225
    %v4254 = vadd.f32 %v3222, %v4230
    %v4255 = vadd.f32 %v3223, %v4233
    %v4256 = vadd.f32 %v3224, %v4238
    %v4257 = vadd.f32 %v3225, %v4241
    %v4258 = vadd.f32 %v3226, %v4246
    %v4259 = vadd.f32 %v3227, %v4249
    %v4260 = vld [vmem:[%s5] sm:$0x1]
    %v4262 = vlaneseq
    %v4263 = vshrl.u32 %v4262, 7
    %v4264 = vsub.s32 0, %v4263
    %v4265 = vrot.slane %v4260, %v4264
    %v4267 = vadd.f32 %v4252, %v4265
    %v4268 = vadd.f32 %v4253, %v4265
    %v4269 = vadd.f32 %v4254, %v4265
    %v4270 = vadd.f32 %v4255, %v4265
    %v4271 = vadd.f32 %v4256, %v4265
    %v4272 = vadd.f32 %v4257, %v4265
    %v4273 = vadd.f32 %v4258, %v4265
    %v4274 = vadd.f32 %v4259, %v4265
    %v4275 = vadd.f32 %v52, %v4267
    %v4276 = vadd.f32 %v53, %v4268
    %v4277 = vadd.f32 %v54, %v4269
    %v4278 = vadd.f32 %v55, %v4270
    %v4279 = vadd.f32 %v56, %v4271
    %v4280 = vadd.f32 %v57, %v4272
    %v4281 = vadd.f32 %v58, %v4273
    %v4282 = vadd.f32 %v59, %v4274
    %v4283 = vsel %vm77, %v4275, 0.0
    %v4284 = vsel %vm77, %v4276, 0.0
    %v4285 = vadd.f32 %v4283, %v4284
    %v4286 = vsel %vm77, %v4277, 0.0
    %v4287 = vadd.f32 %v4285, %v4286
    %v4288 = vsel %vm77, %v4278, 0.0
    %v4289 = vadd.f32 %v4287, %v4288
    %v4290 = vsel %vm77, %v4279, 0.0
    %v4291 = vadd.f32 %v4289, %v4290
    %v4292 = vsel %vm77, %v4280, 0.0
    %v4293 = vadd.f32 %v4291, %v4292
    %v4294 = vsel %vm77, %v4281, 0.0
    %v4295 = vadd.f32 %v4293, %v4294
    %v4296 = vsel %vm77, %v4282, 0.0
    %v4297 = vadd.f32 %v4295, %v4296
    %v4298 = vrot.slane %v4297, 4
    %v4299 = vadd.f32 %v4297, %v4298
    %v4300 = vrot.slane %v4299, 2
    %v4301 = vadd.f32 %v4299, %v4300
    %v4302 = vrot.slane %v4301, 1
    %v4303 = vadd.f32 %v4301, %v4302
    %v4304 = vrcp.pop 64.0
    %v4305 = vmul.f32 %v4303, %v4304
    %v4306 = vsub.f32 %v4275, %v4305
    %v4307 = vsub.f32 %v4276, %v4305
    %v4308 = vsub.f32 %v4277, %v4305
    %v4309 = vsub.f32 %v4278, %v4305
    %v4310 = vsub.f32 %v4279, %v4305
    %v4311 = vsub.f32 %v4280, %v4305
    %v4312 = vsub.f32 %v4281, %v4305
    %v4313 = vsub.f32 %v4282, %v4305
    %v4314 = vmul.f32 %v4306, %v4306
    %v4315 = vmul.f32 %v4307, %v4307
    %v4316 = vmul.f32 %v4308, %v4308
    %v4317 = vmul.f32 %v4309, %v4309
    %v4318 = vmul.f32 %v4310, %v4310
    %v4319 = vmul.f32 %v4311, %v4311
    %v4320 = vmul.f32 %v4312, %v4312
    %v4321 = vmul.f32 %v4313, %v4313
    %v4322 = vsel %vm77, %v4314, 0.0
    %v4323 = vsel %vm77, %v4315, 0.0
    %v4324 = vadd.f32 %v4322, %v4323
    %v4325 = vsel %vm77, %v4316, 0.0
    %v4326 = vadd.f32 %v4324, %v4325
    %v4327 = vsel %vm77, %v4317, 0.0
    %v4328 = vadd.f32 %v4326, %v4327
    %v4329 = vsel %vm77, %v4318, 0.0
    %v4330 = vadd.f32 %v4328, %v4329
    %v4331 = vsel %vm77, %v4319, 0.0
    %v4332 = vadd.f32 %v4330, %v4331
    %v4333 = vsel %vm77, %v4320, 0.0
    %v4334 = vadd.f32 %v4332, %v4333
    %v4335 = vsel %vm77, %v4321, 0.0
    %v4336 = vadd.f32 %v4334, %v4335
    %v4337 = vrot.slane %v4336, 4
    %v4338 = vadd.f32 %v4336, %v4337
    %v4339 = vrot.slane %v4338, 2
    %v4340 = vadd.f32 %v4338, %v4339
    %v4341 = vrot.slane %v4340, 1
    %v4342 = vadd.f32 %v4340, %v4341
    %v4343 = vmul.f32 %v4342, %v4304
    %v4344 = vadd.f32 %v4343, 1e-05
    %v4345 = vrsqrt.pop %v4344
    %v4346 = vmul.f32 %v4306, %v4345
    %v4347 = vmul.f32 %v4307, %v4345
    %v4348 = vmul.f32 %v4308, %v4345
    %v4349 = vmul.f32 %v4309, %v4345
    %v4350 = vmul.f32 %v4310, %v4345
    %v4351 = vmul.f32 %v4311, %v4345
    %v4352 = vmul.f32 %v4312, %v4345
    %v4353 = vmul.f32 %v4313, %v4345
    %v4354 = vld [vmem:[%s6] sm:$0x1]
    %v4356 = vlaneseq
    %v4357 = vshrl.u32 %v4356, 7
    %v4358 = vsub.s32 0, %v4357
    %v4359 = vrot.slane %v4354, %v4358
    %v4361 = vmul.f32 %v4346, %v4359
    %v4362 = vmul.f32 %v4347, %v4359
    %v4363 = vmul.f32 %v4348, %v4359
    %v4364 = vmul.f32 %v4349, %v4359
    %v4365 = vmul.f32 %v4350, %v4359
    %v4366 = vmul.f32 %v4351, %v4359
    %v4367 = vmul.f32 %v4352, %v4359
    %v4368 = vmul.f32 %v4353, %v4359
    %v4369 = vld [vmem:[%s7] sm:$0x1]
    %v4371 = vlaneseq
    %v4372 = vshrl.u32 %v4371, 7
    %v4373 = vsub.s32 0, %v4372
    %v4374 = vrot.slane %v4369, %v4373
    %v4376 = vadd.f32 %v4361, %v4374
    %v4377 = vadd.f32 %v4362, %v4374
    %v4378 = vadd.f32 %v4363, %v4374
    %v4379 = vadd.f32 %v4364, %v4374
    %v4380 = vadd.f32 %v4365, %v4374
    %v4381 = vadd.f32 %v4366, %v4374
    %v4382 = vadd.f32 %v4367, %v4374
    %v4383 = vadd.f32 %v4368, %v4374
    %v4384 = vpack.c.bf16 %v4377, %v4376
    %v4385 = vpack.c.bf16 %v4379, %v4378
    %v4386 = vpack.c.bf16 %v4381, %v4380
    %v4387 = vpack.c.bf16 %v4383, %v4382
    %v4388 = vld [vmem:[%s8] sm:$0xff]
    %v4389 = vld [vmem:[%s8 + $0x8] sm:$0xff]
    %v4390 = vld [vmem:[%s8 + $0x10] sm:$0xff]
    %v4391 = vld [vmem:[%s8 + $0x18] sm:$0xff]
    %v4392 = vpack.c.bf16 %v4389, %v4388
    %v4393 = vpack.c.bf16 %v4391, %v4390
    %v4394 = vld [vmem:[%s9] sm:$0x1]
    %v4396 = vlaneseq
    %v4397 = vshrl.u32 %v4396, 7
    %v4398 = vsub.s32 0, %v4397
    %v4399 = vrot.slane %v4394, %v4398
    %v4402 = vsel %vm77, %v4384, 0
    %v4405 = vsel %vm77, %v4385, 0
    %v4408 = vsel %vm77, %v4386, 0
    %v4411 = vsel %vm77, %v4387, 0
    %4413 = vmatprep.subr.bf16.mxu0 0
    %4414 = vmatpush1.bf16.msra.mxu0 %v4392
    %4415 = vmatprep.subr.bf16.mxu0 0
    %4416 = vmatpush1.bf16.msra.mxu0 %v4393
    %4417 = vmatprep.subr.bf16.mxu0 0
    %4418 = vmatpush1.bf16.msra.mxu0 0
    %4419 = vmatprep.subr.bf16.mxu0 0
    %4420 = vmatpush1.bf16.msra.mxu0 0
    %4421 = vmatprep.subr.bf16.mxu0 0
    %4422 = vmatpush1.bf16.msra.mxu0 0
    %4423 = vmatprep.subr.bf16.mxu0 0
    %4424 = vmatpush1.bf16.msra.mxu0 0
    %4425 = vmatprep.subr.bf16.mxu0 0
    %4426 = vmatpush1.bf16.msra.mxu0 0
    %4427 = vmatprep.subr.bf16.mxu0 0
    %4428 = vmatpush1.bf16.msra.mxu0 0
    %4429 = vmatprep.subr.bf16.mxu0 0
    %4430 = vmatpush1.bf16.msra.mxu0 0
    %4431 = vmatprep.subr.bf16.mxu0 0
    %4432 = vmatpush1.bf16.msra.mxu0 0
    %4433 = vmatprep.subr.bf16.mxu0 0
    %4434 = vmatpush1.bf16.msra.mxu0 0
    %4435 = vmatprep.subr.bf16.mxu0 0
    %4436 = vmatpush1.bf16.msra.mxu0 0
    %4437 = vmatprep.subr.bf16.mxu0 0
    %4438 = vmatpush1.bf16.msra.mxu0 0
    %4439 = vmatprep.subr.bf16.mxu0 0
    %4440 = vmatpush1.bf16.msra.mxu0 0
    %4441 = vmatprep.subr.bf16.mxu0 0
    %4442 = vmatpush1.bf16.msra.mxu0 0
    %4443 = vmatprep.subr.bf16.mxu0 0
    %4444 = vmatpush1.bf16.msra.mxu0 0
    %4445 = vmatprep.mubr.bf16.mxu0 0
    %4446 = vmatmul.mubr.bf16.gmra.mrb[0].mxu0 %v4402
    %v4447 = vpop.f32.mrb[0].mxu0
    %v4448 = vadd.f32 %v4399, %v4447
    %v4449 = vpop.f32.mrb[0].mxu0
    %v4450 = vpop.f32.mrb[0].mxu0
    %v4451 = vadd.f32 %v4399, %v4450
    %v4452 = vpop.f32.mrb[0].mxu0
    %4453 = vmatprep.mubr.bf16.mxu0 0
    %4454 = vmatmul.mubr.bf16.gmra.mrb[0].mxu0 %v4405
    %v4455 = vpop.f32.mrb[0].mxu0
    %v4456 = vadd.f32 %v4399, %v4455
    %v4457 = vpop.f32.mrb[0].mxu0
    %v4458 = vpop.f32.mrb[0].mxu0
    %v4459 = vadd.f32 %v4399, %v4458
    %v4460 = vpop.f32.mrb[0].mxu0
    %4461 = vmatprep.mubr.bf16.mxu0 0
    %4462 = vmatmul.mubr.bf16.gmra.mrb[0].mxu0 %v4408
    %v4463 = vpop.f32.mrb[0].mxu0
    %v4464 = vadd.f32 %v4399, %v4463
    %v4465 = vpop.f32.mrb[0].mxu0
    %v4466 = vpop.f32.mrb[0].mxu0
    %v4467 = vadd.f32 %v4399, %v4466
    %v4468 = vpop.f32.mrb[0].mxu0
    %4469 = vmatprep.mubr.bf16.mxu0 0
    %4470 = vmatmul.mubr.bf16.gmra.mrb[0].mxu0 %v4411
    %v4471 = vpop.f32.mrb[0].mxu0
    %v4472 = vadd.f32 %v4399, %v4471
    %v4473 = vpop.f32.mrb[0].mxu0
    %v4474 = vpop.f32.mrb[0].mxu0
    %v4475 = vadd.f32 %v4399, %v4474
    %v4476 = vpop.f32.mrb[0].mxu0
    %4477 = vdwg.mxu0
    %v4478 = vmul.f32 %v4448, 0.5
    %v4479 = vmul.f32 %v4451, 0.5
    %v4480 = vmul.f32 %v4456, 0.5
    %v4481 = vmul.f32 %v4459, 0.5
    %v4482 = vmul.f32 %v4464, 0.5
    %v4483 = vmul.f32 %v4467, 0.5
    %v4484 = vmul.f32 %v4472, 0.5
    %v4485 = vmul.f32 %v4475, 0.5
    %v4486 = vmul.f32 %v4448, 0.70710677
    %v4487 = vmul.f32 %v4451, 0.70710677
    %v4488 = vmul.f32 %v4456, 0.70710677
    %v4489 = vmul.f32 %v4459, 0.70710677
    %v4490 = vmul.f32 %v4464, 0.70710677
    %v4491 = vmul.f32 %v4467, 0.70710677
    %v4492 = vmul.f32 %v4472, 0.70710677
    %v4493 = vmul.f32 %v4475, 0.70710677
    %v4494 = verf.f32.pop %v4486
    %v4495 = verf.f32.pop %v4487
    %v4496 = verf.f32.pop %v4488
    %v4497 = verf.f32.pop %v4489
    %v4498 = verf.f32.pop %v4490
    %v4499 = verf.f32.pop %v4491
    %v4500 = verf.f32.pop %v4492
    %v4501 = verf.f32.pop %v4493
    %v4502 = vadd.f32 %v4494, 1.0
    %v4503 = vadd.f32 %v4495, 1.0
    %v4504 = vadd.f32 %v4496, 1.0
    %v4505 = vadd.f32 %v4497, 1.0
    %v4506 = vadd.f32 %v4498, 1.0
    %v4507 = vadd.f32 %v4499, 1.0
    %v4508 = vadd.f32 %v4500, 1.0
    %v4509 = vadd.f32 %v4501, 1.0
    %v4510 = vmul.f32 %v4478, %v4502
    %v4511 = vmul.f32 %v4479, %v4503
    %v4512 = vmul.f32 %v4480, %v4504
    %v4513 = vmul.f32 %v4481, %v4505
    %v4514 = vmul.f32 %v4482, %v4506
    %v4515 = vmul.f32 %v4483, %v4507
    %v4516 = vmul.f32 %v4484, %v4508
    %v4517 = vmul.f32 %v4485, %v4509
    %v4518 = vpack.c.bf16 %v4511, %v4510
    %v4519 = vpack.c.bf16 %v4513, %v4512
    %v4520 = vpack.c.bf16 %v4515, %v4514
    %v4521 = vpack.c.bf16 %v4517, %v4516
    %v4522 = vld [vmem:[%s10] sm:$0xff]
    %v4523 = vld [vmem:[%s10 + $0x8] sm:$0xff]
    %v4524 = vld [vmem:[%s10 + $0x10] sm:$0xff]
    %v4525 = vld [vmem:[%s10 + $0x18] sm:$0xff]
    %v4526 = vld [vmem:[%s10 + $0x20] sm:$0xff]
    %v4527 = vld [vmem:[%s10 + $0x28] sm:$0xff]
    %v4528 = vld [vmem:[%s10 + $0x30] sm:$0xff]
    %v4529 = vld [vmem:[%s10 + $0x38] sm:$0xff]
    %v4530 = vpack.c.bf16 %v4523, %v4522
    %v4531 = vpack.c.bf16 %v4525, %v4524
    %v4532 = vpack.c.bf16 %v4527, %v4526
    %v4533 = vpack.c.bf16 %v4529, %v4528
    %v4534 = vld [vmem:[%s11] sm:$0x1]
    %v4536 = vlaneseq
    %v4537 = vshrl.u32 %v4536, 7
    %v4538 = vsub.s32 0, %v4537
    %v4539 = vrot.slane %v4534, %v4538
    %vm4541 = vcmask 523264
    %v4543 = vsel %vm4541, %v4518, 0
    %v4546 = vsel %vm4541, %v4519, 0
    %v4549 = vsel %vm4541, %v4520, 0
    %v4552 = vsel %vm4541, %v4521, 0
    %4554 = vmatprep.subr.bf16.mxu0 0
    %4555 = vmatpush1.bf16.msra.mxu0 %v4530
    %4556 = vmatprep.subr.bf16.mxu0 0
    %4557 = vmatpush1.bf16.msra.mxu0 %v4531
    %4558 = vmatprep.subr.bf16.mxu0 0
    %4559 = vmatpush1.bf16.msra.mxu0 %v4532
    %4560 = vmatprep.subr.bf16.mxu0 0
    %4561 = vmatpush1.bf16.msra.mxu0 %v4533
    %4562 = vmatprep.subr.bf16.mxu0 0
    %4563 = vmatpush1.bf16.msra.mxu0 0
    %4564 = vmatprep.subr.bf16.mxu0 0
    %4565 = vmatpush1.bf16.msra.mxu0 0
    %4566 = vmatprep.subr.bf16.mxu0 0
    %4567 = vmatpush1.bf16.msra.mxu0 0
    %4568 = vmatprep.subr.bf16.mxu0 0
    %4569 = vmatpush1.bf16.msra.mxu0 0
    %4570 = vmatprep.subr.bf16.mxu0 0
    %4571 = vmatpush1.bf16.msra.mxu0 0
    %4572 = vmatprep.subr.bf16.mxu0 0
    %4573 = vmatpush1.bf16.msra.mxu0 0
    %4574 = vmatprep.subr.bf16.mxu0 0
    %4575 = vmatpush1.bf16.msra.mxu0 0
    %4576 = vmatprep.subr.bf16.mxu0 0
    %4577 = vmatpush1.bf16.msra.mxu0 0
    %4578 = vmatprep.subr.bf16.mxu0 0
    %4579 = vmatpush1.bf16.msra.mxu0 0
    %4580 = vmatprep.subr.bf16.mxu0 0
    %4581 = vmatpush1.bf16.msra.mxu0 0
    %4582 = vmatprep.subr.bf16.mxu0 0
    %4583 = vmatpush1.bf16.msra.mxu0 0
    %4584 = vmatprep.subr.bf16.mxu0 0
    %4585 = vmatpush1.bf16.msra.mxu0 0
    %4586 = vmatprep.mubr.bf16.mxu0 0
    %4587 = vmatmul.mubr.bf16.gmra.mrb[0].mxu0 %v4543
    %v4588 = vpop.f32.mrb[0].mxu0
    %v4589 = vadd.f32 %v4539, %v4588
    %v4590 = vpop.f32.mrb[0].mxu0
    %v4591 = vpop.f32.mrb[0].mxu0
    %v4592 = vadd.f32 %v4539, %v4591
    %v4593 = vpop.f32.mrb[0].mxu0
    %4594 = vmatprep.mubr.bf16.mxu0 0
    %4595 = vmatmul.mubr.bf16.gmra.mrb[0].mxu0 %v4546
    %v4596 = vpop.f32.mrb[0].mxu0
    %v4597 = vadd.f32 %v4539, %v4596
    %v4598 = vpop.f32.mrb[0].mxu0
    %v4599 = vpop.f32.mrb[0].mxu0
    %v4600 = vadd.f32 %v4539, %v4599
    %v4601 = vpop.f32.mrb[0].mxu0
    %4602 = vmatprep.mubr.bf16.mxu0 0
    %4603 = vmatmul.mubr.bf16.gmra.mrb[0].mxu0 %v4549
    %v4604 = vpop.f32.mrb[0].mxu0
    %v4605 = vadd.f32 %v4539, %v4604
    %v4606 = vpop.f32.mrb[0].mxu0
    %v4607 = vpop.f32.mrb[0].mxu0
    %v4608 = vadd.f32 %v4539, %v4607
    %v4609 = vpop.f32.mrb[0].mxu0
    %4610 = vmatprep.mubr.bf16.mxu0 0
    %4611 = vmatmul.mubr.bf16.gmra.mrb[0].mxu0 %v4552
    %v4612 = vpop.f32.mrb[0].mxu0
    %v4613 = vadd.f32 %v4539, %v4612
    %v4614 = vpop.f32.mrb[0].mxu0
    %v4615 = vpop.f32.mrb[0].mxu0
    %v4616 = vadd.f32 %v4539, %v4615
    %v4617 = vpop.f32.mrb[0].mxu0
    %4618 = vdwg.mxu0
    %v4619 = vadd.f32 %v4376, %v4589
    %v4620 = vadd.f32 %v4377, %v4592
    %v4621 = vadd.f32 %v4378, %v4597
    %v4622 = vadd.f32 %v4379, %v4600
    %v4623 = vadd.f32 %v4380, %v4605
    %v4624 = vadd.f32 %v4381, %v4608
    %v4625 = vadd.f32 %v4382, %v4613
    %v4626 = vadd.f32 %v4383, %v4616
    %v4627 = vsel %vm77, %v4619, 0.0
    %v4628 = vsel %vm77, %v4620, 0.0
    %v4629 = vadd.f32 %v4627, %v4628
    %v4630 = vsel %vm77, %v4621, 0.0
    %v4631 = vadd.f32 %v4629, %v4630
    %v4632 = vsel %vm77, %v4622, 0.0
    %v4633 = vadd.f32 %v4631, %v4632
    %v4634 = vsel %vm77, %v4623, 0.0
    %v4635 = vadd.f32 %v4633, %v4634
    %v4636 = vsel %vm77, %v4624, 0.0
    %v4637 = vadd.f32 %v4635, %v4636
    %v4638 = vsel %vm77, %v4625, 0.0
    %v4639 = vadd.f32 %v4637, %v4638
    %v4640 = vsel %vm77, %v4626, 0.0
    %v4641 = vadd.f32 %v4639, %v4640
    %v4642 = vrot.slane %v4641, 4
    %v4643 = vadd.f32 %v4641, %v4642
    %v4644 = vrot.slane %v4643, 2
    %v4645 = vadd.f32 %v4643, %v4644
    %v4646 = vrot.slane %v4645, 1
    %v4647 = vadd.f32 %v4645, %v4646
    %v4648 = vmul.f32 %v4647, %v4304
    %v4649 = vsub.f32 %v4619, %v4648
    %v4650 = vsub.f32 %v4620, %v4648
    %v4651 = vsub.f32 %v4621, %v4648
    %v4652 = vsub.f32 %v4622, %v4648
    %v4653 = vsub.f32 %v4623, %v4648
    %v4654 = vsub.f32 %v4624, %v4648
    %v4655 = vsub.f32 %v4625, %v4648
    %v4656 = vsub.f32 %v4626, %v4648
    %v4657 = vmul.f32 %v4649, %v4649
    %v4658 = vmul.f32 %v4650, %v4650
    %v4659 = vmul.f32 %v4651, %v4651
    %v4660 = vmul.f32 %v4652, %v4652
    %v4661 = vmul.f32 %v4653, %v4653
    %v4662 = vmul.f32 %v4654, %v4654
    %v4663 = vmul.f32 %v4655, %v4655
    %v4664 = vmul.f32 %v4656, %v4656
    %v4665 = vsel %vm77, %v4657, 0.0
    %v4666 = vsel %vm77, %v4658, 0.0
    %v4667 = vadd.f32 %v4665, %v4666
    %v4668 = vsel %vm77, %v4659, 0.0
    %v4669 = vadd.f32 %v4667, %v4668
    %v4670 = vsel %vm77, %v4660, 0.0
    %v4671 = vadd.f32 %v4669, %v4670
    %v4672 = vsel %vm77, %v4661, 0.0
    %v4673 = vadd.f32 %v4671, %v4672
    %v4674 = vsel %vm77, %v4662, 0.0
    %v4675 = vadd.f32 %v4673, %v4674
    %v4676 = vsel %vm77, %v4663, 0.0
    %v4677 = vadd.f32 %v4675, %v4676
    %v4678 = vsel %vm77, %v4664, 0.0
    %v4679 = vadd.f32 %v4677, %v4678
    %v4680 = vrot.slane %v4679, 4
    %v4681 = vadd.f32 %v4679, %v4680
    %v4682 = vrot.slane %v4681, 2
    %v4683 = vadd.f32 %v4681, %v4682
    %v4684 = vrot.slane %v4683, 1
    %v4685 = vadd.f32 %v4683, %v4684
    %v4686 = vmul.f32 %v4685, %v4304
    %v4687 = vadd.f32 %v4686, 1e-05
    %v4688 = vrsqrt.pop %v4687
    %v4689 = vmul.f32 %v4649, %v4688
    %v4690 = vmul.f32 %v4650, %v4688
    %v4691 = vmul.f32 %v4651, %v4688
    %v4692 = vmul.f32 %v4652, %v4688
    %v4693 = vmul.f32 %v4653, %v4688
    %v4694 = vmul.f32 %v4654, %v4688
    %v4695 = vmul.f32 %v4655, %v4688
    %v4696 = vmul.f32 %v4656, %v4688
    %v4697 = vld [vmem:[%s12] sm:$0x1]
    %v4699 = vlaneseq
    %v4700 = vshrl.u32 %v4699, 7
    %v4701 = vsub.s32 0, %v4700
    %v4702 = vrot.slane %v4697, %v4701
    %v4704 = vmul.f32 %v4689, %v4702
    %v4705 = vmul.f32 %v4690, %v4702
    %v4706 = vmul.f32 %v4691, %v4702
    %v4707 = vmul.f32 %v4692, %v4702
    %v4708 = vmul.f32 %v4693, %v4702
    %v4709 = vmul.f32 %v4694, %v4702
    %v4710 = vmul.f32 %v4695, %v4702
    %v4711 = vmul.f32 %v4696, %v4702
    %v4712 = vld [vmem:[%s13] sm:$0x1]
    %v4714 = vlaneseq
    %v4715 = vshrl.u32 %v4714, 7
    %v4716 = vsub.s32 0, %v4715
    %v4717 = vrot.slane %v4712, %v4716
    %v4719 = vadd.f32 %v4704, %v4717
    %v4720 = vadd.f32 %v4705, %v4717
    %v4721 = vadd.f32 %v4706, %v4717
    %v4722 = vadd.f32 %v4707, %v4717
    %v4723 = vadd.f32 %v4708, %v4717
    %v4724 = vadd.f32 %v4709, %v4717
    %v4725 = vadd.f32 %v4710, %v4717
    %v4726 = vadd.f32 %v4711, %v4717
    %4727 = vst.msk [vmem:[#allocation3] sm:$0xff] %vm77, %v4719
    %4728 = vst.msk [vmem:[#allocation3 + $0x8] sm:$0xff] %vm77, %v4720
    %4729 = vst.msk [vmem:[#allocation3 + $0x10] sm:$0xff] %vm77, %v4721
    %4730 = vst.msk [vmem:[#allocation3 + $0x18] sm:$0xff] %vm77, %v4722
    %4731 = vst.msk [vmem:[#allocation3 + $0x20] sm:$0xff] %vm77, %v4723
    %4732 = vst.msk [vmem:[#allocation3 + $0x28] sm:$0xff] %vm77, %v4724
    %4733 = vst.msk [vmem:[#allocation3 + $0x30] sm:$0xff] %vm77, %v4725
    %4734 = vst.msk [vmem:[#allocation3 + $0x38] sm:$0xff] %vm77, %v4726
    // Predicated region
    $region58: #{shuffle_mtm_encoder_forward.5} parent=1 // pred_check
      _
    $region59: #{shuffle_mtm_encoder_forward.5} parent=1 // pred_check_branch
      %4736 = sbr.rel (0) target = $region61
    $region60: #{shuffle_mtm_encoder_forward.5} parent=1 // pred_region
      %s4738 = ssub.s32 1024, 1024
      %4739 = vsyncadd [#allocation4], %s4738
      %s4740 = sshll.u32 [#allocation3], 4
      %s4741 = int_to_ptr.vmem [resolvable:$true] %s4740
      %4746 = dma.vmem_to_hbm [thread:$0]  %s4741, 1024, %s14, [#allocation4], 128, 128, 8
    $region61: #{shuffle_mtm_encoder_forward.5} parent=1 // pred_fallthru
      _
    // Predicated region
    $region62: #{shuffle_mtm_encoder_forward.5} parent=1 // pred_check
      _
    $region63: #{shuffle_mtm_encoder_forward.5} parent=1 // pred_check_branch
      %4748 = sbr.rel (0) target = $region65
    $region64: #{shuffle_mtm_encoder_forward.5} parent=1 // pred_region
      %s4750 = ssub.s32 4096, 4096
      %4751 = vsyncadd [#allocation6], %s4750
      %s4752 = sshll.u32 [#allocation5], 4
      %s4753 = int_to_ptr.vmem [resolvable:$true] %s4752
      %4758 = dma.vmem_to_hbm [thread:$0]  %s4753, 4096, %s15, [#allocation6], 128, 128, 8
    $region65: #{shuffle_mtm_encoder_forward.5} parent=1 // pred_fallthru
      _
    // Predicated region
    $region66: #{shuffle_mtm_encoder_forward.5} parent=1 // pred_check
      _
    $region67: #{shuffle_mtm_encoder_forward.5} parent=1 // pred_check_branch
      %4760 = sbr.rel (0) target = $region69
    $region68: #{shuffle_mtm_encoder_forward.5} parent=1 // pred_region
      %4761 = dma.done [#allocation4], 1024
    $region69: #{shuffle_mtm_encoder_forward.5} parent=1 // pred_fallthru
      _
    // Predicated region
    $region70: #{shuffle_mtm_encoder_forward.5} parent=1 // pred_check
      _
    $region71: #{shuffle_mtm_encoder_forward.5} parent=1 // pred_check_branch
      %4763 = sbr.rel (0) target = $region73
    $region72: #{shuffle_mtm_encoder_forward.5} parent=1 // pred_region
      %4764 = dma.done [#allocation6], 4096
    $region73: #{shuffle_mtm_encoder_forward.5} parent=1 // pred_fallthru
      _
    %4765 = vsyncpa [#allocation4], 1
    %4766 = vsyncpa [#allocation6], 1

</llo_original>
